<compile_context>
chip_gen: v5e
topology: v5e:2x2
jax: 0.10.0
libtpu: 0.0.40
codegen_flags: <defaults>
</compile_context>

<pallas_src>
import numpy as np
import jax
import jax.numpy as jnp
from jax import lax
from jax.experimental import pallas as pl
from jax.experimental.pallas import tpu as pltpu

# ----------------------------- configuration ---------------------------------
B = 2            # batch
T = 512          # seq len == args.ctx_len (torch module asserts ctx_len % 512 == 0)
C = 128          # args.n_embd == args.dim_att
HEAD = 64        # head_size (hard-coded 64 in RWKV_TimeMix_RWKV5_Preview)
H = C // HEAD    # n_head
DFFN = 256       # args.dim_ffn
CHUNK = 128      # kernel-side chunk (math is chunk-size invariant; torch uses 512)
NC = T // CHUNK  # chunks per sequence
N_LAYER = 2
LAYER_ID = 0
HEAD_DIVISOR = 8.0   # self.head_size_divisor (hard-coded 8 in the Preview module)
EPS = 1e-5           # torch LayerNorm / GroupNorm default eps


# ----------------------------- kernel helpers ---------------------------------
def _layernorm(x, w, b):
    # x: (CHUNK, C), w/b: (1, C)
    mu = jnp.mean(x, axis=-1, keepdims=True)
    xc = x - mu
    var = jnp.mean(xc * xc, axis=-1, keepdims=True)
    return xc * lax.rsqrt(var + EPS) * w + b


def _time_shift(x, prev_row):
    # nn.ZeroPad2d((0,0,1,-1)) on a (CHUNK, C) tile: xx[t] = x[t-1];
    # row 0 comes from the previous chunk (zeros at chunk 0).
    rolled = pltpu.roll(x, shift=1, axis=0)
    row = lax.broadcasted_iota(jnp.int32, x.shape, 0)
    return jnp.where(row == 0, prev_row, rolled)


# -------- fused kernel: ln0 + ln1 + TimeMix(RWKV5-preview) + ln2 + ChannelMix --------
def rwkv_block_kernel(scal_ref,                       # (3, H) f32 in SMEM (scalar prefetch)
                      x_ref,                          # (1, CHUNK, C)
                      ln0w, ln0b, ln1w, ln1b, ln2w, ln2b,
                      att_tmk, att_tmv, att_tmr,
                      wr_ref, wk_ref, wv_ref, wo_ref,
                      gnw, gnb,
                      ffn_tmk, ffn_tmr,
                      wkey_ref, wrec_ref, wval_ref,
                      out_ref,                        # (1, CHUNK, C)
                      s_ref, sh_att_ref, sh_ffn_ref):
    f32 = jnp.float32
    bf16 = jnp.bfloat16
    ci = pl.program_id(1)

    # Reset per-sequence carries at the first chunk of every batch element.
    @pl.when(ci == 0)
    def _():
        s_ref[...] = jnp.zeros_like(s_ref)
        sh_att_ref[...] = jnp.zeros_like(sh_att_ref)
        sh_ffn_ref[...] = jnp.zeros_like(sh_ffn_ref)

    x = x_ref[0]                                      # (CHUNK, C) f32
    x0 = _layernorm(x, ln0w[...], ln0b[...])          # Block.ln0 (layer_id == 0)

    # -------------------- attention: RWKV_TimeMix_RWKV5_Preview --------------------
    xln = _layernorm(x0, ln1w[...], ln1b[...])        # Block.ln1
    xx = _time_shift(xln, sh_att_ref[...])
    sh_att_ref[...] = xln[CHUNK - 1:CHUNK, :]         # carry last row for next chunk
    d = xln - xx                                      # x*m + xx*(1-m) == xx + (x-xx)*m
    xk = (xx + d * att_tmk[...]).astype(bf16)
    xv = (xx + d * att_tmv[...]).astype(bf16)
    xr = (xx + d * att_tmr[...]).astype(bf16)

    r = jnp.dot(xr, wr_ref[...], preferred_element_type=f32)      # weights already bf16
    k = jnp.dot(xk, wk_ref[...], preferred_element_type=f32)
    v = jnp.dot(xv, wv_ref[...], preferred_element_type=f32)
    r_b, k_b, v_b = r.astype(bf16), k.astype(bf16), v.astype(bf16)

    # Head-independent index masks for the decay tensors (EUP exp is per head).
    ii = lax.broadcasted_iota(jnp.int32, (CHUNK, CHUNK), 0)
    jj = lax.broadcasted_iota(jnp.int32, (CHUNK, CHUNK), 1)
    gt = ii > jj
    eq = ii == jj
    dm1 = jnp.maximum(ii - jj - 1, 0).astype(f32)                  # (i-j-1) clamped
    rowf = lax.broadcasted_iota(jnp.int32, (CHUNK, HEAD), 0).astype(f32)

    gnw_all = gnw[...]
    gnb_all = gnb[...]
    att_out = None
    for h in range(H):                                 # static loop, H == 2
        lo, hi = h * HEAD, (h + 1) * HEAD
        rr, kk, vv = r_b[:, lo:hi], k_b[:, lo:hi], v_b[:, lo:hi]

        # Per-head decay tensors generated on the fly (f32, EUP exp):
        #   wm[i,j] = u if i==j, w0^(i-j-1) if i>j, 0 otherwise
        #   wb[i]   = w0^i,  wk[t] = w0^(CHUNK-1-t),  ws = w0^CHUNK
        logw0 = scal_ref[0, h]        # log(w0) = -exp(decay_speed)
        u_first = scal_ref[1, h]      # exp(time_first)
        w_state = scal_ref[2, h]      # w0 ** CHUNK
        wm = jnp.where(gt, jnp.exp(dm1 * logw0),
                       jnp.where(eq, u_first, 0.0))                # (CHUNK, CHUNK) f32
        wb_m = jnp.exp(rowf * logw0)                               # (CHUNK, HEAD)
        wk_m = jnp.exp((CHUNK - 1.0 - rowf) * logw0)               # (CHUNK, HEAD)

        s = s_ref[h]                                               # (HEAD, HEAD) f32

        # intra-chunk:  (rr @ kk^T * wm) @ vv   — contract head dim, no explicit .T
        a = lax.dot_general(rr, kk, (((1,), (1,)), ((), ())),
                            preferred_element_type=f32)            # (CHUNK, CHUNK)
        p_att = (a * wm).astype(bf16)
        xi = jnp.dot(p_att, vv, preferred_element_type=f32)        # (CHUNK, HEAD)
        # cross-chunk:  + (rr @ s) * wb
        xi = xi + jnp.dot(rr, s.astype(bf16),
                          preferred_element_type=f32) * wb_m
        # state update:  s <- ws*s + (kk^T * wk) @ vv, contracted over the chunk dim
        kkw = (kk * wk_m).astype(bf16)
        upd = lax.dot_general(kkw, vv, (((0,), (0,)), ((), ())),
                              preferred_element_type=f32)          # (HEAD, HEAD)
        s_ref[h] = w_state * s + upd

        # ln_x = GroupNorm(n_head, dim_att), per head, after /head_size_divisor
        xg = xi * (1.0 / HEAD_DIVISOR)
        mu = jnp.mean(xg, axis=-1, keepdims=True)
        xc = xg - mu
        var = jnp.mean(xc * xc, axis=-1, keepdims=True)
        gn_h = (xc * lax.rsqrt(var + EPS) * gnw_all[:, lo:hi]
                + gnb_all[:, lo:hi]).astype(bf16)
        # output projection accumulated per head (gn stays in registers)
        contrib = jnp.dot(gn_h, wo_ref[lo:hi, :], preferred_element_type=f32)
        att_out = contrib if att_out is None else att_out + contrib

    x1 = x0 + att_out                                  # residual 1

    # -------------------------- channel mix: RWKV_ChannelMix --------------------------
    xln2 = _layernorm(x1, ln2w[...], ln2b[...])        # Block.ln2
    xx2 = _time_shift(xln2, sh_ffn_ref[...])
    sh_ffn_ref[...] = xln2[CHUNK - 1:CHUNK, :]         # carry last row for next chunk
    d2 = xln2 - xx2
    xk2 = (xx2 + d2 * ffn_tmk[...]).astype(bf16)
    xr2 = (xx2 + d2 * ffn_tmr[...]).astype(bf16)
    kk2 = jnp.dot(xk2, wkey_ref[...], preferred_element_type=f32)
    kk2 = jnp.square(jnp.maximum(kk2, 0.0))            # relu(k) ** 2
    kv = jnp.dot(kk2.astype(bf16), wval_ref[...], preferred_element_type=f32)
    rec = jax.nn.sigmoid(jnp.dot(xr2, wrec_ref[...], preferred_element_type=f32))
    out_ref[0] = x1 + rec * kv                         # residual 2


# ------------------------------ pallas wrapper --------------------------------
def _param_spec(shape):
    zeros = (0,) * len(shape)
    return pl.BlockSpec(shape, lambda b, ci, scal, _z=zeros: _z)


def _x_spec():
    return pl.BlockSpec((1, CHUNK, C), lambda b, ci, scal: (b, ci, 0))


@jax.jit
def rwkv_block_forward(x, p):
    params = [p['ln0_w'], p['ln0_b'], p['ln1_w'], p['ln1_b'], p['ln2_w'], p['ln2_b'],
              p['att_tmk'], p['att_tmv'], p['att_tmr'],
              p['att_wr'], p['att_wk'], p['att_wv'], p['att_wo'],
              p['gn_w'], p['gn_b'],
              p['ffn_tmk'], p['ffn_tmr'],
              p['ffn_wkey'], p['ffn_wrec'], p['ffn_wval']]
    return pl.pallas_call(
        rwkv_block_kernel,
        out_shape=jax.ShapeDtypeStruct((B, T, C), jnp.float32),
        grid_spec=pltpu.PrefetchScalarGridSpec(
            num_scalar_prefetch=1,                      # att_scal -> SMEM
            grid=(B, NC),
            in_specs=[_x_spec()] + [_param_spec(a.shape) for a in params],
            out_specs=_x_spec(),
            scratch_shapes=[pltpu.VMEM((H, HEAD, HEAD), jnp.float32),  # recurrent state
                            pltpu.VMEM((1, C), jnp.float32),           # att time-shift carry
                            pltpu.VMEM((1, C), jnp.float32)]),         # ffn time-shift carry
        compiler_params=pltpu.CompilerParams(
            dimension_semantics=("parallel", "arbitrary"),   # batch parallel, chunks sequential
            vmem_limit_bytes=32 * 1024 * 1024),
    )(p['att_scal'], x, *params)


# ------------------------------ parameter setup --------------------------------
def make_params(key):
    keys = jax.random.split(key, 8)
    ddd = jnp.arange(C, dtype=jnp.float32) / C                 # ddd[0,0,i] = i / n_embd
    ratio_0_to_1 = LAYER_ID / (N_LAYER - 1)                    # 0.0
    ratio_1_to_almost0 = 1.0 - LAYER_ID / N_LAYER              # 1.0

    def lin(k, fan_in, fan_out):
        w = jax.random.normal(k, (fan_in, fan_out), jnp.float32) / np.sqrt(fan_in)
        return w.astype(jnp.bfloat16)                          # weights stored bf16 in HBM

    p = {}
    # LayerNorms (torch default init: weight=1, bias=0)
    for name in ('ln0', 'ln1', 'ln2'):
        p[f'{name}_w'] = jnp.ones((1, C), jnp.float32)
        p[f'{name}_b'] = jnp.zeros((1, C), jnp.float32)

    # --- RWKV_TimeMix_RWKV5_Preview params ---
    p['att_tmk'] = (ddd ** ratio_1_to_almost0)[None, :]
    p['att_tmv'] = (ddd ** ratio_1_to_almost0 + 0.3 * ratio_0_to_1)[None, :]
    p['att_tmr'] = (ddd ** (0.5 * ratio_1_to_almost0))[None, :]
    hs = jnp.arange(H, dtype=jnp.float32)
    decay_speed = -6.0 + 5.0 * (hs / max(H - 1, 1)) ** (0.7 + 1.3 * ratio_0_to_1)
    time_first = jnp.full((H,), -3.0, jnp.float32)             # non-'r2' path
    p['att_decay_speed'] = decay_speed
    p['att_time_first'] = time_first
    # Per-head scalars consumed by the kernel (SMEM scalar prefetch):
    #   row 0: log(w0) = -exp(decay_speed), row 1: u = exp(time_first), row 2: w0**CHUNK
    logw0 = -jnp.exp(decay_speed)
    p['att_scal'] = jnp.stack([logw0, jnp.exp(time_first),
                               jnp.exp(CHUNK * logw0)], axis=0)  # (3, H) f32
    p['att_wr'] = lin(keys[0], C, C)
    p['att_wk'] = lin(keys[1], C, C)
    p['att_wv'] = lin(keys[2], C, C)
    p['att_wo'] = lin(keys[3], C, C)
    p['gn_w'] = jnp.ones((1, C), jnp.float32)                  # ln_x (GroupNorm) affine
    p['gn_b'] = jnp.zeros((1, C), jnp.float32)

    # --- RWKV_ChannelMix params ---
    p['ffn_tmk'] = (ddd ** ratio_1_to_almost0)[None, :]
    p['ffn_tmr'] = (ddd ** ratio_1_to_almost0)[None, :]
    p['ffn_wkey'] = lin(keys[4], C, DFFN)
    p['ffn_wrec'] = lin(keys[5], C, C)
    p['ffn_wval'] = lin(keys[6], DFFN, C)
    return p


# ------------------------------ pure-JAX reference (f32) -----------------------------
# Follows the torch module exactly, including the torch chunk_len (= T here, i.e. a
# single chunk); the kernel uses CHUNK=128 with the cross-chunk state, so agreement
# also validates the recurrent-state path.
def reference_block(x, p):
    f32 = jnp.float32

    def ln(v, w, b):
        mu = v.mean(-1, keepdims=True)
        var = ((v - mu) ** 2).mean(-1, keepdims=True)
        return (v - mu) / jnp.sqrt(var + EPS) * w[0] + b[0]

    def shift(v):
        return jnp.pad(v, ((0, 0), (1, 0), (0, 0)))[:, :-1]

    wr = p['att_wr'].astype(f32); wkw = p['att_wk'].astype(f32)
    wv = p['att_wv'].astype(f32); wo = p['att_wo'].astype(f32)
    wkey = p['ffn_wkey'].astype(f32); wrec = p['ffn_wrec'].astype(f32)
    wval = p['ffn_wval'].astype(f32)

    x = ln(x, p['ln0_w'], p['ln0_b'])
    # ------------------------------- attention -------------------------------
    xln = ln(x, p['ln1_w'], p['ln1_b'])
    xx = shift(xln)
    xk = xln * p['att_tmk'][0] + xx * (1 - p['att_tmk'][0])
    xv = xln * p['att_tmv'][0] + xx * (1 - p['att_tmv'][0])
    xr = xln * p['att_tmr'][0] + xx * (1 - p['att_tmr'][0])
    r = (xr @ wr).reshape(B, T, H, HEAD).transpose(0, 2, 1, 3)
    k = (xk @ wkw).reshape(B, T, H, HEAD).transpose(0, 2, 3, 1)
    v = (xv @ wv).reshape(B, T, H, HEAD).transpose(0, 2, 1, 3)

    # decay tensors exactly as in the torch forward (chunk_len = T, single chunk)
    TT = T
    w0 = jnp.exp(-jnp.exp(p['att_decay_speed']))               # (H,)
    u = jnp.exp(p['att_time_first'])                           # (H,)
    ws = (w0 ** TT).reshape(1, H, 1, 1)
    ind = jnp.arange(TT - 1, -1, -1, dtype=f32)
    wpow = w0[:, None] ** ind[None, :]                         # (H, TT)  w0^(TT-1-j)
    wk_ = wpow.reshape(1, H, 1, TT)
    wb_ = jnp.flip(wpow, axis=1).reshape(1, H, TT, 1)          # w0^i
    wrow = jnp.concatenate([wpow[:, 1:], u[:, None]], axis=1)
    wrow = jnp.pad(wrow, ((0, 0), (0, TT)))
    wmat = jnp.tile(wrow, (1, TT))[:, :-TT].reshape(H, TT, 2 * TT - 1)[:, :, TT - 1:]
    wmat = wmat.reshape(1, H, TT, TT)

    s = jnp.zeros((B, H, HEAD, HEAD), f32)
    outs = []
    for i in range(T // TT):
        rr = r[:, :, i * TT:(i + 1) * TT, :]
        kk = k[:, :, :, i * TT:(i + 1) * TT]
        vv = v[:, :, i * TT:(i + 1) * TT, :]
        outs.append((rr @ kk * wmat) @ vv + (rr @ s) * wb_)
        s = ws * s + (kk * wk_) @ vv
    xatt = jnp.concatenate(outs, axis=2)
    xatt = xatt.transpose(0, 2, 1, 3).reshape(B * T, H * HEAD) / HEAD_DIVISOR
    g = xatt.reshape(B * T, H, HEAD)
    mu = g.mean(-1, keepdims=True)
    var = ((g - mu) ** 2).mean(-1, keepdims=True)
    xatt = ((g - mu) / jnp.sqrt(var + EPS)).reshape(B * T, H * HEAD)
    xatt = xatt * p['gn_w'][0] + p['gn_b'][0]
    x = x + (xatt @ wo).reshape(B, T, C)
    # ------------------------------ channel mix ------------------------------
    xln = ln(x, p['ln2_w'], p['ln2_b'])
    xx = shift(xln)
    xk = xln * p['ffn_tmk'][0] + xx * (1 - p['ffn_tmk'][0])
    xr = xln * p['ffn_tmr'][0] + xx * (1 - p['ffn_tmr'][0])
    kk = jnp.maximum(xk @ wkey, 0.0) ** 2
    kv = kk @ wval
    return x + jax.nn.sigmoid(xr @ wrec) * kv


# ------------------------------------ main --------------------------------------
if __name__ == "__main__":
    key = jax.random.PRNGKey(0)
    kx, kp = jax.random.split(key)
    x = jax.random.normal(kx, (B, T, C), jnp.float32)
    params = make_params(kp)

    out = jax.block_until_ready(rwkv_block_forward(x, params))
    ref = jax.block_until_ready(reference_block(x, params))

    out_np = np.asarray(out)
    ref_np = np.asarray(ref)
    # Kernel runs matmuls with bf16 operands (f32 accumulation); reference is pure f32.
    # Loose element-wise bound (catches structural bugs) + tight global L2 bound.
    np.testing.assert_allclose(out_np, ref_np, rtol=1e-1, atol=1e-1)
    rel_l2 = np.linalg.norm(out_np - ref_np) / np.linalg.norm(ref_np)
    assert rel_l2 < 2e-2, f"relative L2 error too high: {rel_l2}"
    print("KERNEL_OK")
</pallas_src>

<mosaic_0001>
module attributes {stable_mosaic.version = 11 : i64} {
  func.func @rwkv_block_kernel(%arg0: i32, %arg1: i32, %arg2: memref<3x2xf32, #tpu.memory_space<smem>>, %arg3: memref<1x128x128xf32, #tpu.memory_space<vmem>>, %arg4: memref<1x128xf32, #tpu.memory_space<vmem>>, %arg5: memref<1x128xf32, #tpu.memory_space<vmem>>, %arg6: memref<1x128xf32, #tpu.memory_space<vmem>>, %arg7: memref<1x128xf32, #tpu.memory_space<vmem>>, %arg8: memref<1x128xf32, #tpu.memory_space<vmem>>, %arg9: memref<1x128xf32, #tpu.memory_space<vmem>>, %arg10: memref<1x128xf32, #tpu.memory_space<vmem>>, %arg11: memref<1x128xf32, #tpu.memory_space<vmem>>, %arg12: memref<1x128xf32, #tpu.memory_space<vmem>>, %arg13: memref<128x128xbf16, #tpu.memory_space<vmem>>, %arg14: memref<128x128xbf16, #tpu.memory_space<vmem>>, %arg15: memref<128x128xbf16, #tpu.memory_space<vmem>>, %arg16: memref<128x128xbf16, #tpu.memory_space<vmem>>, %arg17: memref<1x128xf32, #tpu.memory_space<vmem>>, %arg18: memref<1x128xf32, #tpu.memory_space<vmem>>, %arg19: memref<1x128xf32, #tpu.memory_space<vmem>>, %arg20: memref<1x128xf32, #tpu.memory_space<vmem>>, %arg21: memref<128x256xbf16, #tpu.memory_space<vmem>>, %arg22: memref<128x128xbf16, #tpu.memory_space<vmem>>, %arg23: memref<256x128xbf16, #tpu.memory_space<vmem>>, %arg24: memref<1x128x128xf32, #tpu.memory_space<vmem>>, %arg25: memref<2x64x64xf32, #tpu.memory_space<vmem>>, %arg26: memref<1x128xf32, #tpu.memory_space<vmem>>, %arg27: memref<1x128xf32, #tpu.memory_space<vmem>>) attributes {dimension_semantics = [#tpu.dimension_semantics<parallel>, #tpu.dimension_semantics<arbitrary>], iteration_bounds = array<i64: 2, 4>, scalar_prefetch = 1 : i64, scratch_operands = 3 : i64, tpu.core_type = #tpu.core_type<tc>, window_params = [{transform_indices = @transform_0, window_bounds = array<i64: 1, 128, 128>}, {pipeline_mode = #tpu.pipeline_mode<synchronous>, transform_indices = @transform_1, window_bounds = array<i64: 1, 128>}, {pipeline_mode = #tpu.pipeline_mode<synchronous>, transform_indices = @transform_2, window_bounds = array<i64: 1, 128>}, {pipeline_mode = #tpu.pipeline_mode<synchronous>, transform_indices = @transform_3, window_bounds = array<i64: 1, 128>}, {pipeline_mode = #tpu.pipeline_mode<synchronous>, transform_indices = @transform_4, window_bounds = array<i64: 1, 128>}, {pipeline_mode = #tpu.pipeline_mode<synchronous>, transform_indices = @transform_5, window_bounds = array<i64: 1, 128>}, {pipeline_mode = #tpu.pipeline_mode<synchronous>, transform_indices = @transform_6, window_bounds = array<i64: 1, 128>}, {pipeline_mode = #tpu.pipeline_mode<synchronous>, transform_indices = @transform_7, window_bounds = array<i64: 1, 128>}, {pipeline_mode = #tpu.pipeline_mode<synchronous>, transform_indices = @transform_8, window_bounds = array<i64: 1, 128>}, {pipeline_mode = #tpu.pipeline_mode<synchronous>, transform_indices = @transform_9, window_bounds = array<i64: 1, 128>}, {pipeline_mode = #tpu.pipeline_mode<synchronous>, transform_indices = @transform_10, window_bounds = array<i64: 128, 128>}, {pipeline_mode = #tpu.pipeline_mode<synchronous>, transform_indices = @transform_11, window_bounds = array<i64: 128, 128>}, {pipeline_mode = #tpu.pipeline_mode<synchronous>, transform_indices = @transform_12, window_bounds = array<i64: 128, 128>}, {pipeline_mode = #tpu.pipeline_mode<synchronous>, transform_indices = @transform_13, window_bounds = array<i64: 128, 128>}, {pipeline_mode = #tpu.pipeline_mode<synchronous>, transform_indices = @transform_14, window_bounds = array<i64: 1, 128>}, {pipeline_mode = #tpu.pipeline_mode<synchronous>, transform_indices = @transform_15, window_bounds = array<i64: 1, 128>}, {pipeline_mode = #tpu.pipeline_mode<synchronous>, transform_indices = @transform_16, window_bounds = array<i64: 1, 128>}, {pipeline_mode = #tpu.pipeline_mode<synchronous>, transform_indices = @transform_17, window_bounds = array<i64: 1, 128>}, {pipeline_mode = #tpu.pipeline_mode<synchronous>, transform_indices = @transform_18, window_bounds = array<i64: 128, 256>}, {pipeline_mode = #tpu.pipeline_mode<synchronous>, transform_indices = @transform_19, window_bounds = array<i64: 128, 128>}, {pipeline_mode = #tpu.pipeline_mode<synchronous>, transform_indices = @transform_20, window_bounds = array<i64: 256, 128>}, {transform_indices = @transform_21, window_bounds = array<i64: 1, 128, 128>}]} {
    %c0_i32 = arith.constant 0 : i32
    %0 = arith.cmpi eq, %arg1, %c0_i32 : i32
    %1 = arith.extui %0 : i1 to i32
    %c0_i32_0 = arith.constant 0 : i32
    %2 = arith.cmpi ne, %1, %c0_i32_0 : i32
    scf.if %2 {
      %cst_130 = arith.constant 0.000000e+00 : f32
      %299 = vector.broadcast %cst_130 : f32 to vector<2x64x64xf32>
      %c0_131 = arith.constant 0 : index
      %c0_132 = arith.constant 0 : index
      %c0_133 = arith.constant 0 : index
      %300 = vector.load %arg25[%c0_131, %c0_132, %c0_133] : memref<2x64x64xf32, #tpu.memory_space<vmem>>, vector<2x64x64xf32>
      tpu.vector_store %arg25[%c0_131, %c0_132, %c0_133], %299 {strides = array<i32>} : memref<2x64x64xf32, #tpu.memory_space<vmem>>, vector<2x64x64xf32>,
      %cst_134 = arith.constant 0.000000e+00 : f32
      %301 = vector.broadcast %cst_134 : f32 to vector<1x128xf32>
      %c0_135 = arith.constant 0 : index
      %c0_136 = arith.constant 0 : index
      %302 = vector.load %arg26[%c0_135, %c0_136] : memref<1x128xf32, #tpu.memory_space<vmem>>, vector<1x128xf32>
      tpu.vector_store %arg26[%c0_135, %c0_136], %301 {strides = array<i32>} : memref<1x128xf32, #tpu.memory_space<vmem>>, vector<1x128xf32>,
      %cst_137 = arith.constant 0.000000e+00 : f32
      %303 = vector.broadcast %cst_137 : f32 to vector<1x128xf32>
      %c0_138 = arith.constant 0 : index
      %c0_139 = arith.constant 0 : index
      %304 = vector.load %arg27[%c0_138, %c0_139] : memref<1x128xf32, #tpu.memory_space<vmem>>, vector<1x128xf32>
      tpu.vector_store %arg27[%c0_138, %c0_139], %303 {strides = array<i32>} : memref<1x128xf32, #tpu.memory_space<vmem>>, vector<1x128xf32>,
    } else {
    }
    %c0 = arith.constant 0 : index
    %c0_1 = arith.constant 0 : index
    %c0_2 = arith.constant 0 : index
    %3 = vector.load %arg3[%c0, %c0_1, %c0_2] : memref<1x128x128xf32, #tpu.memory_space<vmem>>, vector<1x128x128xf32>
    %4 = vector.shape_cast %3 : vector<1x128x128xf32> to vector<128x128xf32>
    %c0_3 = arith.constant 0 : index
    %c0_4 = arith.constant 0 : index
    %5 = vector.load %arg4[%c0_3, %c0_4] : memref<1x128xf32, #tpu.memory_space<vmem>>, vector<1x128xf32>
    %c0_5 = arith.constant 0 : index
    %c0_6 = arith.constant 0 : index
    %6 = vector.load %arg5[%c0_5, %c0_6] : memref<1x128xf32, #tpu.memory_space<vmem>>, vector<1x128xf32>
    %cst = arith.constant dense<0.000000e+00> : vector<128xf32>
    %7 = vector.multi_reduction <add>, %4, %cst [1] : vector<128x128xf32> to vector<128xf32>
    %8 = vector.shape_cast %7 : vector<128xf32> to vector<128x1xf32>
    %cst_7 = arith.constant 1.280000e+02 : f32
    %9 = vector.broadcast %cst_7 : f32 to vector<128x1xf32>
    %10 = arith.divf %8, %9 : vector<128x1xf32>
    %11 = vector.broadcast %10 : vector<128x1xf32> to vector<128x128xf32>
    %12 = arith.subf %4, %11 : vector<128x128xf32>
    %13 = arith.mulf %12, %12 : vector<128x128xf32>
    %cst_8 = arith.constant dense<0.000000e+00> : vector<128xf32>
    %14 = vector.multi_reduction <add>, %13, %cst_8 [1] : vector<128x128xf32> to vector<128xf32>
    %15 = vector.shape_cast %14 : vector<128xf32> to vector<128x1xf32>
    %cst_9 = arith.constant 1.280000e+02 : f32
    %16 = vector.broadcast %cst_9 : f32 to vector<128x1xf32>
    %17 = arith.divf %15, %16 : vector<128x1xf32>
    %cst_10 = arith.constant 9.99999974E-6 : f32
    %18 = vector.broadcast %cst_10 : f32 to vector<128x1xf32>
    %19 = arith.addf %17, %18 : vector<128x1xf32>
    %20 = math.rsqrt %19 : vector<128x1xf32>
    %21 = vector.broadcast %20 : vector<128x1xf32> to vector<128x128xf32>
    %22 = arith.mulf %12, %21 : vector<128x128xf32>
    %23 = vector.broadcast %5 : vector<1x128xf32> to vector<128x128xf32>
    %24 = arith.mulf %22, %23 : vector<128x128xf32>
    %25 = vector.broadcast %6 : vector<1x128xf32> to vector<128x128xf32>
    %26 = arith.addf %24, %25 : vector<128x128xf32>
    %c0_11 = arith.constant 0 : index
    %c0_12 = arith.constant 0 : index
    %27 = vector.load %arg6[%c0_11, %c0_12] : memref<1x128xf32, #tpu.memory_space<vmem>>, vector<1x128xf32>
    %c0_13 = arith.constant 0 : index
    %c0_14 = arith.constant 0 : index
    %28 = vector.load %arg7[%c0_13, %c0_14] : memref<1x128xf32, #tpu.memory_space<vmem>>, vector<1x128xf32>
    %cst_15 = arith.constant dense<0.000000e+00> : vector<128xf32>
    %29 = vector.multi_reduction <add>, %26, %cst_15 [1] : vector<128x128xf32> to vector<128xf32>
    %30 = vector.shape_cast %29 : vector<128xf32> to vector<128x1xf32>
    %cst_16 = arith.constant 1.280000e+02 : f32
    %31 = vector.broadcast %cst_16 : f32 to vector<128x1xf32>
    %32 = arith.divf %30, %31 : vector<128x1xf32>
    %33 = vector.broadcast %32 : vector<128x1xf32> to vector<128x128xf32>
    %34 = arith.subf %26, %33 : vector<128x128xf32>
    %35 = arith.mulf %34, %34 : vector<128x128xf32>
    %cst_17 = arith.constant dense<0.000000e+00> : vector<128xf32>
    %36 = vector.multi_reduction <add>, %35, %cst_17 [1] : vector<128x128xf32> to vector<128xf32>
    %37 = vector.shape_cast %36 : vector<128xf32> to vector<128x1xf32>
    %cst_18 = arith.constant 1.280000e+02 : f32
    %38 = vector.broadcast %cst_18 : f32 to vector<128x1xf32>
    %39 = arith.divf %37, %38 : vector<128x1xf32>
    %cst_19 = arith.constant 9.99999974E-6 : f32
    %40 = vector.broadcast %cst_19 : f32 to vector<128x1xf32>
    %41 = arith.addf %39, %40 : vector<128x1xf32>
    %42 = math.rsqrt %41 : vector<128x1xf32>
    %43 = vector.broadcast %42 : vector<128x1xf32> to vector<128x128xf32>
    %44 = arith.mulf %34, %43 : vector<128x128xf32>
    %45 = vector.broadcast %27 : vector<1x128xf32> to vector<128x128xf32>
    %46 = arith.mulf %44, %45 : vector<128x128xf32>
    %47 = vector.broadcast %28 : vector<1x128xf32> to vector<128x128xf32>
    %48 = arith.addf %46, %47 : vector<128x128xf32>
    %c0_20 = arith.constant 0 : index
    %c0_21 = arith.constant 0 : index
    %49 = vector.load %arg26[%c0_20, %c0_21] : memref<1x128xf32, #tpu.memory_space<vmem>>, vector<1x128xf32>
    %c1_i32 = arith.constant 1 : i32
    %50 = tpu.dynamic_rotate %48 by %c1_i32 dim 0 : vector<128x128xf32>, i32 -> vector<128x128xf32>
    %51 = tpu.iota {dimensions = array<i32: 0>} : vector<128x128xi32>
    %c0_i32_22 = arith.constant 0 : i32
    %52 = vector.broadcast %c0_i32_22 : i32 to vector<128x128xi32>
    %53 = arith.cmpi eq, %51, %52 : vector<128x128xi32>
    %54 = vector.shape_cast %49 : vector<1x128xf32> to vector<1x128xf32>
    %55 = vector.broadcast %54 : vector<1x128xf32> to vector<128x128xf32>
    %56 = arith.select %53, %55, %50 : vector<128x128xi1>, vector<128x128xf32>
    %57 = vector.extract_strided_slice %48 {offsets = [127, 0], sizes = [1, 128], strides = [1, 1]} : vector<128x128xf32> to vector<1x128xf32>
    %c0_23 = arith.constant 0 : index
    %c0_24 = arith.constant 0 : index
    %58 = vector.load %arg26[%c0_23, %c0_24] : memref<1x128xf32, #tpu.memory_space<vmem>>, vector<1x128xf32>
    tpu.vector_store %arg26[%c0_23, %c0_24], %57 {strides = array<i32>} : memref<1x128xf32, #tpu.memory_space<vmem>>, vector<1x128xf32>,
    %59 = arith.subf %48, %56 : vector<128x128xf32>
    %c0_25 = arith.constant 0 : index
    %c0_26 = arith.constant 0 : index
    %60 = vector.load %arg10[%c0_25, %c0_26] : memref<1x128xf32, #tpu.memory_space<vmem>>, vector<1x128xf32>
    %61 = vector.broadcast %60 : vector<1x128xf32> to vector<128x128xf32>
    %62 = arith.mulf %59, %61 : vector<128x128xf32>
    %63 = arith.addf %56, %62 : vector<128x128xf32>
    %64 = arith.truncf %63 : vector<128x128xf32> to vector<128x128xbf16>
    %c0_27 = arith.constant 0 : index
    %c0_28 = arith.constant 0 : index
    %65 = vector.load %arg11[%c0_27, %c0_28] : memref<1x128xf32, #tpu.memory_space<vmem>>, vector<1x128xf32>
    %66 = vector.broadcast %65 : vector<1x128xf32> to vector<128x128xf32>
    %67 = arith.mulf %59, %66 : vector<128x128xf32>
    %68 = arith.addf %56, %67 : vector<128x128xf32>
    %69 = arith.truncf %68 : vector<128x128xf32> to vector<128x128xbf16>
    %c0_29 = arith.constant 0 : index
    %c0_30 = arith.constant 0 : index
    %70 = vector.load %arg12[%c0_29, %c0_30] : memref<1x128xf32, #tpu.memory_space<vmem>>, vector<1x128xf32>
    %71 = vector.broadcast %70 : vector<1x128xf32> to vector<128x128xf32>
    %72 = arith.mulf %59, %71 : vector<128x128xf32>
    %73 = arith.addf %56, %72 : vector<128x128xf32>
    %74 = arith.truncf %73 : vector<128x128xf32> to vector<128x128xbf16>
    %c0_31 = arith.constant 0 : index
    %c0_32 = arith.constant 0 : index
    %75 = vector.load %arg13[%c0_31, %c0_32] : memref<128x128xbf16, #tpu.memory_space<vmem>>, vector<128x128xbf16>
    %cst_33 = arith.constant dense<0.000000e+00> : vector<128x128xf32>
    %76 = tpu.matmul %74, %75, %cst_33 {dimension_numbers = #tpu.dot_dimension_numbers<[1], [0], [0], [1], [0, 0, 1, 1], [], []>} : vector<128x128xbf16>, vector<128x128xbf16>, vector<128x128xf32> -> vector<128x128xf32>
    %c0_34 = arith.constant 0 : index
    %c0_35 = arith.constant 0 : index
    %77 = vector.load %arg14[%c0_34, %c0_35] : memref<128x128xbf16, #tpu.memory_space<vmem>>, vector<128x128xbf16>
    %cst_36 = arith.constant dense<0.000000e+00> : vector<128x128xf32>
    %78 = tpu.matmul %64, %77, %cst_36 {dimension_numbers = #tpu.dot_dimension_numbers<[1], [0], [0], [1], [0, 0, 1, 1], [], []>} : vector<128x128xbf16>, vector<128x128xbf16>, vector<128x128xf32> -> vector<128x128xf32>
    %c0_37 = arith.constant 0 : index
    %c0_38 = arith.constant 0 : index
    %79 = vector.load %arg15[%c0_37, %c0_38] : memref<128x128xbf16, #tpu.memory_space<vmem>>, vector<128x128xbf16>
    %cst_39 = arith.constant dense<0.000000e+00> : vector<128x128xf32>
    %80 = tpu.matmul %69, %79, %cst_39 {dimension_numbers = #tpu.dot_dimension_numbers<[1], [0], [0], [1], [0, 0, 1, 1], [], []>} : vector<128x128xbf16>, vector<128x128xbf16>, vector<128x128xf32> -> vector<128x128xf32>
    %81 = arith.truncf %76 : vector<128x128xf32> to vector<128x128xbf16>
    %82 = arith.truncf %78 : vector<128x128xf32> to vector<128x128xbf16>
    %83 = arith.truncf %80 : vector<128x128xf32> to vector<128x128xbf16>
    %84 = tpu.iota {dimensions = array<i32: 0>} : vector<128x128xi32>
    %85 = tpu.iota {dimensions = array<i32: 1>} : vector<128x128xi32>
    %86 = arith.cmpi sgt, %84, %85 : vector<128x128xi32>
    %87 = arith.cmpi eq, %84, %85 : vector<128x128xi32>
    %88 = arith.subi %84, %85 : vector<128x128xi32>
    %c1_i32_40 = arith.constant 1 : i32
    %89 = vector.broadcast %c1_i32_40 : i32 to vector<128x128xi32>
    %90 = arith.subi %88, %89 : vector<128x128xi32>
    %c0_i32_41 = arith.constant 0 : i32
    %91 = vector.broadcast %c0_i32_41 : i32 to vector<128x128xi32>
    %92 = arith.maxsi %90, %91 : vector<128x128xi32>
    %93 = arith.sitofp %92 : vector<128x128xi32> to vector<128x128xf32>
    %94 = tpu.iota {dimensions = array<i32: 0>} : vector<128x64xi32>
    %95 = arith.sitofp %94 : vector<128x64xi32> to vector<128x64xf32>
    %c0_42 = arith.constant 0 : index
    %c0_43 = arith.constant 0 : index
    %96 = vector.load %arg17[%c0_42, %c0_43] : memref<1x128xf32, #tpu.memory_space<vmem>>, vector<1x128xf32>
    %c0_44 = arith.constant 0 : index
    %c0_45 = arith.constant 0 : index
    %97 = vector.load %arg18[%c0_44, %c0_45] : memref<1x128xf32, #tpu.memory_space<vmem>>, vector<1x128xf32>
    %98 = vector.extract_strided_slice %81 {offsets = [0, 0], sizes = [128, 64], strides = [1, 1]} : vector<128x128xbf16> to vector<128x64xbf16>
    %99 = vector.extract_strided_slice %82 {offsets = [0, 0], sizes = [128, 64], strides = [1, 1]} : vector<128x128xbf16> to vector<128x64xbf16>
    %100 = vector.extract_strided_slice %83 {offsets = [0, 0], sizes = [128, 64], strides = [1, 1]} : vector<128x128xbf16> to vector<128x64xbf16>
    %c0_46 = arith.constant 0 : index
    %c0_47 = arith.constant 0 : index
    %101 = memref.load %arg2[%c0_46, %c0_47] : memref<3x2xf32, #tpu.memory_space<smem>>
    %c1 = arith.constant 1 : index
    %c0_48 = arith.constant 0 : index
    %102 = memref.load %arg2[%c1, %c0_48] : memref<3x2xf32, #tpu.memory_space<smem>>
    %c2 = arith.constant 2 : index
    %c0_49 = arith.constant 0 : index
    %103 = memref.load %arg2[%c2, %c0_49] : memref<3x2xf32, #tpu.memory_space<smem>>
    %104 = vector.broadcast %101 : f32 to vector<128x128xf32>
    %105 = arith.mulf %93, %104 : vector<128x128xf32>
    %106 = math.exp %105 : vector<128x128xf32>
    %cst_50 = arith.constant 0.000000e+00 : f32
    %107 = vector.broadcast %102 : f32 to vector<128x128xf32>
    %108 = vector.broadcast %cst_50 : f32 to vector<128x128xf32>
    %109 = arith.select %87, %107, %108 : vector<128x128xi1>, vector<128x128xf32>
    %110 = arith.select %86, %106, %109 : vector<128x128xi1>, vector<128x128xf32>
    %111 = vector.broadcast %101 : f32 to vector<128x64xf32>
    %112 = arith.mulf %95, %111 : vector<128x64xf32>
    %113 = math.exp %112 : vector<128x64xf32>
    %cst_51 = arith.constant 1.270000e+02 : f32
    %114 = vector.broadcast %cst_51 : f32 to vector<128x64xf32>
    %115 = arith.subf %114, %95 : vector<128x64xf32>
    %116 = vector.broadcast %101 : f32 to vector<128x64xf32>
    %117 = arith.mulf %115, %116 : vector<128x64xf32>
    %118 = math.exp %117 : vector<128x64xf32>
    %c0_52 = arith.constant 0 : index
    %c0_53 = arith.constant 0 : index
    %c0_54 = arith.constant 0 : index
    %119 = vector.load %arg25[%c0_52, %c0_53, %c0_54] : memref<2x64x64xf32, #tpu.memory_space<vmem>>, vector<1x64x64xf32>
    %120 = vector.shape_cast %119 : vector<1x64x64xf32> to vector<64x64xf32>
    %cst_55 = arith.constant dense<0.000000e+00> : vector<128x128xf32>
    %121 = tpu.matmul %98, %99, %cst_55 {dimension_numbers = #tpu.dot_dimension_numbers<[1], [1], [0], [0], [0, 0, 1, 0], [], []>} : vector<128x64xbf16>, vector<128x64xbf16>, vector<128x128xf32> -> vector<128x128xf32>
    %122 = arith.mulf %121, %110 : vector<128x128xf32>
    %123 = arith.truncf %122 : vector<128x128xf32> to vector<128x128xbf16>
    %cst_56 = arith.constant dense<0.000000e+00> : vector<128x64xf32>
    %124 = tpu.matmul %123, %100, %cst_56 {dimension_numbers = #tpu.dot_dimension_numbers<[1], [0], [0], [1], [0, 0, 1, 1], [], []>} : vector<128x128xbf16>, vector<128x64xbf16>, vector<128x64xf32> -> vector<128x64xf32>
    %125 = arith.truncf %120 : vector<64x64xf32> to vector<64x64xbf16>
    %cst_57 = arith.constant dense<0.000000e+00> : vector<128x64xf32>
    %126 = tpu.matmul %98, %125, %cst_57 {dimension_numbers = #tpu.dot_dimension_numbers<[1], [0], [0], [1], [0, 0, 1, 1], [], []>} : vector<128x64xbf16>, vector<64x64xbf16>, vector<128x64xf32> -> vector<128x64xf32>
    %127 = arith.mulf %126, %113 : vector<128x64xf32>
    %128 = arith.addf %124, %127 : vector<128x64xf32>
    %129 = arith.extf %99 : vector<128x64xbf16> to vector<128x64xf32>
    %130 = arith.mulf %129, %118 : vector<128x64xf32>
    %131 = arith.truncf %130 : vector<128x64xf32> to vector<128x64xbf16>
    %cst_58 = arith.constant dense<0.000000e+00> : vector<64x64xf32>
    %132 = tpu.matmul %131, %100, %cst_58 {dimension_numbers = #tpu.dot_dimension_numbers<[0], [0], [1], [1], [0, 1, 1, 1], [], []>} : vector<128x64xbf16>, vector<128x64xbf16>, vector<64x64xf32> -> vector<64x64xf32>
    %133 = vector.broadcast %103 : f32 to vector<64x64xf32>
    %134 = arith.mulf %133, %120 : vector<64x64xf32>
    %135 = arith.addf %134, %132 : vector<64x64xf32>
    %c0_59 = arith.constant 0 : index
    %c0_60 = arith.constant 0 : index
    %c0_61 = arith.constant 0 : index
    %136 = vector.load %arg25[%c0_59, %c0_60, %c0_61] : memref<2x64x64xf32, #tpu.memory_space<vmem>>, vector<1x64x64xf32>
    %137 = vector.shape_cast %136 : vector<1x64x64xf32> to vector<64x64xf32>
    %138 = vector.shape_cast %135 : vector<64x64xf32> to vector<1x64x64xf32>
    tpu.vector_store %arg25[%c0_59, %c0_60, %c0_61], %138 {strides = array<i32>} : memref<2x64x64xf32, #tpu.memory_space<vmem>>, vector<1x64x64xf32>,
    %cst_62 = arith.constant 1.250000e-01 : f32
    %139 = vector.broadcast %cst_62 : f32 to vector<128x64xf32>
    %140 = arith.mulf %128, %139 : vector<128x64xf32>
    %cst_63 = arith.constant dense<0.000000e+00> : vector<128xf32>
    %141 = vector.multi_reduction <add>, %140, %cst_63 [1] : vector<128x64xf32> to vector<128xf32>
    %142 = vector.shape_cast %141 : vector<128xf32> to vector<128x1xf32>
    %cst_64 = arith.constant 6.400000e+01 : f32
    %143 = vector.broadcast %cst_64 : f32 to vector<128x1xf32>
    %144 = arith.divf %142, %143 : vector<128x1xf32>
    %145 = vector.broadcast %144 : vector<128x1xf32> to vector<128x64xf32>
    %146 = arith.subf %140, %145 : vector<128x64xf32>
    %147 = arith.mulf %146, %146 : vector<128x64xf32>
    %cst_65 = arith.constant dense<0.000000e+00> : vector<128xf32>
    %148 = vector.multi_reduction <add>, %147, %cst_65 [1] : vector<128x64xf32> to vector<128xf32>
    %149 = vector.shape_cast %148 : vector<128xf32> to vector<128x1xf32>
    %cst_66 = arith.constant 6.400000e+01 : f32
    %150 = vector.broadcast %cst_66 : f32 to vector<128x1xf32>
    %151 = arith.divf %149, %150 : vector<128x1xf32>
    %cst_67 = arith.constant 9.99999974E-6 : f32
    %152 = vector.broadcast %cst_67 : f32 to vector<128x1xf32>
    %153 = arith.addf %151, %152 : vector<128x1xf32>
    %154 = math.rsqrt %153 : vector<128x1xf32>
    %155 = vector.broadcast %154 : vector<128x1xf32> to vector<128x64xf32>
    %156 = arith.mulf %146, %155 : vector<128x64xf32>
    %157 = vector.extract_strided_slice %96 {offsets = [0, 0], sizes = [1, 64], strides = [1, 1]} : vector<1x128xf32> to vector<1x64xf32>
    %158 = vector.broadcast %157 : vector<1x64xf32> to vector<128x64xf32>
    %159 = arith.mulf %156, %158 : vector<128x64xf32>
    %160 = vector.extract_strided_slice %97 {offsets = [0, 0], sizes = [1, 64], strides = [1, 1]} : vector<1x128xf32> to vector<1x64xf32>
    %161 = vector.broadcast %160 : vector<1x64xf32> to vector<128x64xf32>
    %162 = arith.addf %159, %161 : vector<128x64xf32>
    %163 = arith.truncf %162 : vector<128x64xf32> to vector<128x64xbf16>
    %c0_68 = arith.constant 0 : index
    %c0_69 = arith.constant 0 : index
    %164 = vector.load %arg16[%c0_68, %c0_69] : memref<128x128xbf16, #tpu.memory_space<vmem>>, vector<64x128xbf16>
    %cst_70 = arith.constant dense<0.000000e+00> : vector<128x128xf32>
    %165 = tpu.matmul %163, %164, %cst_70 {dimension_numbers = #tpu.dot_dimension_numbers<[1], [0], [0], [1], [0, 0, 1, 1], [], []>} : vector<128x64xbf16>, vector<64x128xbf16>, vector<128x128xf32> -> vector<128x128xf32>
    %166 = vector.extract_strided_slice %81 {offsets = [0, 64], sizes = [128, 64], strides = [1, 1]} : vector<128x128xbf16> to vector<128x64xbf16>
    %167 = vector.extract_strided_slice %82 {offsets = [0, 64], sizes = [128, 64], strides = [1, 1]} : vector<128x128xbf16> to vector<128x64xbf16>
    %168 = vector.extract_strided_slice %83 {offsets = [0, 64], sizes = [128, 64], strides = [1, 1]} : vector<128x128xbf16> to vector<128x64xbf16>
    %c0_71 = arith.constant 0 : index
    %c1_72 = arith.constant 1 : index
    %169 = memref.load %arg2[%c0_71, %c1_72] : memref<3x2xf32, #tpu.memory_space<smem>>
    %c1_73 = arith.constant 1 : index
    %c1_74 = arith.constant 1 : index
    %170 = memref.load %arg2[%c1_73, %c1_74] : memref<3x2xf32, #tpu.memory_space<smem>>
    %c2_75 = arith.constant 2 : index
    %c1_76 = arith.constant 1 : index
    %171 = memref.load %arg2[%c2_75, %c1_76] : memref<3x2xf32, #tpu.memory_space<smem>>
    %172 = vector.broadcast %169 : f32 to vector<128x128xf32>
    %173 = arith.mulf %93, %172 : vector<128x128xf32>
    %174 = math.exp %173 : vector<128x128xf32>
    %cst_77 = arith.constant 0.000000e+00 : f32
    %175 = vector.broadcast %170 : f32 to vector<128x128xf32>
    %176 = vector.broadcast %cst_77 : f32 to vector<128x128xf32>
    %177 = arith.select %87, %175, %176 : vector<128x128xi1>, vector<128x128xf32>
    %178 = arith.select %86, %174, %177 : vector<128x128xi1>, vector<128x128xf32>
    %179 = vector.broadcast %169 : f32 to vector<128x64xf32>
    %180 = arith.mulf %95, %179 : vector<128x64xf32>
    %181 = math.exp %180 : vector<128x64xf32>
    %cst_78 = arith.constant 1.270000e+02 : f32
    %182 = vector.broadcast %cst_78 : f32 to vector<128x64xf32>
    %183 = arith.subf %182, %95 : vector<128x64xf32>
    %184 = vector.broadcast %169 : f32 to vector<128x64xf32>
    %185 = arith.mulf %183, %184 : vector<128x64xf32>
    %186 = math.exp %185 : vector<128x64xf32>
    %c1_79 = arith.constant 1 : index
    %c0_80 = arith.constant 0 : index
    %c0_81 = arith.constant 0 : index
    %187 = vector.load %arg25[%c1_79, %c0_80, %c0_81] : memref<2x64x64xf32, #tpu.memory_space<vmem>>, vector<1x64x64xf32>
    %188 = vector.shape_cast %187 : vector<1x64x64xf32> to vector<64x64xf32>
    %cst_82 = arith.constant dense<0.000000e+00> : vector<128x128xf32>
    %189 = tpu.matmul %166, %167, %cst_82 {dimension_numbers = #tpu.dot_dimension_numbers<[1], [1], [0], [0], [0, 0, 1, 0], [], []>} : vector<128x64xbf16>, vector<128x64xbf16>, vector<128x128xf32> -> vector<128x128xf32>
    %190 = arith.mulf %189, %178 : vector<128x128xf32>
    %191 = arith.truncf %190 : vector<128x128xf32> to vector<128x128xbf16>
    %cst_83 = arith.constant dense<0.000000e+00> : vector<128x64xf32>
    %192 = tpu.matmul %191, %168, %cst_83 {dimension_numbers = #tpu.dot_dimension_numbers<[1], [0], [0], [1], [0, 0, 1, 1], [], []>} : vector<128x128xbf16>, vector<128x64xbf16>, vector<128x64xf32> -> vector<128x64xf32>
    %193 = arith.truncf %188 : vector<64x64xf32> to vector<64x64xbf16>
    %cst_84 = arith.constant dense<0.000000e+00> : vector<128x64xf32>
    %194 = tpu.matmul %166, %193, %cst_84 {dimension_numbers = #tpu.dot_dimension_numbers<[1], [0], [0], [1], [0, 0, 1, 1], [], []>} : vector<128x64xbf16>, vector<64x64xbf16>, vector<128x64xf32> -> vector<128x64xf32>
    %195 = arith.mulf %194, %181 : vector<128x64xf32>
    %196 = arith.addf %192, %195 : vector<128x64xf32>
    %197 = arith.extf %167 : vector<128x64xbf16> to vector<128x64xf32>
    %198 = arith.mulf %197, %186 : vector<128x64xf32>
    %199 = arith.truncf %198 : vector<128x64xf32> to vector<128x64xbf16>
    %cst_85 = arith.constant dense<0.000000e+00> : vector<64x64xf32>
    %200 = tpu.matmul %199, %168, %cst_85 {dimension_numbers = #tpu.dot_dimension_numbers<[0], [0], [1], [1], [0, 1, 1, 1], [], []>} : vector<128x64xbf16>, vector<128x64xbf16>, vector<64x64xf32> -> vector<64x64xf32>
    %201 = vector.broadcast %171 : f32 to vector<64x64xf32>
    %202 = arith.mulf %201, %188 : vector<64x64xf32>
    %203 = arith.addf %202, %200 : vector<64x64xf32>
    %c1_86 = arith.constant 1 : index
    %c0_87 = arith.constant 0 : index
    %c0_88 = arith.constant 0 : index
    %204 = vector.load %arg25[%c1_86, %c0_87, %c0_88] : memref<2x64x64xf32, #tpu.memory_space<vmem>>, vector<1x64x64xf32>
    %205 = vector.shape_cast %204 : vector<1x64x64xf32> to vector<64x64xf32>
    %206 = vector.shape_cast %203 : vector<64x64xf32> to vector<1x64x64xf32>
    tpu.vector_store %arg25[%c1_86, %c0_87, %c0_88], %206 {strides = array<i32>} : memref<2x64x64xf32, #tpu.memory_space<vmem>>, vector<1x64x64xf32>,
    %cst_89 = arith.constant 1.250000e-01 : f32
    %207 = vector.broadcast %cst_89 : f32 to vector<128x64xf32>
    %208 = arith.mulf %196, %207 : vector<128x64xf32>
    %cst_90 = arith.constant dense<0.000000e+00> : vector<128xf32>
    %209 = vector.multi_reduction <add>, %208, %cst_90 [1] : vector<128x64xf32> to vector<128xf32>
    %210 = vector.shape_cast %209 : vector<128xf32> to vector<128x1xf32>
    %cst_91 = arith.constant 6.400000e+01 : f32
    %211 = vector.broadcast %cst_91 : f32 to vector<128x1xf32>
    %212 = arith.divf %210, %211 : vector<128x1xf32>
    %213 = vector.broadcast %212 : vector<128x1xf32> to vector<128x64xf32>
    %214 = arith.subf %208, %213 : vector<128x64xf32>
    %215 = arith.mulf %214, %214 : vector<128x64xf32>
    %cst_92 = arith.constant dense<0.000000e+00> : vector<128xf32>
    %216 = vector.multi_reduction <add>, %215, %cst_92 [1] : vector<128x64xf32> to vector<128xf32>
    %217 = vector.shape_cast %216 : vector<128xf32> to vector<128x1xf32>
    %cst_93 = arith.constant 6.400000e+01 : f32
    %218 = vector.broadcast %cst_93 : f32 to vector<128x1xf32>
    %219 = arith.divf %217, %218 : vector<128x1xf32>
    %cst_94 = arith.constant 9.99999974E-6 : f32
    %220 = vector.broadcast %cst_94 : f32 to vector<128x1xf32>
    %221 = arith.addf %219, %220 : vector<128x1xf32>
    %222 = math.rsqrt %221 : vector<128x1xf32>
    %223 = vector.broadcast %222 : vector<128x1xf32> to vector<128x64xf32>
    %224 = arith.mulf %214, %223 : vector<128x64xf32>
    %225 = vector.extract_strided_slice %96 {offsets = [0, 64], sizes = [1, 64], strides = [1, 1]} : vector<1x128xf32> to vector<1x64xf32>
    %226 = vector.broadcast %225 : vector<1x64xf32> to vector<128x64xf32>
    %227 = arith.mulf %224, %226 : vector<128x64xf32>
    %228 = vector.extract_strided_slice %97 {offsets = [0, 64], sizes = [1, 64], strides = [1, 1]} : vector<1x128xf32> to vector<1x64xf32>
    %229 = vector.broadcast %228 : vector<1x64xf32> to vector<128x64xf32>
    %230 = arith.addf %227, %229 : vector<128x64xf32>
    %231 = arith.truncf %230 : vector<128x64xf32> to vector<128x64xbf16>
    %c64 = arith.constant 64 : index
    %c0_95 = arith.constant 0 : index
    %232 = vector.load %arg16[%c64, %c0_95] : memref<128x128xbf16, #tpu.memory_space<vmem>>, vector<64x128xbf16>
    %cst_96 = arith.constant dense<0.000000e+00> : vector<128x128xf32>
    %233 = tpu.matmul %231, %232, %cst_96 {dimension_numbers = #tpu.dot_dimension_numbers<[1], [0], [0], [1], [0, 0, 1, 1], [], []>} : vector<128x64xbf16>, vector<64x128xbf16>, vector<128x128xf32> -> vector<128x128xf32>
    %234 = arith.addf %165, %233 : vector<128x128xf32>
    %235 = arith.addf %26, %234 : vector<128x128xf32>
    %c0_97 = arith.constant 0 : index
    %c0_98 = arith.constant 0 : index
    %236 = vector.load %arg8[%c0_97, %c0_98] : memref<1x128xf32, #tpu.memory_space<vmem>>, vector<1x128xf32>
    %c0_99 = arith.constant 0 : index
    %c0_100 = arith.constant 0 : index
    %237 = vector.load %arg9[%c0_99, %c0_100] : memref<1x128xf32, #tpu.memory_space<vmem>>, vector<1x128xf32>
    %cst_101 = arith.constant dense<0.000000e+00> : vector<128xf32>
    %238 = vector.multi_reduction <add>, %235, %cst_101 [1] : vector<128x128xf32> to vector<128xf32>
    %239 = vector.shape_cast %238 : vector<128xf32> to vector<128x1xf32>
    %cst_102 = arith.constant 1.280000e+02 : f32
    %240 = vector.broadcast %cst_102 : f32 to vector<128x1xf32>
    %241 = arith.divf %239, %240 : vector<128x1xf32>
    %242 = vector.broadcast %241 : vector<128x1xf32> to vector<128x128xf32>
    %243 = arith.subf %235, %242 : vector<128x128xf32>
    %244 = arith.mulf %243, %243 : vector<128x128xf32>
    %cst_103 = arith.constant dense<0.000000e+00> : vector<128xf32>
    %245 = vector.multi_reduction <add>, %244, %cst_103 [1] : vector<128x128xf32> to vector<128xf32>
    %246 = vector.shape_cast %245 : vector<128xf32> to vector<128x1xf32>
    %cst_104 = arith.constant 1.280000e+02 : f32
    %247 = vector.broadcast %cst_104 : f32 to vector<128x1xf32>
    %248 = arith.divf %246, %247 : vector<128x1xf32>
    %cst_105 = arith.constant 9.99999974E-6 : f32
    %249 = vector.broadcast %cst_105 : f32 to vector<128x1xf32>
    %250 = arith.addf %248, %249 : vector<128x1xf32>
    %251 = math.rsqrt %250 : vector<128x1xf32>
    %252 = vector.broadcast %251 : vector<128x1xf32> to vector<128x128xf32>
    %253 = arith.mulf %243, %252 : vector<128x128xf32>
    %254 = vector.broadcast %236 : vector<1x128xf32> to vector<128x128xf32>
    %255 = arith.mulf %253, %254 : vector<128x128xf32>
    %256 = vector.broadcast %237 : vector<1x128xf32> to vector<128x128xf32>
    %257 = arith.addf %255, %256 : vector<128x128xf32>
    %c0_106 = arith.constant 0 : index
    %c0_107 = arith.constant 0 : index
    %258 = vector.load %arg27[%c0_106, %c0_107] : memref<1x128xf32, #tpu.memory_space<vmem>>, vector<1x128xf32>
    %c1_i32_108 = arith.constant 1 : i32
    %259 = tpu.dynamic_rotate %257 by %c1_i32_108 dim 0 : vector<128x128xf32>, i32 -> vector<128x128xf32>
    %260 = tpu.iota {dimensions = array<i32: 0>} : vector<128x128xi32>
    %c0_i32_109 = arith.constant 0 : i32
    %261 = vector.broadcast %c0_i32_109 : i32 to vector<128x128xi32>
    %262 = arith.cmpi eq, %260, %261 : vector<128x128xi32>
    %263 = vector.shape_cast %258 : vector<1x128xf32> to vector<1x128xf32>
    %264 = vector.broadcast %263 : vector<1x128xf32> to vector<128x128xf32>
    %265 = arith.select %262, %264, %259 : vector<128x128xi1>, vector<128x128xf32>
    %266 = vector.extract_strided_slice %257 {offsets = [127, 0], sizes = [1, 128], strides = [1, 1]} : vector<128x128xf32> to vector<1x128xf32>
    %c0_110 = arith.constant 0 : index
    %c0_111 = arith.constant 0 : index
    %267 = vector.load %arg27[%c0_110, %c0_111] : memref<1x128xf32, #tpu.memory_space<vmem>>, vector<1x128xf32>
    tpu.vector_store %arg27[%c0_110, %c0_111], %266 {strides = array<i32>} : memref<1x128xf32, #tpu.memory_space<vmem>>, vector<1x128xf32>,
    %268 = arith.subf %257, %265 : vector<128x128xf32>
    %c0_112 = arith.constant 0 : index
    %c0_113 = arith.constant 0 : index
    %269 = vector.load %arg19[%c0_112, %c0_113] : memref<1x128xf32, #tpu.memory_space<vmem>>, vector<1x128xf32>
    %270 = vector.broadcast %269 : vector<1x128xf32> to vector<128x128xf32>
    %271 = arith.mulf %268, %270 : vector<128x128xf32>
    %272 = arith.addf %265, %271 : vector<128x128xf32>
    %273 = arith.truncf %272 : vector<128x128xf32> to vector<128x128xbf16>
    %c0_114 = arith.constant 0 : index
    %c0_115 = arith.constant 0 : index
    %274 = vector.load %arg20[%c0_114, %c0_115] : memref<1x128xf32, #tpu.memory_space<vmem>>, vector<1x128xf32>
    %275 = vector.broadcast %274 : vector<1x128xf32> to vector<128x128xf32>
    %276 = arith.mulf %268, %275 : vector<128x128xf32>
    %277 = arith.addf %265, %276 : vector<128x128xf32>
    %278 = arith.truncf %277 : vector<128x128xf32> to vector<128x128xbf16>
    %c0_116 = arith.constant 0 : index
    %c0_117 = arith.constant 0 : index
    %279 = vector.load %arg21[%c0_116, %c0_117] : memref<128x256xbf16, #tpu.memory_space<vmem>>, vector<128x256xbf16>
    %cst_118 = arith.constant dense<0.000000e+00> : vector<128x256xf32>
    %280 = tpu.matmul %273, %279, %cst_118 {dimension_numbers = #tpu.dot_dimension_numbers<[1], [0], [0], [1], [0, 0, 1, 1], [], []>} : vector<128x128xbf16>, vector<128x256xbf16>, vector<128x256xf32> -> vector<128x256xf32>
    %cst_119 = arith.constant 0.000000e+00 : f32
    %281 = vector.broadcast %cst_119 : f32 to vector<128x256xf32>
    %282 = arith.maximumf %280, %281 : vector<128x256xf32>
    %283 = arith.mulf %282, %282 : vector<128x256xf32>
    %284 = arith.truncf %283 : vector<128x256xf32> to vector<128x256xbf16>
    %c0_120 = arith.constant 0 : index
    %c0_121 = arith.constant 0 : index
    %285 = vector.load %arg23[%c0_120, %c0_121] : memref<256x128xbf16, #tpu.memory_space<vmem>>, vector<256x128xbf16>
    %cst_122 = arith.constant dense<0.000000e+00> : vector<128x128xf32>
    %286 = tpu.matmul %284, %285, %cst_122 {dimension_numbers = #tpu.dot_dimension_numbers<[1], [0], [0], [1], [0, 0, 1, 1], [], []>} : vector<128x256xbf16>, vector<256x128xbf16>, vector<128x128xf32> -> vector<128x128xf32>
    %c0_123 = arith.constant 0 : index
    %c0_124 = arith.constant 0 : index
    %287 = vector.load %arg22[%c0_123, %c0_124] : memref<128x128xbf16, #tpu.memory_space<vmem>>, vector<128x128xbf16>
    %cst_125 = arith.constant dense<0.000000e+00> : vector<128x128xf32>
    %288 = tpu.matmul %278, %287, %cst_125 {dimension_numbers = #tpu.dot_dimension_numbers<[1], [0], [0], [1], [0, 0, 1, 1], [], []>} : vector<128x128xbf16>, vector<128x128xbf16>, vector<128x128xf32> -> vector<128x128xf32>
    %289 = arith.negf %288 : vector<128x128xf32>
    %290 = math.exp %289 : vector<128x128xf32>
    %cst_126 = arith.constant 1.000000e+00 : f32
    %291 = vector.broadcast %cst_126 : f32 to vector<128x128xf32>
    %292 = arith.addf %291, %290 : vector<128x128xf32>
    %293 = arith.divf %291, %292 : vector<128x128xf32>
    %294 = arith.mulf %293, %286 : vector<128x128xf32>
    %295 = arith.addf %235, %294 : vector<128x128xf32>
    %c0_127 = arith.constant 0 : index
    %c0_128 = arith.constant 0 : index
    %c0_129 = arith.constant 0 : index
    %296 = vector.load %arg24[%c0_127, %c0_128, %c0_129] : memref<1x128x128xf32, #tpu.memory_space<vmem>>, vector<1x128x128xf32>
    %297 = vector.shape_cast %296 : vector<1x128x128xf32> to vector<128x128xf32>
    %298 = vector.shape_cast %295 : vector<128x128xf32> to vector<1x128x128xf32>
    tpu.vector_store %arg24[%c0_127, %c0_128, %c0_129], %298 {strides = array<i32>} : memref<1x128x128xf32, #tpu.memory_space<vmem>>, vector<1x128x128xf32>,
    return
  }
  func.func @transform_0(%arg0: i32, %arg1: i32, %arg2: memref<3x2xf32, #tpu.memory_space<smem>>) -> (i32, i32, i32) {
    %c0_i32 = arith.constant 0 : i32
    %c0_i32_0 = arith.constant 0 : i32
    return %arg0, %arg1, %c0_i32 : i32, i32, i32
  }
  func.func @transform_1(%arg0: i32, %arg1: i32, %arg2: memref<3x2xf32, #tpu.memory_space<smem>>) -> (i32, i32) {
    %c0_i32 = arith.constant 0 : i32
    %c0_i32_0 = arith.constant 0 : i32
    %c0_i32_1 = arith.constant 0 : i32
    return %c0_i32, %c0_i32_0 : i32, i32
  }
  func.func @transform_2(%arg0: i32, %arg1: i32, %arg2: memref<3x2xf32, #tpu.memory_space<smem>>) -> (i32, i32) {
    %c0_i32 = arith.constant 0 : i32
    %c0_i32_0 = arith.constant 0 : i32
    %c0_i32_1 = arith.constant 0 : i32
    return %c0_i32, %c0_i32_0 : i32, i32
  }
  func.func @transform_3(%arg0: i32, %arg1: i32, %arg2: memref<3x2xf32, #tpu.memory_space<smem>>) -> (i32, i32) {
    %c0_i32 = arith.constant 0 : i32
    %c0_i32_0 = arith.constant 0 : i32
    %c0_i32_1 = arith.constant 0 : i32
    return %c0_i32, %c0_i32_0 : i32, i32
  }
  func.func @transform_4(%arg0: i32, %arg1: i32, %arg2: memref<3x2xf32, #tpu.memory_space<smem>>) -> (i32, i32) {
    %c0_i32 = arith.constant 0 : i32
    %c0_i32_0 = arith.constant 0 : i32
    %c0_i32_1 = arith.constant 0 : i32
    return %c0_i32, %c0_i32_0 : i32, i32
  }
  func.func @transform_5(%arg0: i32, %arg1: i32, %arg2: memref<3x2xf32, #tpu.memory_space<smem>>) -> (i32, i32) {
    %c0_i32 = arith.constant 0 : i32
    %c0_i32_0 = arith.constant 0 : i32
    %c0_i32_1 = arith.constant 0 : i32
    return %c0_i32, %c0_i32_0 : i32, i32
  }
  func.func @transform_6(%arg0: i32, %arg1: i32, %arg2: memref<3x2xf32, #tpu.memory_space<smem>>) -> (i32, i32) {
    %c0_i32 = arith.constant 0 : i32
    %c0_i32_0 = arith.constant 0 : i32
    %c0_i32_1 = arith.constant 0 : i32
    return %c0_i32, %c0_i32_0 : i32, i32
  }
  func.func @transform_7(%arg0: i32, %arg1: i32, %arg2: memref<3x2xf32, #tpu.memory_space<smem>>) -> (i32, i32) {
    %c0_i32 = arith.constant 0 : i32
    %c0_i32_0 = arith.constant 0 : i32
    %c0_i32_1 = arith.constant 0 : i32
    return %c0_i32, %c0_i32_0 : i32, i32
  }
  func.func @transform_8(%arg0: i32, %arg1: i32, %arg2: memref<3x2xf32, #tpu.memory_space<smem>>) -> (i32, i32) {
    %c0_i32 = arith.constant 0 : i32
    %c0_i32_0 = arith.constant 0 : i32
    %c0_i32_1 = arith.constant 0 : i32
    return %c0_i32, %c0_i32_0 : i32, i32
  }
  func.func @transform_9(%arg0: i32, %arg1: i32, %arg2: memref<3x2xf32, #tpu.memory_space<smem>>) -> (i32, i32) {
    %c0_i32 = arith.constant 0 : i32
    %c0_i32_0 = arith.constant 0 : i32
    %c0_i32_1 = arith.constant 0 : i32
    return %c0_i32, %c0_i32_0 : i32, i32
  }
  func.func @transform_10(%arg0: i32, %arg1: i32, %arg2: memref<3x2xf32, #tpu.memory_space<smem>>) -> (i32, i32) {
    %c0_i32 = arith.constant 0 : i32
    %c0_i32_0 = arith.constant 0 : i32
    %c0_i32_1 = arith.constant 0 : i32
    return %c0_i32, %c0_i32_0 : i32, i32
  }
  func.func @transform_11(%arg0: i32, %arg1: i32, %arg2: memref<3x2xf32, #tpu.memory_space<smem>>) -> (i32, i32) {
    %c0_i32 = arith.constant 0 : i32
    %c0_i32_0 = arith.constant 0 : i32
    %c0_i32_1 = arith.constant 0 : i32
    return %c0_i32, %c0_i32_0 : i32, i32
  }
  func.func @transform_12(%arg0: i32, %arg1: i32, %arg2: memref<3x2xf32, #tpu.memory_space<smem>>) -> (i32, i32) {
    %c0_i32 = arith.constant 0 : i32
    %c0_i32_0 = arith.constant 0 : i32
    %c0_i32_1 = arith.constant 0 : i32
    return %c0_i32, %c0_i32_0 : i32, i32
  }
  func.func @transform_13(%arg0: i32, %arg1: i32, %arg2: memref<3x2xf32, #tpu.memory_space<smem>>) -> (i32, i32) {
    %c0_i32 = arith.constant 0 : i32
    %c0_i32_0 = arith.constant 0 : i32
    %c0_i32_1 = arith.constant 0 : i32
    return %c0_i32, %c0_i32_0 : i32, i32
  }
  func.func @transform_14(%arg0: i32, %arg1: i32, %arg2: memref<3x2xf32, #tpu.memory_space<smem>>) -> (i32, i32) {
    %c0_i32 = arith.constant 0 : i32
    %c0_i32_0 = arith.constant 0 : i32
    %c0_i32_1 = arith.constant 0 : i32
    return %c0_i32, %c0_i32_0 : i32, i32
  }
  func.func @transform_15(%arg0: i32, %arg1: i32, %arg2: memref<3x2xf32, #tpu.memory_space<smem>>) -> (i32, i32) {
    %c0_i32 = arith.constant 0 : i32
    %c0_i32_0 = arith.constant 0 : i32
    %c0_i32_1 = arith.constant 0 : i32
    return %c0_i32, %c0_i32_0 : i32, i32
  }
  func.func @transform_16(%arg0: i32, %arg1: i32, %arg2: memref<3x2xf32, #tpu.memory_space<smem>>) -> (i32, i32) {
    %c0_i32 = arith.constant 0 : i32
    %c0_i32_0 = arith.constant 0 : i32
    %c0_i32_1 = arith.constant 0 : i32
    return %c0_i32, %c0_i32_0 : i32, i32
  }
  func.func @transform_17(%arg0: i32, %arg1: i32, %arg2: memref<3x2xf32, #tpu.memory_space<smem>>) -> (i32, i32) {
    %c0_i32 = arith.constant 0 : i32
    %c0_i32_0 = arith.constant 0 : i32
    %c0_i32_1 = arith.constant 0 : i32
    return %c0_i32, %c0_i32_0 : i32, i32
  }
  func.func @transform_18(%arg0: i32, %arg1: i32, %arg2: memref<3x2xf32, #tpu.memory_space<smem>>) -> (i32, i32) {
    %c0_i32 = arith.constant 0 : i32
    %c0_i32_0 = arith.constant 0 : i32
    %c0_i32_1 = arith.constant 0 : i32
    return %c0_i32, %c0_i32_0 : i32, i32
  }
  func.func @transform_19(%arg0: i32, %arg1: i32, %arg2: memref<3x2xf32, #tpu.memory_space<smem>>) -> (i32, i32) {
    %c0_i32 = arith.constant 0 : i32
    %c0_i32_0 = arith.constant 0 : i32
    %c0_i32_1 = arith.constant 0 : i32
    return %c0_i32, %c0_i32_0 : i32, i32
  }
  func.func @transform_20(%arg0: i32, %arg1: i32, %arg2: memref<3x2xf32, #tpu.memory_space<smem>>) -> (i32, i32) {
    %c0_i32 = arith.constant 0 : i32
    %c0_i32_0 = arith.constant 0 : i32
    %c0_i32_1 = arith.constant 0 : i32
    return %c0_i32, %c0_i32_0 : i32, i32
  }
  func.func @transform_21(%arg0: i32, %arg1: i32, %arg2: memref<3x2xf32, #tpu.memory_space<smem>>) -> (i32, i32, i32) {
    %c0_i32 = arith.constant 0 : i32
    %c0_i32_0 = arith.constant 0 : i32
    return %arg0, %arg1, %c0_i32 : i32, i32, i32
  }
}

</mosaic_0001>

<llo_original>
// kernel: rwkv_block_forward.1
$region0: #{rwkv_block_forward.1}
  #allocation0 [shape = 'u32[]', space=smem, size = 0x4, offset = 0x4, fixed_abs, tag = 'smem constant byte address 0x4 - core index']
  #allocation1 [shape = 'u32[72,128]{1,0:T(1,128)}', space=vmem, size = 0x9000, scoped, tag = 'internal scratch']
  #allocation2 [shape = 'f32[2,64,64]{2,1,0:T(8,128)}', space=vmem, size = 0x10000, scoped, tag = 'scratch operand']
  #allocation3 [shape = 'f32[1,128]{1,0:T(1,128)}', space=vmem, size = 0x200, scoped, tag = 'scratch operand']
  #allocation4 [shape = 'f32[1,128]{1,0:T(1,128)}', space=vmem, size = 0x200, scoped, tag = 'scratch operand']
  #allocation5 [shape = 's32[1]{0}', space=sflag, size = 0x4, scoped, tag = 'scoped memory for rwkv_block_forward.1']
  #allocation6 [shape = 'u8[2048]{0}', space=smem, size = 0x800, scoped, tag = 'prefetched SMEM operand 0']
  %s0 = inlined_call_operand.vmem [shape: f32[3,2], index: 0, kind: input, shape index: {}]
  %s1 = inlined_call_operand.hbm [shape: f32[2,512,128], index: 1, kind: input, shape index: {}]
  %s2 = inlined_call_operand.vmem [shape: f32[1,128], index: 2, kind: input, shape index: {}]
  %s3 = inlined_call_operand.vmem [shape: f32[1,128], index: 3, kind: input, shape index: {}]
  %s4 = inlined_call_operand.vmem [shape: f32[1,128], index: 4, kind: input, shape index: {}]
  %s5 = inlined_call_operand.vmem [shape: f32[1,128], index: 5, kind: input, shape index: {}]
  %s6 = inlined_call_operand.vmem [shape: f32[1,128], index: 6, kind: input, shape index: {}]
  %s7 = inlined_call_operand.vmem [shape: f32[1,128], index: 7, kind: input, shape index: {}]
  %s8 = inlined_call_operand.vmem [shape: f32[1,128], index: 8, kind: input, shape index: {}]
  %s9 = inlined_call_operand.vmem [shape: f32[1,128], index: 9, kind: input, shape index: {}]
  %s10 = inlined_call_operand.hbm [shape: f32[1,128], index: 10, kind: input, shape index: {}]
  %s11 = inlined_call_operand.hbm [shape: bf16[128,128], index: 11, kind: input, shape index: {}]
  %s12 = inlined_call_operand.hbm [shape: bf16[128,128], index: 12, kind: input, shape index: {}]
  %s13 = inlined_call_operand.hbm [shape: bf16[128,128], index: 13, kind: input, shape index: {}]
  %s14 = inlined_call_operand.hbm [shape: bf16[128,128], index: 14, kind: input, shape index: {}]
  %s15 = inlined_call_operand.vmem [shape: f32[1,128], index: 15, kind: input, shape index: {}]
  %s16 = inlined_call_operand.vmem [shape: f32[1,128], index: 16, kind: input, shape index: {}]
  %s17 = inlined_call_operand.vmem [shape: f32[1,128], index: 17, kind: input, shape index: {}]
  %s18 = inlined_call_operand.vmem [shape: f32[1,128], index: 18, kind: input, shape index: {}]
  %s19 = inlined_call_operand.hbm [shape: bf16[128,256], index: 19, kind: input, shape index: {}]
  %s20 = inlined_call_operand.hbm [shape: bf16[128,128], index: 20, kind: input, shape index: {}]
  %s21 = inlined_call_operand.hbm [shape: bf16[256,128], index: 21, kind: input, shape index: {}]
  %s22 = inlined_call_operand.hbm [shape: f32[2,512,128], index: 22, kind: output, shape index: {}]
  %s23 = sld [smem:[#allocation0]]
  $region157: #{rwkv_block_forward.1} parent=0
    _
  %s25 = ssub.s32 1, %s23
  %s26 = scalar_select 0, %s25, %s23
  %s28 = sshll.u32 %s0, 4
  %s29 = int_to_ptr.vmem [resolvable:$true] %s28
  %31 = dma.vmem_to_smem %s29, 64, [#allocation6], [#allocation5]
  %33 = dma.done [#allocation5], 64
  %34 = sfence
  $region1: #{rwkv_block_forward.1} parent=0
    #allocation7 [shape = 'u8[131072]{0}', space=vmem, size = 0x20000, scoped, tag = 'input window, operand 1']
    #allocation8 [shape = 's32[2]{0}', space=sflag, size = 0x8, scoped, tag = 'scoped memory for rwkv_block_forward.1']
    #allocation9 [shape = 's32[2]{0}', space=sflag, size = 0x8, scoped, tag = 'scoped memory for rwkv_block_forward.1']
    #allocation10 [shape = 'u8[512]{0}', space=vmem, size = 0x400, scoped, tag = 'input window, operand 10, single buffered']
    #allocation11 [shape = 's32[1]{0}', space=sflag, size = 0x4, scoped, tag = 'scoped memory for rwkv_block_forward.1']
    #allocation12 [shape = 'u8[32768]{0}', space=vmem, size = 0x8000, scoped, tag = 'input window, operand 11, single buffered']
    #allocation13 [shape = 'u8[32768]{0}', space=vmem, size = 0x8000, scoped, tag = 'input window, operand 12, single buffered']
    #allocation14 [shape = 's32[1]{0}', space=sflag, size = 0x4, scoped, tag = 'scoped memory for rwkv_block_forward.1']
    #allocation15 [shape = 'u8[32768]{0}', space=vmem, size = 0x8000, scoped, tag = 'input window, operand 13, single buffered']
    #allocation16 [shape = 'u8[32768]{0}', space=vmem, size = 0x8000, scoped, tag = 'input window, operand 14, single buffered']
    #allocation17 [shape = 's32[1]{0}', space=sflag, size = 0x4, scoped, tag = 'scoped memory for rwkv_block_forward.1']
    #allocation18 [shape = 'u8[65536]{0}', space=vmem, size = 0x10000, scoped, tag = 'input window, operand 19, single buffered']
    #allocation19 [shape = 'u8[32768]{0}', space=vmem, size = 0x8000, scoped, tag = 'input window, operand 20, single buffered']
    #allocation20 [shape = 's32[1]{0}', space=sflag, size = 0x4, scoped, tag = 'scoped memory for rwkv_block_forward.1']
    #allocation21 [shape = 'u8[65536]{0}', space=vmem, size = 0x10000, scoped, tag = 'input window, operand 21, single buffered']
    #allocation22 [shape = 'u8[131072]{0}', space=vmem, size = 0x20000, scoped, tag = 'output window, operand 0']
    %35 = vsyncpa [#allocation8], 0
    %s36 = scalar_lea.sflag [#allocation8], 1
    %37 = vsyncpa %s36, 0
    %38 = vsyncpa [#allocation11], 0
    %39 = vsyncpa [#allocation14], 0
    %40 = vsyncpa [#allocation17], 0
    %41 = vsyncpa [#allocation20], 0
    %42 = vsyncpa [#allocation9], 0
    %s43 = scalar_lea.sflag [#allocation9], 1
    %44 = vsyncpa %s43, 0
    loop: start=0, step=1, limit=10
    $region2: #{rwkv_block_forward.1} parent=1 // loop_pre_header
      _
    $region3: #{rwkv_block_forward.1} parent=1 // loop_header
      %s46 = sphi 0, %s50
      %p47 = scmp.ge.s32.totalorder %s46, 10
      %s53 = sphi 0, %s65
      %s54 = sphi 0, %s61
      %s55 = sphi 0, %s53
      %s56 = sphi 0, %s54
      %s57 = sphi 0, %s55
      %s58 = sphi 0, %s56
      %s70 = sphi 0, %s72
      %s73 = sphi 0, %s70
      %s74 = sphi 0, %s73
      %s90 = sphi 0, %s74
      %s94 = sphi 0, %s94
      %s96 = sphi 0, %s94
      %s97 = sphi 0, %s96
      %s111 = sphi 0, %s97
      %s115 = sphi 0, %s115
      %s117 = sphi 0, %s115
      %s118 = sphi 0, %s117
      %s132 = sphi 0, %s118
      %s136 = sphi 0, %s136
      %s138 = sphi 0, %s136
      %s139 = sphi 0, %s138
      %s153 = sphi 0, %s139
      %s157 = sphi 0, %s157
      %s159 = sphi 0, %s157
      %s160 = sphi 0, %s159
      %s174 = sphi 0, %s160
      %s178 = sphi 0, %s178
      %s180 = sphi 0, %s178
      %s181 = sphi 0, %s180
      %s195 = sphi 0, %s181
      %s199 = sphi 0, %s199
      %s201 = sphi 0, %s199
      %s202 = sphi 0, %s201
      %s216 = sphi 0, %s202
      %s220 = sphi 0, %s220
      %s222 = sphi 0, %s220
      %s223 = sphi 0, %s222
      %s237 = sphi 0, %s223
      %s241 = sphi 0, %s241
      %s243 = sphi 0, %s241
      %s244 = sphi 0, %s243
      %s258 = sphi 0, %s244
      %s262 = sphi 0, %s262
      %s264 = sphi 0, %s262
      %s265 = sphi 0, %s264
      %s279 = sphi 0, %s265
      %s283 = sphi 0, %s283
      %s285 = sphi 0, %s283
      %s286 = sphi 0, %s285
      %s300 = sphi 0, %s286
      %s304 = sphi 0, %s304
      %s306 = sphi 0, %s304
      %s307 = sphi 0, %s306
      %s321 = sphi 0, %s307
      %s325 = sphi 0, %s325
      %s327 = sphi 0, %s325
      %s328 = sphi 0, %s327
      %s342 = sphi 0, %s328
      %s346 = sphi 0, %s346
      %s348 = sphi 0, %s346
      %s349 = sphi 0, %s348
      %s363 = sphi 0, %s349
      %s367 = sphi 0, %s367
      %s369 = sphi 0, %s367
      %s370 = sphi 0, %s369
      %s384 = sphi 0, %s370
      %s388 = sphi 0, %s388
      %s390 = sphi 0, %s388
      %s391 = sphi 0, %s390
      %s405 = sphi 0, %s391
      %s409 = sphi 0, %s409
      %s411 = sphi 0, %s409
      %s412 = sphi 0, %s411
      %s426 = sphi 0, %s412
      %s430 = sphi 0, %s430
      %s432 = sphi 0, %s430
      %s433 = sphi 0, %s432
      %s447 = sphi 0, %s433
      %s451 = sphi 0, %s451
      %s453 = sphi 0, %s451
      %s454 = sphi 0, %s453
      %s468 = sphi 0, %s454
      %s472 = sphi 0, %s472
      %s474 = sphi 0, %s472
      %s475 = sphi 0, %s474
      %s489 = sphi 0, %s475
      %s493 = sphi 0, %s493
      %s495 = sphi 0, %s493
      %s496 = sphi 0, %s495
      %s510 = sphi 0, %s496
      %s518 = sphi 0, %s520
      %s521 = sphi 0, %s518
      %s522 = sphi 0, %s521
      %s538 = sphi 0, %s522
    $region4: #{rwkv_block_forward.1} parent=1 // loop_header_branch
      %49 = sbr.rel (%p47) target = $region8
    $region5: #{rwkv_block_forward.1} parent=1 // loop_body
      %s51 = ssub.s32 %s46, 1
      %s52 = ssub.s32 %s46, 2
      %s59 = sadd.s32 1, %s54
      %p60 = scmp.ge.s32.totalorder %s59, 4
      %s61 = scalar_select %p60, 0, %s59
      %s62 = sadd.s32 1, %s53
      %s63 = scalar_select %p60, %s62, %s53
      %p64 = scmp.ge.s32.totalorder %s63, 2
      %s65 = scalar_select %p64, 0, %s63
      %s66 = ssub.s32 %s53, %s65
      %s67 = ssub.s32 %s54, %s61
      %s68 = sor.u32 %s66, %s67
      %p69 = scmp.eq.s32.totalorder %s68, 0
      %s71 = sadd.s32 %s70, 1
      %s72 = scalar_select %p69, %s70, %s71
      %p75 = pneg %p69
      %p76 = scmp.eq.s32.totalorder %s46, 7
      %p77 = por %p75, %p76
      %p78 = scmp.ne.s32.totalorder %s70, %s73
      %p79 = scmp.eq.s32.totalorder %s46, 0
      %p80 = por %p78, %p79
      %p81 = scmp.ne.s32.totalorder %s70, %s73
      %p82 = scmp.eq.s32.totalorder %s51, 7
      %p83 = por %p81, %p82
      %p84 = scmp.ne.s32.totalorder %s73, %s74
      %p85 = scmp.eq.s32.totalorder %s51, 0
      %p86 = por %p84, %p85
      %p87 = scmp.ne.s32.totalorder %s73, %s74
      %p88 = scmp.eq.s32.totalorder %s52, 7
      %p89 = por %p87, %p88
      %p91 = scmp.ne.s32.totalorder %s74, %s90
      %p92 = scmp.eq.s32.totalorder %s52, 0
      %p93 = por %p91, %p92
      %s95 = sadd.s32 %s94, 1
      %p98 = scmp.eq.s32.totalorder %s46, 7
      %p99 = scmp.ne.s32.totalorder %s94, %s96
      %p100 = scmp.eq.s32.totalorder %s46, 0
      %p101 = por %p99, %p100
      %p102 = scmp.ne.s32.totalorder %s94, %s96
      %p103 = scmp.eq.s32.totalorder %s51, 7
      %p104 = por %p102, %p103
      %p105 = scmp.ne.s32.totalorder %s96, %s97
      %p106 = scmp.eq.s32.totalorder %s51, 0
      %p107 = por %p105, %p106
      %p108 = scmp.ne.s32.totalorder %s96, %s97
      %p109 = scmp.eq.s32.totalorder %s52, 7
      %p110 = por %p108, %p109
      %p112 = scmp.ne.s32.totalorder %s97, %s111
      %p113 = scmp.eq.s32.totalorder %s52, 0
      %p114 = por %p112, %p113
      %s116 = sadd.s32 %s115, 1
      %p119 = scmp.eq.s32.totalorder %s46, 7
      %p120 = scmp.ne.s32.totalorder %s115, %s117
      %p121 = scmp.eq.s32.totalorder %s46, 0
      %p122 = por %p120, %p121
      %p123 = scmp.ne.s32.totalorder %s115, %s117
      %p124 = scmp.eq.s32.totalorder %s51, 7
      %p125 = por %p123, %p124
      %p126 = scmp.ne.s32.totalorder %s117, %s118
      %p127 = scmp.eq.s32.totalorder %s51, 0
      %p128 = por %p126, %p127
      %p129 = scmp.ne.s32.totalorder %s117, %s118
      %p130 = scmp.eq.s32.totalorder %s52, 7
      %p131 = por %p129, %p130
      %p133 = scmp.ne.s32.totalorder %s118, %s132
      %p134 = scmp.eq.s32.totalorder %s52, 0
      %p135 = por %p133, %p134
      %s137 = sadd.s32 %s136, 1
      %p140 = scmp.eq.s32.totalorder %s46, 7
      %p141 = scmp.ne.s32.totalorder %s136, %s138
      %p142 = scmp.eq.s32.totalorder %s46, 0
      %p143 = por %p141, %p142
      %p144 = scmp.ne.s32.totalorder %s136, %s138
      %p145 = scmp.eq.s32.totalorder %s51, 7
      %p146 = por %p144, %p145
      %p147 = scmp.ne.s32.totalorder %s138, %s139
      %p148 = scmp.eq.s32.totalorder %s51, 0
      %p149 = por %p147, %p148
      %p150 = scmp.ne.s32.totalorder %s138, %s139
      %p151 = scmp.eq.s32.totalorder %s52, 7
      %p152 = por %p150, %p151
      %p154 = scmp.ne.s32.totalorder %s139, %s153
      %p155 = scmp.eq.s32.totalorder %s52, 0
      %p156 = por %p154, %p155
      %s158 = sadd.s32 %s157, 1
      %p161 = scmp.eq.s32.totalorder %s46, 7
      %p162 = scmp.ne.s32.totalorder %s157, %s159
      %p163 = scmp.eq.s32.totalorder %s46, 0
      %p164 = por %p162, %p163
      %p165 = scmp.ne.s32.totalorder %s157, %s159
      %p166 = scmp.eq.s32.totalorder %s51, 7
      %p167 = por %p165, %p166
      %p168 = scmp.ne.s32.totalorder %s159, %s160
      %p169 = scmp.eq.s32.totalorder %s51, 0
      %p170 = por %p168, %p169
      %p171 = scmp.ne.s32.totalorder %s159, %s160
      %p172 = scmp.eq.s32.totalorder %s52, 7
      %p173 = por %p171, %p172
      %p175 = scmp.ne.s32.totalorder %s160, %s174
      %p176 = scmp.eq.s32.totalorder %s52, 0
      %p177 = por %p175, %p176
      %s179 = sadd.s32 %s178, 1
      %p182 = scmp.eq.s32.totalorder %s46, 7
      %p183 = scmp.ne.s32.totalorder %s178, %s180
      %p184 = scmp.eq.s32.totalorder %s46, 0
      %p185 = por %p183, %p184
      %p186 = scmp.ne.s32.totalorder %s178, %s180
      %p187 = scmp.eq.s32.totalorder %s51, 7
      %p188 = por %p186, %p187
      %p189 = scmp.ne.s32.totalorder %s180, %s181
      %p190 = scmp.eq.s32.totalorder %s51, 0
      %p191 = por %p189, %p190
      %p192 = scmp.ne.s32.totalorder %s180, %s181
      %p193 = scmp.eq.s32.totalorder %s52, 7
      %p194 = por %p192, %p193
      %p196 = scmp.ne.s32.totalorder %s181, %s195
      %p197 = scmp.eq.s32.totalorder %s52, 0
      %p198 = por %p196, %p197
      %s200 = sadd.s32 %s199, 1
      %p203 = scmp.eq.s32.totalorder %s46, 7
      %p204 = scmp.ne.s32.totalorder %s199, %s201
      %p205 = scmp.eq.s32.totalorder %s46, 0
      %p206 = por %p204, %p205
      %p207 = scmp.ne.s32.totalorder %s199, %s201
      %p208 = scmp.eq.s32.totalorder %s51, 7
      %p209 = por %p207, %p208
      %p210 = scmp.ne.s32.totalorder %s201, %s202
      %p211 = scmp.eq.s32.totalorder %s51, 0
      %p212 = por %p210, %p211
      %p213 = scmp.ne.s32.totalorder %s201, %s202
      %p214 = scmp.eq.s32.totalorder %s52, 7
      %p215 = por %p213, %p214
      %p217 = scmp.ne.s32.totalorder %s202, %s216
      %p218 = scmp.eq.s32.totalorder %s52, 0
      %p219 = por %p217, %p218
      %s221 = sadd.s32 %s220, 1
      %p224 = scmp.eq.s32.totalorder %s46, 7
      %p225 = scmp.ne.s32.totalorder %s220, %s222
      %p226 = scmp.eq.s32.totalorder %s46, 0
      %p227 = por %p225, %p226
      %p228 = scmp.ne.s32.totalorder %s220, %s222
      %p229 = scmp.eq.s32.totalorder %s51, 7
      %p230 = por %p228, %p229
      %p231 = scmp.ne.s32.totalorder %s222, %s223
      %p232 = scmp.eq.s32.totalorder %s51, 0
      %p233 = por %p231, %p232
      %p234 = scmp.ne.s32.totalorder %s222, %s223
      %p235 = scmp.eq.s32.totalorder %s52, 7
      %p236 = por %p234, %p235
      %p238 = scmp.ne.s32.totalorder %s223, %s237
      %p239 = scmp.eq.s32.totalorder %s52, 0
      %p240 = por %p238, %p239
      %s242 = sadd.s32 %s241, 1
      %p245 = scmp.eq.s32.totalorder %s46, 7
      %p246 = scmp.ne.s32.totalorder %s241, %s243
      %p247 = scmp.eq.s32.totalorder %s46, 0
      %p248 = por %p246, %p247
      %p249 = scmp.ne.s32.totalorder %s241, %s243
      %p250 = scmp.eq.s32.totalorder %s51, 7
      %p251 = por %p249, %p250
      %p252 = scmp.ne.s32.totalorder %s243, %s244
      %p253 = scmp.eq.s32.totalorder %s51, 0
      %p254 = por %p252, %p253
      %p255 = scmp.ne.s32.totalorder %s243, %s244
      %p256 = scmp.eq.s32.totalorder %s52, 7
      %p257 = por %p255, %p256
      %p259 = scmp.ne.s32.totalorder %s244, %s258
      %p260 = scmp.eq.s32.totalorder %s52, 0
      %p261 = por %p259, %p260
      %s263 = sadd.s32 %s262, 1
      %p266 = scmp.eq.s32.totalorder %s46, 7
      %p267 = scmp.ne.s32.totalorder %s262, %s264
      %p268 = scmp.eq.s32.totalorder %s46, 0
      %p269 = por %p267, %p268
      %p270 = scmp.ne.s32.totalorder %s262, %s264
      %p271 = scmp.eq.s32.totalorder %s51, 7
      %p272 = por %p270, %p271
      %p273 = scmp.ne.s32.totalorder %s264, %s265
      %p274 = scmp.eq.s32.totalorder %s51, 0
      %p275 = por %p273, %p274
      %p276 = scmp.ne.s32.totalorder %s264, %s265
      %p277 = scmp.eq.s32.totalorder %s52, 7
      %p278 = por %p276, %p277
      %p280 = scmp.ne.s32.totalorder %s265, %s279
      %p281 = scmp.eq.s32.totalorder %s52, 0
      %p282 = por %p280, %p281
      %s284 = sadd.s32 %s283, 1
      %p287 = scmp.eq.s32.totalorder %s46, 7
      %p288 = scmp.ne.s32.totalorder %s283, %s285
      %p289 = scmp.eq.s32.totalorder %s46, 0
      %p290 = por %p288, %p289
      %p291 = scmp.ne.s32.totalorder %s283, %s285
      %p292 = scmp.eq.s32.totalorder %s51, 7
      %p293 = por %p291, %p292
      %p294 = scmp.ne.s32.totalorder %s285, %s286
      %p295 = scmp.eq.s32.totalorder %s51, 0
      %p296 = por %p294, %p295
      %p297 = scmp.ne.s32.totalorder %s285, %s286
      %p298 = scmp.eq.s32.totalorder %s52, 7
      %p299 = por %p297, %p298
      %p301 = scmp.ne.s32.totalorder %s286, %s300
      %p302 = scmp.eq.s32.totalorder %s52, 0
      %p303 = por %p301, %p302
      %s305 = sadd.s32 %s304, 1
      %p308 = scmp.eq.s32.totalorder %s46, 7
      %p309 = scmp.ne.s32.totalorder %s304, %s306
      %p310 = scmp.eq.s32.totalorder %s46, 0
      %p311 = por %p309, %p310
      %p312 = scmp.ne.s32.totalorder %s304, %s306
      %p313 = scmp.eq.s32.totalorder %s51, 7
      %p314 = por %p312, %p313
      %p315 = scmp.ne.s32.totalorder %s306, %s307
      %p316 = scmp.eq.s32.totalorder %s51, 0
      %p317 = por %p315, %p316
      %p318 = scmp.ne.s32.totalorder %s306, %s307
      %p319 = scmp.eq.s32.totalorder %s52, 7
      %p320 = por %p318, %p319
      %p322 = scmp.ne.s32.totalorder %s307, %s321
      %p323 = scmp.eq.s32.totalorder %s52, 0
      %p324 = por %p322, %p323
      %s326 = sadd.s32 %s325, 1
      %p329 = scmp.eq.s32.totalorder %s46, 7
      %p330 = scmp.ne.s32.totalorder %s325, %s327
      %p331 = scmp.eq.s32.totalorder %s46, 0
      %p332 = por %p330, %p331
      %p333 = scmp.ne.s32.totalorder %s325, %s327
      %p334 = scmp.eq.s32.totalorder %s51, 7
      %p335 = por %p333, %p334
      %p336 = scmp.ne.s32.totalorder %s327, %s328
      %p337 = scmp.eq.s32.totalorder %s51, 0
      %p338 = por %p336, %p337
      %p339 = scmp.ne.s32.totalorder %s327, %s328
      %p340 = scmp.eq.s32.totalorder %s52, 7
      %p341 = por %p339, %p340
      %p343 = scmp.ne.s32.totalorder %s328, %s342
      %p344 = scmp.eq.s32.totalorder %s52, 0
      %p345 = por %p343, %p344
      %s347 = sadd.s32 %s346, 1
      %p350 = scmp.eq.s32.totalorder %s46, 7
      %p351 = scmp.ne.s32.totalorder %s346, %s348
      %p352 = scmp.eq.s32.totalorder %s46, 0
      %p353 = por %p351, %p352
      %p354 = scmp.ne.s32.totalorder %s346, %s348
      %p355 = scmp.eq.s32.totalorder %s51, 7
      %p356 = por %p354, %p355
      %p357 = scmp.ne.s32.totalorder %s348, %s349
      %p358 = scmp.eq.s32.totalorder %s51, 0
      %p359 = por %p357, %p358
      %p360 = scmp.ne.s32.totalorder %s348, %s349
      %p361 = scmp.eq.s32.totalorder %s52, 7
      %p362 = por %p360, %p361
      %p364 = scmp.ne.s32.totalorder %s349, %s363
      %p365 = scmp.eq.s32.totalorder %s52, 0
      %p366 = por %p364, %p365
      %s368 = sadd.s32 %s367, 1
      %p371 = scmp.eq.s32.totalorder %s46, 7
      %p372 = scmp.ne.s32.totalorder %s367, %s369
      %p373 = scmp.eq.s32.totalorder %s46, 0
      %p374 = por %p372, %p373
      %p375 = scmp.ne.s32.totalorder %s367, %s369
      %p376 = scmp.eq.s32.totalorder %s51, 7
      %p377 = por %p375, %p376
      %p378 = scmp.ne.s32.totalorder %s369, %s370
      %p379 = scmp.eq.s32.totalorder %s51, 0
      %p380 = por %p378, %p379
      %p381 = scmp.ne.s32.totalorder %s369, %s370
      %p382 = scmp.eq.s32.totalorder %s52, 7
      %p383 = por %p381, %p382
      %p385 = scmp.ne.s32.totalorder %s370, %s384
      %p386 = scmp.eq.s32.totalorder %s52, 0
      %p387 = por %p385, %p386
      %s389 = sadd.s32 %s388, 1
      %p392 = scmp.eq.s32.totalorder %s46, 7
      %p393 = scmp.ne.s32.totalorder %s388, %s390
      %p394 = scmp.eq.s32.totalorder %s46, 0
      %p395 = por %p393, %p394
      %p396 = scmp.ne.s32.totalorder %s388, %s390
      %p397 = scmp.eq.s32.totalorder %s51, 7
      %p398 = por %p396, %p397
      %p399 = scmp.ne.s32.totalorder %s390, %s391
      %p400 = scmp.eq.s32.totalorder %s51, 0
      %p401 = por %p399, %p400
      %p402 = scmp.ne.s32.totalorder %s390, %s391
      %p403 = scmp.eq.s32.totalorder %s52, 7
      %p404 = por %p402, %p403
      %p406 = scmp.ne.s32.totalorder %s391, %s405
      %p407 = scmp.eq.s32.totalorder %s52, 0
      %p408 = por %p406, %p407
      %s410 = sadd.s32 %s409, 1
      %p413 = scmp.eq.s32.totalorder %s46, 7
      %p414 = scmp.ne.s32.totalorder %s409, %s411
      %p415 = scmp.eq.s32.totalorder %s46, 0
      %p416 = por %p414, %p415
      %p417 = scmp.ne.s32.totalorder %s409, %s411
      %p418 = scmp.eq.s32.totalorder %s51, 7
      %p419 = por %p417, %p418
      %p420 = scmp.ne.s32.totalorder %s411, %s412
      %p421 = scmp.eq.s32.totalorder %s51, 0
      %p422 = por %p420, %p421
      %p423 = scmp.ne.s32.totalorder %s411, %s412
      %p424 = scmp.eq.s32.totalorder %s52, 7
      %p425 = por %p423, %p424
      %p427 = scmp.ne.s32.totalorder %s412, %s426
      %p428 = scmp.eq.s32.totalorder %s52, 0
      %p429 = por %p427, %p428
      %s431 = sadd.s32 %s430, 1
      %p434 = scmp.eq.s32.totalorder %s46, 7
      %p435 = scmp.ne.s32.totalorder %s430, %s432
      %p436 = scmp.eq.s32.totalorder %s46, 0
      %p437 = por %p435, %p436
      %p438 = scmp.ne.s32.totalorder %s430, %s432
      %p439 = scmp.eq.s32.totalorder %s51, 7
      %p440 = por %p438, %p439
      %p441 = scmp.ne.s32.totalorder %s432, %s433
      %p442 = scmp.eq.s32.totalorder %s51, 0
      %p443 = por %p441, %p442
      %p444 = scmp.ne.s32.totalorder %s432, %s433
      %p445 = scmp.eq.s32.totalorder %s52, 7
      %p446 = por %p444, %p445
      %p448 = scmp.ne.s32.totalorder %s433, %s447
      %p449 = scmp.eq.s32.totalorder %s52, 0
      %p450 = por %p448, %p449
      %s452 = sadd.s32 %s451, 1
      %p455 = scmp.eq.s32.totalorder %s46, 7
      %p456 = scmp.ne.s32.totalorder %s451, %s453
      %p457 = scmp.eq.s32.totalorder %s46, 0
      %p458 = por %p456, %p457
      %p459 = scmp.ne.s32.totalorder %s451, %s453
      %p460 = scmp.eq.s32.totalorder %s51, 7
      %p461 = por %p459, %p460
      %p462 = scmp.ne.s32.totalorder %s453, %s454
      %p463 = scmp.eq.s32.totalorder %s51, 0
      %p464 = por %p462, %p463
      %p465 = scmp.ne.s32.totalorder %s453, %s454
      %p466 = scmp.eq.s32.totalorder %s52, 7
      %p467 = por %p465, %p466
      %p469 = scmp.ne.s32.totalorder %s454, %s468
      %p470 = scmp.eq.s32.totalorder %s52, 0
      %p471 = por %p469, %p470
      %s473 = sadd.s32 %s472, 1
      %p476 = scmp.eq.s32.totalorder %s46, 7
      %p477 = scmp.ne.s32.totalorder %s472, %s474
      %p478 = scmp.eq.s32.totalorder %s46, 0
      %p479 = por %p477, %p478
      %p480 = scmp.ne.s32.totalorder %s472, %s474
      %p481 = scmp.eq.s32.totalorder %s51, 7
      %p482 = por %p480, %p481
      %p483 = scmp.ne.s32.totalorder %s474, %s475
      %p484 = scmp.eq.s32.totalorder %s51, 0
      %p485 = por %p483, %p484
      %p486 = scmp.ne.s32.totalorder %s474, %s475
      %p487 = scmp.eq.s32.totalorder %s52, 7
      %p488 = por %p486, %p487
      %p490 = scmp.ne.s32.totalorder %s475, %s489
      %p491 = scmp.eq.s32.totalorder %s52, 0
      %p492 = por %p490, %p491
      %s494 = sadd.s32 %s493, 1
      %p497 = scmp.eq.s32.totalorder %s46, 7
      %p498 = scmp.ne.s32.totalorder %s493, %s495
      %p499 = scmp.eq.s32.totalorder %s46, 0
      %p500 = por %p498, %p499
      %p501 = scmp.ne.s32.totalorder %s493, %s495
      %p502 = scmp.eq.s32.totalorder %s51, 7
      %p503 = por %p501, %p502
      %p504 = scmp.ne.s32.totalorder %s495, %s496
      %p505 = scmp.eq.s32.totalorder %s51, 0
      %p506 = por %p504, %p505
      %p507 = scmp.ne.s32.totalorder %s495, %s496
      %p508 = scmp.eq.s32.totalorder %s52, 7
      %p509 = por %p507, %p508
      %p511 = scmp.ne.s32.totalorder %s496, %s510
      %p512 = scmp.eq.s32.totalorder %s52, 0
      %p513 = por %p511, %p512
      %s514 = ssub.s32 %s53, %s65
      %s515 = ssub.s32 %s54, %s61
      %s516 = sor.u32 %s514, %s515
      %p517 = scmp.eq.s32.totalorder %s516, 0
      %s519 = sadd.s32 %s518, 1
      %s520 = scalar_select %p517, %s518, %s519
      %p523 = pneg %p517
      %p524 = scmp.eq.s32.totalorder %s46, 7
      %p525 = por %p523, %p524
      %p526 = scmp.ne.s32.totalorder %s518, %s521
      %p527 = scmp.eq.s32.totalorder %s46, 0
      %p528 = por %p526, %p527
      %p529 = scmp.ne.s32.totalorder %s518, %s521
      %p530 = scmp.eq.s32.totalorder %s51, 7
      %p531 = por %p529, %p530
      %p532 = scmp.ne.s32.totalorder %s521, %s522
      %p533 = scmp.eq.s32.totalorder %s51, 0
      %p534 = por %p532, %p533
      %p535 = scmp.ne.s32.totalorder %s521, %s522
      %p536 = scmp.eq.s32.totalorder %s52, 7
      %p537 = por %p535, %p536
      %p539 = scmp.ne.s32.totalorder %s522, %s538
      %p540 = scmp.eq.s32.totalorder %s52, 0
      %p541 = por %p539, %p540
      %p542 = scmp.le.s32.totalorder 1, %s46
      %p543 = scmp.lt.s32.totalorder %s46, 9
      %p544 = pnand %p542, %p543
      %p545 = pneg %p544
      // Predicated region
      $region9: #{rwkv_block_forward.1} parent=5 // pred_check
        _
      $region10: #{rwkv_block_forward.1} parent=5 // pred_check_branch
        %547 = sbr.rel (%p544) target = $region12
      $region11: #{rwkv_block_forward.1} parent=5 // pred_region
        %s548 = ssub.s32 %s46, 1
        // Predicated region
        $region13: #{rwkv_block_forward.1} parent=11 // pred_check
          %p549 = pneg %p107
        $region14: #{rwkv_block_forward.1} parent=11 // pred_check_branch
          %551 = sbr.rel (%p549) target = $region16
        $region15: #{rwkv_block_forward.1} parent=11 // pred_region
          _
        $region16: #{rwkv_block_forward.1} parent=11 // pred_fallthru
          _
        // Predicated region
        $region17: #{rwkv_block_forward.1} parent=11 // pred_check
          %p552 = pneg %p128
        $region18: #{rwkv_block_forward.1} parent=11 // pred_check_branch
          %554 = sbr.rel (%p552) target = $region20
        $region19: #{rwkv_block_forward.1} parent=11 // pred_region
          _
        $region20: #{rwkv_block_forward.1} parent=11 // pred_fallthru
          _
        // Predicated region
        $region21: #{rwkv_block_forward.1} parent=11 // pred_check
          %p555 = pneg %p149
        $region22: #{rwkv_block_forward.1} parent=11 // pred_check_branch
          %557 = sbr.rel (%p555) target = $region24
        $region23: #{rwkv_block_forward.1} parent=11 // pred_region
          _
        $region24: #{rwkv_block_forward.1} parent=11 // pred_fallthru
          _
        // Predicated region
        $region25: #{rwkv_block_forward.1} parent=11 // pred_check
          %p558 = pneg %p170
        $region26: #{rwkv_block_forward.1} parent=11 // pred_check_branch
          %560 = sbr.rel (%p558) target = $region28
        $region27: #{rwkv_block_forward.1} parent=11 // pred_region
          _
        $region28: #{rwkv_block_forward.1} parent=11 // pred_fallthru
          _
        // Predicated region
        $region29: #{rwkv_block_forward.1} parent=11 // pred_check
          %p561 = pneg %p191
        $region30: #{rwkv_block_forward.1} parent=11 // pred_check_branch
          %563 = sbr.rel (%p561) target = $region32
        $region31: #{rwkv_block_forward.1} parent=11 // pred_region
          _
        $region32: #{rwkv_block_forward.1} parent=11 // pred_fallthru
          _
        // Predicated region
        $region33: #{rwkv_block_forward.1} parent=11 // pred_check
          %p564 = pneg %p212
        $region34: #{rwkv_block_forward.1} parent=11 // pred_check_branch
          %566 = sbr.rel (%p564) target = $region36
        $region35: #{rwkv_block_forward.1} parent=11 // pred_region
          _
        $region36: #{rwkv_block_forward.1} parent=11 // pred_fallthru
          _
        // Predicated region
        $region37: #{rwkv_block_forward.1} parent=11 // pred_check
          %p567 = pneg %p233
        $region38: #{rwkv_block_forward.1} parent=11 // pred_check_branch
          %569 = sbr.rel (%p567) target = $region40
        $region39: #{rwkv_block_forward.1} parent=11 // pred_region
          _
        $region40: #{rwkv_block_forward.1} parent=11 // pred_fallthru
          _
        // Predicated region
        $region41: #{rwkv_block_forward.1} parent=11 // pred_check
          %p570 = pneg %p254
        $region42: #{rwkv_block_forward.1} parent=11 // pred_check_branch
          %572 = sbr.rel (%p570) target = $region44
        $region43: #{rwkv_block_forward.1} parent=11 // pred_region
          _
        $region44: #{rwkv_block_forward.1} parent=11 // pred_fallthru
          _
        // Predicated region
        $region45: #{rwkv_block_forward.1} parent=11 // pred_check
          %p573 = pneg %p275
        $region46: #{rwkv_block_forward.1} parent=11 // pred_check_branch
          %575 = sbr.rel (%p573) target = $region48
        $region47: #{rwkv_block_forward.1} parent=11 // pred_region
          %577 = vsyncadd [#allocation11], 0
          %s579 = sshll.u32 %s10, 4
          %s580 = int_to_ptr.hbm [resolvable:$true] %s579
          %s581 = sshll.u32 [#allocation10], 4
          %s582 = int_to_ptr.vmem [resolvable:$true] %s581
          %584 = dma.hbm_to_vmem [thread:$0]  %s580, 16, %s582, [#allocation11]
        $region48: #{rwkv_block_forward.1} parent=11 // pred_fallthru
          _
        // Predicated region
        $region49: #{rwkv_block_forward.1} parent=11 // pred_check
          %p585 = pneg %p296
        $region50: #{rwkv_block_forward.1} parent=11 // pred_check_branch
          %587 = sbr.rel (%p585) target = $region52
        $region51: #{rwkv_block_forward.1} parent=11 // pred_region
          %589 = vsyncadd [#allocation11], 0
          %s590 = sshll.u32 %s11, 4
          %s591 = int_to_ptr.hbm [resolvable:$true] %s590
          %s592 = sshll.u32 [#allocation12], 4
          %s593 = int_to_ptr.vmem [resolvable:$true] %s592
          %598 = dma.hbm_to_vmem [thread:$0]  %s591, 1024, %s593, [#allocation11], 64, 64, 4
        $region52: #{rwkv_block_forward.1} parent=11 // pred_fallthru
          _
        // Predicated region
        $region53: #{rwkv_block_forward.1} parent=11 // pred_check
          %p599 = pneg %p317
        $region54: #{rwkv_block_forward.1} parent=11 // pred_check_branch
          %601 = sbr.rel (%p599) target = $region56
        $region55: #{rwkv_block_forward.1} parent=11 // pred_region
          %603 = vsyncadd [#allocation14], 0
          %s604 = sshll.u32 %s12, 4
          %s605 = int_to_ptr.hbm [resolvable:$true] %s604
          %s606 = sshll.u32 [#allocation13], 4
          %s607 = int_to_ptr.vmem [resolvable:$true] %s606
          %612 = dma.hbm_to_vmem [thread:$0]  %s605, 1024, %s607, [#allocation14], 64, 64, 4
        $region56: #{rwkv_block_forward.1} parent=11 // pred_fallthru
          _
        // Predicated region
        $region57: #{rwkv_block_forward.1} parent=11 // pred_check
          %p613 = pneg %p338
        $region58: #{rwkv_block_forward.1} parent=11 // pred_check_branch
          %615 = sbr.rel (%p613) target = $region60
        $region59: #{rwkv_block_forward.1} parent=11 // pred_region
          %617 = vsyncadd [#allocation14], 0
          %s618 = sshll.u32 %s13, 4
          %s619 = int_to_ptr.hbm [resolvable:$true] %s618
          %s620 = sshll.u32 [#allocation15], 4
          %s621 = int_to_ptr.vmem [resolvable:$true] %s620
          %626 = dma.hbm_to_vmem [thread:$0]  %s619, 1024, %s621, [#allocation14], 64, 64, 4
        $region60: #{rwkv_block_forward.1} parent=11 // pred_fallthru
          _
        // Predicated region
        $region61: #{rwkv_block_forward.1} parent=11 // pred_check
          %p627 = pneg %p359
        $region62: #{rwkv_block_forward.1} parent=11 // pred_check_branch
          %629 = sbr.rel (%p627) target = $region64
        $region63: #{rwkv_block_forward.1} parent=11 // pred_region
          %631 = vsyncadd [#allocation17], 0
          %s632 = sshll.u32 %s14, 4
          %s633 = int_to_ptr.hbm [resolvable:$true] %s632
          %s634 = sshll.u32 [#allocation16], 4
          %s635 = int_to_ptr.vmem [resolvable:$true] %s634
          %640 = dma.hbm_to_vmem [thread:$0]  %s633, 1024, %s635, [#allocation17], 64, 64, 4
        $region64: #{rwkv_block_forward.1} parent=11 // pred_fallthru
          _
        // Predicated region
        $region65: #{rwkv_block_forward.1} parent=11 // pred_check
          %p641 = pneg %p380
        $region66: #{rwkv_block_forward.1} parent=11 // pred_check_branch
          %643 = sbr.rel (%p641) target = $region68
        $region67: #{rwkv_block_forward.1} parent=11 // pred_region
          _
        $region68: #{rwkv_block_forward.1} parent=11 // pred_fallthru
          _
        // Predicated region
        $region69: #{rwkv_block_forward.1} parent=11 // pred_check
          %p644 = pneg %p401
        $region70: #{rwkv_block_forward.1} parent=11 // pred_check_branch
          %646 = sbr.rel (%p644) target = $region72
        $region71: #{rwkv_block_forward.1} parent=11 // pred_region
          _
        $region72: #{rwkv_block_forward.1} parent=11 // pred_fallthru
          _
        // Predicated region
        $region73: #{rwkv_block_forward.1} parent=11 // pred_check
          %p647 = pneg %p422
        $region74: #{rwkv_block_forward.1} parent=11 // pred_check_branch
          %649 = sbr.rel (%p647) target = $region76
        $region75: #{rwkv_block_forward.1} parent=11 // pred_region
          _
        $region76: #{rwkv_block_forward.1} parent=11 // pred_fallthru
          _
        // Predicated region
        $region77: #{rwkv_block_forward.1} parent=11 // pred_check
          %p650 = pneg %p443
        $region78: #{rwkv_block_forward.1} parent=11 // pred_check_branch
          %652 = sbr.rel (%p650) target = $region80
        $region79: #{rwkv_block_forward.1} parent=11 // pred_region
          _
        $region80: #{rwkv_block_forward.1} parent=11 // pred_fallthru
          _
        // Predicated region
        $region81: #{rwkv_block_forward.1} parent=11 // pred_check
          %p653 = pneg %p464
        $region82: #{rwkv_block_forward.1} parent=11 // pred_check_branch
          %655 = sbr.rel (%p653) target = $region84
        $region83: #{rwkv_block_forward.1} parent=11 // pred_region
          %657 = vsyncadd [#allocation17], 0
          %s658 = sshll.u32 %s19, 4
          %s659 = int_to_ptr.hbm [resolvable:$true] %s658
          %s660 = sshll.u32 [#allocation18], 4
          %s661 = int_to_ptr.vmem [resolvable:$true] %s660
          %666 = dma.hbm_to_vmem [thread:$0]  %s659, 2048, %s661, [#allocation17], 128, 128, 8
        $region84: #{rwkv_block_forward.1} parent=11 // pred_fallthru
          _
        // Predicated region
        $region85: #{rwkv_block_forward.1} parent=11 // pred_check
          %p667 = pneg %p485
        $region86: #{rwkv_block_forward.1} parent=11 // pred_check_branch
          %669 = sbr.rel (%p667) target = $region88
        $region87: #{rwkv_block_forward.1} parent=11 // pred_region
          %671 = vsyncadd [#allocation20], 0
          %s672 = sshll.u32 %s20, 4
          %s673 = int_to_ptr.hbm [resolvable:$true] %s672
          %s674 = sshll.u32 [#allocation19], 4
          %s675 = int_to_ptr.vmem [resolvable:$true] %s674
          %680 = dma.hbm_to_vmem [thread:$0]  %s673, 1024, %s675, [#allocation20], 64, 64, 4
        $region88: #{rwkv_block_forward.1} parent=11 // pred_fallthru
          _
        // Predicated region
        $region89: #{rwkv_block_forward.1} parent=11 // pred_check
          %p681 = pneg %p506
        $region90: #{rwkv_block_forward.1} parent=11 // pred_check_branch
          %683 = sbr.rel (%p681) target = $region92
        $region91: #{rwkv_block_forward.1} parent=11 // pred_region
          %685 = vsyncadd [#allocation20], 0
          %s686 = sshll.u32 %s21, 4
          %s687 = int_to_ptr.hbm [resolvable:$true] %s686
          %s688 = sshll.u32 [#allocation21], 4
          %s689 = int_to_ptr.vmem [resolvable:$true] %s688
          %694 = dma.hbm_to_vmem [thread:$0]  %s687, 2048, %s689, [#allocation20], 64, 64, 4
        $region92: #{rwkv_block_forward.1} parent=11 // pred_fallthru
          _
      $region12: #{rwkv_block_forward.1} parent=5 // pred_fallthru
        _
      %p695 = scmp.lt.s32.totalorder %s46, 8
      // Predicated region
      $region93: #{rwkv_block_forward.1} parent=5 // pred_check
        %p696 = pneg %p695
      $region94: #{rwkv_block_forward.1} parent=5 // pred_check_branch
        %698 = sbr.rel (%p696) target = $region96
      $region95: #{rwkv_block_forward.1} parent=5 // pred_region
        // Predicated region
        $region97: #{rwkv_block_forward.1} parent=95 // pred_check
          %p699 = pneg %p80
        $region98: #{rwkv_block_forward.1} parent=95 // pred_check_branch
          %701 = sbr.rel (%p699) target = $region100
        $region99: #{rwkv_block_forward.1} parent=95 // pred_region
          %s702 = sand.u32 %s70, 1
          %s703 = scalar_lea.sflag [#allocation8], %s702
          %s704 = sand.u32 %s70, 1
          %s705 = smul.addr %s704, 128
          %s706 = scalar_lea.vmem [#allocation7], %s705
          %s707 = smul.u32 16, %s54
          %709 = vsyncadd %s703, 0
          %s710 = smul.addr %s53, 64
          %s711 = sadd.s32 %s707, %s710
          %s712 = smul.addr %s711, 8
          %s713 = scalar_lea.hbm %s1, %s712
          %s714 = sshll.u32 %s713, 4
          %s715 = int_to_ptr.hbm [resolvable:$true] %s714
          %s716 = sshll.u32 %s706, 4
          %s717 = int_to_ptr.vmem [resolvable:$true] %s716
          %722 = dma.hbm_to_vmem [thread:$0]  %s715, 2048, %s717, %s703, 128, 128, 8
        $region100: #{rwkv_block_forward.1} parent=95 // pred_fallthru
          _
      $region96: #{rwkv_block_forward.1} parent=5 // pred_fallthru
        _
      %p723 = scmp.le.s32.totalorder 1, %s46
      %p724 = scmp.lt.s32.totalorder %s46, 9
      %p725 = pnand %p723, %p724
      %p726 = pneg %p725
      // Predicated region
      $region101: #{rwkv_block_forward.1} parent=5 // pred_check
        _
      $region102: #{rwkv_block_forward.1} parent=5 // pred_check_branch
        %728 = sbr.rel (%p725) target = $region104
      $region103: #{rwkv_block_forward.1} parent=5 // pred_region
        %s729 = ssub.s32 %s46, 1
        %s730 = sand.u32 %s73, 1
        %s731 = scalar_lea.sflag [#allocation8], %s730
        %s732 = sand.u32 %s73, 1
        %s733 = smul.addr %s732, 128
        %s734 = scalar_lea.vmem [#allocation7], %s733
        // Predicated region
        $region105: #{rwkv_block_forward.1} parent=103 // pred_check
          %p735 = pneg %p86
        $region106: #{rwkv_block_forward.1} parent=103 // pred_check_branch
          %737 = sbr.rel (%p735) target = $region108
        $region107: #{rwkv_block_forward.1} parent=103 // pred_region
          %739 = dma.done %s731, 2048
        $region108: #{rwkv_block_forward.1} parent=103 // pred_fallthru
          _
        // Predicated region
        $region109: #{rwkv_block_forward.1} parent=103 // pred_check
          %p740 = pneg %p275
        $region110: #{rwkv_block_forward.1} parent=103 // pred_check_branch
          %742 = sbr.rel (%p740) target = $region112
        $region111: #{rwkv_block_forward.1} parent=103 // pred_region
          %744 = dma.done [#allocation11], 16
        $region112: #{rwkv_block_forward.1} parent=103 // pred_fallthru
          _
        // Predicated region
        $region113: #{rwkv_block_forward.1} parent=103 // pred_check
          %p745 = pneg %p296
        $region114: #{rwkv_block_forward.1} parent=103 // pred_check_branch
          %747 = sbr.rel (%p745) target = $region116
        $region115: #{rwkv_block_forward.1} parent=103 // pred_region
          %749 = dma.done [#allocation11], 1024
        $region116: #{rwkv_block_forward.1} parent=103 // pred_fallthru
          _
        // Predicated region
        $region117: #{rwkv_block_forward.1} parent=103 // pred_check
          %p750 = pneg %p317
        $region118: #{rwkv_block_forward.1} parent=103 // pred_check_branch
          %752 = sbr.rel (%p750) target = $region120
        $region119: #{rwkv_block_forward.1} parent=103 // pred_region
          %754 = dma.done [#allocation14], 1024
        $region120: #{rwkv_block_forward.1} parent=103 // pred_fallthru
          _
        // Predicated region
        $region121: #{rwkv_block_forward.1} parent=103 // pred_check
          %p755 = pneg %p338
        $region122: #{rwkv_block_forward.1} parent=103 // pred_check_branch
          %757 = sbr.rel (%p755) target = $region124
        $region123: #{rwkv_block_forward.1} parent=103 // pred_region
          %759 = dma.done [#allocation14], 1024
        $region124: #{rwkv_block_forward.1} parent=103 // pred_fallthru
          _
        // Predicated region
        $region125: #{rwkv_block_forward.1} parent=103 // pred_check
          %p760 = pneg %p359
        $region126: #{rwkv_block_forward.1} parent=103 // pred_check_branch
          %762 = sbr.rel (%p760) target = $region128
        $region127: #{rwkv_block_forward.1} parent=103 // pred_region
          %764 = dma.done [#allocation17], 1024
        $region128: #{rwkv_block_forward.1} parent=103 // pred_fallthru
          _
        // Predicated region
        $region129: #{rwkv_block_forward.1} parent=103 // pred_check
          %p765 = pneg %p464
        $region130: #{rwkv_block_forward.1} parent=103 // pred_check_branch
          %767 = sbr.rel (%p765) target = $region132
        $region131: #{rwkv_block_forward.1} parent=103 // pred_region
          %769 = dma.done [#allocation17], 2048
        $region132: #{rwkv_block_forward.1} parent=103 // pred_fallthru
          _
        // Predicated region
        $region133: #{rwkv_block_forward.1} parent=103 // pred_check
          %p770 = pneg %p485
        $region134: #{rwkv_block_forward.1} parent=103 // pred_check_branch
          %772 = sbr.rel (%p770) target = $region136
        $region135: #{rwkv_block_forward.1} parent=103 // pred_region
          %774 = dma.done [#allocation20], 1024
        $region136: #{rwkv_block_forward.1} parent=103 // pred_fallthru
          _
        // Predicated region
        $region137: #{rwkv_block_forward.1} parent=103 // pred_check
          %p775 = pneg %p506
        $region138: #{rwkv_block_forward.1} parent=103 // pred_check_branch
          %777 = sbr.rel (%p775) target = $region140
        $region139: #{rwkv_block_forward.1} parent=103 // pred_region
          %779 = dma.done [#allocation20], 2048
        $region140: #{rwkv_block_forward.1} parent=103 // pred_fallthru
          _
        %s780 = sand.u32 %s73, 1
        %s781 = scalar_lea.sflag [#allocation8], %s780
        %s782 = sand.u32 %s73, 1
        %s783 = smul.addr %s782, 128
        %s784 = scalar_lea.vmem [#allocation7], %s783
        %p785 = pneg %p86
        %p786 = pneg %p83
        %p787 = pneg %p107
        %p788 = pneg %p104
        %p789 = pneg %p128
        %p790 = pneg %p125
        %p791 = pneg %p149
        %p792 = pneg %p146
        %p793 = pneg %p170
        %p794 = pneg %p167
        %p795 = pneg %p191
        %p796 = pneg %p188
        %p797 = pneg %p212
        %p798 = pneg %p209
        %p799 = pneg %p233
        %p800 = pneg %p230
        %p801 = pneg %p254
        %p802 = pneg %p251
        %p803 = pneg %p275
        %p804 = pneg %p272
        %p805 = pneg %p296
        %p806 = pneg %p293
        %p807 = pneg %p317
        %p808 = pneg %p314
        %p809 = pneg %p338
        %p810 = pneg %p335
        %p811 = pneg %p359
        %p812 = pneg %p356
        %p813 = pneg %p380
        %p814 = pneg %p377
        %p815 = pneg %p401
        %p816 = pneg %p398
        %p817 = pneg %p422
        %p818 = pneg %p419
        %p819 = pneg %p443
        %p820 = pneg %p440
        %p821 = pneg %p464
        %p822 = pneg %p461
        %p823 = pneg %p485
        %p824 = pneg %p482
        %p825 = pneg %p506
        %p826 = pneg %p503
        %p827 = pneg %p534
        %p828 = pneg %p531
        %s829 = sand.u32 %s521, 1
        %s830 = scalar_lea.sflag [#allocation9], %s829
        %s831 = sand.u32 %s521, 1
        %s832 = smul.addr %s831, 128
        %s833 = scalar_lea.vmem [#allocation22], %s832
        %s834 = smul.u32 16, %s56
        %s835 = smul.u32 16, %s56
        %p837 = scmp.eq.s32.totalorder %s56, 0
        // Predicated region
        $region141: #{rwkv_block_forward.1} parent=103 // pred_check
          %p838 = pneg %p837
        $region142: #{rwkv_block_forward.1} parent=103 // pred_check_branch
          %840 = sbr.rel (%p838) target = $region144
        $region143: #{rwkv_block_forward.1} parent=103 // pred_region
          %vm841 = vcmask 523264
          %842 = vst.msk [vmem:[#allocation2] sm:$0xff] %vm841, 0.0
          %843 = vst.msk [vmem:[#allocation2 + $0x8] sm:$0xff] %vm841, 0.0
          %844 = vst.msk [vmem:[#allocation2 + $0x10] sm:$0xff] %vm841, 0.0
          %845 = vst.msk [vmem:[#allocation2 + $0x18] sm:$0xff] %vm841, 0.0
          %846 = vst.msk [vmem:[#allocation2 + $0x20] sm:$0xff] %vm841, 0.0
          %847 = vst.msk [vmem:[#allocation2 + $0x28] sm:$0xff] %vm841, 0.0
          %848 = vst.msk [vmem:[#allocation2 + $0x30] sm:$0xff] %vm841, 0.0
          %849 = vst.msk [vmem:[#allocation2 + $0x38] sm:$0xff] %vm841, 0.0
          %850 = vst.msk [vmem:[#allocation2 + $0x40] sm:$0xff] %vm841, 0.0
          %851 = vst.msk [vmem:[#allocation2 + $0x48] sm:$0xff] %vm841, 0.0
          %852 = vst.msk [vmem:[#allocation2 + $0x50] sm:$0xff] %vm841, 0.0
          %853 = vst.msk [vmem:[#allocation2 + $0x58] sm:$0xff] %vm841, 0.0
          %854 = vst.msk [vmem:[#allocation2 + $0x60] sm:$0xff] %vm841, 0.0
          %855 = vst.msk [vmem:[#allocation2 + $0x68] sm:$0xff] %vm841, 0.0
          %856 = vst.msk [vmem:[#allocation2 + $0x70] sm:$0xff] %vm841, 0.0
          %857 = vst.msk [vmem:[#allocation2 + $0x78] sm:$0xff] %vm841, 0.0
          %858 = vst [vmem:[#allocation3] sm:$0x1] 0.0
          %859 = vst [vmem:[#allocation4] sm:$0x1] 0.0
        $region144: #{rwkv_block_forward.1} parent=103 // pred_fallthru
          _
        %v860 = vld [vmem:[%s734] sm:$0xff]
        %v861 = vld [vmem:[%s734 + $0x8] sm:$0xff]
        %v862 = vld [vmem:[%s734 + $0x10] sm:$0xff]
        %v863 = vld [vmem:[%s734 + $0x18] sm:$0xff]
        %v864 = vld [vmem:[%s734 + $0x20] sm:$0xff]
        %v865 = vld [vmem:[%s734 + $0x28] sm:$0xff]
        %v866 = vld [vmem:[%s734 + $0x30] sm:$0xff]
        %v867 = vld [vmem:[%s734 + $0x38] sm:$0xff]
        %v868 = vld [vmem:[%s734 + $0x40] sm:$0xff]
        %v869 = vld [vmem:[%s734 + $0x48] sm:$0xff]
        %v870 = vld [vmem:[%s734 + $0x50] sm:$0xff]
        %v871 = vld [vmem:[%s734 + $0x58] sm:$0xff]
        %v872 = vld [vmem:[%s734 + $0x60] sm:$0xff]
        %v873 = vld [vmem:[%s734 + $0x68] sm:$0xff]
        %v874 = vld [vmem:[%s734 + $0x70] sm:$0xff]
        %v875 = vld [vmem:[%s734 + $0x78] sm:$0xff]
        %v876 = vld [vmem:[%s2] sm:$0x1]
        %v877 = vld [vmem:[%s3] sm:$0x1]
        %878 = vadd.xlane.f32.xlu0 %v860
        %v879 = vpop.xlane.xlu0 %878
        %880 = vadd.xlane.f32.xlu0 %v861
        %v881 = vpop.xlane.xlu0 %880
        %882 = vadd.xlane.f32.xlu0 %v862
        %v883 = vpop.xlane.xlu0 %882
        %884 = vadd.xlane.f32.xlu0 %v863
        %v885 = vpop.xlane.xlu0 %884
        %886 = vadd.xlane.f32.xlu0 %v864
        %v887 = vpop.xlane.xlu0 %886
        %888 = vadd.xlane.f32.xlu0 %v865
        %v889 = vpop.xlane.xlu0 %888
        %890 = vadd.xlane.f32.xlu0 %v866
        %v891 = vpop.xlane.xlu0 %890
        %892 = vadd.xlane.f32.xlu0 %v867
        %v893 = vpop.xlane.xlu0 %892
        %894 = vadd.xlane.f32.xlu0 %v868
        %v895 = vpop.xlane.xlu0 %894
        %896 = vadd.xlane.f32.xlu0 %v869
        %v897 = vpop.xlane.xlu0 %896
        %898 = vadd.xlane.f32.xlu0 %v870
        %v899 = vpop.xlane.xlu0 %898
        %900 = vadd.xlane.f32.xlu0 %v871
        %v901 = vpop.xlane.xlu0 %900
        %902 = vadd.xlane.f32.xlu0 %v872
        %v903 = vpop.xlane.xlu0 %902
        %904 = vadd.xlane.f32.xlu0 %v873
        %v905 = vpop.xlane.xlu0 %904
        %906 = vadd.xlane.f32.xlu0 %v874
        %v907 = vpop.xlane.xlu0 %906
        %908 = vadd.xlane.f32.xlu0 %v875
        %v909 = vpop.xlane.xlu0 %908
        %v910 = vrcp.pop 128.0
        %v911 = vmul.f32 128.0, %v910
        %v912 = vsub.f32 1.0, %v911
        %v913 = vmul.f32 %v910, %v912
        %v914 = vadd.f32 %v910, %v913
        %vm915 = vweird.f32 %v910
        %v916 = vsel %vm915, %v910, %v914
        %v917 = vmul.f32 %v879, %v916
        %v918 = vmul.f32 %v881, %v916
        %v919 = vmul.f32 %v883, %v916
        %v920 = vmul.f32 %v885, %v916
        %v921 = vmul.f32 %v887, %v916
        %v922 = vmul.f32 %v889, %v916
        %v923 = vmul.f32 %v891, %v916
        %v924 = vmul.f32 %v893, %v916
        %v925 = vmul.f32 %v895, %v916
        %v926 = vmul.f32 %v897, %v916
        %v927 = vmul.f32 %v899, %v916
        %v928 = vmul.f32 %v901, %v916
        %v929 = vmul.f32 %v903, %v916
        %v930 = vmul.f32 %v905, %v916
        %v931 = vmul.f32 %v907, %v916
        %v932 = vmul.f32 %v909, %v916
        %v933 = vsub.f32 %v860, %v917
        %v934 = vsub.f32 %v861, %v918
        %v935 = vsub.f32 %v862, %v919
        %v936 = vsub.f32 %v863, %v920
        %v937 = vsub.f32 %v864, %v921
        %v938 = vsub.f32 %v865, %v922
        %v939 = vsub.f32 %v866, %v923
        %v940 = vsub.f32 %v867, %v924
        %v941 = vsub.f32 %v868, %v925
        %v942 = vsub.f32 %v869, %v926
        %v943 = vsub.f32 %v870, %v927
        %v944 = vsub.f32 %v871, %v928
        %v945 = vsub.f32 %v872, %v929
        %v946 = vsub.f32 %v873, %v930
        %v947 = vsub.f32 %v874, %v931
        %v948 = vsub.f32 %v875, %v932
        %v949 = vmul.f32 %v933, %v933
        %v950 = vmul.f32 %v934, %v934
        %v951 = vmul.f32 %v935, %v935
        %v952 = vmul.f32 %v936, %v936
        %v953 = vmul.f32 %v937, %v937
        %v954 = vmul.f32 %v938, %v938
        %v955 = vmul.f32 %v939, %v939
        %v956 = vmul.f32 %v940, %v940
        %v957 = vmul.f32 %v941, %v941
        %v958 = vmul.f32 %v942, %v942
        %v959 = vmul.f32 %v943, %v943
        %v960 = vmul.f32 %v944, %v944
        %v961 = vmul.f32 %v945, %v945
        %v962 = vmul.f32 %v946, %v946
        %v963 = vmul.f32 %v947, %v947
        %v964 = vmul.f32 %v948, %v948
        %965 = vadd.xlane.f32.xlu0 %v949
        %v966 = vpop.xlane.xlu0 %965
        %967 = vadd.xlane.f32.xlu0 %v950
        %v968 = vpop.xlane.xlu0 %967
        %969 = vadd.xlane.f32.xlu0 %v951
        %v970 = vpop.xlane.xlu0 %969
        %971 = vadd.xlane.f32.xlu0 %v952
        %v972 = vpop.xlane.xlu0 %971
        %973 = vadd.xlane.f32.xlu0 %v953
        %v974 = vpop.xlane.xlu0 %973
        %975 = vadd.xlane.f32.xlu0 %v954
        %v976 = vpop.xlane.xlu0 %975
        %977 = vadd.xlane.f32.xlu0 %v955
        %v978 = vpop.xlane.xlu0 %977
        %979 = vadd.xlane.f32.xlu0 %v956
        %v980 = vpop.xlane.xlu0 %979
        %981 = vadd.xlane.f32.xlu0 %v957
        %v982 = vpop.xlane.xlu0 %981
        %983 = vadd.xlane.f32.xlu0 %v958
        %v984 = vpop.xlane.xlu0 %983
        %985 = vadd.xlane.f32.xlu0 %v959
        %v986 = vpop.xlane.xlu0 %985
        %987 = vadd.xlane.f32.xlu0 %v960
        %v988 = vpop.xlane.xlu0 %987
        %989 = vadd.xlane.f32.xlu0 %v961
        %v990 = vpop.xlane.xlu0 %989
        %991 = vadd.xlane.f32.xlu0 %v962
        %v992 = vpop.xlane.xlu0 %991
        %993 = vadd.xlane.f32.xlu0 %v963
        %v994 = vpop.xlane.xlu0 %993
        %995 = vadd.xlane.f32.xlu0 %v964
        %v996 = vpop.xlane.xlu0 %995
        %v997 = vmul.f32 %v966, %v916
        %v998 = vmul.f32 %v968, %v916
        %v999 = vmul.f32 %v970, %v916
        %v1000 = vmul.f32 %v972, %v916
        %v1001 = vmul.f32 %v974, %v916
        %v1002 = vmul.f32 %v976, %v916
        %v1003 = vmul.f32 %v978, %v916
        %v1004 = vmul.f32 %v980, %v916
        %v1005 = vmul.f32 %v982, %v916
        %v1006 = vmul.f32 %v984, %v916
        %v1007 = vmul.f32 %v986, %v916
        %v1008 = vmul.f32 %v988, %v916
        %v1009 = vmul.f32 %v990, %v916
        %v1010 = vmul.f32 %v992, %v916
        %v1011 = vmul.f32 %v994, %v916
        %v1012 = vmul.f32 %v996, %v916
        %v1013 = vadd.f32 %v997, 1e-05
        %v1014 = vadd.f32 %v998, 1e-05
        %v1015 = vadd.f32 %v999, 1e-05
        %v1016 = vadd.f32 %v1000, 1e-05
        %v1017 = vadd.f32 %v1001, 1e-05
        %v1018 = vadd.f32 %v1002, 1e-05
        %v1019 = vadd.f32 %v1003, 1e-05
        %v1020 = vadd.f32 %v1004, 1e-05
        %v1021 = vadd.f32 %v1005, 1e-05
        %v1022 = vadd.f32 %v1006, 1e-05
        %v1023 = vadd.f32 %v1007, 1e-05
        %v1024 = vadd.f32 %v1008, 1e-05
        %v1025 = vadd.f32 %v1009, 1e-05
        %v1026 = vadd.f32 %v1010, 1e-05
        %v1027 = vadd.f32 %v1011, 1e-05
        %v1028 = vadd.f32 %v1012, 1e-05
        %v1029 = vrsqrt.pop %v1013
        %v1030 = vmul.f32 %v1029, %v1013
        %v1031 = vmul.f32 %v1030, %v1029
        %v1032 = vmul.f32 0.5, %v1031
        %v1033 = vsub.f32 1.5, %v1032
        %v1034 = vmul.f32 %v1029, %v1033
        %vm1035 = vweird.f32 %v1013
        %vm1036 = vweird.f32 %v1029
        %vm1037 = vmor %vm1035, %vm1036
        %v1038 = vsel %vm1037, %v1029, %v1034
        %v1039 = vrsqrt.pop %v1014
        %v1040 = vmul.f32 %v1039, %v1014
        %v1041 = vmul.f32 %v1040, %v1039
        %v1042 = vmul.f32 0.5, %v1041
        %v1043 = vsub.f32 1.5, %v1042
        %v1044 = vmul.f32 %v1039, %v1043
        %vm1045 = vweird.f32 %v1014
        %vm1046 = vweird.f32 %v1039
        %vm1047 = vmor %vm1045, %vm1046
        %v1048 = vsel %vm1047, %v1039, %v1044
        %v1049 = vrsqrt.pop %v1015
        %v1050 = vmul.f32 %v1049, %v1015
        %v1051 = vmul.f32 %v1050, %v1049
        %v1052 = vmul.f32 0.5, %v1051
        %v1053 = vsub.f32 1.5, %v1052
        %v1054 = vmul.f32 %v1049, %v1053
        %vm1055 = vweird.f32 %v1015
        %vm1056 = vweird.f32 %v1049
        %vm1057 = vmor %vm1055, %vm1056
        %v1058 = vsel %vm1057, %v1049, %v1054
        %v1059 = vrsqrt.pop %v1016
        %v1060 = vmul.f32 %v1059, %v1016
        %v1061 = vmul.f32 %v1060, %v1059
        %v1062 = vmul.f32 0.5, %v1061
        %v1063 = vsub.f32 1.5, %v1062
        %v1064 = vmul.f32 %v1059, %v1063
        %vm1065 = vweird.f32 %v1016
        %vm1066 = vweird.f32 %v1059
        %vm1067 = vmor %vm1065, %vm1066
        %v1068 = vsel %vm1067, %v1059, %v1064
        %v1069 = vrsqrt.pop %v1017
        %v1070 = vmul.f32 %v1069, %v1017
        %v1071 = vmul.f32 %v1070, %v1069
        %v1072 = vmul.f32 0.5, %v1071
        %v1073 = vsub.f32 1.5, %v1072
        %v1074 = vmul.f32 %v1069, %v1073
        %vm1075 = vweird.f32 %v1017
        %vm1076 = vweird.f32 %v1069
        %vm1077 = vmor %vm1075, %vm1076
        %v1078 = vsel %vm1077, %v1069, %v1074
        %v1079 = vrsqrt.pop %v1018
        %v1080 = vmul.f32 %v1079, %v1018
        %v1081 = vmul.f32 %v1080, %v1079
        %v1082 = vmul.f32 0.5, %v1081
        %v1083 = vsub.f32 1.5, %v1082
        %v1084 = vmul.f32 %v1079, %v1083
        %vm1085 = vweird.f32 %v1018
        %vm1086 = vweird.f32 %v1079
        %vm1087 = vmor %vm1085, %vm1086
        %v1088 = vsel %vm1087, %v1079, %v1084
        %v1089 = vrsqrt.pop %v1019
        %v1090 = vmul.f32 %v1089, %v1019
        %v1091 = vmul.f32 %v1090, %v1089
        %v1092 = vmul.f32 0.5, %v1091
        %v1093 = vsub.f32 1.5, %v1092
        %v1094 = vmul.f32 %v1089, %v1093
        %vm1095 = vweird.f32 %v1019
        %vm1096 = vweird.f32 %v1089
        %vm1097 = vmor %vm1095, %vm1096
        %v1098 = vsel %vm1097, %v1089, %v1094
        %v1099 = vrsqrt.pop %v1020
        %v1100 = vmul.f32 %v1099, %v1020
        %v1101 = vmul.f32 %v1100, %v1099
        %v1102 = vmul.f32 0.5, %v1101
        %v1103 = vsub.f32 1.5, %v1102
        %v1104 = vmul.f32 %v1099, %v1103
        %vm1105 = vweird.f32 %v1020
        %vm1106 = vweird.f32 %v1099
        %vm1107 = vmor %vm1105, %vm1106
        %v1108 = vsel %vm1107, %v1099, %v1104
        %v1109 = vrsqrt.pop %v1021
        %v1110 = vmul.f32 %v1109, %v1021
        %v1111 = vmul.f32 %v1110, %v1109
        %v1112 = vmul.f32 0.5, %v1111
        %v1113 = vsub.f32 1.5, %v1112
        %v1114 = vmul.f32 %v1109, %v1113
        %vm1115 = vweird.f32 %v1021
        %vm1116 = vweird.f32 %v1109
        %vm1117 = vmor %vm1115, %vm1116
        %v1118 = vsel %vm1117, %v1109, %v1114
        %v1119 = vrsqrt.pop %v1022
        %v1120 = vmul.f32 %v1119, %v1022
        %v1121 = vmul.f32 %v1120, %v1119
        %v1122 = vmul.f32 0.5, %v1121
        %v1123 = vsub.f32 1.5, %v1122
        %v1124 = vmul.f32 %v1119, %v1123
        %vm1125 = vweird.f32 %v1022
        %vm1126 = vweird.f32 %v1119
        %vm1127 = vmor %vm1125, %vm1126
        %v1128 = vsel %vm1127, %v1119, %v1124
        %v1129 = vrsqrt.pop %v1023
        %v1130 = vmul.f32 %v1129, %v1023
        %v1131 = vmul.f32 %v1130, %v1129
        %v1132 = vmul.f32 0.5, %v1131
        %v1133 = vsub.f32 1.5, %v1132
        %v1134 = vmul.f32 %v1129, %v1133
        %vm1135 = vweird.f32 %v1023
        %vm1136 = vweird.f32 %v1129
        %vm1137 = vmor %vm1135, %vm1136
        %v1138 = vsel %vm1137, %v1129, %v1134
        %v1139 = vrsqrt.pop %v1024
        %v1140 = vmul.f32 %v1139, %v1024
        %v1141 = vmul.f32 %v1140, %v1139
        %v1142 = vmul.f32 0.5, %v1141
        %v1143 = vsub.f32 1.5, %v1142
        %v1144 = vmul.f32 %v1139, %v1143
        %vm1145 = vweird.f32 %v1024
        %vm1146 = vweird.f32 %v1139
        %vm1147 = vmor %vm1145, %vm1146
        %v1148 = vsel %vm1147, %v1139, %v1144
        %v1149 = vrsqrt.pop %v1025
        %v1150 = vmul.f32 %v1149, %v1025
        %v1151 = vmul.f32 %v1150, %v1149
        %v1152 = vmul.f32 0.5, %v1151
        %v1153 = vsub.f32 1.5, %v1152
        %v1154 = vmul.f32 %v1149, %v1153
        %vm1155 = vweird.f32 %v1025
        %vm1156 = vweird.f32 %v1149
        %vm1157 = vmor %vm1155, %vm1156
        %v1158 = vsel %vm1157, %v1149, %v1154
        %v1159 = vrsqrt.pop %v1026
        %v1160 = vmul.f32 %v1159, %v1026
        %v1161 = vmul.f32 %v1160, %v1159
        %v1162 = vmul.f32 0.5, %v1161
        %v1163 = vsub.f32 1.5, %v1162
        %v1164 = vmul.f32 %v1159, %v1163
        %vm1165 = vweird.f32 %v1026
        %vm1166 = vweird.f32 %v1159
        %vm1167 = vmor %vm1165, %vm1166
        %v1168 = vsel %vm1167, %v1159, %v1164
        %v1169 = vrsqrt.pop %v1027
        %v1170 = vmul.f32 %v1169, %v1027
        %v1171 = vmul.f32 %v1170, %v1169
        %v1172 = vmul.f32 0.5, %v1171
        %v1173 = vsub.f32 1.5, %v1172
        %v1174 = vmul.f32 %v1169, %v1173
        %vm1175 = vweird.f32 %v1027
        %vm1176 = vweird.f32 %v1169
        %vm1177 = vmor %vm1175, %vm1176
        %v1178 = vsel %vm1177, %v1169, %v1174
        %v1179 = vrsqrt.pop %v1028
        %v1180 = vmul.f32 %v1179, %v1028
        %v1181 = vmul.f32 %v1180, %v1179
        %v1182 = vmul.f32 0.5, %v1181
        %v1183 = vsub.f32 1.5, %v1182
        %v1184 = vmul.f32 %v1179, %v1183
        %vm1185 = vweird.f32 %v1028
        %vm1186 = vweird.f32 %v1179
        %vm1187 = vmor %vm1185, %vm1186
        %v1188 = vsel %vm1187, %v1179, %v1184
        %v1189 = vmul.f32 %v933, %v1038
        %v1190 = vmul.f32 %v934, %v1048
        %v1191 = vmul.f32 %v935, %v1058
        %v1192 = vmul.f32 %v936, %v1068
        %v1193 = vmul.f32 %v937, %v1078
        %v1194 = vmul.f32 %v938, %v1088
        %v1195 = vmul.f32 %v939, %v1098
        %v1196 = vmul.f32 %v940, %v1108
        %v1197 = vmul.f32 %v941, %v1118
        %v1198 = vmul.f32 %v942, %v1128
        %v1199 = vmul.f32 %v943, %v1138
        %v1200 = vmul.f32 %v944, %v1148
        %v1201 = vmul.f32 %v945, %v1158
        %v1202 = vmul.f32 %v946, %v1168
        %v1203 = vmul.f32 %v947, %v1178
        %v1204 = vmul.f32 %v948, %v1188
        %v1206 = vperm.slane %v876, 0
        %v1208 = vmul.f32 %v1189, %v1206
        %v1209 = vmul.f32 %v1190, %v1206
        %v1210 = vmul.f32 %v1191, %v1206
        %v1211 = vmul.f32 %v1192, %v1206
        %v1212 = vmul.f32 %v1193, %v1206
        %v1213 = vmul.f32 %v1194, %v1206
        %v1214 = vmul.f32 %v1195, %v1206
        %v1215 = vmul.f32 %v1196, %v1206
        %v1216 = vmul.f32 %v1197, %v1206
        %v1217 = vmul.f32 %v1198, %v1206
        %v1218 = vmul.f32 %v1199, %v1206
        %v1219 = vmul.f32 %v1200, %v1206
        %v1220 = vmul.f32 %v1201, %v1206
        %v1221 = vmul.f32 %v1202, %v1206
        %v1222 = vmul.f32 %v1203, %v1206
        %v1223 = vmul.f32 %v1204, %v1206
        %v1225 = vperm.slane %v877, 0
        %v1227 = vadd.f32 %v1208, %v1225
        %v1228 = vadd.f32 %v1209, %v1225
        %v1229 = vadd.f32 %v1210, %v1225
        %v1230 = vadd.f32 %v1211, %v1225
        %v1231 = vadd.f32 %v1212, %v1225
        %v1232 = vadd.f32 %v1213, %v1225
        %v1233 = vadd.f32 %v1214, %v1225
        %v1234 = vadd.f32 %v1215, %v1225
        %v1235 = vadd.f32 %v1216, %v1225
        %v1236 = vadd.f32 %v1217, %v1225
        %v1237 = vadd.f32 %v1218, %v1225
        %v1238 = vadd.f32 %v1219, %v1225
        %v1239 = vadd.f32 %v1220, %v1225
        %v1240 = vadd.f32 %v1221, %v1225
        %v1241 = vadd.f32 %v1222, %v1225
        %v1242 = vadd.f32 %v1223, %v1225
        %v1243 = vld [vmem:[%s4] sm:$0x1]
        %v1244 = vld [vmem:[%s5] sm:$0x1]
        %1245 = vadd.xlane.f32.xlu0 %v1227
        %v1246 = vpop.xlane.xlu0 %1245
        %1247 = vadd.xlane.f32.xlu0 %v1228
        %v1248 = vpop.xlane.xlu0 %1247
        %1249 = vadd.xlane.f32.xlu0 %v1229
        %v1250 = vpop.xlane.xlu0 %1249
        %1251 = vadd.xlane.f32.xlu0 %v1230
        %v1252 = vpop.xlane.xlu0 %1251
        %1253 = vadd.xlane.f32.xlu0 %v1231
        %v1254 = vpop.xlane.xlu0 %1253
        %1255 = vadd.xlane.f32.xlu0 %v1232
        %v1256 = vpop.xlane.xlu0 %1255
        %1257 = vadd.xlane.f32.xlu0 %v1233
        %v1258 = vpop.xlane.xlu0 %1257
        %1259 = vadd.xlane.f32.xlu0 %v1234
        %v1260 = vpop.xlane.xlu0 %1259
        %1261 = vadd.xlane.f32.xlu0 %v1235
        %v1262 = vpop.xlane.xlu0 %1261
        %1263 = vadd.xlane.f32.xlu0 %v1236
        %v1264 = vpop.xlane.xlu0 %1263
        %1265 = vadd.xlane.f32.xlu0 %v1237
        %v1266 = vpop.xlane.xlu0 %1265
        %1267 = vadd.xlane.f32.xlu0 %v1238
        %v1268 = vpop.xlane.xlu0 %1267
        %1269 = vadd.xlane.f32.xlu0 %v1239
        %v1270 = vpop.xlane.xlu0 %1269
        %1271 = vadd.xlane.f32.xlu0 %v1240
        %v1272 = vpop.xlane.xlu0 %1271
        %1273 = vadd.xlane.f32.xlu0 %v1241
        %v1274 = vpop.xlane.xlu0 %1273
        %1275 = vadd.xlane.f32.xlu0 %v1242
        %v1276 = vpop.xlane.xlu0 %1275
        %v1277 = vmul.f32 %v1246, %v916
        %v1278 = vmul.f32 %v1248, %v916
        %v1279 = vmul.f32 %v1250, %v916
        %v1280 = vmul.f32 %v1252, %v916
        %v1281 = vmul.f32 %v1254, %v916
        %v1282 = vmul.f32 %v1256, %v916
        %v1283 = vmul.f32 %v1258, %v916
        %v1284 = vmul.f32 %v1260, %v916
        %v1285 = vmul.f32 %v1262, %v916
        %v1286 = vmul.f32 %v1264, %v916
        %v1287 = vmul.f32 %v1266, %v916
        %v1288 = vmul.f32 %v1268, %v916
        %v1289 = vmul.f32 %v1270, %v916
        %v1290 = vmul.f32 %v1272, %v916
        %v1291 = vmul.f32 %v1274, %v916
        %v1292 = vmul.f32 %v1276, %v916
        %v1293 = vsub.f32 %v1227, %v1277
        %v1294 = vsub.f32 %v1228, %v1278
        %v1295 = vsub.f32 %v1229, %v1279
        %v1296 = vsub.f32 %v1230, %v1280
        %v1297 = vsub.f32 %v1231, %v1281
        %v1298 = vsub.f32 %v1232, %v1282
        %v1299 = vsub.f32 %v1233, %v1283
        %v1300 = vsub.f32 %v1234, %v1284
        %v1301 = vsub.f32 %v1235, %v1285
        %v1302 = vsub.f32 %v1236, %v1286
        %v1303 = vsub.f32 %v1237, %v1287
        %v1304 = vsub.f32 %v1238, %v1288
        %v1305 = vsub.f32 %v1239, %v1289
        %v1306 = vsub.f32 %v1240, %v1290
        %v1307 = vsub.f32 %v1241, %v1291
        %v1308 = vsub.f32 %v1242, %v1292
        %v1309 = vmul.f32 %v1293, %v1293
        %v1310 = vmul.f32 %v1294, %v1294
        %v1311 = vmul.f32 %v1295, %v1295
        %v1312 = vmul.f32 %v1296, %v1296
        %v1313 = vmul.f32 %v1297, %v1297
        %v1314 = vmul.f32 %v1298, %v1298
        %v1315 = vmul.f32 %v1299, %v1299
        %v1316 = vmul.f32 %v1300, %v1300
        %v1317 = vmul.f32 %v1301, %v1301
        %v1318 = vmul.f32 %v1302, %v1302
        %v1319 = vmul.f32 %v1303, %v1303
        %v1320 = vmul.f32 %v1304, %v1304
        %v1321 = vmul.f32 %v1305, %v1305
        %v1322 = vmul.f32 %v1306, %v1306
        %v1323 = vmul.f32 %v1307, %v1307
        %v1324 = vmul.f32 %v1308, %v1308
        %1325 = vadd.xlane.f32.xlu0 %v1309
        %v1326 = vpop.xlane.xlu0 %1325
        %1327 = vadd.xlane.f32.xlu0 %v1310
        %v1328 = vpop.xlane.xlu0 %1327
        %1329 = vadd.xlane.f32.xlu0 %v1311
        %v1330 = vpop.xlane.xlu0 %1329
        %1331 = vadd.xlane.f32.xlu0 %v1312
        %v1332 = vpop.xlane.xlu0 %1331
        %1333 = vadd.xlane.f32.xlu0 %v1313
        %v1334 = vpop.xlane.xlu0 %1333
        %1335 = vadd.xlane.f32.xlu0 %v1314
        %v1336 = vpop.xlane.xlu0 %1335
        %1337 = vadd.xlane.f32.xlu0 %v1315
        %v1338 = vpop.xlane.xlu0 %1337
        %1339 = vadd.xlane.f32.xlu0 %v1316
        %v1340 = vpop.xlane.xlu0 %1339
        %1341 = vadd.xlane.f32.xlu0 %v1317
        %v1342 = vpop.xlane.xlu0 %1341
        %1343 = vadd.xlane.f32.xlu0 %v1318
        %v1344 = vpop.xlane.xlu0 %1343
        %1345 = vadd.xlane.f32.xlu0 %v1319
        %v1346 = vpop.xlane.xlu0 %1345
        %1347 = vadd.xlane.f32.xlu0 %v1320
        %v1348 = vpop.xlane.xlu0 %1347
        %1349 = vadd.xlane.f32.xlu0 %v1321
        %v1350 = vpop.xlane.xlu0 %1349
        %1351 = vadd.xlane.f32.xlu0 %v1322
        %v1352 = vpop.xlane.xlu0 %1351
        %1353 = vadd.xlane.f32.xlu0 %v1323
        %v1354 = vpop.xlane.xlu0 %1353
        %1355 = vadd.xlane.f32.xlu0 %v1324
        %v1356 = vpop.xlane.xlu0 %1355
        %v1357 = vmul.f32 %v1326, %v916
        %v1358 = vmul.f32 %v1328, %v916
        %v1359 = vmul.f32 %v1330, %v916
        %v1360 = vmul.f32 %v1332, %v916
        %v1361 = vmul.f32 %v1334, %v916
        %v1362 = vmul.f32 %v1336, %v916
        %v1363 = vmul.f32 %v1338, %v916
        %v1364 = vmul.f32 %v1340, %v916
        %v1365 = vmul.f32 %v1342, %v916
        %v1366 = vmul.f32 %v1344, %v916
        %v1367 = vmul.f32 %v1346, %v916
        %v1368 = vmul.f32 %v1348, %v916
        %v1369 = vmul.f32 %v1350, %v916
        %v1370 = vmul.f32 %v1352, %v916
        %v1371 = vmul.f32 %v1354, %v916
        %v1372 = vmul.f32 %v1356, %v916
        %v1373 = vadd.f32 %v1357, 1e-05
        %v1374 = vadd.f32 %v1358, 1e-05
        %v1375 = vadd.f32 %v1359, 1e-05
        %v1376 = vadd.f32 %v1360, 1e-05
        %v1377 = vadd.f32 %v1361, 1e-05
        %v1378 = vadd.f32 %v1362, 1e-05
        %v1379 = vadd.f32 %v1363, 1e-05
        %v1380 = vadd.f32 %v1364, 1e-05
        %v1381 = vadd.f32 %v1365, 1e-05
        %v1382 = vadd.f32 %v1366, 1e-05
        %v1383 = vadd.f32 %v1367, 1e-05
        %v1384 = vadd.f32 %v1368, 1e-05
        %v1385 = vadd.f32 %v1369, 1e-05
        %v1386 = vadd.f32 %v1370, 1e-05
        %v1387 = vadd.f32 %v1371, 1e-05
        %v1388 = vadd.f32 %v1372, 1e-05
        %v1389 = vrsqrt.pop %v1373
        %v1390 = vmul.f32 %v1389, %v1373
        %v1391 = vmul.f32 %v1390, %v1389
        %v1392 = vmul.f32 0.5, %v1391
        %v1393 = vsub.f32 1.5, %v1392
        %v1394 = vmul.f32 %v1389, %v1393
        %vm1395 = vweird.f32 %v1373
        %vm1396 = vweird.f32 %v1389
        %vm1397 = vmor %vm1395, %vm1396
        %v1398 = vsel %vm1397, %v1389, %v1394
        %v1399 = vrsqrt.pop %v1374
        %v1400 = vmul.f32 %v1399, %v1374
        %v1401 = vmul.f32 %v1400, %v1399
        %v1402 = vmul.f32 0.5, %v1401
        %v1403 = vsub.f32 1.5, %v1402
        %v1404 = vmul.f32 %v1399, %v1403
        %vm1405 = vweird.f32 %v1374
        %vm1406 = vweird.f32 %v1399
        %vm1407 = vmor %vm1405, %vm1406
        %v1408 = vsel %vm1407, %v1399, %v1404
        %v1409 = vrsqrt.pop %v1375
        %v1410 = vmul.f32 %v1409, %v1375
        %v1411 = vmul.f32 %v1410, %v1409
        %v1412 = vmul.f32 0.5, %v1411
        %v1413 = vsub.f32 1.5, %v1412
        %v1414 = vmul.f32 %v1409, %v1413
        %vm1415 = vweird.f32 %v1375
        %vm1416 = vweird.f32 %v1409
        %vm1417 = vmor %vm1415, %vm1416
        %v1418 = vsel %vm1417, %v1409, %v1414
        %v1419 = vrsqrt.pop %v1376
        %v1420 = vmul.f32 %v1419, %v1376
        %v1421 = vmul.f32 %v1420, %v1419
        %v1422 = vmul.f32 0.5, %v1421
        %v1423 = vsub.f32 1.5, %v1422
        %v1424 = vmul.f32 %v1419, %v1423
        %vm1425 = vweird.f32 %v1376
        %vm1426 = vweird.f32 %v1419
        %vm1427 = vmor %vm1425, %vm1426
        %v1428 = vsel %vm1427, %v1419, %v1424
        %v1429 = vrsqrt.pop %v1377
        %v1430 = vmul.f32 %v1429, %v1377
        %v1431 = vmul.f32 %v1430, %v1429
        %v1432 = vmul.f32 0.5, %v1431
        %v1433 = vsub.f32 1.5, %v1432
        %v1434 = vmul.f32 %v1429, %v1433
        %vm1435 = vweird.f32 %v1377
        %vm1436 = vweird.f32 %v1429
        %vm1437 = vmor %vm1435, %vm1436
        %v1438 = vsel %vm1437, %v1429, %v1434
        %v1439 = vrsqrt.pop %v1378
        %v1440 = vmul.f32 %v1439, %v1378
        %v1441 = vmul.f32 %v1440, %v1439
        %v1442 = vmul.f32 0.5, %v1441
        %v1443 = vsub.f32 1.5, %v1442
        %v1444 = vmul.f32 %v1439, %v1443
        %vm1445 = vweird.f32 %v1378
        %vm1446 = vweird.f32 %v1439
        %vm1447 = vmor %vm1445, %vm1446
        %v1448 = vsel %vm1447, %v1439, %v1444
        %v1449 = vrsqrt.pop %v1379
        %v1450 = vmul.f32 %v1449, %v1379
        %v1451 = vmul.f32 %v1450, %v1449
        %v1452 = vmul.f32 0.5, %v1451
        %v1453 = vsub.f32 1.5, %v1452
        %v1454 = vmul.f32 %v1449, %v1453
        %vm1455 = vweird.f32 %v1379
        %vm1456 = vweird.f32 %v1449
        %vm1457 = vmor %vm1455, %vm1456
        %v1458 = vsel %vm1457, %v1449, %v1454
        %v1459 = vrsqrt.pop %v1380
        %v1460 = vmul.f32 %v1459, %v1380
        %v1461 = vmul.f32 %v1460, %v1459
        %v1462 = vmul.f32 0.5, %v1461
        %v1463 = vsub.f32 1.5, %v1462
        %v1464 = vmul.f32 %v1459, %v1463
        %vm1465 = vweird.f32 %v1380
        %vm1466 = vweird.f32 %v1459
        %vm1467 = vmor %vm1465, %vm1466
        %v1468 = vsel %vm1467, %v1459, %v1464
        %v1469 = vrsqrt.pop %v1381
        %v1470 = vmul.f32 %v1469, %v1381
        %v1471 = vmul.f32 %v1470, %v1469
        %v1472 = vmul.f32 0.5, %v1471
        %v1473 = vsub.f32 1.5, %v1472
        %v1474 = vmul.f32 %v1469, %v1473
        %vm1475 = vweird.f32 %v1381
        %vm1476 = vweird.f32 %v1469
        %vm1477 = vmor %vm1475, %vm1476
        %v1478 = vsel %vm1477, %v1469, %v1474
        %v1479 = vrsqrt.pop %v1382
        %v1480 = vmul.f32 %v1479, %v1382
        %v1481 = vmul.f32 %v1480, %v1479
        %v1482 = vmul.f32 0.5, %v1481
        %v1483 = vsub.f32 1.5, %v1482
        %v1484 = vmul.f32 %v1479, %v1483
        %vm1485 = vweird.f32 %v1382
        %vm1486 = vweird.f32 %v1479
        %vm1487 = vmor %vm1485, %vm1486
        %v1488 = vsel %vm1487, %v1479, %v1484
        %v1489 = vrsqrt.pop %v1383
        %v1490 = vmul.f32 %v1489, %v1383
        %v1491 = vmul.f32 %v1490, %v1489
        %v1492 = vmul.f32 0.5, %v1491
        %v1493 = vsub.f32 1.5, %v1492
        %v1494 = vmul.f32 %v1489, %v1493
        %vm1495 = vweird.f32 %v1383
        %vm1496 = vweird.f32 %v1489
        %vm1497 = vmor %vm1495, %vm1496
        %v1498 = vsel %vm1497, %v1489, %v1494
        %v1499 = vrsqrt.pop %v1384
        %v1500 = vmul.f32 %v1499, %v1384
        %v1501 = vmul.f32 %v1500, %v1499
        %v1502 = vmul.f32 0.5, %v1501
        %v1503 = vsub.f32 1.5, %v1502
        %v1504 = vmul.f32 %v1499, %v1503
        %vm1505 = vweird.f32 %v1384
        %vm1506 = vweird.f32 %v1499
        %vm1507 = vmor %vm1505, %vm1506
        %v1508 = vsel %vm1507, %v1499, %v1504
        %v1509 = vrsqrt.pop %v1385
        %v1510 = vmul.f32 %v1509, %v1385
        %v1511 = vmul.f32 %v1510, %v1509
        %v1512 = vmul.f32 0.5, %v1511
        %v1513 = vsub.f32 1.5, %v1512
        %v1514 = vmul.f32 %v1509, %v1513
        %vm1515 = vweird.f32 %v1385
        %vm1516 = vweird.f32 %v1509
        %vm1517 = vmor %vm1515, %vm1516
        %v1518 = vsel %vm1517, %v1509, %v1514
        %v1519 = vrsqrt.pop %v1386
        %v1520 = vmul.f32 %v1519, %v1386
        %v1521 = vmul.f32 %v1520, %v1519
        %v1522 = vmul.f32 0.5, %v1521
        %v1523 = vsub.f32 1.5, %v1522
        %v1524 = vmul.f32 %v1519, %v1523
        %vm1525 = vweird.f32 %v1386
        %vm1526 = vweird.f32 %v1519
        %vm1527 = vmor %vm1525, %vm1526
        %v1528 = vsel %vm1527, %v1519, %v1524
        %v1529 = vrsqrt.pop %v1387
        %v1530 = vmul.f32 %v1529, %v1387
        %v1531 = vmul.f32 %v1530, %v1529
        %v1532 = vmul.f32 0.5, %v1531
        %v1533 = vsub.f32 1.5, %v1532
        %v1534 = vmul.f32 %v1529, %v1533
        %vm1535 = vweird.f32 %v1387
        %vm1536 = vweird.f32 %v1529
        %vm1537 = vmor %vm1535, %vm1536
        %v1538 = vsel %vm1537, %v1529, %v1534
        %v1539 = vrsqrt.pop %v1388
        %v1540 = vmul.f32 %v1539, %v1388
        %v1541 = vmul.f32 %v1540, %v1539
        %v1542 = vmul.f32 0.5, %v1541
        %v1543 = vsub.f32 1.5, %v1542
        %v1544 = vmul.f32 %v1539, %v1543
        %vm1545 = vweird.f32 %v1388
        %vm1546 = vweird.f32 %v1539
        %vm1547 = vmor %vm1545, %vm1546
        %v1548 = vsel %vm1547, %v1539, %v1544
        %v1549 = vmul.f32 %v1293, %v1398
        %v1550 = vmul.f32 %v1294, %v1408
        %v1551 = vmul.f32 %v1295, %v1418
        %v1552 = vmul.f32 %v1296, %v1428
        %v1553 = vmul.f32 %v1297, %v1438
        %v1554 = vmul.f32 %v1298, %v1448
        %v1555 = vmul.f32 %v1299, %v1458
        %v1556 = vmul.f32 %v1300, %v1468
        %v1557 = vmul.f32 %v1301, %v1478
        %v1558 = vmul.f32 %v1302, %v1488
        %v1559 = vmul.f32 %v1303, %v1498
        %v1560 = vmul.f32 %v1304, %v1508
        %v1561 = vmul.f32 %v1305, %v1518
        %v1562 = vmul.f32 %v1306, %v1528
        %v1563 = vmul.f32 %v1307, %v1538
        %v1564 = vmul.f32 %v1308, %v1548
        %v1566 = vperm.slane %v1243, 0
        %v1568 = vmul.f32 %v1549, %v1566
        %v1569 = vmul.f32 %v1550, %v1566
        %v1570 = vmul.f32 %v1551, %v1566
        %v1571 = vmul.f32 %v1552, %v1566
        %v1572 = vmul.f32 %v1553, %v1566
        %v1573 = vmul.f32 %v1554, %v1566
        %v1574 = vmul.f32 %v1555, %v1566
        %v1575 = vmul.f32 %v1556, %v1566
        %v1576 = vmul.f32 %v1557, %v1566
        %v1577 = vmul.f32 %v1558, %v1566
        %v1578 = vmul.f32 %v1559, %v1566
        %v1579 = vmul.f32 %v1560, %v1566
        %v1580 = vmul.f32 %v1561, %v1566
        %v1581 = vmul.f32 %v1562, %v1566
        %v1582 = vmul.f32 %v1563, %v1566
        %v1583 = vmul.f32 %v1564, %v1566
        %v1585 = vperm.slane %v1244, 0
        %v1587 = vadd.f32 %v1568, %v1585
        %v1588 = vadd.f32 %v1569, %v1585
        %v1589 = vadd.f32 %v1570, %v1585
        %v1590 = vadd.f32 %v1571, %v1585
        %v1591 = vadd.f32 %v1572, %v1585
        %v1592 = vadd.f32 %v1573, %v1585
        %v1593 = vadd.f32 %v1574, %v1585
        %v1594 = vadd.f32 %v1575, %v1585
        %v1595 = vadd.f32 %v1576, %v1585
        %v1596 = vadd.f32 %v1577, %v1585
        %v1597 = vadd.f32 %v1578, %v1585
        %v1598 = vadd.f32 %v1579, %v1585
        %v1599 = vadd.f32 %v1580, %v1585
        %v1600 = vadd.f32 %v1581, %v1585
        %v1601 = vadd.f32 %v1582, %v1585
        %v1602 = vadd.f32 %v1583, %v1585
        %v1603 = vld [vmem:[#allocation3] sm:$0x1]
        %v1604 = vrot.slane %v1587, 7
        %v1605 = vrot.slane %v1588, 7
        %v1606 = vrot.slane %v1589, 7
        %v1607 = vrot.slane %v1590, 7
        %v1608 = vrot.slane %v1591, 7
        %v1609 = vrot.slane %v1592, 7
        %v1610 = vrot.slane %v1593, 7
        %v1611 = vrot.slane %v1594, 7
        %v1612 = vrot.slane %v1595, 7
        %v1613 = vrot.slane %v1596, 7
        %v1614 = vrot.slane %v1597, 7
        %v1615 = vrot.slane %v1598, 7
        %v1616 = vrot.slane %v1599, 7
        %v1617 = vrot.slane %v1600, 7
        %v1618 = vrot.slane %v1601, 7
        %v1619 = vrot.slane %v1602, 7
        %v1620 = vlaneseq
        %v1621 = vshrl.u32 %v1620, 7
        %vm1622 = vcmp.lt.s32.totalorder %v1621, 1
        %v1623 = vsel %vm1622, %v1618, %v1619
        %v1624 = vsel %vm1622, %v1617, %v1618
        %v1625 = vsel %vm1622, %v1616, %v1617
        %v1626 = vsel %vm1622, %v1615, %v1616
        %v1627 = vsel %vm1622, %v1614, %v1615
        %v1628 = vsel %vm1622, %v1613, %v1614
        %v1629 = vsel %vm1622, %v1612, %v1613
        %v1630 = vsel %vm1622, %v1611, %v1612
        %v1631 = vsel %vm1622, %v1610, %v1611
        %v1632 = vsel %vm1622, %v1609, %v1610
        %v1633 = vsel %vm1622, %v1608, %v1609
        %v1634 = vsel %vm1622, %v1607, %v1608
        %v1635 = vsel %vm1622, %v1606, %v1607
        %v1636 = vsel %vm1622, %v1605, %v1606
        %v1637 = vsel %vm1622, %v1604, %v1605
        %v1638 = vsel %vm1622, %v1619, %v1604
        %v1639 = vadd.s32 %v1621, 8
        %v1640 = vadd.s32 %v1621, 16
        %v1641 = vadd.s32 %v1621, 24
        %v1642 = vadd.s32 %v1621, 32
        %v1643 = vadd.s32 %v1621, 40
        %v1644 = vadd.s32 %v1621, 48
        %v1645 = vadd.s32 %v1621, 56
        %v1646 = vadd.s32 %v1621, 64
        %v1647 = vadd.s32 %v1621, 72
        %v1648 = vadd.s32 %v1621, 80
        %v1649 = vadd.s32 %v1621, 88
        %v1650 = vadd.s32 %v1621, 96
        %v1651 = vadd.s32 %v1621, 104
        %v1652 = vadd.s32 %v1621, 112
        %v1653 = vadd.s32 %v1621, 120
        %vm1654 = vcmp.eq.s32.totalorder %v1621, 0
        %vm1655 = vcmp.eq.s32.totalorder %v1639, 0
        %vm1656 = vcmp.eq.s32.totalorder %v1640, 0
        %vm1657 = vcmp.eq.s32.totalorder %v1641, 0
        %vm1658 = vcmp.eq.s32.totalorder %v1642, 0
        %vm1659 = vcmp.eq.s32.totalorder %v1643, 0
        %vm1660 = vcmp.eq.s32.totalorder %v1644, 0
        %vm1661 = vcmp.eq.s32.totalorder %v1645, 0
        %vm1662 = vcmp.eq.s32.totalorder %v1646, 0
        %vm1663 = vcmp.eq.s32.totalorder %v1647, 0
        %vm1664 = vcmp.eq.s32.totalorder %v1648, 0
        %vm1665 = vcmp.eq.s32.totalorder %v1649, 0
        %vm1666 = vcmp.eq.s32.totalorder %v1650, 0
        %vm1667 = vcmp.eq.s32.totalorder %v1651, 0
        %vm1668 = vcmp.eq.s32.totalorder %v1652, 0
        %vm1669 = vcmp.eq.s32.totalorder %v1653, 0
        %v1671 = vperm.slane %v1603, 0
        %v1673 = vsel %vm1654, %v1671, %v1638
        %v1674 = vsel %vm1655, %v1671, %v1637
        %v1675 = vsel %vm1656, %v1671, %v1636
        %v1676 = vsel %vm1657, %v1671, %v1635
        %v1677 = vsel %vm1658, %v1671, %v1634
        %v1678 = vsel %vm1659, %v1671, %v1633
        %v1679 = vsel %vm1660, %v1671, %v1632
        %v1680 = vsel %vm1661, %v1671, %v1631
        %v1681 = vsel %vm1662, %v1671, %v1630
        %v1682 = vsel %vm1663, %v1671, %v1629
        %v1683 = vsel %vm1664, %v1671, %v1628
        %v1684 = vsel %vm1665, %v1671, %v1627
        %v1685 = vsel %vm1666, %v1671, %v1626
        %v1686 = vsel %vm1667, %v1671, %v1625
        %v1687 = vsel %vm1668, %v1671, %v1624
        %v1688 = vsel %vm1669, %v1671, %v1623
        %1689 = vst [vmem:[#allocation3 - $0x7] sm:$0x80] %v1602
        %v1690 = vsub.f32 %v1587, %v1673
        %v1691 = vsub.f32 %v1588, %v1674
        %v1692 = vsub.f32 %v1589, %v1675
        %v1693 = vsub.f32 %v1590, %v1676
        %v1694 = vsub.f32 %v1591, %v1677
        %v1695 = vsub.f32 %v1592, %v1678
        %v1696 = vsub.f32 %v1593, %v1679
        %v1697 = vsub.f32 %v1594, %v1680
        %v1698 = vsub.f32 %v1595, %v1681
        %v1699 = vsub.f32 %v1596, %v1682
        %v1700 = vsub.f32 %v1597, %v1683
        %v1701 = vsub.f32 %v1598, %v1684
        %v1702 = vsub.f32 %v1599, %v1685
        %v1703 = vsub.f32 %v1600, %v1686
        %v1704 = vsub.f32 %v1601, %v1687
        %v1705 = vsub.f32 %v1602, %v1688
        %v1706 = vld [vmem:[%s8] sm:$0x1]
        %v1708 = vperm.slane %v1706, 0
        %v1710 = vmul.f32 %v1690, %v1708
        %v1711 = vmul.f32 %v1691, %v1708
        %v1712 = vmul.f32 %v1692, %v1708
        %v1713 = vmul.f32 %v1693, %v1708
        %v1714 = vmul.f32 %v1694, %v1708
        %v1715 = vmul.f32 %v1695, %v1708
        %v1716 = vmul.f32 %v1696, %v1708
        %v1717 = vmul.f32 %v1697, %v1708
        %v1718 = vmul.f32 %v1698, %v1708
        %v1719 = vmul.f32 %v1699, %v1708
        %v1720 = vmul.f32 %v1700, %v1708
        %v1721 = vmul.f32 %v1701, %v1708
        %v1722 = vmul.f32 %v1702, %v1708
        %v1723 = vmul.f32 %v1703, %v1708
        %v1724 = vmul.f32 %v1704, %v1708
        %v1725 = vmul.f32 %v1705, %v1708
        %v1726 = vadd.f32 %v1673, %v1710
        %v1727 = vadd.f32 %v1674, %v1711
        %v1728 = vadd.f32 %v1675, %v1712
        %v1729 = vadd.f32 %v1676, %v1713
        %v1730 = vadd.f32 %v1677, %v1714
        %v1731 = vadd.f32 %v1678, %v1715
        %v1732 = vadd.f32 %v1679, %v1716
        %v1733 = vadd.f32 %v1680, %v1717
        %v1734 = vadd.f32 %v1681, %v1718
        %v1735 = vadd.f32 %v1682, %v1719
        %v1736 = vadd.f32 %v1683, %v1720
        %v1737 = vadd.f32 %v1684, %v1721
        %v1738 = vadd.f32 %v1685, %v1722
        %v1739 = vadd.f32 %v1686, %v1723
        %v1740 = vadd.f32 %v1687, %v1724
        %v1741 = vadd.f32 %v1688, %v1725
        %v1742 = vpack.c.bf16 %v1727, %v1726
        %v1743 = vpack.c.bf16 %v1729, %v1728
        %v1744 = vpack.c.bf16 %v1731, %v1730
        %v1745 = vpack.c.bf16 %v1733, %v1732
        %v1746 = vpack.c.bf16 %v1735, %v1734
        %v1747 = vpack.c.bf16 %v1737, %v1736
        %v1748 = vpack.c.bf16 %v1739, %v1738
        %v1749 = vpack.c.bf16 %v1741, %v1740
        %v1750 = vld [vmem:[%s9] sm:$0x1]
        %v1752 = vperm.slane %v1750, 0
        %v1754 = vmul.f32 %v1690, %v1752
        %v1755 = vmul.f32 %v1691, %v1752
        %v1756 = vmul.f32 %v1692, %v1752
        %v1757 = vmul.f32 %v1693, %v1752
        %v1758 = vmul.f32 %v1694, %v1752
        %v1759 = vmul.f32 %v1695, %v1752
        %v1760 = vmul.f32 %v1696, %v1752
        %v1761 = vmul.f32 %v1697, %v1752
        %v1762 = vmul.f32 %v1698, %v1752
        %v1763 = vmul.f32 %v1699, %v1752
        %v1764 = vmul.f32 %v1700, %v1752
        %v1765 = vmul.f32 %v1701, %v1752
        %v1766 = vmul.f32 %v1702, %v1752
        %v1767 = vmul.f32 %v1703, %v1752
        %v1768 = vmul.f32 %v1704, %v1752
        %v1769 = vmul.f32 %v1705, %v1752
        %v1770 = vadd.f32 %v1673, %v1754
        %v1771 = vadd.f32 %v1674, %v1755
        %v1772 = vadd.f32 %v1675, %v1756
        %v1773 = vadd.f32 %v1676, %v1757
        %v1774 = vadd.f32 %v1677, %v1758
        %v1775 = vadd.f32 %v1678, %v1759
        %v1776 = vadd.f32 %v1679, %v1760
        %v1777 = vadd.f32 %v1680, %v1761
        %v1778 = vadd.f32 %v1681, %v1762
        %v1779 = vadd.f32 %v1682, %v1763
        %v1780 = vadd.f32 %v1683, %v1764
        %v1781 = vadd.f32 %v1684, %v1765
        %v1782 = vadd.f32 %v1685, %v1766
        %v1783 = vadd.f32 %v1686, %v1767
        %v1784 = vadd.f32 %v1687, %v1768
        %v1785 = vadd.f32 %v1688, %v1769
        %v1786 = vpack.c.bf16 %v1771, %v1770
        %v1787 = vpack.c.bf16 %v1773, %v1772
        %v1788 = vpack.c.bf16 %v1775, %v1774
        %v1789 = vpack.c.bf16 %v1777, %v1776
        %v1790 = vpack.c.bf16 %v1779, %v1778
        %v1791 = vpack.c.bf16 %v1781, %v1780
        %v1792 = vpack.c.bf16 %v1783, %v1782
        %v1793 = vpack.c.bf16 %v1785, %v1784
        %v1794 = vld [vmem:[#allocation10] sm:$0x1]
        %v1796 = vperm.slane %v1794, 0
        %v1798 = vmul.f32 %v1690, %v1796
        %v1799 = vmul.f32 %v1691, %v1796
        %v1800 = vmul.f32 %v1692, %v1796
        %v1801 = vmul.f32 %v1693, %v1796
        %v1802 = vmul.f32 %v1694, %v1796
        %v1803 = vmul.f32 %v1695, %v1796
        %v1804 = vmul.f32 %v1696, %v1796
        %v1805 = vmul.f32 %v1697, %v1796
        %v1806 = vmul.f32 %v1698, %v1796
        %v1807 = vmul.f32 %v1699, %v1796
        %v1808 = vmul.f32 %v1700, %v1796
        %v1809 = vmul.f32 %v1701, %v1796
        %v1810 = vmul.f32 %v1702, %v1796
        %v1811 = vmul.f32 %v1703, %v1796
        %v1812 = vmul.f32 %v1704, %v1796
        %v1813 = vmul.f32 %v1705, %v1796
        %v1814 = vadd.f32 %v1673, %v1798
        %v1815 = vadd.f32 %v1674, %v1799
        %v1816 = vadd.f32 %v1675, %v1800
        %v1817 = vadd.f32 %v1676, %v1801
        %v1818 = vadd.f32 %v1677, %v1802
        %v1819 = vadd.f32 %v1678, %v1803
        %v1820 = vadd.f32 %v1679, %v1804
        %v1821 = vadd.f32 %v1680, %v1805
        %v1822 = vadd.f32 %v1681, %v1806
        %v1823 = vadd.f32 %v1682, %v1807
        %v1824 = vadd.f32 %v1683, %v1808
        %v1825 = vadd.f32 %v1684, %v1809
        %v1826 = vadd.f32 %v1685, %v1810
        %v1827 = vadd.f32 %v1686, %v1811
        %v1828 = vadd.f32 %v1687, %v1812
        %v1829 = vadd.f32 %v1688, %v1813
        %v1830 = vpack.c.bf16 %v1815, %v1814
        %v1831 = vpack.c.bf16 %v1817, %v1816
        %v1832 = vpack.c.bf16 %v1819, %v1818
        %v1833 = vpack.c.bf16 %v1821, %v1820
        %v1834 = vpack.c.bf16 %v1823, %v1822
        %v1835 = vpack.c.bf16 %v1825, %v1824
        %v1836 = vpack.c.bf16 %v1827, %v1826
        %v1837 = vpack.c.bf16 %v1829, %v1828
        %v1838 = vld [vmem:[#allocation12] sm:$0xf]
        %v1839 = vld [vmem:[#allocation12 + $0x4] sm:$0xf]
        %v1840 = vld [vmem:[#allocation12 + $0x8] sm:$0xf]
        %v1841 = vld [vmem:[#allocation12 + $0xc] sm:$0xf]
        %v1842 = vld [vmem:[#allocation12 + $0x10] sm:$0xf]
        %v1843 = vld [vmem:[#allocation12 + $0x14] sm:$0xf]
        %v1844 = vld [vmem:[#allocation12 + $0x18] sm:$0xf]
        %v1845 = vld [vmem:[#allocation12 + $0x1c] sm:$0xf]
        %v1846 = vld [vmem:[#allocation12 + $0x20] sm:$0xf]
        %v1847 = vld [vmem:[#allocation12 + $0x24] sm:$0xf]
        %v1848 = vld [vmem:[#allocation12 + $0x28] sm:$0xf]
        %v1849 = vld [vmem:[#allocation12 + $0x2c] sm:$0xf]
        %v1850 = vld [vmem:[#allocation12 + $0x30] sm:$0xf]
        %v1851 = vld [vmem:[#allocation12 + $0x34] sm:$0xf]
        %v1852 = vld [vmem:[#allocation12 + $0x38] sm:$0xf]
        %v1853 = vld [vmem:[#allocation12 + $0x3c] sm:$0xf]
        %v1870 = vunpack.c.l.b16 %v1838
        %v1871 = vunpack.c.l.b16 %v1839
        %v1872 = vunpack.c.l.b16 %v1840
        %v1873 = vunpack.c.l.b16 %v1841
        %v1874 = vunpack.c.l.b16 %v1842
        %v1875 = vunpack.c.l.b16 %v1843
        %v1876 = vunpack.c.l.b16 %v1844
        %v1877 = vunpack.c.l.b16 %v1845
        %v1878 = vunpack.c.l.b16 %v1846
        %v1879 = vunpack.c.l.b16 %v1847
        %v1880 = vunpack.c.l.b16 %v1848
        %v1881 = vunpack.c.l.b16 %v1849
        %v1882 = vunpack.c.l.b16 %v1850
        %v1883 = vunpack.c.l.b16 %v1851
        %v1884 = vunpack.c.l.b16 %v1852
        %v1885 = vunpack.c.l.b16 %v1853
        %v1886 = vpack.c.b16 %v1871, %v1870
        %v1887 = vpack.c.b16 %v1873, %v1872
        %v1888 = vpack.c.b16 %v1875, %v1874
        %v1889 = vpack.c.b16 %v1877, %v1876
        %v1890 = vpack.c.b16 %v1879, %v1878
        %v1891 = vpack.c.b16 %v1881, %v1880
        %v1892 = vpack.c.b16 %v1883, %v1882
        %v1893 = vpack.c.b16 %v1885, %v1884
        %1902 = vmatpush.bf16.msra.mxu0 %v1893
        %1903 = vmatpush.bf16.msra.mxu0 %v1892
        %1904 = vmatpush.bf16.msra.mxu0 %v1891
        %1905 = vmatpush.bf16.msra.mxu0 %v1890
        %1906 = vmatpush.bf16.msra.mxu0 %v1889
        %1907 = vmatpush.bf16.msra.mxu0 %v1888
        %1908 = vmatpush.bf16.msra.mxu0 %v1887
        %1909 = vmatpush.bf16.msra.mxu0 %v1886
        %1910 = vmatmul.bf16.gmra.mxu0 %v1830
        %v1911 = vpop.f32.mrf.mxu0
        %v1912 = vadd.f32 0.0, %v1911
        %v1913 = vpop.f32.mrf.mxu0
        %v1914 = vadd.f32 0.0, %v1913
        %1915 = vmatmul.bf16.gmra.mxu0 %v1831
        %v1916 = vpop.f32.mrf.mxu0
        %v1917 = vadd.f32 0.0, %v1916
        %v1918 = vpop.f32.mrf.mxu0
        %v1919 = vadd.f32 0.0, %v1918
        %1920 = vmatmul.bf16.gmra.mxu0 %v1832
        %v1921 = vpop.f32.mrf.mxu0
        %v1922 = vadd.f32 0.0, %v1921
        %v1923 = vpop.f32.mrf.mxu0
        %v1924 = vadd.f32 0.0, %v1923
        %1925 = vmatmul.bf16.gmra.mxu0 %v1833
        %v1926 = vpop.f32.mrf.mxu0
        %v1927 = vadd.f32 0.0, %v1926
        %v1928 = vpop.f32.mrf.mxu0
        %v1929 = vadd.f32 0.0, %v1928
        %1930 = vmatmul.bf16.gmra.mxu0 %v1834
        %v1931 = vpop.f32.mrf.mxu0
        %v1932 = vadd.f32 0.0, %v1931
        %v1933 = vpop.f32.mrf.mxu0
        %v1934 = vadd.f32 0.0, %v1933
        %1935 = vmatmul.bf16.gmra.mxu0 %v1835
        %v1936 = vpop.f32.mrf.mxu0
        %v1937 = vadd.f32 0.0, %v1936
        %v1938 = vpop.f32.mrf.mxu0
        %v1939 = vadd.f32 0.0, %v1938
        %1940 = vmatmul.bf16.gmra.mxu0 %v1836
        %v1941 = vpop.f32.mrf.mxu0
        %v1942 = vadd.f32 0.0, %v1941
        %v1943 = vpop.f32.mrf.mxu0
        %v1944 = vadd.f32 0.0, %v1943
        %1945 = vmatmul.bf16.gmra.mxu0 %v1837
        %v1946 = vpop.f32.mrf.mxu0
        %v1947 = vadd.f32 0.0, %v1946
        %v1948 = vpop.f32.mrf.mxu0
        %v1949 = vadd.f32 0.0, %v1948
        %1950 = vdwg.mxu0
        %v1951 = vld [vmem:[#allocation13] sm:$0xf]
        %v1952 = vld [vmem:[#allocation13 + $0x4] sm:$0xf]
        %v1953 = vld [vmem:[#allocation13 + $0x8] sm:$0xf]
        %v1954 = vld [vmem:[#allocation13 + $0xc] sm:$0xf]
        %v1955 = vld [vmem:[#allocation13 + $0x10] sm:$0xf]
        %v1956 = vld [vmem:[#allocation13 + $0x14] sm:$0xf]
        %v1957 = vld [vmem:[#allocation13 + $0x18] sm:$0xf]
        %v1958 = vld [vmem:[#allocation13 + $0x1c] sm:$0xf]
        %v1959 = vld [vmem:[#allocation13 + $0x20] sm:$0xf]
        %v1960 = vld [vmem:[#allocation13 + $0x24] sm:$0xf]
        %v1961 = vld [vmem:[#allocation13 + $0x28] sm:$0xf]
        %v1962 = vld [vmem:[#allocation13 + $0x2c] sm:$0xf]
        %v1963 = vld [vmem:[#allocation13 + $0x30] sm:$0xf]
        %v1964 = vld [vmem:[#allocation13 + $0x34] sm:$0xf]
        %v1965 = vld [vmem:[#allocation13 + $0x38] sm:$0xf]
        %v1966 = vld [vmem:[#allocation13 + $0x3c] sm:$0xf]
        %v1983 = vunpack.c.l.b16 %v1951
        %v1984 = vunpack.c.l.b16 %v1952
        %v1985 = vunpack.c.l.b16 %v1953
        %v1986 = vunpack.c.l.b16 %v1954
        %v1987 = vunpack.c.l.b16 %v1955
        %v1988 = vunpack.c.l.b16 %v1956
        %v1989 = vunpack.c.l.b16 %v1957
        %v1990 = vunpack.c.l.b16 %v1958
        %v1991 = vunpack.c.l.b16 %v1959
        %v1992 = vunpack.c.l.b16 %v1960
        %v1993 = vunpack.c.l.b16 %v1961
        %v1994 = vunpack.c.l.b16 %v1962
        %v1995 = vunpack.c.l.b16 %v1963
        %v1996 = vunpack.c.l.b16 %v1964
        %v1997 = vunpack.c.l.b16 %v1965
        %v1998 = vunpack.c.l.b16 %v1966
        %v1999 = vpack.c.b16 %v1984, %v1983
        %v2000 = vpack.c.b16 %v1986, %v1985
        %v2001 = vpack.c.b16 %v1988, %v1987
        %v2002 = vpack.c.b16 %v1990, %v1989
        %v2003 = vpack.c.b16 %v1992, %v1991
        %v2004 = vpack.c.b16 %v1994, %v1993
        %v2005 = vpack.c.b16 %v1996, %v1995
        %v2006 = vpack.c.b16 %v1998, %v1997
        %2015 = vmatpush.bf16.msra.mxu0 %v2006
        %2016 = vmatpush.bf16.msra.mxu0 %v2005
        %2017 = vmatpush.bf16.msra.mxu0 %v2004
        %2018 = vmatpush.bf16.msra.mxu0 %v2003
        %2019 = vmatpush.bf16.msra.mxu0 %v2002
        %2020 = vmatpush.bf16.msra.mxu0 %v2001
        %2021 = vmatpush.bf16.msra.mxu0 %v2000
        %2022 = vmatpush.bf16.msra.mxu0 %v1999
        %2023 = vmatmul.bf16.gmra.mxu0 %v1742
        %v2024 = vpop.f32.mrf.mxu0
        %v2025 = vadd.f32 0.0, %v2024
        %v2026 = vpop.f32.mrf.mxu0
        %v2027 = vadd.f32 0.0, %v2026
        %2028 = vmatmul.bf16.gmra.mxu0 %v1743
        %v2029 = vpop.f32.mrf.mxu0
        %v2030 = vadd.f32 0.0, %v2029
        %v2031 = vpop.f32.mrf.mxu0
        %v2032 = vadd.f32 0.0, %v2031
        %2033 = vmatmul.bf16.gmra.mxu0 %v1744
        %v2034 = vpop.f32.mrf.mxu0
        %v2035 = vadd.f32 0.0, %v2034
        %v2036 = vpop.f32.mrf.mxu0
        %v2037 = vadd.f32 0.0, %v2036
        %2038 = vmatmul.bf16.gmra.mxu0 %v1745
        %v2039 = vpop.f32.mrf.mxu0
        %v2040 = vadd.f32 0.0, %v2039
        %v2041 = vpop.f32.mrf.mxu0
        %v2042 = vadd.f32 0.0, %v2041
        %2043 = vmatmul.bf16.gmra.mxu0 %v1746
        %v2044 = vpop.f32.mrf.mxu0
        %v2045 = vadd.f32 0.0, %v2044
        %v2046 = vpop.f32.mrf.mxu0
        %v2047 = vadd.f32 0.0, %v2046
        %2048 = vmatmul.bf16.gmra.mxu0 %v1747
        %v2049 = vpop.f32.mrf.mxu0
        %v2050 = vadd.f32 0.0, %v2049
        %v2051 = vpop.f32.mrf.mxu0
        %v2052 = vadd.f32 0.0, %v2051
        %2053 = vmatmul.bf16.gmra.mxu0 %v1748
        %v2054 = vpop.f32.mrf.mxu0
        %v2055 = vadd.f32 0.0, %v2054
        %v2056 = vpop.f32.mrf.mxu0
        %v2057 = vadd.f32 0.0, %v2056
        %2058 = vmatmul.bf16.gmra.mxu0 %v1749
        %v2059 = vpop.f32.mrf.mxu0
        %v2060 = vadd.f32 0.0, %v2059
        %v2061 = vpop.f32.mrf.mxu0
        %v2062 = vadd.f32 0.0, %v2061
        %2063 = vdwg.mxu0
        %v2064 = vld [vmem:[#allocation15] sm:$0xf]
        %v2065 = vld [vmem:[#allocation15 + $0x4] sm:$0xf]
        %v2066 = vld [vmem:[#allocation15 + $0x8] sm:$0xf]
        %v2067 = vld [vmem:[#allocation15 + $0xc] sm:$0xf]
        %v2068 = vld [vmem:[#allocation15 + $0x10] sm:$0xf]
        %v2069 = vld [vmem:[#allocation15 + $0x14] sm:$0xf]
        %v2070 = vld [vmem:[#allocation15 + $0x18] sm:$0xf]
        %v2071 = vld [vmem:[#allocation15 + $0x1c] sm:$0xf]
        %v2072 = vld [vmem:[#allocation15 + $0x20] sm:$0xf]
        %v2073 = vld [vmem:[#allocation15 + $0x24] sm:$0xf]
        %v2074 = vld [vmem:[#allocation15 + $0x28] sm:$0xf]
        %v2075 = vld [vmem:[#allocation15 + $0x2c] sm:$0xf]
        %v2076 = vld [vmem:[#allocation15 + $0x30] sm:$0xf]
        %v2077 = vld [vmem:[#allocation15 + $0x34] sm:$0xf]
        %v2078 = vld [vmem:[#allocation15 + $0x38] sm:$0xf]
        %v2079 = vld [vmem:[#allocation15 + $0x3c] sm:$0xf]
        %v2096 = vunpack.c.l.b16 %v2064
        %v2097 = vunpack.c.l.b16 %v2065
        %v2098 = vunpack.c.l.b16 %v2066
        %v2099 = vunpack.c.l.b16 %v2067
        %v2100 = vunpack.c.l.b16 %v2068
        %v2101 = vunpack.c.l.b16 %v2069
        %v2102 = vunpack.c.l.b16 %v2070
        %v2103 = vunpack.c.l.b16 %v2071
        %v2104 = vunpack.c.l.b16 %v2072
        %v2105 = vunpack.c.l.b16 %v2073
        %v2106 = vunpack.c.l.b16 %v2074
        %v2107 = vunpack.c.l.b16 %v2075
        %v2108 = vunpack.c.l.b16 %v2076
        %v2109 = vunpack.c.l.b16 %v2077
        %v2110 = vunpack.c.l.b16 %v2078
        %v2111 = vunpack.c.l.b16 %v2079
        %v2112 = vpack.c.b16 %v2097, %v2096
        %v2113 = vpack.c.b16 %v2099, %v2098
        %v2114 = vpack.c.b16 %v2101, %v2100
        %v2115 = vpack.c.b16 %v2103, %v2102
        %v2116 = vpack.c.b16 %v2105, %v2104
        %v2117 = vpack.c.b16 %v2107, %v2106
        %v2118 = vpack.c.b16 %v2109, %v2108
        %v2119 = vpack.c.b16 %v2111, %v2110
        %2128 = vmatpush.bf16.msra.mxu0 %v2119
        %2129 = vmatpush.bf16.msra.mxu0 %v2118
        %2130 = vmatpush.bf16.msra.mxu0 %v2117
        %2131 = vmatpush.bf16.msra.mxu0 %v2116
        %2132 = vmatpush.bf16.msra.mxu0 %v2115
        %2133 = vmatpush.bf16.msra.mxu0 %v2114
        %2134 = vmatpush.bf16.msra.mxu0 %v2113
        %2135 = vmatpush.bf16.msra.mxu0 %v2112
        %2136 = vmatmul.bf16.gmra.mxu0 %v1786
        %v2137 = vpop.f32.mrf.mxu0
        %v2138 = vadd.f32 0.0, %v2137
        %v2139 = vpop.f32.mrf.mxu0
        %v2140 = vadd.f32 0.0, %v2139
        %2141 = vmatmul.bf16.gmra.mxu0 %v1787
        %v2142 = vpop.f32.mrf.mxu0
        %v2143 = vadd.f32 0.0, %v2142
        %v2144 = vpop.f32.mrf.mxu0
        %v2145 = vadd.f32 0.0, %v2144
        %2146 = vmatmul.bf16.gmra.mxu0 %v1788
        %v2147 = vpop.f32.mrf.mxu0
        %v2148 = vadd.f32 0.0, %v2147
        %v2149 = vpop.f32.mrf.mxu0
        %v2150 = vadd.f32 0.0, %v2149
        %2151 = vmatmul.bf16.gmra.mxu0 %v1789
        %v2152 = vpop.f32.mrf.mxu0
        %v2153 = vadd.f32 0.0, %v2152
        %v2154 = vpop.f32.mrf.mxu0
        %v2155 = vadd.f32 0.0, %v2154
        %2156 = vmatmul.bf16.gmra.mxu0 %v1790
        %v2157 = vpop.f32.mrf.mxu0
        %v2158 = vadd.f32 0.0, %v2157
        %v2159 = vpop.f32.mrf.mxu0
        %v2160 = vadd.f32 0.0, %v2159
        %2161 = vmatmul.bf16.gmra.mxu0 %v1791
        %v2162 = vpop.f32.mrf.mxu0
        %v2163 = vadd.f32 0.0, %v2162
        %v2164 = vpop.f32.mrf.mxu0
        %v2165 = vadd.f32 0.0, %v2164
        %2166 = vmatmul.bf16.gmra.mxu0 %v1792
        %v2167 = vpop.f32.mrf.mxu0
        %v2168 = vadd.f32 0.0, %v2167
        %v2169 = vpop.f32.mrf.mxu0
        %v2170 = vadd.f32 0.0, %v2169
        %2171 = vmatmul.bf16.gmra.mxu0 %v1793
        %v2172 = vpop.f32.mrf.mxu0
        %v2173 = vadd.f32 0.0, %v2172
        %v2174 = vpop.f32.mrf.mxu0
        %v2175 = vadd.f32 0.0, %v2174
        %2176 = vdwg.mxu0
        %v2177 = vpack.c.bf16 %v1912, %v1912
        %v2178 = vpack.c.bf16 %v1914, %v1914
        %v2179 = vpack.c.bf16 %v1917, %v1917
        %v2180 = vpack.c.bf16 %v1919, %v1919
        %v2181 = vpack.c.bf16 %v1922, %v1922
        %v2182 = vpack.c.bf16 %v1924, %v1924
        %v2183 = vpack.c.bf16 %v1927, %v1927
        %v2184 = vpack.c.bf16 %v1929, %v1929
        %v2185 = vpack.c.bf16 %v1932, %v1932
        %v2186 = vpack.c.bf16 %v1934, %v1934
        %v2187 = vpack.c.bf16 %v1937, %v1937
        %v2188 = vpack.c.bf16 %v1939, %v1939
        %v2189 = vpack.c.bf16 %v1942, %v1942
        %v2190 = vpack.c.bf16 %v1944, %v1944
        %v2191 = vpack.c.bf16 %v1947, %v1947
        %v2192 = vpack.c.bf16 %v1949, %v1949
        %v2193 = vpack.c.bf16 %v2025, %v2025
        %v2194 = vpack.c.bf16 %v2027, %v2027
        %v2195 = vpack.c.bf16 %v2030, %v2030
        %v2196 = vpack.c.bf16 %v2032, %v2032
        %v2197 = vpack.c.bf16 %v2035, %v2035
        %v2198 = vpack.c.bf16 %v2037, %v2037
        %v2199 = vpack.c.bf16 %v2040, %v2040
        %v2200 = vpack.c.bf16 %v2042, %v2042
        %v2201 = vpack.c.bf16 %v2045, %v2045
        %v2202 = vpack.c.bf16 %v2047, %v2047
        %v2203 = vpack.c.bf16 %v2050, %v2050
        %v2204 = vpack.c.bf16 %v2052, %v2052
        %v2205 = vpack.c.bf16 %v2055, %v2055
        %v2206 = vpack.c.bf16 %v2057, %v2057
        %v2207 = vpack.c.bf16 %v2060, %v2060
        %v2208 = vpack.c.bf16 %v2062, %v2062
        %v2209 = vpack.c.bf16 %v2138, %v2138
        %v2210 = vpack.c.bf16 %v2140, %v2140
        %v2211 = vpack.c.bf16 %v2143, %v2143
        %v2212 = vpack.c.bf16 %v2145, %v2145
        %v2213 = vpack.c.bf16 %v2148, %v2148
        %v2214 = vpack.c.bf16 %v2150, %v2150
        %v2215 = vpack.c.bf16 %v2153, %v2153
        %v2216 = vpack.c.bf16 %v2155, %v2155
        %v2217 = vpack.c.bf16 %v2158, %v2158
        %v2218 = vpack.c.bf16 %v2160, %v2160
        %v2219 = vpack.c.bf16 %v2163, %v2163
        %v2220 = vpack.c.bf16 %v2165, %v2165
        %v2221 = vpack.c.bf16 %v2168, %v2168
        %v2222 = vpack.c.bf16 %v2170, %v2170
        %v2223 = vpack.c.bf16 %v2173, %v2173
        %v2224 = vpack.c.bf16 %v2175, %v2175
        %v2225 = vlaneseq
        %v2226 = vand.u32 %v2225, 127
        %vm2227 = vcmp.gt.s32.totalorder %v1621, %v2226
        %vm2228 = vcmp.gt.s32.totalorder %v1639, %v2226
        %vm2229 = vcmp.gt.s32.totalorder %v1640, %v2226
        %vm2230 = vcmp.gt.s32.totalorder %v1641, %v2226
        %vm2231 = vcmp.gt.s32.totalorder %v1642, %v2226
        %vm2232 = vcmp.gt.s32.totalorder %v1643, %v2226
        %vm2233 = vcmp.gt.s32.totalorder %v1644, %v2226
        %vm2234 = vcmp.gt.s32.totalorder %v1645, %v2226
        %vm2235 = vcmp.gt.s32.totalorder %v1646, %v2226
        %vm2236 = vcmp.gt.s32.totalorder %v1647, %v2226
        %vm2237 = vcmp.gt.s32.totalorder %v1648, %v2226
        %vm2238 = vcmp.gt.s32.totalorder %v1649, %v2226
        %vm2239 = vcmp.gt.s32.totalorder %v1650, %v2226
        %vm2240 = vcmp.gt.s32.totalorder %v1651, %v2226
        %vm2241 = vcmp.gt.s32.totalorder %v1652, %v2226
        %vm2242 = vcmp.gt.s32.totalorder %v1653, %v2226
        %vm2243 = vcmp.eq.s32.totalorder %v1621, %v2226
        %vm2244 = vcmp.eq.s32.totalorder %v1639, %v2226
        %vm2245 = vcmp.eq.s32.totalorder %v1640, %v2226
        %vm2246 = vcmp.eq.s32.totalorder %v1641, %v2226
        %vm2247 = vcmp.eq.s32.totalorder %v1642, %v2226
        %vm2248 = vcmp.eq.s32.totalorder %v1643, %v2226
        %vm2249 = vcmp.eq.s32.totalorder %v1644, %v2226
        %vm2250 = vcmp.eq.s32.totalorder %v1645, %v2226
        %vm2251 = vcmp.eq.s32.totalorder %v1646, %v2226
        %vm2252 = vcmp.eq.s32.totalorder %v1647, %v2226
        %vm2253 = vcmp.eq.s32.totalorder %v1648, %v2226
        %vm2254 = vcmp.eq.s32.totalorder %v1649, %v2226
        %vm2255 = vcmp.eq.s32.totalorder %v1650, %v2226
        %vm2256 = vcmp.eq.s32.totalorder %v1651, %v2226
        %vm2257 = vcmp.eq.s32.totalorder %v1652, %v2226
        %vm2258 = vcmp.eq.s32.totalorder %v1653, %v2226
        %v2259 = vsub.s32 %v1621, %v2226
        %v2260 = vsub.s32 %v1639, %v2226
        %v2261 = vsub.s32 %v1640, %v2226
        %v2262 = vsub.s32 %v1641, %v2226
        %v2263 = vsub.s32 %v1642, %v2226
        %v2264 = vsub.s32 %v1643, %v2226
        %v2265 = vsub.s32 %v1644, %v2226
        %v2266 = vsub.s32 %v1645, %v2226
        %v2267 = vsub.s32 %v1646, %v2226
        %v2268 = vsub.s32 %v1647, %v2226
        %v2269 = vsub.s32 %v1648, %v2226
        %v2270 = vsub.s32 %v1649, %v2226
        %v2271 = vsub.s32 %v1650, %v2226
        %v2272 = vsub.s32 %v1651, %v2226
        %v2273 = vsub.s32 %v1652, %v2226
        %v2274 = vsub.s32 %v1653, %v2226
        %v2275 = vsub.s32 %v2259, 1
        %v2276 = vsub.s32 %v2260, 1
        %v2277 = vsub.s32 %v2261, 1
        %v2278 = vsub.s32 %v2262, 1
        %v2279 = vsub.s32 %v2263, 1
        %v2280 = vsub.s32 %v2264, 1
        %v2281 = vsub.s32 %v2265, 1
        %v2282 = vsub.s32 %v2266, 1
        %v2283 = vsub.s32 %v2267, 1
        %v2284 = vsub.s32 %v2268, 1
        %v2285 = vsub.s32 %v2269, 1
        %v2286 = vsub.s32 %v2270, 1
        %v2287 = vsub.s32 %v2271, 1
        %v2288 = vsub.s32 %v2272, 1
        %v2289 = vsub.s32 %v2273, 1
        %v2290 = vsub.s32 %v2274, 1
        %vm2291 = vcmp.gt.s32.totalorder %v2275, 0
        %v2292 = vsel %vm2291, %v2275, 0
        %vm2293 = vcmp.gt.s32.totalorder %v2276, 0
        %v2294 = vsel %vm2293, %v2276, 0
        %vm2295 = vcmp.gt.s32.totalorder %v2277, 0
        %v2296 = vsel %vm2295, %v2277, 0
        %vm2297 = vcmp.gt.s32.totalorder %v2278, 0
        %v2298 = vsel %vm2297, %v2278, 0
        %vm2299 = vcmp.gt.s32.totalorder %v2279, 0
        %v2300 = vsel %vm2299, %v2279, 0
        %vm2301 = vcmp.gt.s32.totalorder %v2280, 0
        %v2302 = vsel %vm2301, %v2280, 0
        %vm2303 = vcmp.gt.s32.totalorder %v2281, 0
        %v2304 = vsel %vm2303, %v2281, 0
        %vm2305 = vcmp.gt.s32.totalorder %v2282, 0
        %v2306 = vsel %vm2305, %v2282, 0
        %vm2307 = vcmp.gt.s32.totalorder %v2283, 0
        %v2308 = vsel %vm2307, %v2283, 0
        %vm2309 = vcmp.gt.s32.totalorder %v2284, 0
        %v2310 = vsel %vm2309, %v2284, 0
        %vm2311 = vcmp.gt.s32.totalorder %v2285, 0
        %v2312 = vsel %vm2311, %v2285, 0
        %vm2313 = vcmp.gt.s32.totalorder %v2286, 0
        %v2314 = vsel %vm2313, %v2286, 0
        %vm2315 = vcmp.gt.s32.totalorder %v2287, 0
        %v2316 = vsel %vm2315, %v2287, 0
        %vm2317 = vcmp.gt.s32.totalorder %v2288, 0
        %v2318 = vsel %vm2317, %v2288, 0
        %vm2319 = vcmp.gt.s32.totalorder %v2289, 0
        %v2320 = vsel %vm2319, %v2289, 0
        %vm2321 = vcmp.gt.s32.totalorder %v2290, 0
        %v2322 = vsel %vm2321, %v2290, 0
        %v2323 = vcvt.s32.f32 %v2292
        %v2324 = vcvt.s32.f32 %v2294
        %v2325 = vcvt.s32.f32 %v2296
        %v2326 = vcvt.s32.f32 %v2298
        %v2327 = vcvt.s32.f32 %v2300
        %v2328 = vcvt.s32.f32 %v2302
        %v2329 = vcvt.s32.f32 %v2304
        %v2330 = vcvt.s32.f32 %v2306
        %v2331 = vcvt.s32.f32 %v2308
        %v2332 = vcvt.s32.f32 %v2310
        %v2333 = vcvt.s32.f32 %v2312
        %v2334 = vcvt.s32.f32 %v2314
        %v2335 = vcvt.s32.f32 %v2316
        %v2336 = vcvt.s32.f32 %v2318
        %v2337 = vcvt.s32.f32 %v2320
        %v2338 = vcvt.s32.f32 %v2322
        %v2339 = vcvt.s32.f32 %v1621
        %v2340 = vcvt.s32.f32 %v1639
        %v2341 = vcvt.s32.f32 %v1640
        %v2342 = vcvt.s32.f32 %v1641
        %v2343 = vcvt.s32.f32 %v1642
        %v2344 = vcvt.s32.f32 %v1643
        %v2345 = vcvt.s32.f32 %v1644
        %v2346 = vcvt.s32.f32 %v1645
        %v2347 = vcvt.s32.f32 %v1646
        %v2348 = vcvt.s32.f32 %v1647
        %v2349 = vcvt.s32.f32 %v1648
        %v2350 = vcvt.s32.f32 %v1649
        %v2351 = vcvt.s32.f32 %v1650
        %v2352 = vcvt.s32.f32 %v1651
        %v2353 = vcvt.s32.f32 %v1652
        %v2354 = vcvt.s32.f32 %v1653
        %v2355 = vld [vmem:[%s15] sm:$0x1]
        %v2356 = vld [vmem:[%s16] sm:$0x1]
        %s2357 = sld [smem:[#allocation6]]
        %s2358 = sld [smem:[#allocation6 + $0x80]]
        %s2359 = sld [smem:[#allocation6 + $0x100]]
        %v2360 = vstv %s2357
        %v2361 = vmul.f32 %v2323, %v2360
        %v2362 = vmul.f32 %v2324, %v2360
        %v2363 = vmul.f32 %v2325, %v2360
        %v2364 = vmul.f32 %v2326, %v2360
        %v2365 = vmul.f32 %v2327, %v2360
        %v2366 = vmul.f32 %v2328, %v2360
        %v2367 = vmul.f32 %v2329, %v2360
        %v2368 = vmul.f32 %v2330, %v2360
        %v2369 = vmul.f32 %v2331, %v2360
        %v2370 = vmul.f32 %v2332, %v2360
        %v2371 = vmul.f32 %v2333, %v2360
        %v2372 = vmul.f32 %v2334, %v2360
        %v2373 = vmul.f32 %v2335, %v2360
        %v2374 = vmul.f32 %v2336, %v2360
        %v2375 = vmul.f32 %v2337, %v2360
        %v2376 = vmul.f32 %v2338, %v2360
        %v2377 = vmul.f32 %v2361, 1.442695
        %v2378 = vpow.pop %v2377
        %v2379 = vmul.f32 %v2362, 1.442695
        %v2380 = vpow.pop %v2379
        %v2381 = vmul.f32 %v2363, 1.442695
        %v2382 = vpow.pop %v2381
        %v2383 = vmul.f32 %v2364, 1.442695
        %v2384 = vpow.pop %v2383
        %v2385 = vmul.f32 %v2365, 1.442695
        %v2386 = vpow.pop %v2385
        %v2387 = vmul.f32 %v2366, 1.442695
        %v2388 = vpow.pop %v2387
        %v2389 = vmul.f32 %v2367, 1.442695
        %v2390 = vpow.pop %v2389
        %v2391 = vmul.f32 %v2368, 1.442695
        %v2392 = vpow.pop %v2391
        %v2393 = vmul.f32 %v2369, 1.442695
        %v2394 = vpow.pop %v2393
        %v2395 = vmul.f32 %v2370, 1.442695
        %v2396 = vpow.pop %v2395
        %v2397 = vmul.f32 %v2371, 1.442695
        %v2398 = vpow.pop %v2397
        %v2399 = vmul.f32 %v2372, 1.442695
        %v2400 = vpow.pop %v2399
        %v2401 = vmul.f32 %v2373, 1.442695
        %v2402 = vpow.pop %v2401
        %v2403 = vmul.f32 %v2374, 1.442695
        %v2404 = vpow.pop %v2403
        %v2405 = vmul.f32 %v2375, 1.442695
        %v2406 = vpow.pop %v2405
        %v2407 = vmul.f32 %v2376, 1.442695
        %v2408 = vpow.pop %v2407
        %v2409 = vstv %s2358
        %v2410 = vsel %vm2243, %v2409, 0.0
        %v2411 = vsel %vm2244, %v2409, 0.0
        %v2412 = vsel %vm2245, %v2409, 0.0
        %v2413 = vsel %vm2246, %v2409, 0.0
        %v2414 = vsel %vm2247, %v2409, 0.0
        %v2415 = vsel %vm2248, %v2409, 0.0
        %v2416 = vsel %vm2249, %v2409, 0.0
        %v2417 = vsel %vm2250, %v2409, 0.0
        %v2418 = vsel %vm2251, %v2409, 0.0
        %v2419 = vsel %vm2252, %v2409, 0.0
        %v2420 = vsel %vm2253, %v2409, 0.0
        %v2421 = vsel %vm2254, %v2409, 0.0
        %v2422 = vsel %vm2255, %v2409, 0.0
        %v2423 = vsel %vm2256, %v2409, 0.0
        %v2424 = vsel %vm2257, %v2409, 0.0
        %v2425 = vsel %vm2258, %v2409, 0.0
        %v2426 = vsel %vm2227, %v2378, %v2410
        %v2427 = vsel %vm2228, %v2380, %v2411
        %v2428 = vsel %vm2229, %v2382, %v2412
        %v2429 = vsel %vm2230, %v2384, %v2413
        %v2430 = vsel %vm2231, %v2386, %v2414
        %v2431 = vsel %vm2232, %v2388, %v2415
        %v2432 = vsel %vm2233, %v2390, %v2416
        %v2433 = vsel %vm2234, %v2392, %v2417
        %v2434 = vsel %vm2235, %v2394, %v2418
        %v2435 = vsel %vm2236, %v2396, %v2419
        %v2436 = vsel %vm2237, %v2398, %v2420
        %v2437 = vsel %vm2238, %v2400, %v2421
        %v2438 = vsel %vm2239, %v2402, %v2422
        %v2439 = vsel %vm2240, %v2404, %v2423
        %v2440 = vsel %vm2241, %v2406, %v2424
        %v2441 = vsel %vm2242, %v2408, %v2425
        %v2442 = vmul.f32 %v2339, %v2360
        %v2443 = vmul.f32 %v2340, %v2360
        %v2444 = vmul.f32 %v2341, %v2360
        %v2445 = vmul.f32 %v2342, %v2360
        %v2446 = vmul.f32 %v2343, %v2360
        %v2447 = vmul.f32 %v2344, %v2360
        %v2448 = vmul.f32 %v2345, %v2360
        %v2449 = vmul.f32 %v2346, %v2360
        %v2450 = vmul.f32 %v2347, %v2360
        %v2451 = vmul.f32 %v2348, %v2360
        %v2452 = vmul.f32 %v2349, %v2360
        %v2453 = vmul.f32 %v2350, %v2360
        %v2454 = vmul.f32 %v2351, %v2360
        %v2455 = vmul.f32 %v2352, %v2360
        %v2456 = vmul.f32 %v2353, %v2360
        %v2457 = vmul.f32 %v2354, %v2360
        %v2458 = vmul.f32 %v2442, 1.442695
        %v2459 = vpow.pop %v2458
        %v2460 = vmul.f32 %v2443, 1.442695
        %v2461 = vpow.pop %v2460
        %v2462 = vmul.f32 %v2444, 1.442695
        %v2463 = vpow.pop %v2462
        %v2464 = vmul.f32 %v2445, 1.442695
        %v2465 = vpow.pop %v2464
        %v2466 = vmul.f32 %v2446, 1.442695
        %v2467 = vpow.pop %v2466
        %v2468 = vmul.f32 %v2447, 1.442695
        %v2469 = vpow.pop %v2468
        %v2470 = vmul.f32 %v2448, 1.442695
        %v2471 = vpow.pop %v2470
        %v2472 = vmul.f32 %v2449, 1.442695
        %v2473 = vpow.pop %v2472
        %v2474 = vmul.f32 %v2450, 1.442695
        %v2475 = vpow.pop %v2474
        %v2476 = vmul.f32 %v2451, 1.442695
        %v2477 = vpow.pop %v2476
        %v2478 = vmul.f32 %v2452, 1.442695
        %v2479 = vpow.pop %v2478
        %v2480 = vmul.f32 %v2453, 1.442695
        %v2481 = vpow.pop %v2480
        %v2482 = vmul.f32 %v2454, 1.442695
        %v2483 = vpow.pop %v2482
        %v2484 = vmul.f32 %v2455, 1.442695
        %v2485 = vpow.pop %v2484
        %v2486 = vmul.f32 %v2456, 1.442695
        %v2487 = vpow.pop %v2486
        %v2488 = vmul.f32 %v2457, 1.442695
        %v2489 = vpow.pop %v2488
        %v2490 = vsub.f32 127.0, %v2339
        %v2491 = vsub.f32 127.0, %v2340
        %v2492 = vsub.f32 127.0, %v2341
        %v2493 = vsub.f32 127.0, %v2342
        %v2494 = vsub.f32 127.0, %v2343
        %v2495 = vsub.f32 127.0, %v2344
        %v2496 = vsub.f32 127.0, %v2345
        %v2497 = vsub.f32 127.0, %v2346
        %v2498 = vsub.f32 127.0, %v2347
        %v2499 = vsub.f32 127.0, %v2348
        %v2500 = vsub.f32 127.0, %v2349
        %v2501 = vsub.f32 127.0, %v2350
        %v2502 = vsub.f32 127.0, %v2351
        %v2503 = vsub.f32 127.0, %v2352
        %v2504 = vsub.f32 127.0, %v2353
        %v2505 = vsub.f32 127.0, %v2354
        %v2506 = vmul.f32 %v2490, %v2360
        %v2507 = vmul.f32 %v2491, %v2360
        %v2508 = vmul.f32 %v2492, %v2360
        %v2509 = vmul.f32 %v2493, %v2360
        %v2510 = vmul.f32 %v2494, %v2360
        %v2511 = vmul.f32 %v2495, %v2360
        %v2512 = vmul.f32 %v2496, %v2360
        %v2513 = vmul.f32 %v2497, %v2360
        %v2514 = vmul.f32 %v2498, %v2360
        %v2515 = vmul.f32 %v2499, %v2360
        %v2516 = vmul.f32 %v2500, %v2360
        %v2517 = vmul.f32 %v2501, %v2360
        %v2518 = vmul.f32 %v2502, %v2360
        %v2519 = vmul.f32 %v2503, %v2360
        %v2520 = vmul.f32 %v2504, %v2360
        %v2521 = vmul.f32 %v2505, %v2360
        %v2522 = vmul.f32 %v2506, 1.442695
        %v2523 = vpow.pop %v2522
        %v2524 = vmul.f32 %v2507, 1.442695
        %v2525 = vpow.pop %v2524
        %v2526 = vmul.f32 %v2508, 1.442695
        %v2527 = vpow.pop %v2526
        %v2528 = vmul.f32 %v2509, 1.442695
        %v2529 = vpow.pop %v2528
        %v2530 = vmul.f32 %v2510, 1.442695
        %v2531 = vpow.pop %v2530
        %v2532 = vmul.f32 %v2511, 1.442695
        %v2533 = vpow.pop %v2532
        %v2534 = vmul.f32 %v2512, 1.442695
        %v2535 = vpow.pop %v2534
        %v2536 = vmul.f32 %v2513, 1.442695
        %v2537 = vpow.pop %v2536
        %v2538 = vmul.f32 %v2514, 1.442695
        %v2539 = vpow.pop %v2538
        %v2540 = vmul.f32 %v2515, 1.442695
        %v2541 = vpow.pop %v2540
        %v2542 = vmul.f32 %v2516, 1.442695
        %v2543 = vpow.pop %v2542
        %v2544 = vmul.f32 %v2517, 1.442695
        %v2545 = vpow.pop %v2544
        %v2546 = vmul.f32 %v2518, 1.442695
        %v2547 = vpow.pop %v2546
        %v2548 = vmul.f32 %v2519, 1.442695
        %v2549 = vpow.pop %v2548
        %v2550 = vmul.f32 %v2520, 1.442695
        %v2551 = vpow.pop %v2550
        %v2552 = vmul.f32 %v2521, 1.442695
        %v2553 = vpow.pop %v2552
        %v2554 = vld [vmem:[#allocation2] sm:$0xff]
        %v2555 = vld [vmem:[#allocation2 + $0x8] sm:$0xff]
        %v2556 = vld [vmem:[#allocation2 + $0x10] sm:$0xff]
        %v2557 = vld [vmem:[#allocation2 + $0x18] sm:$0xff]
        %v2558 = vld [vmem:[#allocation2 + $0x20] sm:$0xff]
        %v2559 = vld [vmem:[#allocation2 + $0x28] sm:$0xff]
        %v2560 = vld [vmem:[#allocation2 + $0x30] sm:$0xff]
        %v2561 = vld [vmem:[#allocation2 + $0x38] sm:$0xff]
        %v2578 = vunpack.c.l.b16 %v2177
        %v2579 = vunpack.c.l.b16 %v2178
        %v2580 = vunpack.c.l.b16 %v2179
        %v2581 = vunpack.c.l.b16 %v2180
        %v2582 = vunpack.c.l.b16 %v2181
        %v2583 = vunpack.c.l.b16 %v2182
        %v2584 = vunpack.c.l.b16 %v2183
        %v2585 = vunpack.c.l.b16 %v2184
        %v2586 = vunpack.c.l.b16 %v2185
        %v2587 = vunpack.c.l.b16 %v2186
        %v2588 = vunpack.c.l.b16 %v2187
        %v2589 = vunpack.c.l.b16 %v2188
        %v2590 = vunpack.c.l.b16 %v2189
        %v2591 = vunpack.c.l.b16 %v2190
        %v2592 = vunpack.c.l.b16 %v2191
        %v2593 = vunpack.c.l.b16 %v2192
        %v2594 = vpack.c.b16 %v2579, %v2578
        %v2595 = vpack.c.b16 %v2581, %v2580
        %v2596 = vpack.c.b16 %v2583, %v2582
        %v2597 = vpack.c.b16 %v2585, %v2584
        %v2598 = vpack.c.b16 %v2587, %v2586
        %v2599 = vpack.c.b16 %v2589, %v2588
        %v2600 = vpack.c.b16 %v2591, %v2590
        %v2601 = vpack.c.b16 %v2593, %v2592
        %v2618 = vunpack.c.l.b16 %v2193
        %v2619 = vunpack.c.l.b16 %v2194
        %v2620 = vunpack.c.l.b16 %v2195
        %v2621 = vunpack.c.l.b16 %v2196
        %v2622 = vunpack.c.l.b16 %v2197
        %v2623 = vunpack.c.l.b16 %v2198
        %v2624 = vunpack.c.l.b16 %v2199
        %v2625 = vunpack.c.l.b16 %v2200
        %v2626 = vunpack.c.l.b16 %v2201
        %v2627 = vunpack.c.l.b16 %v2202
        %v2628 = vunpack.c.l.b16 %v2203
        %v2629 = vunpack.c.l.b16 %v2204
        %v2630 = vunpack.c.l.b16 %v2205
        %v2631 = vunpack.c.l.b16 %v2206
        %v2632 = vunpack.c.l.b16 %v2207
        %v2633 = vunpack.c.l.b16 %v2208
        %v2634 = vpack.c.b16 %v2619, %v2618
        %v2635 = vpack.c.b16 %v2621, %v2620
        %v2636 = vpack.c.b16 %v2623, %v2622
        %v2637 = vpack.c.b16 %v2625, %v2624
        %v2638 = vpack.c.b16 %v2627, %v2626
        %v2639 = vpack.c.b16 %v2629, %v2628
        %v2640 = vpack.c.b16 %v2631, %v2630
        %v2641 = vpack.c.b16 %v2633, %v2632
        %vm2642 = vcmask 523264
        %v2644 = vsel %vm2642, %v2594, 0
        %v2647 = vsel %vm2642, %v2595, 0
        %v2650 = vsel %vm2642, %v2596, 0
        %v2653 = vsel %vm2642, %v2597, 0
        %v2656 = vsel %vm2642, %v2598, 0
        %v2659 = vsel %vm2642, %v2599, 0
        %v2662 = vsel %vm2642, %v2600, 0
        %v2665 = vsel %vm2642, %v2601, 0
        %v2668 = vsel %vm2642, %v2634, 0
        %v2671 = vsel %vm2642, %v2635, 0
        %v2674 = vsel %vm2642, %v2636, 0
        %v2677 = vsel %vm2642, %v2637, 0
        %v2680 = vsel %vm2642, %v2638, 0
        %v2683 = vsel %vm2642, %v2639, 0
        %v2686 = vsel %vm2642, %v2640, 0
        %v2689 = vsel %vm2642, %v2641, 0
        %2691 = vmatpush.bf16.xpose.msra.mxu0 %v2689
        %2692 = vmatpush.bf16.xpose.msra.mxu0 %v2686
        %2693 = vmatpush.bf16.xpose.msra.mxu0 %v2683
        %2694 = vmatpush.bf16.xpose.msra.mxu0 %v2680
        %2695 = vmatpush.bf16.xpose.msra.mxu0 %v2677
        %2696 = vmatpush.bf16.xpose.msra.mxu0 %v2674
        %2697 = vmatpush.bf16.xpose.msra.mxu0 %v2671
        %2698 = vmatpush.bf16.xpose.msra.mxu0 %v2668
        %2699 = vmatmul.bf16.gmra.mxu0 %v2644
        %v2700 = vpop.f32.mrf.mxu0
        %v2701 = vadd.f32 0.0, %v2700
        %v2702 = vpop.f32.mrf.mxu0
        %v2703 = vadd.f32 0.0, %v2702
        %2704 = vmatmul.bf16.gmra.mxu0 %v2647
        %v2705 = vpop.f32.mrf.mxu0
        %v2706 = vadd.f32 0.0, %v2705
        %v2707 = vpop.f32.mrf.mxu0
        %v2708 = vadd.f32 0.0, %v2707
        %2709 = vmatmul.bf16.gmra.mxu0 %v2650
        %v2710 = vpop.f32.mrf.mxu0
        %v2711 = vadd.f32 0.0, %v2710
        %v2712 = vpop.f32.mrf.mxu0
        %v2713 = vadd.f32 0.0, %v2712
        %2714 = vmatmul.bf16.gmra.mxu0 %v2653
        %v2715 = vpop.f32.mrf.mxu0
        %v2716 = vadd.f32 0.0, %v2715
        %v2717 = vpop.f32.mrf.mxu0
        %v2718 = vadd.f32 0.0, %v2717
        %2719 = vmatmul.bf16.gmra.mxu0 %v2656
        %v2720 = vpop.f32.mrf.mxu0
        %v2721 = vadd.f32 0.0, %v2720
        %v2722 = vpop.f32.mrf.mxu0
        %v2723 = vadd.f32 0.0, %v2722
        %2724 = vmatmul.bf16.gmra.mxu0 %v2659
        %v2725 = vpop.f32.mrf.mxu0
        %v2726 = vadd.f32 0.0, %v2725
        %v2727 = vpop.f32.mrf.mxu0
        %v2728 = vadd.f32 0.0, %v2727
        %2729 = vmatmul.bf16.gmra.mxu0 %v2662
        %v2730 = vpop.f32.mrf.mxu0
        %v2731 = vadd.f32 0.0, %v2730
        %v2732 = vpop.f32.mrf.mxu0
        %v2733 = vadd.f32 0.0, %v2732
        %2734 = vmatmul.bf16.gmra.mxu0 %v2665
        %v2735 = vpop.f32.mrf.mxu0
        %v2736 = vadd.f32 0.0, %v2735
        %v2737 = vpop.f32.mrf.mxu0
        %v2738 = vadd.f32 0.0, %v2737
        %2739 = vdwg.mxu0
        %v2740 = vmul.f32 %v2701, %v2426
        %v2741 = vmul.f32 %v2703, %v2427
        %v2742 = vmul.f32 %v2706, %v2428
        %v2743 = vmul.f32 %v2708, %v2429
        %v2744 = vmul.f32 %v2711, %v2430
        %v2745 = vmul.f32 %v2713, %v2431
        %v2746 = vmul.f32 %v2716, %v2432
        %v2747 = vmul.f32 %v2718, %v2433
        %v2748 = vmul.f32 %v2721, %v2434
        %v2749 = vmul.f32 %v2723, %v2435
        %v2750 = vmul.f32 %v2726, %v2436
        %v2751 = vmul.f32 %v2728, %v2437
        %v2752 = vmul.f32 %v2731, %v2438
        %v2753 = vmul.f32 %v2733, %v2439
        %v2754 = vmul.f32 %v2736, %v2440
        %v2755 = vmul.f32 %v2738, %v2441
        %v2756 = vpack.c.bf16 %v2741, %v2740
        %v2757 = vpack.c.bf16 %v2743, %v2742
        %v2758 = vpack.c.bf16 %v2745, %v2744
        %v2759 = vpack.c.bf16 %v2747, %v2746
        %v2760 = vpack.c.bf16 %v2749, %v2748
        %v2761 = vpack.c.bf16 %v2751, %v2750
        %v2762 = vpack.c.bf16 %v2753, %v2752
        %v2763 = vpack.c.bf16 %v2755, %v2754
        %v2764 = vpack.c.bf16 %v2555, %v2554
        %v2765 = vpack.c.bf16 %v2557, %v2556
        %v2766 = vpack.c.bf16 %v2559, %v2558
        %v2767 = vpack.c.bf16 %v2561, %v2560
        %2768 = vmatpush.bf16.msra.mxu0 0
        %2769 = vmatpush.bf16.msra.mxu0 0
        %2770 = vmatpush.bf16.msra.mxu0 0
        %2771 = vmatpush.bf16.msra.mxu0 0
        %2772 = vmatpush.bf16.msra.mxu0 %v2767
        %2773 = vmatpush.bf16.msra.mxu0 %v2766
        %2774 = vmatpush.bf16.msra.mxu0 %v2765
        %2775 = vmatpush.bf16.msra.mxu0 %v2764
        %2776 = vmatmul.bf16.gmra.mxu0 %v2644
        %v2777 = vpop.f32.mrf.mxu0
        %v2778 = vadd.f32 0.0, %v2777
        %v2779 = vpop.f32.mrf.mxu0
        %v2780 = vadd.f32 0.0, %v2779
        %2781 = vmatmul.bf16.gmra.mxu0 %v2647
        %v2782 = vpop.f32.mrf.mxu0
        %v2783 = vadd.f32 0.0, %v2782
        %v2784 = vpop.f32.mrf.mxu0
        %v2785 = vadd.f32 0.0, %v2784
        %2786 = vmatmul.bf16.gmra.mxu0 %v2650
        %v2787 = vpop.f32.mrf.mxu0
        %v2788 = vadd.f32 0.0, %v2787
        %v2789 = vpop.f32.mrf.mxu0
        %v2790 = vadd.f32 0.0, %v2789
        %2791 = vmatmul.bf16.gmra.mxu0 %v2653
        %v2792 = vpop.f32.mrf.mxu0
        %v2793 = vadd.f32 0.0, %v2792
        %v2794 = vpop.f32.mrf.mxu0
        %v2795 = vadd.f32 0.0, %v2794
        %2796 = vmatmul.bf16.gmra.mxu0 %v2656
        %v2797 = vpop.f32.mrf.mxu0
        %v2798 = vadd.f32 0.0, %v2797
        %v2799 = vpop.f32.mrf.mxu0
        %v2800 = vadd.f32 0.0, %v2799
        %2801 = vmatmul.bf16.gmra.mxu0 %v2659
        %v2802 = vpop.f32.mrf.mxu0
        %v2803 = vadd.f32 0.0, %v2802
        %v2804 = vpop.f32.mrf.mxu0
        %v2805 = vadd.f32 0.0, %v2804
        %2806 = vmatmul.bf16.gmra.mxu0 %v2662
        %v2807 = vpop.f32.mrf.mxu0
        %v2808 = vadd.f32 0.0, %v2807
        %v2809 = vpop.f32.mrf.mxu0
        %v2810 = vadd.f32 0.0, %v2809
        %2811 = vmatmul.bf16.gmra.mxu0 %v2665
        %v2812 = vpop.f32.mrf.mxu0
        %v2813 = vadd.f32 0.0, %v2812
        %v2814 = vpop.f32.mrf.mxu0
        %v2815 = vadd.f32 0.0, %v2814
        %2816 = vdwg.mxu0
        %v2817 = vmul.f32 %v2778, %v2459
        %v2818 = vmul.f32 %v2780, %v2461
        %v2819 = vmul.f32 %v2783, %v2463
        %v2820 = vmul.f32 %v2785, %v2465
        %v2821 = vmul.f32 %v2788, %v2467
        %v2822 = vmul.f32 %v2790, %v2469
        %v2823 = vmul.f32 %v2793, %v2471
        %v2824 = vmul.f32 %v2795, %v2473
        %v2825 = vmul.f32 %v2798, %v2475
        %v2826 = vmul.f32 %v2800, %v2477
        %v2827 = vmul.f32 %v2803, %v2479
        %v2828 = vmul.f32 %v2805, %v2481
        %v2829 = vmul.f32 %v2808, %v2483
        %v2830 = vmul.f32 %v2810, %v2485
        %v2831 = vmul.f32 %v2813, %v2487
        %v2832 = vmul.f32 %v2815, %v2489
        %v2849 = vunpack.c.l.b16 %v2209
        %v2850 = vunpack.c.l.b16 %v2210
        %v2851 = vunpack.c.l.b16 %v2211
        %v2852 = vunpack.c.l.b16 %v2212
        %v2853 = vunpack.c.l.b16 %v2213
        %v2854 = vunpack.c.l.b16 %v2214
        %v2855 = vunpack.c.l.b16 %v2215
        %v2856 = vunpack.c.l.b16 %v2216
        %v2857 = vunpack.c.l.b16 %v2217
        %v2858 = vunpack.c.l.b16 %v2218
        %v2859 = vunpack.c.l.b16 %v2219
        %v2860 = vunpack.c.l.b16 %v2220
        %v2861 = vunpack.c.l.b16 %v2221
        %v2862 = vunpack.c.l.b16 %v2222
        %v2863 = vunpack.c.l.b16 %v2223
        %v2864 = vunpack.c.l.b16 %v2224
        %v2865 = vpack.c.b16 %v2850, %v2849
        %v2866 = vpack.c.b16 %v2852, %v2851
        %v2867 = vpack.c.b16 %v2854, %v2853
        %v2868 = vpack.c.b16 %v2856, %v2855
        %v2869 = vpack.c.b16 %v2858, %v2857
        %v2870 = vpack.c.b16 %v2860, %v2859
        %v2871 = vpack.c.b16 %v2862, %v2861
        %v2872 = vpack.c.b16 %v2864, %v2863
        %2881 = vmatpush.bf16.msra.mxu0 %v2872
        %2882 = vmatpush.bf16.msra.mxu0 %v2871
        %2883 = vmatpush.bf16.msra.mxu0 %v2870
        %2884 = vmatpush.bf16.msra.mxu0 %v2869
        %2885 = vmatpush.bf16.msra.mxu0 %v2868
        %2886 = vmatpush.bf16.msra.mxu0 %v2867
        %2887 = vmatpush.bf16.msra.mxu0 %v2866
        %2888 = vmatpush.bf16.msra.mxu0 %v2865
        %2889 = vmatmul.bf16.gmra.mxu0 %v2756
        %v2890 = vpop.f32.mrf.mxu0
        %v2891 = vadd.f32 %v2817, %v2890
        %v2892 = vpop.f32.mrf.mxu0
        %v2893 = vadd.f32 %v2818, %v2892
        %2894 = vmatmul.bf16.gmra.mxu0 %v2757
        %v2895 = vpop.f32.mrf.mxu0
        %v2896 = vadd.f32 %v2819, %v2895
        %v2897 = vpop.f32.mrf.mxu0
        %v2898 = vadd.f32 %v2820, %v2897
        %2899 = vmatmul.bf16.gmra.mxu0 %v2758
        %v2900 = vpop.f32.mrf.mxu0
        %v2901 = vadd.f32 %v2821, %v2900
        %v2902 = vpop.f32.mrf.mxu0
        %v2903 = vadd.f32 %v2822, %v2902
        %2904 = vmatmul.bf16.gmra.mxu0 %v2759
        %v2905 = vpop.f32.mrf.mxu0
        %v2906 = vadd.f32 %v2823, %v2905
        %v2907 = vpop.f32.mrf.mxu0
        %v2908 = vadd.f32 %v2824, %v2907
        %2909 = vmatmul.bf16.gmra.mxu0 %v2760
        %v2910 = vpop.f32.mrf.mxu0
        %v2911 = vadd.f32 %v2825, %v2910
        %v2912 = vpop.f32.mrf.mxu0
        %v2913 = vadd.f32 %v2826, %v2912
        %2914 = vmatmul.bf16.gmra.mxu0 %v2761
        %v2915 = vpop.f32.mrf.mxu0
        %v2916 = vadd.f32 %v2827, %v2915
        %v2917 = vpop.f32.mrf.mxu0
        %v2918 = vadd.f32 %v2828, %v2917
        %2919 = vmatmul.bf16.gmra.mxu0 %v2762
        %v2920 = vpop.f32.mrf.mxu0
        %v2921 = vadd.f32 %v2829, %v2920
        %v2922 = vpop.f32.mrf.mxu0
        %v2923 = vadd.f32 %v2830, %v2922
        %2924 = vmatmul.bf16.gmra.mxu0 %v2763
        %v2925 = vpop.f32.mrf.mxu0
        %v2926 = vadd.f32 %v2831, %v2925
        %v2927 = vpop.f32.mrf.mxu0
        %v2928 = vadd.f32 %v2832, %v2927
        %2929 = vdwg.mxu0
        %v2930 = vunpack.c.l.bf16 %v2193
        %v2931 = vunpack.c.l.bf16 %v2194
        %v2932 = vunpack.c.l.bf16 %v2195
        %v2933 = vunpack.c.l.bf16 %v2196
        %v2934 = vunpack.c.l.bf16 %v2197
        %v2935 = vunpack.c.l.bf16 %v2198
        %v2936 = vunpack.c.l.bf16 %v2199
        %v2937 = vunpack.c.l.bf16 %v2200
        %v2938 = vunpack.c.l.bf16 %v2201
        %v2939 = vunpack.c.l.bf16 %v2202
        %v2940 = vunpack.c.l.bf16 %v2203
        %v2941 = vunpack.c.l.bf16 %v2204
        %v2942 = vunpack.c.l.bf16 %v2205
        %v2943 = vunpack.c.l.bf16 %v2206
        %v2944 = vunpack.c.l.bf16 %v2207
        %v2945 = vunpack.c.l.bf16 %v2208
        %v2946 = vmul.f32 %v2930, %v2523
        %v2947 = vmul.f32 %v2931, %v2525
        %v2948 = vmul.f32 %v2932, %v2527
        %v2949 = vmul.f32 %v2933, %v2529
        %v2950 = vmul.f32 %v2934, %v2531
        %v2951 = vmul.f32 %v2935, %v2533
        %v2952 = vmul.f32 %v2936, %v2535
        %v2953 = vmul.f32 %v2937, %v2537
        %v2954 = vmul.f32 %v2938, %v2539
        %v2955 = vmul.f32 %v2939, %v2541
        %v2956 = vmul.f32 %v2940, %v2543
        %v2957 = vmul.f32 %v2941, %v2545
        %v2958 = vmul.f32 %v2942, %v2547
        %v2959 = vmul.f32 %v2943, %v2549
        %v2960 = vmul.f32 %v2944, %v2551
        %v2961 = vmul.f32 %v2945, %v2553
        %v2962 = vpack.c.bf16 %v2947, %v2946
        %v2963 = vpack.c.bf16 %v2949, %v2948
        %v2964 = vpack.c.bf16 %v2951, %v2950
        %v2965 = vpack.c.bf16 %v2953, %v2952
        %v2966 = vpack.c.bf16 %v2955, %v2954
        %v2967 = vpack.c.bf16 %v2957, %v2956
        %v2968 = vpack.c.bf16 %v2959, %v2958
        %v2969 = vpack.c.bf16 %v2961, %v2960
        %2970 = vxpose.xlu0.c.b16.start [1/8] %v2962, 128
        %2971 = vxpose.xlu0.c.b16.cont [2/8] %v2963, 128
        %2972 = vxpose.xlu0.c.b16.cont [3/8] %v2964, 128
        %2973 = vxpose.xlu0.c.b16.cont [4/8] %v2965, 128
        %2974 = vxpose.xlu0.c.b16.cont [5/8] %v2966, 128
        %2975 = vxpose.xlu0.c.b16.cont [6/8] %v2967, 128
        %2976 = vxpose.xlu0.c.b16.cont [7/8] %v2968, 128
        %2977 = vxpose.xlu0.c.b16.end [8/8] %v2969, 128
        %v2978 = vpop.trf.xlu0
        %v2979 = vpop.trf.xlu0
        %v2980 = vpop.trf.xlu0
        %v2981 = vpop.trf.xlu0
        %v2982 = vpop.trf.xlu0
        %v2983 = vpop.trf.xlu0
        %v2984 = vpop.trf.xlu0
        %v2985 = vpop.trf.xlu0
        %2986 = vmatpush.bf16.msra.mxu0 %v2872
        %2987 = vmatpush.bf16.msra.mxu0 %v2871
        %2988 = vmatpush.bf16.msra.mxu0 %v2870
        %2989 = vmatpush.bf16.msra.mxu0 %v2869
        %2990 = vmatpush.bf16.msra.mxu0 %v2868
        %2991 = vmatpush.bf16.msra.mxu0 %v2867
        %2992 = vmatpush.bf16.msra.mxu0 %v2866
        %2993 = vmatpush.bf16.msra.mxu0 %v2865
        %2994 = vmatmul.bf16.gmra.mxu0 %v2978
        %v2995 = vpop.f32.mrf.mxu0
        %v2996 = vadd.f32 0.0, %v2995
        %v2997 = vpop.f32.mrf.mxu0
        %v2998 = vadd.f32 0.0, %v2997
        %2999 = vmatmul.bf16.gmra.mxu0 %v2979
        %v3000 = vpop.f32.mrf.mxu0
        %v3001 = vadd.f32 0.0, %v3000
        %v3002 = vpop.f32.mrf.mxu0
        %v3003 = vadd.f32 0.0, %v3002
        %3004 = vmatmul.bf16.gmra.mxu0 %v2980
        %v3005 = vpop.f32.mrf.mxu0
        %v3006 = vadd.f32 0.0, %v3005
        %v3007 = vpop.f32.mrf.mxu0
        %v3008 = vadd.f32 0.0, %v3007
        %3009 = vmatmul.bf16.gmra.mxu0 %v2981
        %v3010 = vpop.f32.mrf.mxu0
        %v3011 = vadd.f32 0.0, %v3010
        %v3012 = vpop.f32.mrf.mxu0
        %v3013 = vadd.f32 0.0, %v3012
        %3014 = vdwg.mxu0
        %v3015 = vstv %s2359
        %v3016 = vmul.f32 %v3015, %v2554
        %v3017 = vmul.f32 %v3015, %v2555
        %v3018 = vmul.f32 %v3015, %v2556
        %v3019 = vmul.f32 %v3015, %v2557
        %v3020 = vmul.f32 %v3015, %v2558
        %v3021 = vmul.f32 %v3015, %v2559
        %v3022 = vmul.f32 %v3015, %v2560
        %v3023 = vmul.f32 %v3015, %v2561
        %v3024 = vadd.f32 %v3016, %v2996
        %v3025 = vadd.f32 %v3017, %v2998
        %v3026 = vadd.f32 %v3018, %v3001
        %v3027 = vadd.f32 %v3019, %v3003
        %v3028 = vadd.f32 %v3020, %v3006
        %v3029 = vadd.f32 %v3021, %v3008
        %v3030 = vadd.f32 %v3022, %v3011
        %v3031 = vadd.f32 %v3023, %v3013
        %3032 = vst.msk [vmem:[#allocation2] sm:$0xff] %vm2642, %v3024
        %3033 = vst.msk [vmem:[#allocation2 + $0x8] sm:$0xff] %vm2642, %v3025
        %3034 = vst.msk [vmem:[#allocation2 + $0x10] sm:$0xff] %vm2642, %v3026
        %3035 = vst.msk [vmem:[#allocation2 + $0x18] sm:$0xff] %vm2642, %v3027
        %3036 = vst.msk [vmem:[#allocation2 + $0x20] sm:$0xff] %vm2642, %v3028
        %3037 = vst.msk [vmem:[#allocation2 + $0x28] sm:$0xff] %vm2642, %v3029
        %3038 = vst.msk [vmem:[#allocation2 + $0x30] sm:$0xff] %vm2642, %v3030
        %3039 = vst.msk [vmem:[#allocation2 + $0x38] sm:$0xff] %vm2642, %v3031
        %v3040 = vmul.f32 %v2891, 0.125
        %v3041 = vmul.f32 %v2893, 0.125
        %v3042 = vmul.f32 %v2896, 0.125
        %v3043 = vmul.f32 %v2898, 0.125
        %v3044 = vmul.f32 %v2901, 0.125
        %v3045 = vmul.f32 %v2903, 0.125
        %v3046 = vmul.f32 %v2906, 0.125
        %v3047 = vmul.f32 %v2908, 0.125
        %v3048 = vmul.f32 %v2911, 0.125
        %v3049 = vmul.f32 %v2913, 0.125
        %v3050 = vmul.f32 %v2916, 0.125
        %v3051 = vmul.f32 %v2918, 0.125
        %v3052 = vmul.f32 %v2921, 0.125
        %v3053 = vmul.f32 %v2923, 0.125
        %v3054 = vmul.f32 %v2926, 0.125
        %v3055 = vmul.f32 %v2928, 0.125
        %v3056 = vsel %vm2642, %v3040, 0.0
        %3057 = vadd.xlane.f32.xlu0 %v3056
        %v3058 = vpop.xlane.xlu0 %3057
        %v3059 = vsel %vm2642, %v3041, 0.0
        %3060 = vadd.xlane.f32.xlu0 %v3059
        %v3061 = vpop.xlane.xlu0 %3060
        %v3062 = vsel %vm2642, %v3042, 0.0
        %3063 = vadd.xlane.f32.xlu0 %v3062
        %v3064 = vpop.xlane.xlu0 %3063
        %v3065 = vsel %vm2642, %v3043, 0.0
        %3066 = vadd.xlane.f32.xlu0 %v3065
        %v3067 = vpop.xlane.xlu0 %3066
        %v3068 = vsel %vm2642, %v3044, 0.0
        %3069 = vadd.xlane.f32.xlu0 %v3068
        %v3070 = vpop.xlane.xlu0 %3069
        %v3071 = vsel %vm2642, %v3045, 0.0
        %3072 = vadd.xlane.f32.xlu0 %v3071
        %v3073 = vpop.xlane.xlu0 %3072
        %v3074 = vsel %vm2642, %v3046, 0.0
        %3075 = vadd.xlane.f32.xlu0 %v3074
        %v3076 = vpop.xlane.xlu0 %3075
        %v3077 = vsel %vm2642, %v3047, 0.0
        %3078 = vadd.xlane.f32.xlu0 %v3077
        %v3079 = vpop.xlane.xlu0 %3078
        %v3080 = vsel %vm2642, %v3048, 0.0
        %3081 = vadd.xlane.f32.xlu0 %v3080
        %v3082 = vpop.xlane.xlu0 %3081
        %v3083 = vsel %vm2642, %v3049, 0.0
        %3084 = vadd.xlane.f32.xlu0 %v3083
        %v3085 = vpop.xlane.xlu0 %3084
        %v3086 = vsel %vm2642, %v3050, 0.0
        %3087 = vadd.xlane.f32.xlu0 %v3086
        %v3088 = vpop.xlane.xlu0 %3087
        %v3089 = vsel %vm2642, %v3051, 0.0
        %3090 = vadd.xlane.f32.xlu0 %v3089
        %v3091 = vpop.xlane.xlu0 %3090
        %v3092 = vsel %vm2642, %v3052, 0.0
        %3093 = vadd.xlane.f32.xlu0 %v3092
        %v3094 = vpop.xlane.xlu0 %3093
        %v3095 = vsel %vm2642, %v3053, 0.0
        %3096 = vadd.xlane.f32.xlu0 %v3095
        %v3097 = vpop.xlane.xlu0 %3096
        %v3098 = vsel %vm2642, %v3054, 0.0
        %3099 = vadd.xlane.f32.xlu0 %v3098
        %v3100 = vpop.xlane.xlu0 %3099
        %v3101 = vsel %vm2642, %v3055, 0.0
        %3102 = vadd.xlane.f32.xlu0 %v3101
        %v3103 = vpop.xlane.xlu0 %3102
        %v3104 = vrcp.pop 64.0
        %v3105 = vmul.f32 64.0, %v3104
        %v3106 = vsub.f32 1.0, %v3105
        %v3107 = vmul.f32 %v3104, %v3106
        %v3108 = vadd.f32 %v3104, %v3107
        %vm3109 = vweird.f32 %v3104
        %v3110 = vsel %vm3109, %v3104, %v3108
        %v3111 = vmul.f32 %v3058, %v3110
        %v3112 = vmul.f32 %v3061, %v3110
        %v3113 = vmul.f32 %v3064, %v3110
        %v3114 = vmul.f32 %v3067, %v3110
        %v3115 = vmul.f32 %v3070, %v3110
        %v3116 = vmul.f32 %v3073, %v3110
        %v3117 = vmul.f32 %v3076, %v3110
        %v3118 = vmul.f32 %v3079, %v3110
        %v3119 = vmul.f32 %v3082, %v3110
        %v3120 = vmul.f32 %v3085, %v3110
        %v3121 = vmul.f32 %v3088, %v3110
        %v3122 = vmul.f32 %v3091, %v3110
        %v3123 = vmul.f32 %v3094, %v3110
        %v3124 = vmul.f32 %v3097, %v3110
        %v3125 = vmul.f32 %v3100, %v3110
        %v3126 = vmul.f32 %v3103, %v3110
        %v3127 = vsub.f32 %v3040, %v3111
        %v3128 = vsub.f32 %v3041, %v3112
        %v3129 = vsub.f32 %v3042, %v3113
        %v3130 = vsub.f32 %v3043, %v3114
        %v3131 = vsub.f32 %v3044, %v3115
        %v3132 = vsub.f32 %v3045, %v3116
        %v3133 = vsub.f32 %v3046, %v3117
        %v3134 = vsub.f32 %v3047, %v3118
        %v3135 = vsub.f32 %v3048, %v3119
        %v3136 = vsub.f32 %v3049, %v3120
        %v3137 = vsub.f32 %v3050, %v3121
        %v3138 = vsub.f32 %v3051, %v3122
        %v3139 = vsub.f32 %v3052, %v3123
        %v3140 = vsub.f32 %v3053, %v3124
        %v3141 = vsub.f32 %v3054, %v3125
        %v3142 = vsub.f32 %v3055, %v3126
        %v3143 = vmul.f32 %v3127, %v3127
        %v3144 = vmul.f32 %v3128, %v3128
        %v3145 = vmul.f32 %v3129, %v3129
        %v3146 = vmul.f32 %v3130, %v3130
        %v3147 = vmul.f32 %v3131, %v3131
        %v3148 = vmul.f32 %v3132, %v3132
        %v3149 = vmul.f32 %v3133, %v3133
        %v3150 = vmul.f32 %v3134, %v3134
        %v3151 = vmul.f32 %v3135, %v3135
        %v3152 = vmul.f32 %v3136, %v3136
        %v3153 = vmul.f32 %v3137, %v3137
        %v3154 = vmul.f32 %v3138, %v3138
        %v3155 = vmul.f32 %v3139, %v3139
        %v3156 = vmul.f32 %v3140, %v3140
        %v3157 = vmul.f32 %v3141, %v3141
        %v3158 = vmul.f32 %v3142, %v3142
        %v3159 = vsel %vm2642, %v3143, 0.0
        %3160 = vadd.xlane.f32.xlu0 %v3159
        %v3161 = vpop.xlane.xlu0 %3160
        %v3162 = vsel %vm2642, %v3144, 0.0
        %3163 = vadd.xlane.f32.xlu0 %v3162
        %v3164 = vpop.xlane.xlu0 %3163
        %v3165 = vsel %vm2642, %v3145, 0.0
        %3166 = vadd.xlane.f32.xlu0 %v3165
        %v3167 = vpop.xlane.xlu0 %3166
        %v3168 = vsel %vm2642, %v3146, 0.0
        %3169 = vadd.xlane.f32.xlu0 %v3168
        %v3170 = vpop.xlane.xlu0 %3169
        %v3171 = vsel %vm2642, %v3147, 0.0
        %3172 = vadd.xlane.f32.xlu0 %v3171
        %v3173 = vpop.xlane.xlu0 %3172
        %v3174 = vsel %vm2642, %v3148, 0.0
        %3175 = vadd.xlane.f32.xlu0 %v3174
        %v3176 = vpop.xlane.xlu0 %3175
        %v3177 = vsel %vm2642, %v3149, 0.0
        %3178 = vadd.xlane.f32.xlu0 %v3177
        %v3179 = vpop.xlane.xlu0 %3178
        %v3180 = vsel %vm2642, %v3150, 0.0
        %3181 = vadd.xlane.f32.xlu0 %v3180
        %v3182 = vpop.xlane.xlu0 %3181
        %v3183 = vsel %vm2642, %v3151, 0.0
        %3184 = vadd.xlane.f32.xlu0 %v3183
        %v3185 = vpop.xlane.xlu0 %3184
        %v3186 = vsel %vm2642, %v3152, 0.0
        %3187 = vadd.xlane.f32.xlu0 %v3186
        %v3188 = vpop.xlane.xlu0 %3187
        %v3189 = vsel %vm2642, %v3153, 0.0
        %3190 = vadd.xlane.f32.xlu0 %v3189
        %v3191 = vpop.xlane.xlu0 %3190
        %v3192 = vsel %vm2642, %v3154, 0.0
        %3193 = vadd.xlane.f32.xlu0 %v3192
        %v3194 = vpop.xlane.xlu0 %3193
        %v3195 = vsel %vm2642, %v3155, 0.0
        %3196 = vadd.xlane.f32.xlu0 %v3195
        %v3197 = vpop.xlane.xlu0 %3196
        %v3198 = vsel %vm2642, %v3156, 0.0
        %3199 = vadd.xlane.f32.xlu0 %v3198
        %v3200 = vpop.xlane.xlu0 %3199
        %v3201 = vsel %vm2642, %v3157, 0.0
        %3202 = vadd.xlane.f32.xlu0 %v3201
        %v3203 = vpop.xlane.xlu0 %3202
        %v3204 = vsel %vm2642, %v3158, 0.0
        %3205 = vadd.xlane.f32.xlu0 %v3204
        %v3206 = vpop.xlane.xlu0 %3205
        %v3207 = vmul.f32 %v3161, %v3110
        %v3208 = vmul.f32 %v3164, %v3110
        %v3209 = vmul.f32 %v3167, %v3110
        %v3210 = vmul.f32 %v3170, %v3110
        %v3211 = vmul.f32 %v3173, %v3110
        %v3212 = vmul.f32 %v3176, %v3110
        %v3213 = vmul.f32 %v3179, %v3110
        %v3214 = vmul.f32 %v3182, %v3110
        %v3215 = vmul.f32 %v3185, %v3110
        %v3216 = vmul.f32 %v3188, %v3110
        %v3217 = vmul.f32 %v3191, %v3110
        %v3218 = vmul.f32 %v3194, %v3110
        %v3219 = vmul.f32 %v3197, %v3110
        %v3220 = vmul.f32 %v3200, %v3110
        %v3221 = vmul.f32 %v3203, %v3110
        %v3222 = vmul.f32 %v3206, %v3110
        %v3223 = vadd.f32 %v3207, 1e-05
        %v3224 = vadd.f32 %v3208, 1e-05
        %v3225 = vadd.f32 %v3209, 1e-05
        %v3226 = vadd.f32 %v3210, 1e-05
        %v3227 = vadd.f32 %v3211, 1e-05
        %v3228 = vadd.f32 %v3212, 1e-05
        %v3229 = vadd.f32 %v3213, 1e-05
        %v3230 = vadd.f32 %v3214, 1e-05
        %v3231 = vadd.f32 %v3215, 1e-05
        %v3232 = vadd.f32 %v3216, 1e-05
        %v3233 = vadd.f32 %v3217, 1e-05
        %v3234 = vadd.f32 %v3218, 1e-05
        %v3235 = vadd.f32 %v3219, 1e-05
        %v3236 = vadd.f32 %v3220, 1e-05
        %v3237 = vadd.f32 %v3221, 1e-05
        %v3238 = vadd.f32 %v3222, 1e-05
        %v3239 = vrsqrt.pop %v3223
        %v3240 = vmul.f32 %v3239, %v3223
        %v3241 = vmul.f32 %v3240, %v3239
        %v3242 = vmul.f32 0.5, %v3241
        %v3243 = vsub.f32 1.5, %v3242
        %v3244 = vmul.f32 %v3239, %v3243
        %vm3245 = vweird.f32 %v3223
        %vm3246 = vweird.f32 %v3239
        %vm3247 = vmor %vm3245, %vm3246
        %v3248 = vsel %vm3247, %v3239, %v3244
        %v3249 = vrsqrt.pop %v3224
        %v3250 = vmul.f32 %v3249, %v3224
        %v3251 = vmul.f32 %v3250, %v3249
        %v3252 = vmul.f32 0.5, %v3251
        %v3253 = vsub.f32 1.5, %v3252
        %v3254 = vmul.f32 %v3249, %v3253
        %vm3255 = vweird.f32 %v3224
        %vm3256 = vweird.f32 %v3249
        %vm3257 = vmor %vm3255, %vm3256
        %v3258 = vsel %vm3257, %v3249, %v3254
        %v3259 = vrsqrt.pop %v3225
        %v3260 = vmul.f32 %v3259, %v3225
        %v3261 = vmul.f32 %v3260, %v3259
        %v3262 = vmul.f32 0.5, %v3261
        %v3263 = vsub.f32 1.5, %v3262
        %v3264 = vmul.f32 %v3259, %v3263
        %vm3265 = vweird.f32 %v3225
        %vm3266 = vweird.f32 %v3259
        %vm3267 = vmor %vm3265, %vm3266
        %v3268 = vsel %vm3267, %v3259, %v3264
        %v3269 = vrsqrt.pop %v3226
        %v3270 = vmul.f32 %v3269, %v3226
        %v3271 = vmul.f32 %v3270, %v3269
        %v3272 = vmul.f32 0.5, %v3271
        %v3273 = vsub.f32 1.5, %v3272
        %v3274 = vmul.f32 %v3269, %v3273
        %vm3275 = vweird.f32 %v3226
        %vm3276 = vweird.f32 %v3269
        %vm3277 = vmor %vm3275, %vm3276
        %v3278 = vsel %vm3277, %v3269, %v3274
        %v3279 = vrsqrt.pop %v3227
        %v3280 = vmul.f32 %v3279, %v3227
        %v3281 = vmul.f32 %v3280, %v3279
        %v3282 = vmul.f32 0.5, %v3281
        %v3283 = vsub.f32 1.5, %v3282
        %v3284 = vmul.f32 %v3279, %v3283
        %vm3285 = vweird.f32 %v3227
        %vm3286 = vweird.f32 %v3279
        %vm3287 = vmor %vm3285, %vm3286
        %v3288 = vsel %vm3287, %v3279, %v3284
        %v3289 = vrsqrt.pop %v3228
        %v3290 = vmul.f32 %v3289, %v3228
        %v3291 = vmul.f32 %v3290, %v3289
        %v3292 = vmul.f32 0.5, %v3291
        %v3293 = vsub.f32 1.5, %v3292
        %v3294 = vmul.f32 %v3289, %v3293
        %vm3295 = vweird.f32 %v3228
        %vm3296 = vweird.f32 %v3289
        %vm3297 = vmor %vm3295, %vm3296
        %v3298 = vsel %vm3297, %v3289, %v3294
        %v3299 = vrsqrt.pop %v3229
        %v3300 = vmul.f32 %v3299, %v3229
        %v3301 = vmul.f32 %v3300, %v3299
        %v3302 = vmul.f32 0.5, %v3301
        %v3303 = vsub.f32 1.5, %v3302
        %v3304 = vmul.f32 %v3299, %v3303
        %vm3305 = vweird.f32 %v3229
        %vm3306 = vweird.f32 %v3299
        %vm3307 = vmor %vm3305, %vm3306
        %v3308 = vsel %vm3307, %v3299, %v3304
        %v3309 = vrsqrt.pop %v3230
        %v3310 = vmul.f32 %v3309, %v3230
        %v3311 = vmul.f32 %v3310, %v3309
        %v3312 = vmul.f32 0.5, %v3311
        %v3313 = vsub.f32 1.5, %v3312
        %v3314 = vmul.f32 %v3309, %v3313
        %vm3315 = vweird.f32 %v3230
        %vm3316 = vweird.f32 %v3309
        %vm3317 = vmor %vm3315, %vm3316
        %v3318 = vsel %vm3317, %v3309, %v3314
        %v3319 = vrsqrt.pop %v3231
        %v3320 = vmul.f32 %v3319, %v3231
        %v3321 = vmul.f32 %v3320, %v3319
        %v3322 = vmul.f32 0.5, %v3321
        %v3323 = vsub.f32 1.5, %v3322
        %v3324 = vmul.f32 %v3319, %v3323
        %vm3325 = vweird.f32 %v3231
        %vm3326 = vweird.f32 %v3319
        %vm3327 = vmor %vm3325, %vm3326
        %v3328 = vsel %vm3327, %v3319, %v3324
        %v3329 = vrsqrt.pop %v3232
        %v3330 = vmul.f32 %v3329, %v3232
        %v3331 = vmul.f32 %v3330, %v3329
        %v3332 = vmul.f32 0.5, %v3331
        %v3333 = vsub.f32 1.5, %v3332
        %v3334 = vmul.f32 %v3329, %v3333
        %vm3335 = vweird.f32 %v3232
        %vm3336 = vweird.f32 %v3329
        %vm3337 = vmor %vm3335, %vm3336
        %v3338 = vsel %vm3337, %v3329, %v3334
        %v3339 = vrsqrt.pop %v3233
        %v3340 = vmul.f32 %v3339, %v3233
        %v3341 = vmul.f32 %v3340, %v3339
        %v3342 = vmul.f32 0.5, %v3341
        %v3343 = vsub.f32 1.5, %v3342
        %v3344 = vmul.f32 %v3339, %v3343
        %vm3345 = vweird.f32 %v3233
        %vm3346 = vweird.f32 %v3339
        %vm3347 = vmor %vm3345, %vm3346
        %v3348 = vsel %vm3347, %v3339, %v3344
        %v3349 = vrsqrt.pop %v3234
        %v3350 = vmul.f32 %v3349, %v3234
        %v3351 = vmul.f32 %v3350, %v3349
        %v3352 = vmul.f32 0.5, %v3351
        %v3353 = vsub.f32 1.5, %v3352
        %v3354 = vmul.f32 %v3349, %v3353
        %vm3355 = vweird.f32 %v3234
        %vm3356 = vweird.f32 %v3349
        %vm3357 = vmor %vm3355, %vm3356
        %v3358 = vsel %vm3357, %v3349, %v3354
        %v3359 = vrsqrt.pop %v3235
        %v3360 = vmul.f32 %v3359, %v3235
        %v3361 = vmul.f32 %v3360, %v3359
        %v3362 = vmul.f32 0.5, %v3361
        %v3363 = vsub.f32 1.5, %v3362
        %v3364 = vmul.f32 %v3359, %v3363
        %vm3365 = vweird.f32 %v3235
        %vm3366 = vweird.f32 %v3359
        %vm3367 = vmor %vm3365, %vm3366
        %v3368 = vsel %vm3367, %v3359, %v3364
        %v3369 = vrsqrt.pop %v3236
        %v3370 = vmul.f32 %v3369, %v3236
        %v3371 = vmul.f32 %v3370, %v3369
        %v3372 = vmul.f32 0.5, %v3371
        %v3373 = vsub.f32 1.5, %v3372
        %v3374 = vmul.f32 %v3369, %v3373
        %vm3375 = vweird.f32 %v3236
        %vm3376 = vweird.f32 %v3369
        %vm3377 = vmor %vm3375, %vm3376
        %v3378 = vsel %vm3377, %v3369, %v3374
        %v3379 = vrsqrt.pop %v3237
        %v3380 = vmul.f32 %v3379, %v3237
        %v3381 = vmul.f32 %v3380, %v3379
        %v3382 = vmul.f32 0.5, %v3381
        %v3383 = vsub.f32 1.5, %v3382
        %v3384 = vmul.f32 %v3379, %v3383
        %vm3385 = vweird.f32 %v3237
        %vm3386 = vweird.f32 %v3379
        %vm3387 = vmor %vm3385, %vm3386
        %v3388 = vsel %vm3387, %v3379, %v3384
        %v3389 = vrsqrt.pop %v3238
        %v3390 = vmul.f32 %v3389, %v3238
        %v3391 = vmul.f32 %v3390, %v3389
        %v3392 = vmul.f32 0.5, %v3391
        %v3393 = vsub.f32 1.5, %v3392
        %v3394 = vmul.f32 %v3389, %v3393
        %vm3395 = vweird.f32 %v3238
        %vm3396 = vweird.f32 %v3389
        %vm3397 = vmor %vm3395, %vm3396
        %v3398 = vsel %vm3397, %v3389, %v3394
        %v3399 = vmul.f32 %v3127, %v3248
        %v3400 = vmul.f32 %v3128, %v3258
        %v3401 = vmul.f32 %v3129, %v3268
        %v3402 = vmul.f32 %v3130, %v3278
        %v3403 = vmul.f32 %v3131, %v3288
        %v3404 = vmul.f32 %v3132, %v3298
        %v3405 = vmul.f32 %v3133, %v3308
        %v3406 = vmul.f32 %v3134, %v3318
        %v3407 = vmul.f32 %v3135, %v3328
        %v3408 = vmul.f32 %v3136, %v3338
        %v3409 = vmul.f32 %v3137, %v3348
        %v3410 = vmul.f32 %v3138, %v3358
        %v3411 = vmul.f32 %v3139, %v3368
        %v3412 = vmul.f32 %v3140, %v3378
        %v3413 = vmul.f32 %v3141, %v3388
        %v3414 = vmul.f32 %v3142, %v3398
        %v3416 = vperm.slane %v2355, 0
        %v3418 = vmul.f32 %v3399, %v3416
        %v3419 = vmul.f32 %v3400, %v3416
        %v3420 = vmul.f32 %v3401, %v3416
        %v3421 = vmul.f32 %v3402, %v3416
        %v3422 = vmul.f32 %v3403, %v3416
        %v3423 = vmul.f32 %v3404, %v3416
        %v3424 = vmul.f32 %v3405, %v3416
        %v3425 = vmul.f32 %v3406, %v3416
        %v3426 = vmul.f32 %v3407, %v3416
        %v3427 = vmul.f32 %v3408, %v3416
        %v3428 = vmul.f32 %v3409, %v3416
        %v3429 = vmul.f32 %v3410, %v3416
        %v3430 = vmul.f32 %v3411, %v3416
        %v3431 = vmul.f32 %v3412, %v3416
        %v3432 = vmul.f32 %v3413, %v3416
        %v3433 = vmul.f32 %v3414, %v3416
        %v3435 = vperm.slane %v2356, 0
        %v3437 = vadd.f32 %v3418, %v3435
        %v3438 = vadd.f32 %v3419, %v3435
        %v3439 = vadd.f32 %v3420, %v3435
        %v3440 = vadd.f32 %v3421, %v3435
        %v3441 = vadd.f32 %v3422, %v3435
        %v3442 = vadd.f32 %v3423, %v3435
        %v3443 = vadd.f32 %v3424, %v3435
        %v3444 = vadd.f32 %v3425, %v3435
        %v3445 = vadd.f32 %v3426, %v3435
        %v3446 = vadd.f32 %v3427, %v3435
        %v3447 = vadd.f32 %v3428, %v3435
        %v3448 = vadd.f32 %v3429, %v3435
        %v3449 = vadd.f32 %v3430, %v3435
        %v3450 = vadd.f32 %v3431, %v3435
        %v3451 = vadd.f32 %v3432, %v3435
        %v3452 = vadd.f32 %v3433, %v3435
        %v3453 = vpack.c.bf16 %v3438, %v3437
        %v3454 = vpack.c.bf16 %v3440, %v3439
        %v3455 = vpack.c.bf16 %v3442, %v3441
        %v3456 = vpack.c.bf16 %v3444, %v3443
        %v3457 = vpack.c.bf16 %v3446, %v3445
        %v3458 = vpack.c.bf16 %v3448, %v3447
        %v3459 = vpack.c.bf16 %v3450, %v3449
        %v3460 = vpack.c.bf16 %v3452, %v3451
        %v3461 = vld [vmem:[#allocation16] sm:$0xf]
        %v3462 = vld [vmem:[#allocation16 + $0x4] sm:$0xf]
        %v3463 = vld [vmem:[#allocation16 + $0x8] sm:$0xf]
        %v3464 = vld [vmem:[#allocation16 + $0xc] sm:$0xf]
        %v3465 = vld [vmem:[#allocation16 + $0x10] sm:$0xf]
        %v3466 = vld [vmem:[#allocation16 + $0x14] sm:$0xf]
        %v3467 = vld [vmem:[#allocation16 + $0x18] sm:$0xf]
        %v3468 = vld [vmem:[#allocation16 + $0x1c] sm:$0xf]
        %s3469 = sld [smem:[#allocation6 + $0x1]]
        %s3470 = sld [smem:[#allocation6 + $0x81]]
        %s3471 = sld [smem:[#allocation6 + $0x101]]
        %v3472 = vstv %s3469
        %v3473 = vmul.f32 %v2323, %v3472
        %v3474 = vmul.f32 %v2324, %v3472
        %v3475 = vmul.f32 %v2325, %v3472
        %v3476 = vmul.f32 %v2326, %v3472
        %v3477 = vmul.f32 %v2327, %v3472
        %v3478 = vmul.f32 %v2328, %v3472
        %v3479 = vmul.f32 %v2329, %v3472
        %v3480 = vmul.f32 %v2330, %v3472
        %v3481 = vmul.f32 %v2331, %v3472
        %v3482 = vmul.f32 %v2332, %v3472
        %v3483 = vmul.f32 %v2333, %v3472
        %v3484 = vmul.f32 %v2334, %v3472
        %v3485 = vmul.f32 %v2335, %v3472
        %v3486 = vmul.f32 %v2336, %v3472
        %v3487 = vmul.f32 %v2337, %v3472
        %v3488 = vmul.f32 %v2338, %v3472
        %v3489 = vmul.f32 %v3473, 1.442695
        %v3490 = vpow.pop %v3489
        %v3491 = vmul.f32 %v3474, 1.442695
        %v3492 = vpow.pop %v3491
        %v3493 = vmul.f32 %v3475, 1.442695
        %v3494 = vpow.pop %v3493
        %v3495 = vmul.f32 %v3476, 1.442695
        %v3496 = vpow.pop %v3495
        %v3497 = vmul.f32 %v3477, 1.442695
        %v3498 = vpow.pop %v3497
        %v3499 = vmul.f32 %v3478, 1.442695
        %v3500 = vpow.pop %v3499
        %v3501 = vmul.f32 %v3479, 1.442695
        %v3502 = vpow.pop %v3501
        %v3503 = vmul.f32 %v3480, 1.442695
        %v3504 = vpow.pop %v3503
        %v3505 = vmul.f32 %v3481, 1.442695
        %v3506 = vpow.pop %v3505
        %v3507 = vmul.f32 %v3482, 1.442695
        %v3508 = vpow.pop %v3507
        %v3509 = vmul.f32 %v3483, 1.442695
        %v3510 = vpow.pop %v3509
        %v3511 = vmul.f32 %v3484, 1.442695
        %v3512 = vpow.pop %v3511
        %v3513 = vmul.f32 %v3485, 1.442695
        %v3514 = vpow.pop %v3513
        %v3515 = vmul.f32 %v3486, 1.442695
        %v3516 = vpow.pop %v3515
        %v3517 = vmul.f32 %v3487, 1.442695
        %v3518 = vpow.pop %v3517
        %v3519 = vmul.f32 %v3488, 1.442695
        %v3520 = vpow.pop %v3519
        %v3521 = vstv %s3470
        %v3522 = vsel %vm2243, %v3521, 0.0
        %v3523 = vsel %vm2244, %v3521, 0.0
        %v3524 = vsel %vm2245, %v3521, 0.0
        %v3525 = vsel %vm2246, %v3521, 0.0
        %v3526 = vsel %vm2247, %v3521, 0.0
        %v3527 = vsel %vm2248, %v3521, 0.0
        %v3528 = vsel %vm2249, %v3521, 0.0
        %v3529 = vsel %vm2250, %v3521, 0.0
        %v3530 = vsel %vm2251, %v3521, 0.0
        %v3531 = vsel %vm2252, %v3521, 0.0
        %v3532 = vsel %vm2253, %v3521, 0.0
        %v3533 = vsel %vm2254, %v3521, 0.0
        %v3534 = vsel %vm2255, %v3521, 0.0
        %v3535 = vsel %vm2256, %v3521, 0.0
        %v3536 = vsel %vm2257, %v3521, 0.0
        %v3537 = vsel %vm2258, %v3521, 0.0
        %v3538 = vsel %vm2227, %v3490, %v3522
        %v3539 = vsel %vm2228, %v3492, %v3523
        %v3540 = vsel %vm2229, %v3494, %v3524
        %v3541 = vsel %vm2230, %v3496, %v3525
        %v3542 = vsel %vm2231, %v3498, %v3526
        %v3543 = vsel %vm2232, %v3500, %v3527
        %v3544 = vsel %vm2233, %v3502, %v3528
        %v3545 = vsel %vm2234, %v3504, %v3529
        %v3546 = vsel %vm2235, %v3506, %v3530
        %v3547 = vsel %vm2236, %v3508, %v3531
        %v3548 = vsel %vm2237, %v3510, %v3532
        %v3549 = vsel %vm2238, %v3512, %v3533
        %v3550 = vsel %vm2239, %v3514, %v3534
        %v3551 = vsel %vm2240, %v3516, %v3535
        %v3552 = vsel %vm2241, %v3518, %v3536
        %v3553 = vsel %vm2242, %v3520, %v3537
        %v3554 = vmul.f32 %v2339, %v3472
        %v3555 = vmul.f32 %v2340, %v3472
        %v3556 = vmul.f32 %v2341, %v3472
        %v3557 = vmul.f32 %v2342, %v3472
        %v3558 = vmul.f32 %v2343, %v3472
        %v3559 = vmul.f32 %v2344, %v3472
        %v3560 = vmul.f32 %v2345, %v3472
        %v3561 = vmul.f32 %v2346, %v3472
        %v3562 = vmul.f32 %v2347, %v3472
        %v3563 = vmul.f32 %v2348, %v3472
        %v3564 = vmul.f32 %v2349, %v3472
        %v3565 = vmul.f32 %v2350, %v3472
        %v3566 = vmul.f32 %v2351, %v3472
        %v3567 = vmul.f32 %v2352, %v3472
        %v3568 = vmul.f32 %v2353, %v3472
        %v3569 = vmul.f32 %v2354, %v3472
        %v3570 = vmul.f32 %v3554, 1.442695
        %v3571 = vpow.pop %v3570
        %v3572 = vmul.f32 %v3555, 1.442695
        %v3573 = vpow.pop %v3572
        %v3574 = vmul.f32 %v3556, 1.442695
        %v3575 = vpow.pop %v3574
        %v3576 = vmul.f32 %v3557, 1.442695
        %v3577 = vpow.pop %v3576
        %v3578 = vmul.f32 %v3558, 1.442695
        %v3579 = vpow.pop %v3578
        %v3580 = vmul.f32 %v3559, 1.442695
        %v3581 = vpow.pop %v3580
        %v3582 = vmul.f32 %v3560, 1.442695
        %v3583 = vpow.pop %v3582
        %v3584 = vmul.f32 %v3561, 1.442695
        %v3585 = vpow.pop %v3584
        %v3586 = vmul.f32 %v3562, 1.442695
        %v3587 = vpow.pop %v3586
        %v3588 = vmul.f32 %v3563, 1.442695
        %v3589 = vpow.pop %v3588
        %v3590 = vmul.f32 %v3564, 1.442695
        %v3591 = vpow.pop %v3590
        %v3592 = vmul.f32 %v3565, 1.442695
        %v3593 = vpow.pop %v3592
        %v3594 = vmul.f32 %v3566, 1.442695
        %v3595 = vpow.pop %v3594
        %v3596 = vmul.f32 %v3567, 1.442695
        %v3597 = vpow.pop %v3596
        %v3598 = vmul.f32 %v3568, 1.442695
        %v3599 = vpow.pop %v3598
        %v3600 = vmul.f32 %v3569, 1.442695
        %v3601 = vpow.pop %v3600
        %v3602 = vmul.f32 %v2490, %v3472
        %v3603 = vmul.f32 %v2491, %v3472
        %v3604 = vmul.f32 %v2492, %v3472
        %v3605 = vmul.f32 %v2493, %v3472
        %v3606 = vmul.f32 %v2494, %v3472
        %v3607 = vmul.f32 %v2495, %v3472
        %v3608 = vmul.f32 %v2496, %v3472
        %v3609 = vmul.f32 %v2497, %v3472
        %v3610 = vmul.f32 %v2498, %v3472
        %v3611 = vmul.f32 %v2499, %v3472
        %v3612 = vmul.f32 %v2500, %v3472
        %v3613 = vmul.f32 %v2501, %v3472
        %v3614 = vmul.f32 %v2502, %v3472
        %v3615 = vmul.f32 %v2503, %v3472
        %v3616 = vmul.f32 %v2504, %v3472
        %v3617 = vmul.f32 %v2505, %v3472
        %v3618 = vmul.f32 %v3602, 1.442695
        %v3619 = vpow.pop %v3618
        %v3620 = vmul.f32 %v3603, 1.442695
        %v3621 = vpow.pop %v3620
        %v3622 = vmul.f32 %v3604, 1.442695
        %v3623 = vpow.pop %v3622
        %v3624 = vmul.f32 %v3605, 1.442695
        %v3625 = vpow.pop %v3624
        %v3626 = vmul.f32 %v3606, 1.442695
        %v3627 = vpow.pop %v3626
        %v3628 = vmul.f32 %v3607, 1.442695
        %v3629 = vpow.pop %v3628
        %v3630 = vmul.f32 %v3608, 1.442695
        %v3631 = vpow.pop %v3630
        %v3632 = vmul.f32 %v3609, 1.442695
        %v3633 = vpow.pop %v3632
        %v3634 = vmul.f32 %v3610, 1.442695
        %v3635 = vpow.pop %v3634
        %v3636 = vmul.f32 %v3611, 1.442695
        %v3637 = vpow.pop %v3636
        %v3638 = vmul.f32 %v3612, 1.442695
        %v3639 = vpow.pop %v3638
        %v3640 = vmul.f32 %v3613, 1.442695
        %v3641 = vpow.pop %v3640
        %v3642 = vmul.f32 %v3614, 1.442695
        %v3643 = vpow.pop %v3642
        %v3644 = vmul.f32 %v3615, 1.442695
        %v3645 = vpow.pop %v3644
        %v3646 = vmul.f32 %v3616, 1.442695
        %v3647 = vpow.pop %v3646
        %v3648 = vmul.f32 %v3617, 1.442695
        %v3649 = vpow.pop %v3648
        %s3650 = scalar_lea.vmem [#allocation2], 64
        %v3651 = vld [vmem:[%s3650] sm:$0xff]
        %v3652 = vld [vmem:[%s3650 + $0x8] sm:$0xff]
        %v3653 = vld [vmem:[%s3650 + $0x10] sm:$0xff]
        %v3654 = vld [vmem:[%s3650 + $0x18] sm:$0xff]
        %v3655 = vld [vmem:[%s3650 + $0x20] sm:$0xff]
        %v3656 = vld [vmem:[%s3650 + $0x28] sm:$0xff]
        %v3657 = vld [vmem:[%s3650 + $0x30] sm:$0xff]
        %v3658 = vld [vmem:[%s3650 + $0x38] sm:$0xff]
        %3659 = vrot.lane.b32.xlu0 %v2594, 64
        %v3660 = vpop.permute.xlu0 %3659
        %3661 = vrot.lane.b32.xlu0 %v2595, 64
        %v3662 = vpop.permute.xlu0 %3661
        %3663 = vrot.lane.b32.xlu0 %v2596, 64
        %v3664 = vpop.permute.xlu0 %3663
        %3665 = vrot.lane.b32.xlu0 %v2597, 64
        %v3666 = vpop.permute.xlu0 %3665
        %3667 = vrot.lane.b32.xlu0 %v2598, 64
        %v3668 = vpop.permute.xlu0 %3667
        %3669 = vrot.lane.b32.xlu0 %v2599, 64
        %v3670 = vpop.permute.xlu0 %3669
        %3671 = vrot.lane.b32.xlu0 %v2600, 64
        %v3672 = vpop.permute.xlu0 %3671
        %3673 = vrot.lane.b32.xlu0 %v2601, 64
        %v3674 = vpop.permute.xlu0 %3673
        %3675 = vrot.lane.b32.xlu0 %v2634, 64
        %v3676 = vpop.permute.xlu0 %3675
        %3677 = vrot.lane.b32.xlu0 %v2635, 64
        %v3678 = vpop.permute.xlu0 %3677
        %3679 = vrot.lane.b32.xlu0 %v2636, 64
        %v3680 = vpop.permute.xlu0 %3679
        %3681 = vrot.lane.b32.xlu0 %v2637, 64
        %v3682 = vpop.permute.xlu0 %3681
        %3683 = vrot.lane.b32.xlu0 %v2638, 64
        %v3684 = vpop.permute.xlu0 %3683
        %3685 = vrot.lane.b32.xlu0 %v2639, 64
        %v3686 = vpop.permute.xlu0 %3685
        %3687 = vrot.lane.b32.xlu0 %v2640, 64
        %v3688 = vpop.permute.xlu0 %3687
        %3689 = vrot.lane.b32.xlu0 %v2641, 64
        %v3690 = vpop.permute.xlu0 %3689
        %v3692 = vsel %vm2642, %v3660, 0
        %v3695 = vsel %vm2642, %v3662, 0
        %v3698 = vsel %vm2642, %v3664, 0
        %v3701 = vsel %vm2642, %v3666, 0
        %v3704 = vsel %vm2642, %v3668, 0
        %v3707 = vsel %vm2642, %v3670, 0
        %v3710 = vsel %vm2642, %v3672, 0
        %v3713 = vsel %vm2642, %v3674, 0
        %v3716 = vsel %vm2642, %v3676, 0
        %v3719 = vsel %vm2642, %v3678, 0
        %v3722 = vsel %vm2642, %v3680, 0
        %v3725 = vsel %vm2642, %v3682, 0
        %v3728 = vsel %vm2642, %v3684, 0
        %v3731 = vsel %vm2642, %v3686, 0
        %v3734 = vsel %vm2642, %v3688, 0
        %v3737 = vsel %vm2642, %v3690, 0
        %3739 = vmatpush.bf16.xpose.msra.mxu0 %v3737
        %3740 = vmatpush.bf16.xpose.msra.mxu0 %v3734
        %3741 = vmatpush.bf16.xpose.msra.mxu0 %v3731
        %3742 = vmatpush.bf16.xpose.msra.mxu0 %v3728
        %3743 = vmatpush.bf16.xpose.msra.mxu0 %v3725
        %3744 = vmatpush.bf16.xpose.msra.mxu0 %v3722
        %3745 = vmatpush.bf16.xpose.msra.mxu0 %v3719
        %3746 = vmatpush.bf16.xpose.msra.mxu0 %v3716
        %3747 = vmatmul.bf16.gmra.mxu0 %v3692
        %v3748 = vpop.f32.mrf.mxu0
        %v3749 = vadd.f32 0.0, %v3748
        %v3750 = vpop.f32.mrf.mxu0
        %v3751 = vadd.f32 0.0, %v3750
        %3752 = vmatmul.bf16.gmra.mxu0 %v3695
        %v3753 = vpop.f32.mrf.mxu0
        %v3754 = vadd.f32 0.0, %v3753
        %v3755 = vpop.f32.mrf.mxu0
        %v3756 = vadd.f32 0.0, %v3755
        %3757 = vmatmul.bf16.gmra.mxu0 %v3698
        %v3758 = vpop.f32.mrf.mxu0
        %v3759 = vadd.f32 0.0, %v3758
        %v3760 = vpop.f32.mrf.mxu0
        %v3761 = vadd.f32 0.0, %v3760
        %3762 = vmatmul.bf16.gmra.mxu0 %v3701
        %v3763 = vpop.f32.mrf.mxu0
        %v3764 = vadd.f32 0.0, %v3763
        %v3765 = vpop.f32.mrf.mxu0
        %v3766 = vadd.f32 0.0, %v3765
        %3767 = vmatmul.bf16.gmra.mxu0 %v3704
        %v3768 = vpop.f32.mrf.mxu0
        %v3769 = vadd.f32 0.0, %v3768
        %v3770 = vpop.f32.mrf.mxu0
        %v3771 = vadd.f32 0.0, %v3770
        %3772 = vmatmul.bf16.gmra.mxu0 %v3707
        %v3773 = vpop.f32.mrf.mxu0
        %v3774 = vadd.f32 0.0, %v3773
        %v3775 = vpop.f32.mrf.mxu0
        %v3776 = vadd.f32 0.0, %v3775
        %3777 = vmatmul.bf16.gmra.mxu0 %v3710
        %v3778 = vpop.f32.mrf.mxu0
        %v3779 = vadd.f32 0.0, %v3778
        %v3780 = vpop.f32.mrf.mxu0
        %v3781 = vadd.f32 0.0, %v3780
        %3782 = vmatmul.bf16.gmra.mxu0 %v3713
        %v3783 = vpop.f32.mrf.mxu0
        %v3784 = vadd.f32 0.0, %v3783
        %v3785 = vpop.f32.mrf.mxu0
        %v3786 = vadd.f32 0.0, %v3785
        %3787 = vdwg.mxu0
        %v3788 = vmul.f32 %v3749, %v3538
        %v3789 = vmul.f32 %v3751, %v3539
        %v3790 = vmul.f32 %v3754, %v3540
        %v3791 = vmul.f32 %v3756, %v3541
        %v3792 = vmul.f32 %v3759, %v3542
        %v3793 = vmul.f32 %v3761, %v3543
        %v3794 = vmul.f32 %v3764, %v3544
        %v3795 = vmul.f32 %v3766, %v3545
        %v3796 = vmul.f32 %v3769, %v3546
        %v3797 = vmul.f32 %v3771, %v3547
        %v3798 = vmul.f32 %v3774, %v3548
        %v3799 = vmul.f32 %v3776, %v3549
        %v3800 = vmul.f32 %v3779, %v3550
        %v3801 = vmul.f32 %v3781, %v3551
        %v3802 = vmul.f32 %v3784, %v3552
        %v3803 = vmul.f32 %v3786, %v3553
        %v3804 = vpack.c.bf16 %v3789, %v3788
        %v3805 = vpack.c.bf16 %v3791, %v3790
        %v3806 = vpack.c.bf16 %v3793, %v3792
        %v3807 = vpack.c.bf16 %v3795, %v3794
        %v3808 = vpack.c.bf16 %v3797, %v3796
        %v3809 = vpack.c.bf16 %v3799, %v3798
        %v3810 = vpack.c.bf16 %v3801, %v3800
        %v3811 = vpack.c.bf16 %v3803, %v3802
        %v3812 = vpack.c.bf16 %v3652, %v3651
        %v3813 = vpack.c.bf16 %v3654, %v3653
        %v3814 = vpack.c.bf16 %v3656, %v3655
        %v3815 = vpack.c.bf16 %v3658, %v3657
        %3816 = vmatpush.bf16.msra.mxu0 0
        %3817 = vmatpush.bf16.msra.mxu0 0
        %3818 = vmatpush.bf16.msra.mxu0 0
        %3819 = vmatpush.bf16.msra.mxu0 0
        %3820 = vmatpush.bf16.msra.mxu0 %v3815
        %3821 = vmatpush.bf16.msra.mxu0 %v3814
        %3822 = vmatpush.bf16.msra.mxu0 %v3813
        %3823 = vmatpush.bf16.msra.mxu0 %v3812
        %3824 = vmatmul.bf16.gmra.mxu0 %v3692
        %v3825 = vpop.f32.mrf.mxu0
        %v3826 = vadd.f32 0.0, %v3825
        %v3827 = vpop.f32.mrf.mxu0
        %v3828 = vadd.f32 0.0, %v3827
        %3829 = vmatmul.bf16.gmra.mxu0 %v3695
        %v3830 = vpop.f32.mrf.mxu0
        %v3831 = vadd.f32 0.0, %v3830
        %v3832 = vpop.f32.mrf.mxu0
        %v3833 = vadd.f32 0.0, %v3832
        %3834 = vmatmul.bf16.gmra.mxu0 %v3698
        %v3835 = vpop.f32.mrf.mxu0
        %v3836 = vadd.f32 0.0, %v3835
        %v3837 = vpop.f32.mrf.mxu0
        %v3838 = vadd.f32 0.0, %v3837
        %3839 = vmatmul.bf16.gmra.mxu0 %v3701
        %v3840 = vpop.f32.mrf.mxu0
        %v3841 = vadd.f32 0.0, %v3840
        %v3842 = vpop.f32.mrf.mxu0
        %v3843 = vadd.f32 0.0, %v3842
        %3844 = vmatmul.bf16.gmra.mxu0 %v3704
        %v3845 = vpop.f32.mrf.mxu0
        %v3846 = vadd.f32 0.0, %v3845
        %v3847 = vpop.f32.mrf.mxu0
        %v3848 = vadd.f32 0.0, %v3847
        %3849 = vmatmul.bf16.gmra.mxu0 %v3707
        %v3850 = vpop.f32.mrf.mxu0
        %v3851 = vadd.f32 0.0, %v3850
        %v3852 = vpop.f32.mrf.mxu0
        %v3853 = vadd.f32 0.0, %v3852
        %3854 = vmatmul.bf16.gmra.mxu0 %v3710
        %v3855 = vpop.f32.mrf.mxu0
        %v3856 = vadd.f32 0.0, %v3855
        %v3857 = vpop.f32.mrf.mxu0
        %v3858 = vadd.f32 0.0, %v3857
        %3859 = vmatmul.bf16.gmra.mxu0 %v3713
        %v3860 = vpop.f32.mrf.mxu0
        %v3861 = vadd.f32 0.0, %v3860
        %v3862 = vpop.f32.mrf.mxu0
        %v3863 = vadd.f32 0.0, %v3862
        %3864 = vdwg.mxu0
        %v3865 = vmul.f32 %v3826, %v3571
        %v3866 = vmul.f32 %v3828, %v3573
        %v3867 = vmul.f32 %v3831, %v3575
        %v3868 = vmul.f32 %v3833, %v3577
        %v3869 = vmul.f32 %v3836, %v3579
        %v3870 = vmul.f32 %v3838, %v3581
        %v3871 = vmul.f32 %v3841, %v3583
        %v3872 = vmul.f32 %v3843, %v3585
        %v3873 = vmul.f32 %v3846, %v3587
        %v3874 = vmul.f32 %v3848, %v3589
        %v3875 = vmul.f32 %v3851, %v3591
        %v3876 = vmul.f32 %v3853, %v3593
        %v3877 = vmul.f32 %v3856, %v3595
        %v3878 = vmul.f32 %v3858, %v3597
        %v3879 = vmul.f32 %v3861, %v3599
        %v3880 = vmul.f32 %v3863, %v3601
        %3881 = vrot.lane.b32.xlu0 %v2865, 64
        %v3882 = vpop.permute.xlu0 %3881
        %3883 = vrot.lane.b32.xlu0 %v2866, 64
        %v3884 = vpop.permute.xlu0 %3883
        %3885 = vrot.lane.b32.xlu0 %v2867, 64
        %v3886 = vpop.permute.xlu0 %3885
        %3887 = vrot.lane.b32.xlu0 %v2868, 64
        %v3888 = vpop.permute.xlu0 %3887
        %3889 = vrot.lane.b32.xlu0 %v2869, 64
        %v3890 = vpop.permute.xlu0 %3889
        %3891 = vrot.lane.b32.xlu0 %v2870, 64
        %v3892 = vpop.permute.xlu0 %3891
        %3893 = vrot.lane.b32.xlu0 %v2871, 64
        %v3894 = vpop.permute.xlu0 %3893
        %3895 = vrot.lane.b32.xlu0 %v2872, 64
        %v3896 = vpop.permute.xlu0 %3895
        %3905 = vmatpush.bf16.msra.mxu0 %v3896
        %3906 = vmatpush.bf16.msra.mxu0 %v3894
        %3907 = vmatpush.bf16.msra.mxu0 %v3892
        %3908 = vmatpush.bf16.msra.mxu0 %v3890
        %3909 = vmatpush.bf16.msra.mxu0 %v3888
        %3910 = vmatpush.bf16.msra.mxu0 %v3886
        %3911 = vmatpush.bf16.msra.mxu0 %v3884
        %3912 = vmatpush.bf16.msra.mxu0 %v3882
        %3913 = vmatmul.bf16.gmra.mxu0 %v3804
        %v3914 = vpop.f32.mrf.mxu0
        %v3915 = vadd.f32 %v3865, %v3914
        %v3916 = vpop.f32.mrf.mxu0
        %v3917 = vadd.f32 %v3866, %v3916
        %3918 = vmatmul.bf16.gmra.mxu0 %v3805
        %v3919 = vpop.f32.mrf.mxu0
        %v3920 = vadd.f32 %v3867, %v3919
        %v3921 = vpop.f32.mrf.mxu0
        %v3922 = vadd.f32 %v3868, %v3921
        %3923 = vmatmul.bf16.gmra.mxu0 %v3806
        %v3924 = vpop.f32.mrf.mxu0
        %v3925 = vadd.f32 %v3869, %v3924
        %v3926 = vpop.f32.mrf.mxu0
        %v3927 = vadd.f32 %v3870, %v3926
        %3928 = vmatmul.bf16.gmra.mxu0 %v3807
        %v3929 = vpop.f32.mrf.mxu0
        %v3930 = vadd.f32 %v3871, %v3929
        %v3931 = vpop.f32.mrf.mxu0
        %v3932 = vadd.f32 %v3872, %v3931
        %3933 = vmatmul.bf16.gmra.mxu0 %v3808
        %v3934 = vpop.f32.mrf.mxu0
        %v3935 = vadd.f32 %v3873, %v3934
        %v3936 = vpop.f32.mrf.mxu0
        %v3937 = vadd.f32 %v3874, %v3936
        %3938 = vmatmul.bf16.gmra.mxu0 %v3809
        %v3939 = vpop.f32.mrf.mxu0
        %v3940 = vadd.f32 %v3875, %v3939
        %v3941 = vpop.f32.mrf.mxu0
        %v3942 = vadd.f32 %v3876, %v3941
        %3943 = vmatmul.bf16.gmra.mxu0 %v3810
        %v3944 = vpop.f32.mrf.mxu0
        %v3945 = vadd.f32 %v3877, %v3944
        %v3946 = vpop.f32.mrf.mxu0
        %v3947 = vadd.f32 %v3878, %v3946
        %3948 = vmatmul.bf16.gmra.mxu0 %v3811
        %v3949 = vpop.f32.mrf.mxu0
        %v3950 = vadd.f32 %v3879, %v3949
        %v3951 = vpop.f32.mrf.mxu0
        %v3952 = vadd.f32 %v3880, %v3951
        %3953 = vdwg.mxu0
        %v3954 = vmul.f32 %v2930, %v3619
        %v3955 = vmul.f32 %v2931, %v3621
        %v3956 = vmul.f32 %v2932, %v3623
        %v3957 = vmul.f32 %v2933, %v3625
        %v3958 = vmul.f32 %v2934, %v3627
        %v3959 = vmul.f32 %v2935, %v3629
        %v3960 = vmul.f32 %v2936, %v3631
        %v3961 = vmul.f32 %v2937, %v3633
        %v3962 = vmul.f32 %v2938, %v3635
        %v3963 = vmul.f32 %v2939, %v3637
        %v3964 = vmul.f32 %v2940, %v3639
        %v3965 = vmul.f32 %v2941, %v3641
        %v3966 = vmul.f32 %v2942, %v3643
        %v3967 = vmul.f32 %v2943, %v3645
        %v3968 = vmul.f32 %v2944, %v3647
        %v3969 = vmul.f32 %v2945, %v3649
        %v3970 = vpack.c.bf16 %v3955, %v3954
        %v3971 = vpack.c.bf16 %v3957, %v3956
        %v3972 = vpack.c.bf16 %v3959, %v3958
        %v3973 = vpack.c.bf16 %v3961, %v3960
        %v3974 = vpack.c.bf16 %v3963, %v3962
        %v3975 = vpack.c.bf16 %v3965, %v3964
        %v3976 = vpack.c.bf16 %v3967, %v3966
        %v3977 = vpack.c.bf16 %v3969, %v3968
        %3986 = vrot.lane.b32.xlu0 %v3970, 64
        %v3987 = vpop.permute.xlu0 %3986
        %3988 = vrot.lane.b32.xlu0 %v3971, 64
        %v3989 = vpop.permute.xlu0 %3988
        %3990 = vrot.lane.b32.xlu0 %v3972, 64
        %v3991 = vpop.permute.xlu0 %3990
        %3992 = vrot.lane.b32.xlu0 %v3973, 64
        %v3993 = vpop.permute.xlu0 %3992
        %3994 = vrot.lane.b32.xlu0 %v3974, 64
        %v3995 = vpop.permute.xlu0 %3994
        %3996 = vrot.lane.b32.xlu0 %v3975, 64
        %v3997 = vpop.permute.xlu0 %3996
        %3998 = vrot.lane.b32.xlu0 %v3976, 64
        %v3999 = vpop.permute.xlu0 %3998
        %4000 = vrot.lane.b32.xlu0 %v3977, 64
        %v4001 = vpop.permute.xlu0 %4000
        %4010 = vxpose.xlu0.c.b16.start [1/8] %v3987, 128
        %4011 = vxpose.xlu0.c.b16.cont [2/8] %v3989, 128
        %4012 = vxpose.xlu0.c.b16.cont [3/8] %v3991, 128
        %4013 = vxpose.xlu0.c.b16.cont [4/8] %v3993, 128
        %4014 = vxpose.xlu0.c.b16.cont [5/8] %v3995, 128
        %4015 = vxpose.xlu0.c.b16.cont [6/8] %v3997, 128
        %4016 = vxpose.xlu0.c.b16.cont [7/8] %v3999, 128
        %4017 = vxpose.xlu0.c.b16.end [8/8] %v4001, 128
        %v4018 = vpop.trf.xlu0
        %v4019 = vpop.trf.xlu0
        %v4020 = vpop.trf.xlu0
        %v4021 = vpop.trf.xlu0
        %v4022 = vpop.trf.xlu0
        %v4023 = vpop.trf.xlu0
        %v4024 = vpop.trf.xlu0
        %v4025 = vpop.trf.xlu0
        %4026 = vmatpush.bf16.msra.mxu0 %v3896
        %4027 = vmatpush.bf16.msra.mxu0 %v3894
        %4028 = vmatpush.bf16.msra.mxu0 %v3892
        %4029 = vmatpush.bf16.msra.mxu0 %v3890
        %4030 = vmatpush.bf16.msra.mxu0 %v3888
        %4031 = vmatpush.bf16.msra.mxu0 %v3886
        %4032 = vmatpush.bf16.msra.mxu0 %v3884
        %4033 = vmatpush.bf16.msra.mxu0 %v3882
        %4034 = vmatmul.bf16.gmra.mxu0 %v4018
        %v4035 = vpop.f32.mrf.mxu0
        %v4036 = vadd.f32 0.0, %v4035
        %v4037 = vpop.f32.mrf.mxu0
        %v4038 = vadd.f32 0.0, %v4037
        %4039 = vmatmul.bf16.gmra.mxu0 %v4019
        %v4040 = vpop.f32.mrf.mxu0
        %v4041 = vadd.f32 0.0, %v4040
        %v4042 = vpop.f32.mrf.mxu0
        %v4043 = vadd.f32 0.0, %v4042
        %4044 = vmatmul.bf16.gmra.mxu0 %v4020
        %v4045 = vpop.f32.mrf.mxu0
        %v4046 = vadd.f32 0.0, %v4045
        %v4047 = vpop.f32.mrf.mxu0
        %v4048 = vadd.f32 0.0, %v4047
        %4049 = vmatmul.bf16.gmra.mxu0 %v4021
        %v4050 = vpop.f32.mrf.mxu0
        %v4051 = vadd.f32 0.0, %v4050
        %v4052 = vpop.f32.mrf.mxu0
        %v4053 = vadd.f32 0.0, %v4052
        %4054 = vdwg.mxu0
        %v4055 = vstv %s3471
        %v4056 = vmul.f32 %v4055, %v3651
        %v4057 = vmul.f32 %v4055, %v3652
        %v4058 = vmul.f32 %v4055, %v3653
        %v4059 = vmul.f32 %v4055, %v3654
        %v4060 = vmul.f32 %v4055, %v3655
        %v4061 = vmul.f32 %v4055, %v3656
        %v4062 = vmul.f32 %v4055, %v3657
        %v4063 = vmul.f32 %v4055, %v3658
        %v4064 = vadd.f32 %v4056, %v4036
        %v4065 = vadd.f32 %v4057, %v4038
        %v4066 = vadd.f32 %v4058, %v4041
        %v4067 = vadd.f32 %v4059, %v4043
        %v4068 = vadd.f32 %v4060, %v4046
        %v4069 = vadd.f32 %v4061, %v4048
        %v4070 = vadd.f32 %v4062, %v4051
        %v4071 = vadd.f32 %v4063, %v4053
        %4072 = vst.msk [vmem:[%s3650] sm:$0xff] %vm2642, %v4064
        %4073 = vst.msk [vmem:[%s3650 + $0x8] sm:$0xff] %vm2642, %v4065
        %4074 = vst.msk [vmem:[%s3650 + $0x10] sm:$0xff] %vm2642, %v4066
        %4075 = vst.msk [vmem:[%s3650 + $0x18] sm:$0xff] %vm2642, %v4067
        %4076 = vst.msk [vmem:[%s3650 + $0x20] sm:$0xff] %vm2642, %v4068
        %4077 = vst.msk [vmem:[%s3650 + $0x28] sm:$0xff] %vm2642, %v4069
        %4078 = vst.msk [vmem:[%s3650 + $0x30] sm:$0xff] %vm2642, %v4070
        %4079 = vst.msk [vmem:[%s3650 + $0x38] sm:$0xff] %vm2642, %v4071
        %v4080 = vmul.f32 %v3915, 0.125
        %v4081 = vmul.f32 %v3917, 0.125
        %v4082 = vmul.f32 %v3920, 0.125
        %v4083 = vmul.f32 %v3922, 0.125
        %v4084 = vmul.f32 %v3925, 0.125
        %v4085 = vmul.f32 %v3927, 0.125
        %v4086 = vmul.f32 %v3930, 0.125
        %v4087 = vmul.f32 %v3932, 0.125
        %v4088 = vmul.f32 %v3935, 0.125
        %v4089 = vmul.f32 %v3937, 0.125
        %v4090 = vmul.f32 %v3940, 0.125
        %v4091 = vmul.f32 %v3942, 0.125
        %v4092 = vmul.f32 %v3945, 0.125
        %v4093 = vmul.f32 %v3947, 0.125
        %v4094 = vmul.f32 %v3950, 0.125
        %v4095 = vmul.f32 %v3952, 0.125
        %v4096 = vsel %vm2642, %v4080, 0.0
        %4097 = vadd.xlane.f32.xlu0 %v4096
        %v4098 = vpop.xlane.xlu0 %4097
        %v4099 = vsel %vm2642, %v4081, 0.0
        %4100 = vadd.xlane.f32.xlu0 %v4099
        %v4101 = vpop.xlane.xlu0 %4100
        %v4102 = vsel %vm2642, %v4082, 0.0
        %4103 = vadd.xlane.f32.xlu0 %v4102
        %v4104 = vpop.xlane.xlu0 %4103
        %v4105 = vsel %vm2642, %v4083, 0.0
        %4106 = vadd.xlane.f32.xlu0 %v4105
        %v4107 = vpop.xlane.xlu0 %4106
        %v4108 = vsel %vm2642, %v4084, 0.0
        %4109 = vadd.xlane.f32.xlu0 %v4108
        %v4110 = vpop.xlane.xlu0 %4109
        %v4111 = vsel %vm2642, %v4085, 0.0
        %4112 = vadd.xlane.f32.xlu0 %v4111
        %v4113 = vpop.xlane.xlu0 %4112
        %v4114 = vsel %vm2642, %v4086, 0.0
        %4115 = vadd.xlane.f32.xlu0 %v4114
        %v4116 = vpop.xlane.xlu0 %4115
        %v4117 = vsel %vm2642, %v4087, 0.0
        %4118 = vadd.xlane.f32.xlu0 %v4117
        %v4119 = vpop.xlane.xlu0 %4118
        %v4120 = vsel %vm2642, %v4088, 0.0
        %4121 = vadd.xlane.f32.xlu0 %v4120
        %v4122 = vpop.xlane.xlu0 %4121
        %v4123 = vsel %vm2642, %v4089, 0.0
        %4124 = vadd.xlane.f32.xlu0 %v4123
        %v4125 = vpop.xlane.xlu0 %4124
        %v4126 = vsel %vm2642, %v4090, 0.0
        %4127 = vadd.xlane.f32.xlu0 %v4126
        %v4128 = vpop.xlane.xlu0 %4127
        %v4129 = vsel %vm2642, %v4091, 0.0
        %4130 = vadd.xlane.f32.xlu0 %v4129
        %v4131 = vpop.xlane.xlu0 %4130
        %v4132 = vsel %vm2642, %v4092, 0.0
        %4133 = vadd.xlane.f32.xlu0 %v4132
        %v4134 = vpop.xlane.xlu0 %4133
        %v4135 = vsel %vm2642, %v4093, 0.0
        %4136 = vadd.xlane.f32.xlu0 %v4135
        %v4137 = vpop.xlane.xlu0 %4136
        %v4138 = vsel %vm2642, %v4094, 0.0
        %4139 = vadd.xlane.f32.xlu0 %v4138
        %v4140 = vpop.xlane.xlu0 %4139
        %v4141 = vsel %vm2642, %v4095, 0.0
        %4142 = vadd.xlane.f32.xlu0 %v4141
        %v4143 = vpop.xlane.xlu0 %4142
        %v4144 = vmul.f32 %v4098, %v3110
        %v4145 = vmul.f32 %v4101, %v3110
        %v4146 = vmul.f32 %v4104, %v3110
        %v4147 = vmul.f32 %v4107, %v3110
        %v4148 = vmul.f32 %v4110, %v3110
        %v4149 = vmul.f32 %v4113, %v3110
        %v4150 = vmul.f32 %v4116, %v3110
        %v4151 = vmul.f32 %v4119, %v3110
        %v4152 = vmul.f32 %v4122, %v3110
        %v4153 = vmul.f32 %v4125, %v3110
        %v4154 = vmul.f32 %v4128, %v3110
        %v4155 = vmul.f32 %v4131, %v3110
        %v4156 = vmul.f32 %v4134, %v3110
        %v4157 = vmul.f32 %v4137, %v3110
        %v4158 = vmul.f32 %v4140, %v3110
        %v4159 = vmul.f32 %v4143, %v3110
        %v4160 = vsub.f32 %v4080, %v4144
        %v4161 = vsub.f32 %v4081, %v4145
        %v4162 = vsub.f32 %v4082, %v4146
        %v4163 = vsub.f32 %v4083, %v4147
        %v4164 = vsub.f32 %v4084, %v4148
        %v4165 = vsub.f32 %v4085, %v4149
        %v4166 = vsub.f32 %v4086, %v4150
        %v4167 = vsub.f32 %v4087, %v4151
        %v4168 = vsub.f32 %v4088, %v4152
        %v4169 = vsub.f32 %v4089, %v4153
        %v4170 = vsub.f32 %v4090, %v4154
        %v4171 = vsub.f32 %v4091, %v4155
        %v4172 = vsub.f32 %v4092, %v4156
        %v4173 = vsub.f32 %v4093, %v4157
        %v4174 = vsub.f32 %v4094, %v4158
        %v4175 = vsub.f32 %v4095, %v4159
        %v4176 = vmul.f32 %v4160, %v4160
        %v4177 = vmul.f32 %v4161, %v4161
        %v4178 = vmul.f32 %v4162, %v4162
        %v4179 = vmul.f32 %v4163, %v4163
        %v4180 = vmul.f32 %v4164, %v4164
        %v4181 = vmul.f32 %v4165, %v4165
        %v4182 = vmul.f32 %v4166, %v4166
        %v4183 = vmul.f32 %v4167, %v4167
        %v4184 = vmul.f32 %v4168, %v4168
        %v4185 = vmul.f32 %v4169, %v4169
        %v4186 = vmul.f32 %v4170, %v4170
        %v4187 = vmul.f32 %v4171, %v4171
        %v4188 = vmul.f32 %v4172, %v4172
        %v4189 = vmul.f32 %v4173, %v4173
        %v4190 = vmul.f32 %v4174, %v4174
        %v4191 = vmul.f32 %v4175, %v4175
        %v4192 = vsel %vm2642, %v4176, 0.0
        %4193 = vadd.xlane.f32.xlu0 %v4192
        %v4194 = vpop.xlane.xlu0 %4193
        %v4195 = vsel %vm2642, %v4177, 0.0
        %4196 = vadd.xlane.f32.xlu0 %v4195
        %v4197 = vpop.xlane.xlu0 %4196
        %v4198 = vsel %vm2642, %v4178, 0.0
        %4199 = vadd.xlane.f32.xlu0 %v4198
        %v4200 = vpop.xlane.xlu0 %4199
        %v4201 = vsel %vm2642, %v4179, 0.0
        %4202 = vadd.xlane.f32.xlu0 %v4201
        %v4203 = vpop.xlane.xlu0 %4202
        %v4204 = vsel %vm2642, %v4180, 0.0
        %4205 = vadd.xlane.f32.xlu0 %v4204
        %v4206 = vpop.xlane.xlu0 %4205
        %v4207 = vsel %vm2642, %v4181, 0.0
        %4208 = vadd.xlane.f32.xlu0 %v4207
        %v4209 = vpop.xlane.xlu0 %4208
        %v4210 = vsel %vm2642, %v4182, 0.0
        %4211 = vadd.xlane.f32.xlu0 %v4210
        %v4212 = vpop.xlane.xlu0 %4211
        %v4213 = vsel %vm2642, %v4183, 0.0
        %4214 = vadd.xlane.f32.xlu0 %v4213
        %v4215 = vpop.xlane.xlu0 %4214
        %v4216 = vsel %vm2642, %v4184, 0.0
        %4217 = vadd.xlane.f32.xlu0 %v4216
        %v4218 = vpop.xlane.xlu0 %4217
        %v4219 = vsel %vm2642, %v4185, 0.0
        %4220 = vadd.xlane.f32.xlu0 %v4219
        %v4221 = vpop.xlane.xlu0 %4220
        %v4222 = vsel %vm2642, %v4186, 0.0
        %4223 = vadd.xlane.f32.xlu0 %v4222
        %v4224 = vpop.xlane.xlu0 %4223
        %v4225 = vsel %vm2642, %v4187, 0.0
        %4226 = vadd.xlane.f32.xlu0 %v4225
        %v4227 = vpop.xlane.xlu0 %4226
        %v4228 = vsel %vm2642, %v4188, 0.0
        %4229 = vadd.xlane.f32.xlu0 %v4228
        %v4230 = vpop.xlane.xlu0 %4229
        %v4231 = vsel %vm2642, %v4189, 0.0
        %4232 = vadd.xlane.f32.xlu0 %v4231
        %v4233 = vpop.xlane.xlu0 %4232
        %v4234 = vsel %vm2642, %v4190, 0.0
        %4235 = vadd.xlane.f32.xlu0 %v4234
        %v4236 = vpop.xlane.xlu0 %4235
        %v4237 = vsel %vm2642, %v4191, 0.0
        %4238 = vadd.xlane.f32.xlu0 %v4237
        %v4239 = vpop.xlane.xlu0 %4238
        %v4240 = vmul.f32 %v4194, %v3110
        %v4241 = vmul.f32 %v4197, %v3110
        %v4242 = vmul.f32 %v4200, %v3110
        %v4243 = vmul.f32 %v4203, %v3110
        %v4244 = vmul.f32 %v4206, %v3110
        %v4245 = vmul.f32 %v4209, %v3110
        %v4246 = vmul.f32 %v4212, %v3110
        %v4247 = vmul.f32 %v4215, %v3110
        %v4248 = vmul.f32 %v4218, %v3110
        %v4249 = vmul.f32 %v4221, %v3110
        %v4250 = vmul.f32 %v4224, %v3110
        %v4251 = vmul.f32 %v4227, %v3110
        %v4252 = vmul.f32 %v4230, %v3110
        %v4253 = vmul.f32 %v4233, %v3110
        %v4254 = vmul.f32 %v4236, %v3110
        %v4255 = vmul.f32 %v4239, %v3110
        %v4256 = vadd.f32 %v4240, 1e-05
        %v4257 = vadd.f32 %v4241, 1e-05
        %v4258 = vadd.f32 %v4242, 1e-05
        %v4259 = vadd.f32 %v4243, 1e-05
        %v4260 = vadd.f32 %v4244, 1e-05
        %v4261 = vadd.f32 %v4245, 1e-05
        %v4262 = vadd.f32 %v4246, 1e-05
        %v4263 = vadd.f32 %v4247, 1e-05
        %v4264 = vadd.f32 %v4248, 1e-05
        %v4265 = vadd.f32 %v4249, 1e-05
        %v4266 = vadd.f32 %v4250, 1e-05
        %v4267 = vadd.f32 %v4251, 1e-05
        %v4268 = vadd.f32 %v4252, 1e-05
        %v4269 = vadd.f32 %v4253, 1e-05
        %v4270 = vadd.f32 %v4254, 1e-05
        %v4271 = vadd.f32 %v4255, 1e-05
        %v4272 = vrsqrt.pop %v4256
        %v4273 = vmul.f32 %v4272, %v4256
        %v4274 = vmul.f32 %v4273, %v4272
        %v4275 = vmul.f32 0.5, %v4274
        %v4276 = vsub.f32 1.5, %v4275
        %v4277 = vmul.f32 %v4272, %v4276
        %vm4278 = vweird.f32 %v4256
        %vm4279 = vweird.f32 %v4272
        %vm4280 = vmor %vm4278, %vm4279
        %v4281 = vsel %vm4280, %v4272, %v4277
        %v4282 = vrsqrt.pop %v4257
        %v4283 = vmul.f32 %v4282, %v4257
        %v4284 = vmul.f32 %v4283, %v4282
        %v4285 = vmul.f32 0.5, %v4284
        %v4286 = vsub.f32 1.5, %v4285
        %v4287 = vmul.f32 %v4282, %v4286
        %vm4288 = vweird.f32 %v4257
        %vm4289 = vweird.f32 %v4282
        %vm4290 = vmor %vm4288, %vm4289
        %v4291 = vsel %vm4290, %v4282, %v4287
        %v4292 = vrsqrt.pop %v4258
        %v4293 = vmul.f32 %v4292, %v4258
        %v4294 = vmul.f32 %v4293, %v4292
        %v4295 = vmul.f32 0.5, %v4294
        %v4296 = vsub.f32 1.5, %v4295
        %v4297 = vmul.f32 %v4292, %v4296
        %vm4298 = vweird.f32 %v4258
        %vm4299 = vweird.f32 %v4292
        %vm4300 = vmor %vm4298, %vm4299
        %v4301 = vsel %vm4300, %v4292, %v4297
        %v4302 = vrsqrt.pop %v4259
        %v4303 = vmul.f32 %v4302, %v4259
        %v4304 = vmul.f32 %v4303, %v4302
        %v4305 = vmul.f32 0.5, %v4304
        %v4306 = vsub.f32 1.5, %v4305
        %v4307 = vmul.f32 %v4302, %v4306
        %vm4308 = vweird.f32 %v4259
        %vm4309 = vweird.f32 %v4302
        %vm4310 = vmor %vm4308, %vm4309
        %v4311 = vsel %vm4310, %v4302, %v4307
        %v4312 = vrsqrt.pop %v4260
        %v4313 = vmul.f32 %v4312, %v4260
        %v4314 = vmul.f32 %v4313, %v4312
        %v4315 = vmul.f32 0.5, %v4314
        %v4316 = vsub.f32 1.5, %v4315
        %v4317 = vmul.f32 %v4312, %v4316
        %vm4318 = vweird.f32 %v4260
        %vm4319 = vweird.f32 %v4312
        %vm4320 = vmor %vm4318, %vm4319
        %v4321 = vsel %vm4320, %v4312, %v4317
        %v4322 = vrsqrt.pop %v4261
        %v4323 = vmul.f32 %v4322, %v4261
        %v4324 = vmul.f32 %v4323, %v4322
        %v4325 = vmul.f32 0.5, %v4324
        %v4326 = vsub.f32 1.5, %v4325
        %v4327 = vmul.f32 %v4322, %v4326
        %vm4328 = vweird.f32 %v4261
        %vm4329 = vweird.f32 %v4322
        %vm4330 = vmor %vm4328, %vm4329
        %v4331 = vsel %vm4330, %v4322, %v4327
        %v4332 = vrsqrt.pop %v4262
        %v4333 = vmul.f32 %v4332, %v4262
        %v4334 = vmul.f32 %v4333, %v4332
        %v4335 = vmul.f32 0.5, %v4334
        %v4336 = vsub.f32 1.5, %v4335
        %v4337 = vmul.f32 %v4332, %v4336
        %vm4338 = vweird.f32 %v4262
        %vm4339 = vweird.f32 %v4332
        %vm4340 = vmor %vm4338, %vm4339
        %v4341 = vsel %vm4340, %v4332, %v4337
        %v4342 = vrsqrt.pop %v4263
        %v4343 = vmul.f32 %v4342, %v4263
        %v4344 = vmul.f32 %v4343, %v4342
        %v4345 = vmul.f32 0.5, %v4344
        %v4346 = vsub.f32 1.5, %v4345
        %v4347 = vmul.f32 %v4342, %v4346
        %vm4348 = vweird.f32 %v4263
        %vm4349 = vweird.f32 %v4342
        %vm4350 = vmor %vm4348, %vm4349
        %v4351 = vsel %vm4350, %v4342, %v4347
        %v4352 = vrsqrt.pop %v4264
        %v4353 = vmul.f32 %v4352, %v4264
        %v4354 = vmul.f32 %v4353, %v4352
        %v4355 = vmul.f32 0.5, %v4354
        %v4356 = vsub.f32 1.5, %v4355
        %v4357 = vmul.f32 %v4352, %v4356
        %vm4358 = vweird.f32 %v4264
        %vm4359 = vweird.f32 %v4352
        %vm4360 = vmor %vm4358, %vm4359
        %v4361 = vsel %vm4360, %v4352, %v4357
        %v4362 = vrsqrt.pop %v4265
        %v4363 = vmul.f32 %v4362, %v4265
        %v4364 = vmul.f32 %v4363, %v4362
        %v4365 = vmul.f32 0.5, %v4364
        %v4366 = vsub.f32 1.5, %v4365
        %v4367 = vmul.f32 %v4362, %v4366
        %vm4368 = vweird.f32 %v4265
        %vm4369 = vweird.f32 %v4362
        %vm4370 = vmor %vm4368, %vm4369
        %v4371 = vsel %vm4370, %v4362, %v4367
        %v4372 = vrsqrt.pop %v4266
        %v4373 = vmul.f32 %v4372, %v4266
        %v4374 = vmul.f32 %v4373, %v4372
        %v4375 = vmul.f32 0.5, %v4374
        %v4376 = vsub.f32 1.5, %v4375
        %v4377 = vmul.f32 %v4372, %v4376
        %vm4378 = vweird.f32 %v4266
        %vm4379 = vweird.f32 %v4372
        %vm4380 = vmor %vm4378, %vm4379
        %v4381 = vsel %vm4380, %v4372, %v4377
        %v4382 = vrsqrt.pop %v4267
        %v4383 = vmul.f32 %v4382, %v4267
        %v4384 = vmul.f32 %v4383, %v4382
        %v4385 = vmul.f32 0.5, %v4384
        %v4386 = vsub.f32 1.5, %v4385
        %v4387 = vmul.f32 %v4382, %v4386
        %vm4388 = vweird.f32 %v4267
        %vm4389 = vweird.f32 %v4382
        %vm4390 = vmor %vm4388, %vm4389
        %v4391 = vsel %vm4390, %v4382, %v4387
        %v4392 = vrsqrt.pop %v4268
        %v4393 = vmul.f32 %v4392, %v4268
        %v4394 = vmul.f32 %v4393, %v4392
        %v4395 = vmul.f32 0.5, %v4394
        %v4396 = vsub.f32 1.5, %v4395
        %v4397 = vmul.f32 %v4392, %v4396
        %vm4398 = vweird.f32 %v4268
        %vm4399 = vweird.f32 %v4392
        %vm4400 = vmor %vm4398, %vm4399
        %v4401 = vsel %vm4400, %v4392, %v4397
        %v4402 = vrsqrt.pop %v4269
        %v4403 = vmul.f32 %v4402, %v4269
        %v4404 = vmul.f32 %v4403, %v4402
        %v4405 = vmul.f32 0.5, %v4404
        %v4406 = vsub.f32 1.5, %v4405
        %v4407 = vmul.f32 %v4402, %v4406
        %vm4408 = vweird.f32 %v4269
        %vm4409 = vweird.f32 %v4402
        %vm4410 = vmor %vm4408, %vm4409
        %v4411 = vsel %vm4410, %v4402, %v4407
        %v4412 = vrsqrt.pop %v4270
        %v4413 = vmul.f32 %v4412, %v4270
        %v4414 = vmul.f32 %v4413, %v4412
        %v4415 = vmul.f32 0.5, %v4414
        %v4416 = vsub.f32 1.5, %v4415
        %v4417 = vmul.f32 %v4412, %v4416
        %vm4418 = vweird.f32 %v4270
        %vm4419 = vweird.f32 %v4412
        %vm4420 = vmor %vm4418, %vm4419
        %v4421 = vsel %vm4420, %v4412, %v4417
        %v4422 = vrsqrt.pop %v4271
        %v4423 = vmul.f32 %v4422, %v4271
        %v4424 = vmul.f32 %v4423, %v4422
        %v4425 = vmul.f32 0.5, %v4424
        %v4426 = vsub.f32 1.5, %v4425
        %v4427 = vmul.f32 %v4422, %v4426
        %vm4428 = vweird.f32 %v4271
        %vm4429 = vweird.f32 %v4422
        %vm4430 = vmor %vm4428, %vm4429
        %v4431 = vsel %vm4430, %v4422, %v4427
        %v4432 = vmul.f32 %v4160, %v4281
        %v4433 = vmul.f32 %v4161, %v4291
        %v4434 = vmul.f32 %v4162, %v4301
        %v4435 = vmul.f32 %v4163, %v4311
        %v4436 = vmul.f32 %v4164, %v4321
        %v4437 = vmul.f32 %v4165, %v4331
        %v4438 = vmul.f32 %v4166, %v4341
        %v4439 = vmul.f32 %v4167, %v4351
        %v4440 = vmul.f32 %v4168, %v4361
        %v4441 = vmul.f32 %v4169, %v4371
        %v4442 = vmul.f32 %v4170, %v4381
        %v4443 = vmul.f32 %v4171, %v4391
        %v4444 = vmul.f32 %v4172, %v4401
        %v4445 = vmul.f32 %v4173, %v4411
        %v4446 = vmul.f32 %v4174, %v4421
        %v4447 = vmul.f32 %v4175, %v4431
        %4448 = vrot.lane.b32.xlu0 %v3416, 64
        %v4449 = vpop.permute.xlu0 %4448
        %v4451 = vmul.f32 %v4432, %v4449
        %v4452 = vmul.f32 %v4433, %v4449
        %v4453 = vmul.f32 %v4434, %v4449
        %v4454 = vmul.f32 %v4435, %v4449
        %v4455 = vmul.f32 %v4436, %v4449
        %v4456 = vmul.f32 %v4437, %v4449
        %v4457 = vmul.f32 %v4438, %v4449
        %v4458 = vmul.f32 %v4439, %v4449
        %v4459 = vmul.f32 %v4440, %v4449
        %v4460 = vmul.f32 %v4441, %v4449
        %v4461 = vmul.f32 %v4442, %v4449
        %v4462 = vmul.f32 %v4443, %v4449
        %v4463 = vmul.f32 %v4444, %v4449
        %v4464 = vmul.f32 %v4445, %v4449
        %v4465 = vmul.f32 %v4446, %v4449
        %v4466 = vmul.f32 %v4447, %v4449
        %4467 = vrot.lane.b32.xlu0 %v3435, 64
        %v4468 = vpop.permute.xlu0 %4467
        %v4470 = vadd.f32 %v4451, %v4468
        %v4471 = vadd.f32 %v4452, %v4468
        %v4472 = vadd.f32 %v4453, %v4468
        %v4473 = vadd.f32 %v4454, %v4468
        %v4474 = vadd.f32 %v4455, %v4468
        %v4475 = vadd.f32 %v4456, %v4468
        %v4476 = vadd.f32 %v4457, %v4468
        %v4477 = vadd.f32 %v4458, %v4468
        %v4478 = vadd.f32 %v4459, %v4468
        %v4479 = vadd.f32 %v4460, %v4468
        %v4480 = vadd.f32 %v4461, %v4468
        %v4481 = vadd.f32 %v4462, %v4468
        %v4482 = vadd.f32 %v4463, %v4468
        %v4483 = vadd.f32 %v4464, %v4468
        %v4484 = vadd.f32 %v4465, %v4468
        %v4485 = vadd.f32 %v4466, %v4468
        %v4486 = vpack.c.bf16 %v4471, %v4470
        %v4487 = vpack.c.bf16 %v4473, %v4472
        %v4488 = vpack.c.bf16 %v4475, %v4474
        %v4489 = vpack.c.bf16 %v4477, %v4476
        %v4490 = vpack.c.bf16 %v4479, %v4478
        %v4491 = vpack.c.bf16 %v4481, %v4480
        %v4492 = vpack.c.bf16 %v4483, %v4482
        %v4493 = vpack.c.bf16 %v4485, %v4484
        %v4494 = vld [vmem:[#allocation16 + $0x20] sm:$0xf]
        %v4495 = vld [vmem:[#allocation16 + $0x24] sm:$0xf]
        %v4496 = vld [vmem:[#allocation16 + $0x28] sm:$0xf]
        %v4497 = vld [vmem:[#allocation16 + $0x2c] sm:$0xf]
        %v4498 = vld [vmem:[#allocation16 + $0x30] sm:$0xf]
        %v4499 = vld [vmem:[#allocation16 + $0x34] sm:$0xf]
        %v4500 = vld [vmem:[#allocation16 + $0x38] sm:$0xf]
        %v4501 = vld [vmem:[#allocation16 + $0x3c] sm:$0xf]
        %v4510 = vunpack.c.l.b16 %v4494
        %v4511 = vunpack.c.l.b16 %v4495
        %v4512 = vunpack.c.l.b16 %v4496
        %v4513 = vunpack.c.l.b16 %v4497
        %v4514 = vunpack.c.l.b16 %v4498
        %v4515 = vunpack.c.l.b16 %v4499
        %v4516 = vunpack.c.l.b16 %v4500
        %v4517 = vunpack.c.l.b16 %v4501
        %v4518 = vpack.c.b16 %v4511, %v4510
        %v4519 = vpack.c.b16 %v4513, %v4512
        %v4520 = vpack.c.b16 %v4515, %v4514
        %v4521 = vpack.c.b16 %v4517, %v4516
        %v4527 = vsel %vm2642, %v4486, 0
        %v4530 = vsel %vm2642, %v4487, 0
        %v4533 = vsel %vm2642, %v4488, 0
        %v4536 = vsel %vm2642, %v4489, 0
        %v4539 = vsel %vm2642, %v4490, 0
        %v4542 = vsel %vm2642, %v4491, 0
        %v4545 = vsel %vm2642, %v4492, 0
        %v4548 = vsel %vm2642, %v4493, 0
        %4550 = vmatpush.bf16.msra.mxu0 0
        %4551 = vmatpush.bf16.msra.mxu0 0
        %4552 = vmatpush.bf16.msra.mxu0 0
        %4553 = vmatpush.bf16.msra.mxu0 0
        %4554 = vmatpush.bf16.msra.mxu0 %v4521
        %4555 = vmatpush.bf16.msra.mxu0 %v4520
        %4556 = vmatpush.bf16.msra.mxu0 %v4519
        %4557 = vmatpush.bf16.msra.mxu0 %v4518
        %4558 = vmatmul.bf16.gmra.mxu0 %v4527
        %v4559 = vpop.f32.mrf.mxu0
        %v4560 = vadd.f32 0.0, %v4559
        %v4561 = vpop.f32.mrf.mxu0
        %v4562 = vadd.f32 0.0, %v4561
        %4563 = vmatmul.bf16.gmra.mxu0 %v4530
        %v4564 = vpop.f32.mrf.mxu0
        %v4565 = vadd.f32 0.0, %v4564
        %v4566 = vpop.f32.mrf.mxu0
        %v4567 = vadd.f32 0.0, %v4566
        %4568 = vmatmul.bf16.gmra.mxu0 %v4533
        %v4569 = vpop.f32.mrf.mxu0
        %v4570 = vadd.f32 0.0, %v4569
        %v4571 = vpop.f32.mrf.mxu0
        %v4572 = vadd.f32 0.0, %v4571
        %4573 = vmatmul.bf16.gmra.mxu0 %v4536
        %v4574 = vpop.f32.mrf.mxu0
        %v4575 = vadd.f32 0.0, %v4574
        %v4576 = vpop.f32.mrf.mxu0
        %v4577 = vadd.f32 0.0, %v4576
        %4578 = vmatmul.bf16.gmra.mxu0 %v4539
        %v4579 = vpop.f32.mrf.mxu0
        %v4580 = vadd.f32 0.0, %v4579
        %v4581 = vpop.f32.mrf.mxu0
        %v4582 = vadd.f32 0.0, %v4581
        %4583 = vmatmul.bf16.gmra.mxu0 %v4542
        %v4584 = vpop.f32.mrf.mxu0
        %v4585 = vadd.f32 0.0, %v4584
        %v4586 = vpop.f32.mrf.mxu0
        %v4587 = vadd.f32 0.0, %v4586
        %4588 = vmatmul.bf16.gmra.mxu0 %v4545
        %v4589 = vpop.f32.mrf.mxu0
        %v4590 = vadd.f32 0.0, %v4589
        %v4591 = vpop.f32.mrf.mxu0
        %v4592 = vadd.f32 0.0, %v4591
        %4593 = vmatmul.bf16.gmra.mxu0 %v4548
        %v4594 = vpop.f32.mrf.mxu0
        %v4595 = vadd.f32 0.0, %v4594
        %v4596 = vpop.f32.mrf.mxu0
        %v4597 = vadd.f32 0.0, %v4596
        %4598 = vdwg.mxu0
        %v4607 = vunpack.c.l.b16 %v3461
        %v4608 = vunpack.c.l.b16 %v3462
        %v4609 = vunpack.c.l.b16 %v3463
        %v4610 = vunpack.c.l.b16 %v3464
        %v4611 = vunpack.c.l.b16 %v3465
        %v4612 = vunpack.c.l.b16 %v3466
        %v4613 = vunpack.c.l.b16 %v3467
        %v4614 = vunpack.c.l.b16 %v3468
        %v4615 = vpack.c.b16 %v4608, %v4607
        %v4616 = vpack.c.b16 %v4610, %v4609
        %v4617 = vpack.c.b16 %v4612, %v4611
        %v4618 = vpack.c.b16 %v4614, %v4613
        %v4624 = vsel %vm2642, %v3453, 0
        %v4627 = vsel %vm2642, %v3454, 0
        %v4630 = vsel %vm2642, %v3455, 0
        %v4633 = vsel %vm2642, %v3456, 0
        %v4636 = vsel %vm2642, %v3457, 0
        %v4639 = vsel %vm2642, %v3458, 0
        %v4642 = vsel %vm2642, %v3459, 0
        %v4645 = vsel %vm2642, %v3460, 0
        %4647 = vmatpush.bf16.msra.mxu0 0
        %4648 = vmatpush.bf16.msra.mxu0 0
        %4649 = vmatpush.bf16.msra.mxu0 0
        %4650 = vmatpush.bf16.msra.mxu0 0
        %4651 = vmatpush.bf16.msra.mxu0 %v4618
        %4652 = vmatpush.bf16.msra.mxu0 %v4617
        %4653 = vmatpush.bf16.msra.mxu0 %v4616
        %4654 = vmatpush.bf16.msra.mxu0 %v4615
        %4655 = vmatmul.bf16.gmra.mxu0 %v4624
        %v4656 = vpop.f32.mrf.mxu0
        %v4657 = vadd.f32 %v4560, %v4656
        %v4658 = vpop.f32.mrf.mxu0
        %v4659 = vadd.f32 %v4562, %v4658
        %4660 = vmatmul.bf16.gmra.mxu0 %v4627
        %v4661 = vpop.f32.mrf.mxu0
        %v4662 = vadd.f32 %v4565, %v4661
        %v4663 = vpop.f32.mrf.mxu0
        %v4664 = vadd.f32 %v4567, %v4663
        %4665 = vmatmul.bf16.gmra.mxu0 %v4630
        %v4666 = vpop.f32.mrf.mxu0
        %v4667 = vadd.f32 %v4570, %v4666
        %v4668 = vpop.f32.mrf.mxu0
        %v4669 = vadd.f32 %v4572, %v4668
        %4670 = vmatmul.bf16.gmra.mxu0 %v4633
        %v4671 = vpop.f32.mrf.mxu0
        %v4672 = vadd.f32 %v4575, %v4671
        %v4673 = vpop.f32.mrf.mxu0
        %v4674 = vadd.f32 %v4577, %v4673
        %4675 = vmatmul.bf16.gmra.mxu0 %v4636
        %v4676 = vpop.f32.mrf.mxu0
        %v4677 = vadd.f32 %v4580, %v4676
        %v4678 = vpop.f32.mrf.mxu0
        %v4679 = vadd.f32 %v4582, %v4678
        %4680 = vmatmul.bf16.gmra.mxu0 %v4639
        %v4681 = vpop.f32.mrf.mxu0
        %v4682 = vadd.f32 %v4585, %v4681
        %v4683 = vpop.f32.mrf.mxu0
        %v4684 = vadd.f32 %v4587, %v4683
        %4685 = vmatmul.bf16.gmra.mxu0 %v4642
        %v4686 = vpop.f32.mrf.mxu0
        %v4687 = vadd.f32 %v4590, %v4686
        %v4688 = vpop.f32.mrf.mxu0
        %v4689 = vadd.f32 %v4592, %v4688
        %4690 = vmatmul.bf16.gmra.mxu0 %v4645
        %v4691 = vpop.f32.mrf.mxu0
        %v4692 = vadd.f32 %v4595, %v4691
        %v4693 = vpop.f32.mrf.mxu0
        %v4694 = vadd.f32 %v4597, %v4693
        %4695 = vdwg.mxu0
        %v4696 = vadd.f32 %v1227, %v4657
        %v4697 = vadd.f32 %v1228, %v4659
        %v4698 = vadd.f32 %v1229, %v4662
        %v4699 = vadd.f32 %v1230, %v4664
        %v4700 = vadd.f32 %v1231, %v4667
        %v4701 = vadd.f32 %v1232, %v4669
        %v4702 = vadd.f32 %v1233, %v4672
        %v4703 = vadd.f32 %v1234, %v4674
        %v4704 = vadd.f32 %v1235, %v4677
        %v4705 = vadd.f32 %v1236, %v4679
        %v4706 = vadd.f32 %v1237, %v4682
        %v4707 = vadd.f32 %v1238, %v4684
        %v4708 = vadd.f32 %v1239, %v4687
        %v4709 = vadd.f32 %v1240, %v4689
        %v4710 = vadd.f32 %v1241, %v4692
        %v4711 = vadd.f32 %v1242, %v4694
        %v4712 = vld [vmem:[%s6] sm:$0x1]
        %v4713 = vld [vmem:[%s7] sm:$0x1]
        %4714 = vadd.xlane.f32.xlu0 %v4696
        %v4715 = vpop.xlane.xlu0 %4714
        %4716 = vadd.xlane.f32.xlu0 %v4697
        %v4717 = vpop.xlane.xlu0 %4716
        %4718 = vadd.xlane.f32.xlu0 %v4698
        %v4719 = vpop.xlane.xlu0 %4718
        %4720 = vadd.xlane.f32.xlu0 %v4699
        %v4721 = vpop.xlane.xlu0 %4720
        %4722 = vadd.xlane.f32.xlu0 %v4700
        %v4723 = vpop.xlane.xlu0 %4722
        %4724 = vadd.xlane.f32.xlu0 %v4701
        %v4725 = vpop.xlane.xlu0 %4724
        %4726 = vadd.xlane.f32.xlu0 %v4702
        %v4727 = vpop.xlane.xlu0 %4726
        %4728 = vadd.xlane.f32.xlu0 %v4703
        %v4729 = vpop.xlane.xlu0 %4728
        %4730 = vadd.xlane.f32.xlu0 %v4704
        %v4731 = vpop.xlane.xlu0 %4730
        %4732 = vadd.xlane.f32.xlu0 %v4705
        %v4733 = vpop.xlane.xlu0 %4732
        %4734 = vadd.xlane.f32.xlu0 %v4706
        %v4735 = vpop.xlane.xlu0 %4734
        %4736 = vadd.xlane.f32.xlu0 %v4707
        %v4737 = vpop.xlane.xlu0 %4736
        %4738 = vadd.xlane.f32.xlu0 %v4708
        %v4739 = vpop.xlane.xlu0 %4738
        %4740 = vadd.xlane.f32.xlu0 %v4709
        %v4741 = vpop.xlane.xlu0 %4740
        %4742 = vadd.xlane.f32.xlu0 %v4710
        %v4743 = vpop.xlane.xlu0 %4742
        %4744 = vadd.xlane.f32.xlu0 %v4711
        %v4745 = vpop.xlane.xlu0 %4744
        %v4746 = vmul.f32 %v4715, %v916
        %v4747 = vmul.f32 %v4717, %v916
        %v4748 = vmul.f32 %v4719, %v916
        %v4749 = vmul.f32 %v4721, %v916
        %v4750 = vmul.f32 %v4723, %v916
        %v4751 = vmul.f32 %v4725, %v916
        %v4752 = vmul.f32 %v4727, %v916
        %v4753 = vmul.f32 %v4729, %v916
        %v4754 = vmul.f32 %v4731, %v916
        %v4755 = vmul.f32 %v4733, %v916
        %v4756 = vmul.f32 %v4735, %v916
        %v4757 = vmul.f32 %v4737, %v916
        %v4758 = vmul.f32 %v4739, %v916
        %v4759 = vmul.f32 %v4741, %v916
        %v4760 = vmul.f32 %v4743, %v916
        %v4761 = vmul.f32 %v4745, %v916
        %v4762 = vsub.f32 %v4696, %v4746
        %v4763 = vsub.f32 %v4697, %v4747
        %v4764 = vsub.f32 %v4698, %v4748
        %v4765 = vsub.f32 %v4699, %v4749
        %v4766 = vsub.f32 %v4700, %v4750
        %v4767 = vsub.f32 %v4701, %v4751
        %v4768 = vsub.f32 %v4702, %v4752
        %v4769 = vsub.f32 %v4703, %v4753
        %v4770 = vsub.f32 %v4704, %v4754
        %v4771 = vsub.f32 %v4705, %v4755
        %v4772 = vsub.f32 %v4706, %v4756
        %v4773 = vsub.f32 %v4707, %v4757
        %v4774 = vsub.f32 %v4708, %v4758
        %v4775 = vsub.f32 %v4709, %v4759
        %v4776 = vsub.f32 %v4710, %v4760
        %v4777 = vsub.f32 %v4711, %v4761
        %v4778 = vmul.f32 %v4762, %v4762
        %v4779 = vmul.f32 %v4763, %v4763
        %v4780 = vmul.f32 %v4764, %v4764
        %v4781 = vmul.f32 %v4765, %v4765
        %v4782 = vmul.f32 %v4766, %v4766
        %v4783 = vmul.f32 %v4767, %v4767
        %v4784 = vmul.f32 %v4768, %v4768
        %v4785 = vmul.f32 %v4769, %v4769
        %v4786 = vmul.f32 %v4770, %v4770
        %v4787 = vmul.f32 %v4771, %v4771
        %v4788 = vmul.f32 %v4772, %v4772
        %v4789 = vmul.f32 %v4773, %v4773
        %v4790 = vmul.f32 %v4774, %v4774
        %v4791 = vmul.f32 %v4775, %v4775
        %v4792 = vmul.f32 %v4776, %v4776
        %v4793 = vmul.f32 %v4777, %v4777
        %4794 = vadd.xlane.f32.xlu0 %v4778
        %v4795 = vpop.xlane.xlu0 %4794
        %4796 = vadd.xlane.f32.xlu0 %v4779
        %v4797 = vpop.xlane.xlu0 %4796
        %4798 = vadd.xlane.f32.xlu0 %v4780
        %v4799 = vpop.xlane.xlu0 %4798
        %4800 = vadd.xlane.f32.xlu0 %v4781
        %v4801 = vpop.xlane.xlu0 %4800
        %4802 = vadd.xlane.f32.xlu0 %v4782
        %v4803 = vpop.xlane.xlu0 %4802
        %4804 = vadd.xlane.f32.xlu0 %v4783
        %v4805 = vpop.xlane.xlu0 %4804
        %4806 = vadd.xlane.f32.xlu0 %v4784
        %v4807 = vpop.xlane.xlu0 %4806
        %4808 = vadd.xlane.f32.xlu0 %v4785
        %v4809 = vpop.xlane.xlu0 %4808
        %4810 = vadd.xlane.f32.xlu0 %v4786
        %v4811 = vpop.xlane.xlu0 %4810
        %4812 = vadd.xlane.f32.xlu0 %v4787
        %v4813 = vpop.xlane.xlu0 %4812
        %4814 = vadd.xlane.f32.xlu0 %v4788
        %v4815 = vpop.xlane.xlu0 %4814
        %4816 = vadd.xlane.f32.xlu0 %v4789
        %v4817 = vpop.xlane.xlu0 %4816
        %4818 = vadd.xlane.f32.xlu0 %v4790
        %v4819 = vpop.xlane.xlu0 %4818
        %4820 = vadd.xlane.f32.xlu0 %v4791
        %v4821 = vpop.xlane.xlu0 %4820
        %4822 = vadd.xlane.f32.xlu0 %v4792
        %v4823 = vpop.xlane.xlu0 %4822
        %4824 = vadd.xlane.f32.xlu0 %v4793
        %v4825 = vpop.xlane.xlu0 %4824
        %v4826 = vmul.f32 %v4795, %v916
        %v4827 = vmul.f32 %v4797, %v916
        %v4828 = vmul.f32 %v4799, %v916
        %v4829 = vmul.f32 %v4801, %v916
        %v4830 = vmul.f32 %v4803, %v916
        %v4831 = vmul.f32 %v4805, %v916
        %v4832 = vmul.f32 %v4807, %v916
        %v4833 = vmul.f32 %v4809, %v916
        %v4834 = vmul.f32 %v4811, %v916
        %v4835 = vmul.f32 %v4813, %v916
        %v4836 = vmul.f32 %v4815, %v916
        %v4837 = vmul.f32 %v4817, %v916
        %v4838 = vmul.f32 %v4819, %v916
        %v4839 = vmul.f32 %v4821, %v916
        %v4840 = vmul.f32 %v4823, %v916
        %v4841 = vmul.f32 %v4825, %v916
        %v4842 = vadd.f32 %v4826, 1e-05
        %v4843 = vadd.f32 %v4827, 1e-05
        %v4844 = vadd.f32 %v4828, 1e-05
        %v4845 = vadd.f32 %v4829, 1e-05
        %v4846 = vadd.f32 %v4830, 1e-05
        %v4847 = vadd.f32 %v4831, 1e-05
        %v4848 = vadd.f32 %v4832, 1e-05
        %v4849 = vadd.f32 %v4833, 1e-05
        %v4850 = vadd.f32 %v4834, 1e-05
        %v4851 = vadd.f32 %v4835, 1e-05
        %v4852 = vadd.f32 %v4836, 1e-05
        %v4853 = vadd.f32 %v4837, 1e-05
        %v4854 = vadd.f32 %v4838, 1e-05
        %v4855 = vadd.f32 %v4839, 1e-05
        %v4856 = vadd.f32 %v4840, 1e-05
        %v4857 = vadd.f32 %v4841, 1e-05
        %v4858 = vrsqrt.pop %v4842
        %v4859 = vmul.f32 %v4858, %v4842
        %v4860 = vmul.f32 %v4859, %v4858
        %v4861 = vmul.f32 0.5, %v4860
        %v4862 = vsub.f32 1.5, %v4861
        %v4863 = vmul.f32 %v4858, %v4862
        %vm4864 = vweird.f32 %v4842
        %vm4865 = vweird.f32 %v4858
        %vm4866 = vmor %vm4864, %vm4865
        %v4867 = vsel %vm4866, %v4858, %v4863
        %v4868 = vrsqrt.pop %v4843
        %v4869 = vmul.f32 %v4868, %v4843
        %v4870 = vmul.f32 %v4869, %v4868
        %v4871 = vmul.f32 0.5, %v4870
        %v4872 = vsub.f32 1.5, %v4871
        %v4873 = vmul.f32 %v4868, %v4872
        %vm4874 = vweird.f32 %v4843
        %vm4875 = vweird.f32 %v4868
        %vm4876 = vmor %vm4874, %vm4875
        %v4877 = vsel %vm4876, %v4868, %v4873
        %v4878 = vrsqrt.pop %v4844
        %v4879 = vmul.f32 %v4878, %v4844
        %v4880 = vmul.f32 %v4879, %v4878
        %v4881 = vmul.f32 0.5, %v4880
        %v4882 = vsub.f32 1.5, %v4881
        %v4883 = vmul.f32 %v4878, %v4882
        %vm4884 = vweird.f32 %v4844
        %vm4885 = vweird.f32 %v4878
        %vm4886 = vmor %vm4884, %vm4885
        %v4887 = vsel %vm4886, %v4878, %v4883
        %v4888 = vrsqrt.pop %v4845
        %v4889 = vmul.f32 %v4888, %v4845
        %v4890 = vmul.f32 %v4889, %v4888
        %v4891 = vmul.f32 0.5, %v4890
        %v4892 = vsub.f32 1.5, %v4891
        %v4893 = vmul.f32 %v4888, %v4892
        %vm4894 = vweird.f32 %v4845
        %vm4895 = vweird.f32 %v4888
        %vm4896 = vmor %vm4894, %vm4895
        %v4897 = vsel %vm4896, %v4888, %v4893
        %v4898 = vrsqrt.pop %v4846
        %v4899 = vmul.f32 %v4898, %v4846
        %v4900 = vmul.f32 %v4899, %v4898
        %v4901 = vmul.f32 0.5, %v4900
        %v4902 = vsub.f32 1.5, %v4901
        %v4903 = vmul.f32 %v4898, %v4902
        %vm4904 = vweird.f32 %v4846
        %vm4905 = vweird.f32 %v4898
        %vm4906 = vmor %vm4904, %vm4905
        %v4907 = vsel %vm4906, %v4898, %v4903
        %v4908 = vrsqrt.pop %v4847
        %v4909 = vmul.f32 %v4908, %v4847
        %v4910 = vmul.f32 %v4909, %v4908
        %v4911 = vmul.f32 0.5, %v4910
        %v4912 = vsub.f32 1.5, %v4911
        %v4913 = vmul.f32 %v4908, %v4912
        %vm4914 = vweird.f32 %v4847
        %vm4915 = vweird.f32 %v4908
        %vm4916 = vmor %vm4914, %vm4915
        %v4917 = vsel %vm4916, %v4908, %v4913
        %v4918 = vrsqrt.pop %v4848
        %v4919 = vmul.f32 %v4918, %v4848
        %v4920 = vmul.f32 %v4919, %v4918
        %v4921 = vmul.f32 0.5, %v4920
        %v4922 = vsub.f32 1.5, %v4921
        %v4923 = vmul.f32 %v4918, %v4922
        %vm4924 = vweird.f32 %v4848
        %vm4925 = vweird.f32 %v4918
        %vm4926 = vmor %vm4924, %vm4925
        %v4927 = vsel %vm4926, %v4918, %v4923
        %v4928 = vrsqrt.pop %v4849
        %v4929 = vmul.f32 %v4928, %v4849
        %v4930 = vmul.f32 %v4929, %v4928
        %v4931 = vmul.f32 0.5, %v4930
        %v4932 = vsub.f32 1.5, %v4931
        %v4933 = vmul.f32 %v4928, %v4932
        %vm4934 = vweird.f32 %v4849
        %vm4935 = vweird.f32 %v4928
        %vm4936 = vmor %vm4934, %vm4935
        %v4937 = vsel %vm4936, %v4928, %v4933
        %v4938 = vrsqrt.pop %v4850
        %v4939 = vmul.f32 %v4938, %v4850
        %v4940 = vmul.f32 %v4939, %v4938
        %v4941 = vmul.f32 0.5, %v4940
        %v4942 = vsub.f32 1.5, %v4941
        %v4943 = vmul.f32 %v4938, %v4942
        %vm4944 = vweird.f32 %v4850
        %vm4945 = vweird.f32 %v4938
        %vm4946 = vmor %vm4944, %vm4945
        %v4947 = vsel %vm4946, %v4938, %v4943
        %v4948 = vrsqrt.pop %v4851
        %v4949 = vmul.f32 %v4948, %v4851
        %v4950 = vmul.f32 %v4949, %v4948
        %v4951 = vmul.f32 0.5, %v4950
        %v4952 = vsub.f32 1.5, %v4951
        %v4953 = vmul.f32 %v4948, %v4952
        %vm4954 = vweird.f32 %v4851
        %vm4955 = vweird.f32 %v4948
        %vm4956 = vmor %vm4954, %vm4955
        %v4957 = vsel %vm4956, %v4948, %v4953
        %v4958 = vrsqrt.pop %v4852
        %v4959 = vmul.f32 %v4958, %v4852
        %v4960 = vmul.f32 %v4959, %v4958
        %v4961 = vmul.f32 0.5, %v4960
        %v4962 = vsub.f32 1.5, %v4961
        %v4963 = vmul.f32 %v4958, %v4962
        %vm4964 = vweird.f32 %v4852
        %vm4965 = vweird.f32 %v4958
        %vm4966 = vmor %vm4964, %vm4965
        %v4967 = vsel %vm4966, %v4958, %v4963
        %v4968 = vrsqrt.pop %v4853
        %v4969 = vmul.f32 %v4968, %v4853
        %v4970 = vmul.f32 %v4969, %v4968
        %v4971 = vmul.f32 0.5, %v4970
        %v4972 = vsub.f32 1.5, %v4971
        %v4973 = vmul.f32 %v4968, %v4972
        %vm4974 = vweird.f32 %v4853
        %vm4975 = vweird.f32 %v4968
        %vm4976 = vmor %vm4974, %vm4975
        %v4977 = vsel %vm4976, %v4968, %v4973
        %v4978 = vrsqrt.pop %v4854
        %v4979 = vmul.f32 %v4978, %v4854
        %v4980 = vmul.f32 %v4979, %v4978
        %v4981 = vmul.f32 0.5, %v4980
        %v4982 = vsub.f32 1.5, %v4981
        %v4983 = vmul.f32 %v4978, %v4982
        %vm4984 = vweird.f32 %v4854
        %vm4985 = vweird.f32 %v4978
        %vm4986 = vmor %vm4984, %vm4985
        %v4987 = vsel %vm4986, %v4978, %v4983
        %v4988 = vrsqrt.pop %v4855
        %v4989 = vmul.f32 %v4988, %v4855
        %v4990 = vmul.f32 %v4989, %v4988
        %v4991 = vmul.f32 0.5, %v4990
        %v4992 = vsub.f32 1.5, %v4991
        %v4993 = vmul.f32 %v4988, %v4992
        %vm4994 = vweird.f32 %v4855
        %vm4995 = vweird.f32 %v4988
        %vm4996 = vmor %vm4994, %vm4995
        %v4997 = vsel %vm4996, %v4988, %v4993
        %v4998 = vrsqrt.pop %v4856
        %v4999 = vmul.f32 %v4998, %v4856
        %v5000 = vmul.f32 %v4999, %v4998
        %v5001 = vmul.f32 0.5, %v5000
        %v5002 = vsub.f32 1.5, %v5001
        %v5003 = vmul.f32 %v4998, %v5002
        %vm5004 = vweird.f32 %v4856
        %vm5005 = vweird.f32 %v4998
        %vm5006 = vmor %vm5004, %vm5005
        %v5007 = vsel %vm5006, %v4998, %v5003
        %v5008 = vrsqrt.pop %v4857
        %v5009 = vmul.f32 %v5008, %v4857
        %v5010 = vmul.f32 %v5009, %v5008
        %v5011 = vmul.f32 0.5, %v5010
        %v5012 = vsub.f32 1.5, %v5011
        %v5013 = vmul.f32 %v5008, %v5012
        %vm5014 = vweird.f32 %v4857
        %vm5015 = vweird.f32 %v5008
        %vm5016 = vmor %vm5014, %vm5015
        %v5017 = vsel %vm5016, %v5008, %v5013
        %v5018 = vmul.f32 %v4762, %v4867
        %v5019 = vmul.f32 %v4763, %v4877
        %v5020 = vmul.f32 %v4764, %v4887
        %v5021 = vmul.f32 %v4765, %v4897
        %v5022 = vmul.f32 %v4766, %v4907
        %v5023 = vmul.f32 %v4767, %v4917
        %v5024 = vmul.f32 %v4768, %v4927
        %v5025 = vmul.f32 %v4769, %v4937
        %v5026 = vmul.f32 %v4770, %v4947
        %v5027 = vmul.f32 %v4771, %v4957
        %v5028 = vmul.f32 %v4772, %v4967
        %v5029 = vmul.f32 %v4773, %v4977
        %v5030 = vmul.f32 %v4774, %v4987
        %v5031 = vmul.f32 %v4775, %v4997
        %v5032 = vmul.f32 %v4776, %v5007
        %v5033 = vmul.f32 %v4777, %v5017
        %v5035 = vperm.slane %v4712, 0
        %v5037 = vmul.f32 %v5018, %v5035
        %v5038 = vmul.f32 %v5019, %v5035
        %v5039 = vmul.f32 %v5020, %v5035
        %v5040 = vmul.f32 %v5021, %v5035
        %v5041 = vmul.f32 %v5022, %v5035
        %v5042 = vmul.f32 %v5023, %v5035
        %v5043 = vmul.f32 %v5024, %v5035
        %v5044 = vmul.f32 %v5025, %v5035
        %v5045 = vmul.f32 %v5026, %v5035
        %v5046 = vmul.f32 %v5027, %v5035
        %v5047 = vmul.f32 %v5028, %v5035
        %v5048 = vmul.f32 %v5029, %v5035
        %v5049 = vmul.f32 %v5030, %v5035
        %v5050 = vmul.f32 %v5031, %v5035
        %v5051 = vmul.f32 %v5032, %v5035
        %v5052 = vmul.f32 %v5033, %v5035
        %v5054 = vperm.slane %v4713, 0
        %v5056 = vadd.f32 %v5037, %v5054
        %v5057 = vadd.f32 %v5038, %v5054
        %v5058 = vadd.f32 %v5039, %v5054
        %v5059 = vadd.f32 %v5040, %v5054
        %v5060 = vadd.f32 %v5041, %v5054
        %v5061 = vadd.f32 %v5042, %v5054
        %v5062 = vadd.f32 %v5043, %v5054
        %v5063 = vadd.f32 %v5044, %v5054
        %v5064 = vadd.f32 %v5045, %v5054
        %v5065 = vadd.f32 %v5046, %v5054
        %v5066 = vadd.f32 %v5047, %v5054
        %v5067 = vadd.f32 %v5048, %v5054
        %v5068 = vadd.f32 %v5049, %v5054
        %v5069 = vadd.f32 %v5050, %v5054
        %v5070 = vadd.f32 %v5051, %v5054
        %v5071 = vadd.f32 %v5052, %v5054
        %v5072 = vld [vmem:[#allocation4] sm:$0x1]
        %v5073 = vrot.slane %v5056, 7
        %v5074 = vrot.slane %v5057, 7
        %v5075 = vrot.slane %v5058, 7
        %v5076 = vrot.slane %v5059, 7
        %v5077 = vrot.slane %v5060, 7
        %v5078 = vrot.slane %v5061, 7
        %v5079 = vrot.slane %v5062, 7
        %v5080 = vrot.slane %v5063, 7
        %v5081 = vrot.slane %v5064, 7
        %v5082 = vrot.slane %v5065, 7
        %v5083 = vrot.slane %v5066, 7
        %v5084 = vrot.slane %v5067, 7
        %v5085 = vrot.slane %v5068, 7
        %v5086 = vrot.slane %v5069, 7
        %v5087 = vrot.slane %v5070, 7
        %v5088 = vrot.slane %v5071, 7
        %v5089 = vsel %vm1622, %v5087, %v5088
        %v5090 = vsel %vm1622, %v5086, %v5087
        %v5091 = vsel %vm1622, %v5085, %v5086
        %v5092 = vsel %vm1622, %v5084, %v5085
        %v5093 = vsel %vm1622, %v5083, %v5084
        %v5094 = vsel %vm1622, %v5082, %v5083
        %v5095 = vsel %vm1622, %v5081, %v5082
        %v5096 = vsel %vm1622, %v5080, %v5081
        %v5097 = vsel %vm1622, %v5079, %v5080
        %v5098 = vsel %vm1622, %v5078, %v5079
        %v5099 = vsel %vm1622, %v5077, %v5078
        %v5100 = vsel %vm1622, %v5076, %v5077
        %v5101 = vsel %vm1622, %v5075, %v5076
        %v5102 = vsel %vm1622, %v5074, %v5075
        %v5103 = vsel %vm1622, %v5073, %v5074
        %v5104 = vsel %vm1622, %v5088, %v5073
        %v5106 = vperm.slane %v5072, 0
        %v5108 = vsel %vm1654, %v5106, %v5104
        %v5109 = vsel %vm1655, %v5106, %v5103
        %v5110 = vsel %vm1656, %v5106, %v5102
        %v5111 = vsel %vm1657, %v5106, %v5101
        %v5112 = vsel %vm1658, %v5106, %v5100
        %v5113 = vsel %vm1659, %v5106, %v5099
        %v5114 = vsel %vm1660, %v5106, %v5098
        %v5115 = vsel %vm1661, %v5106, %v5097
        %v5116 = vsel %vm1662, %v5106, %v5096
        %v5117 = vsel %vm1663, %v5106, %v5095
        %v5118 = vsel %vm1664, %v5106, %v5094
        %v5119 = vsel %vm1665, %v5106, %v5093
        %v5120 = vsel %vm1666, %v5106, %v5092
        %v5121 = vsel %vm1667, %v5106, %v5091
        %v5122 = vsel %vm1668, %v5106, %v5090
        %v5123 = vsel %vm1669, %v5106, %v5089
        %5124 = vst [vmem:[#allocation4 - $0x7] sm:$0x80] %v5071
        %v5125 = vsub.f32 %v5056, %v5108
        %v5126 = vsub.f32 %v5057, %v5109
        %v5127 = vsub.f32 %v5058, %v5110
        %v5128 = vsub.f32 %v5059, %v5111
        %v5129 = vsub.f32 %v5060, %v5112
        %v5130 = vsub.f32 %v5061, %v5113
        %v5131 = vsub.f32 %v5062, %v5114
        %v5132 = vsub.f32 %v5063, %v5115
        %v5133 = vsub.f32 %v5064, %v5116
        %v5134 = vsub.f32 %v5065, %v5117
        %v5135 = vsub.f32 %v5066, %v5118
        %v5136 = vsub.f32 %v5067, %v5119
        %v5137 = vsub.f32 %v5068, %v5120
        %v5138 = vsub.f32 %v5069, %v5121
        %v5139 = vsub.f32 %v5070, %v5122
        %v5140 = vsub.f32 %v5071, %v5123
        %v5141 = vld [vmem:[%s17] sm:$0x1]
        %v5143 = vperm.slane %v5141, 0
        %v5145 = vmul.f32 %v5125, %v5143
        %v5146 = vmul.f32 %v5126, %v5143
        %v5147 = vmul.f32 %v5127, %v5143
        %v5148 = vmul.f32 %v5128, %v5143
        %v5149 = vmul.f32 %v5129, %v5143
        %v5150 = vmul.f32 %v5130, %v5143
        %v5151 = vmul.f32 %v5131, %v5143
        %v5152 = vmul.f32 %v5132, %v5143
        %v5153 = vmul.f32 %v5133, %v5143
        %v5154 = vmul.f32 %v5134, %v5143
        %v5155 = vmul.f32 %v5135, %v5143
        %v5156 = vmul.f32 %v5136, %v5143
        %v5157 = vmul.f32 %v5137, %v5143
        %v5158 = vmul.f32 %v5138, %v5143
        %v5159 = vmul.f32 %v5139, %v5143
        %v5160 = vmul.f32 %v5140, %v5143
        %v5161 = vadd.f32 %v5108, %v5145
        %v5162 = vadd.f32 %v5109, %v5146
        %v5163 = vadd.f32 %v5110, %v5147
        %v5164 = vadd.f32 %v5111, %v5148
        %v5165 = vadd.f32 %v5112, %v5149
        %v5166 = vadd.f32 %v5113, %v5150
        %v5167 = vadd.f32 %v5114, %v5151
        %v5168 = vadd.f32 %v5115, %v5152
        %v5169 = vadd.f32 %v5116, %v5153
        %v5170 = vadd.f32 %v5117, %v5154
        %v5171 = vadd.f32 %v5118, %v5155
        %v5172 = vadd.f32 %v5119, %v5156
        %v5173 = vadd.f32 %v5120, %v5157
        %v5174 = vadd.f32 %v5121, %v5158
        %v5175 = vadd.f32 %v5122, %v5159
        %v5176 = vadd.f32 %v5123, %v5160
        %v5177 = vpack.c.bf16 %v5162, %v5161
        %v5178 = vpack.c.bf16 %v5164, %v5163
        %v5179 = vpack.c.bf16 %v5166, %v5165
        %v5180 = vpack.c.bf16 %v5168, %v5167
        %v5181 = vpack.c.bf16 %v5170, %v5169
        %v5182 = vpack.c.bf16 %v5172, %v5171
        %v5183 = vpack.c.bf16 %v5174, %v5173
        %v5184 = vpack.c.bf16 %v5176, %v5175
        %v5185 = vld [vmem:[%s18] sm:$0x1]
        %v5187 = vperm.slane %v5185, 0
        %v5189 = vmul.f32 %v5125, %v5187
        %v5190 = vmul.f32 %v5126, %v5187
        %v5191 = vmul.f32 %v5127, %v5187
        %v5192 = vmul.f32 %v5128, %v5187
        %v5193 = vmul.f32 %v5129, %v5187
        %v5194 = vmul.f32 %v5130, %v5187
        %v5195 = vmul.f32 %v5131, %v5187
        %v5196 = vmul.f32 %v5132, %v5187
        %v5197 = vmul.f32 %v5133, %v5187
        %v5198 = vmul.f32 %v5134, %v5187
        %v5199 = vmul.f32 %v5135, %v5187
        %v5200 = vmul.f32 %v5136, %v5187
        %v5201 = vmul.f32 %v5137, %v5187
        %v5202 = vmul.f32 %v5138, %v5187
        %v5203 = vmul.f32 %v5139, %v5187
        %v5204 = vmul.f32 %v5140, %v5187
        %v5205 = vadd.f32 %v5108, %v5189
        %v5206 = vadd.f32 %v5109, %v5190
        %v5207 = vadd.f32 %v5110, %v5191
        %v5208 = vadd.f32 %v5111, %v5192
        %v5209 = vadd.f32 %v5112, %v5193
        %v5210 = vadd.f32 %v5113, %v5194
        %v5211 = vadd.f32 %v5114, %v5195
        %v5212 = vadd.f32 %v5115, %v5196
        %v5213 = vadd.f32 %v5116, %v5197
        %v5214 = vadd.f32 %v5117, %v5198
        %v5215 = vadd.f32 %v5118, %v5199
        %v5216 = vadd.f32 %v5119, %v5200
        %v5217 = vadd.f32 %v5120, %v5201
        %v5218 = vadd.f32 %v5121, %v5202
        %v5219 = vadd.f32 %v5122, %v5203
        %v5220 = vadd.f32 %v5123, %v5204
        %v5221 = vpack.c.bf16 %v5206, %v5205
        %v5222 = vpack.c.bf16 %v5208, %v5207
        %v5223 = vpack.c.bf16 %v5210, %v5209
        %v5224 = vpack.c.bf16 %v5212, %v5211
        %v5225 = vpack.c.bf16 %v5214, %v5213
        %v5226 = vpack.c.bf16 %v5216, %v5215
        %v5227 = vpack.c.bf16 %v5218, %v5217
        %v5228 = vpack.c.bf16 %v5220, %v5219
        %v5229 = vld [vmem:[#allocation18] sm:$0xff]
        %v5230 = vld [vmem:[#allocation18 + $0x8] sm:$0xff]
        %v5231 = vld [vmem:[#allocation18 + $0x10] sm:$0xff]
        %v5232 = vld [vmem:[#allocation18 + $0x18] sm:$0xff]
        %v5233 = vld [vmem:[#allocation18 + $0x20] sm:$0xff]
        %v5234 = vld [vmem:[#allocation18 + $0x28] sm:$0xff]
        %v5235 = vld [vmem:[#allocation18 + $0x30] sm:$0xff]
        %v5236 = vld [vmem:[#allocation18 + $0x38] sm:$0xff]
        %v5237 = vld [vmem:[#allocation18 + $0x40] sm:$0xff]
        %v5238 = vld [vmem:[#allocation18 + $0x48] sm:$0xff]
        %v5239 = vld [vmem:[#allocation18 + $0x50] sm:$0xff]
        %v5240 = vld [vmem:[#allocation18 + $0x58] sm:$0xff]
        %v5241 = vld [vmem:[#allocation18 + $0x60] sm:$0xff]
        %v5242 = vld [vmem:[#allocation18 + $0x68] sm:$0xff]
        %v5243 = vld [vmem:[#allocation18 + $0x70] sm:$0xff]
        %v5244 = vld [vmem:[#allocation18 + $0x78] sm:$0xff]
        %v5261 = vunpack.c.l.b16 %v5229
        %v5262 = vunpack.c.h.b16 %v5229
        %v5263 = vunpack.c.l.b16 %v5230
        %v5264 = vunpack.c.h.b16 %v5230
        %v5265 = vunpack.c.l.b16 %v5231
        %v5266 = vunpack.c.h.b16 %v5231
        %v5267 = vunpack.c.l.b16 %v5232
        %v5268 = vunpack.c.h.b16 %v5232
        %v5269 = vunpack.c.l.b16 %v5233
        %v5270 = vunpack.c.h.b16 %v5233
        %v5271 = vunpack.c.l.b16 %v5234
        %v5272 = vunpack.c.h.b16 %v5234
        %v5273 = vunpack.c.l.b16 %v5235
        %v5274 = vunpack.c.h.b16 %v5235
        %v5275 = vunpack.c.l.b16 %v5236
        %v5276 = vunpack.c.h.b16 %v5236
        %v5277 = vunpack.c.l.b16 %v5237
        %v5278 = vunpack.c.h.b16 %v5237
        %v5279 = vunpack.c.l.b16 %v5238
        %v5280 = vunpack.c.h.b16 %v5238
        %v5281 = vunpack.c.l.b16 %v5239
        %v5282 = vunpack.c.h.b16 %v5239
        %v5283 = vunpack.c.l.b16 %v5240
        %v5284 = vunpack.c.h.b16 %v5240
        %v5285 = vunpack.c.l.b16 %v5241
        %v5286 = vunpack.c.h.b16 %v5241
        %v5287 = vunpack.c.l.b16 %v5242
        %v5288 = vunpack.c.h.b16 %v5242
        %v5289 = vunpack.c.l.b16 %v5243
        %v5290 = vunpack.c.h.b16 %v5243
        %v5291 = vunpack.c.l.b16 %v5244
        %v5292 = vunpack.c.h.b16 %v5244
        %v5293 = vpack.c.b16 %v5263, %v5261
        %v5294 = vpack.c.b16 %v5264, %v5262
        %v5295 = vpack.c.b16 %v5267, %v5265
        %v5296 = vpack.c.b16 %v5268, %v5266
        %v5297 = vpack.c.b16 %v5271, %v5269
        %v5298 = vpack.c.b16 %v5272, %v5270
        %v5299 = vpack.c.b16 %v5275, %v5273
        %v5300 = vpack.c.b16 %v5276, %v5274
        %v5301 = vpack.c.b16 %v5279, %v5277
        %v5302 = vpack.c.b16 %v5280, %v5278
        %v5303 = vpack.c.b16 %v5283, %v5281
        %v5304 = vpack.c.b16 %v5284, %v5282
        %v5305 = vpack.c.b16 %v5287, %v5285
        %v5306 = vpack.c.b16 %v5288, %v5286
        %v5307 = vpack.c.b16 %v5291, %v5289
        %v5308 = vpack.c.b16 %v5292, %v5290
        %5325 = vmatpush.bf16.msra.mxu0 %v5307
        %5326 = vmatpush.bf16.msra.mxu0 %v5305
        %5327 = vmatpush.bf16.msra.mxu0 %v5303
        %5328 = vmatpush.bf16.msra.mxu0 %v5301
        %5329 = vmatpush.bf16.msra.mxu0 %v5299
        %5330 = vmatpush.bf16.msra.mxu0 %v5297
        %5331 = vmatpush.bf16.msra.mxu0 %v5295
        %5332 = vmatpush.bf16.msra.mxu0 %v5293
        %5333 = vmatmul.bf16.gmra.mxu0 %v5177
        %v5334 = vpop.f32.mrf.mxu0
        %v5335 = vadd.f32 0.0, %v5334
        %v5336 = vpop.f32.mrf.mxu0
        %v5337 = vadd.f32 0.0, %v5336
        %5338 = vmatmul.bf16.gmra.mxu0 %v5178
        %v5339 = vpop.f32.mrf.mxu0
        %v5340 = vadd.f32 0.0, %v5339
        %v5341 = vpop.f32.mrf.mxu0
        %v5342 = vadd.f32 0.0, %v5341
        %5343 = vmatmul.bf16.gmra.mxu0 %v5179
        %v5344 = vpop.f32.mrf.mxu0
        %v5345 = vadd.f32 0.0, %v5344
        %v5346 = vpop.f32.mrf.mxu0
        %v5347 = vadd.f32 0.0, %v5346
        %5348 = vmatmul.bf16.gmra.mxu0 %v5180
        %v5349 = vpop.f32.mrf.mxu0
        %v5350 = vadd.f32 0.0, %v5349
        %v5351 = vpop.f32.mrf.mxu0
        %v5352 = vadd.f32 0.0, %v5351
        %5353 = vmatmul.bf16.gmra.mxu0 %v5181
        %v5354 = vpop.f32.mrf.mxu0
        %v5355 = vadd.f32 0.0, %v5354
        %v5356 = vpop.f32.mrf.mxu0
        %v5357 = vadd.f32 0.0, %v5356
        %5358 = vmatmul.bf16.gmra.mxu0 %v5182
        %v5359 = vpop.f32.mrf.mxu0
        %v5360 = vadd.f32 0.0, %v5359
        %v5361 = vpop.f32.mrf.mxu0
        %v5362 = vadd.f32 0.0, %v5361
        %5363 = vmatmul.bf16.gmra.mxu0 %v5183
        %v5364 = vpop.f32.mrf.mxu0
        %v5365 = vadd.f32 0.0, %v5364
        %v5366 = vpop.f32.mrf.mxu0
        %v5367 = vadd.f32 0.0, %v5366
        %5368 = vmatmul.bf16.gmra.mxu0 %v5184
        %v5369 = vpop.f32.mrf.mxu0
        %v5370 = vadd.f32 0.0, %v5369
        %v5371 = vpop.f32.mrf.mxu0
        %v5372 = vadd.f32 0.0, %v5371
        %5373 = vdwg.mxu0
        %5374 = vmatpush.bf16.msra.mxu0 %v5308
        %5375 = vmatpush.bf16.msra.mxu0 %v5306
        %5376 = vmatpush.bf16.msra.mxu0 %v5304
        %5377 = vmatpush.bf16.msra.mxu0 %v5302
        %5378 = vmatpush.bf16.msra.mxu0 %v5300
        %5379 = vmatpush.bf16.msra.mxu0 %v5298
        %5380 = vmatpush.bf16.msra.mxu0 %v5296
        %5381 = vmatpush.bf16.msra.mxu0 %v5294
        %5382 = vmatmul.bf16.gmra.mxu0 %v5177
        %v5383 = vpop.f32.mrf.mxu0
        %v5384 = vadd.f32 0.0, %v5383
        %v5385 = vpop.f32.mrf.mxu0
        %v5386 = vadd.f32 0.0, %v5385
        %5387 = vmatmul.bf16.gmra.mxu0 %v5178
        %v5388 = vpop.f32.mrf.mxu0
        %v5389 = vadd.f32 0.0, %v5388
        %v5390 = vpop.f32.mrf.mxu0
        %v5391 = vadd.f32 0.0, %v5390
        %5392 = vmatmul.bf16.gmra.mxu0 %v5179
        %v5393 = vpop.f32.mrf.mxu0
        %v5394 = vadd.f32 0.0, %v5393
        %v5395 = vpop.f32.mrf.mxu0
        %v5396 = vadd.f32 0.0, %v5395
        %5397 = vmatmul.bf16.gmra.mxu0 %v5180
        %v5398 = vpop.f32.mrf.mxu0
        %v5399 = vadd.f32 0.0, %v5398
        %v5400 = vpop.f32.mrf.mxu0
        %v5401 = vadd.f32 0.0, %v5400
        %5402 = vmatmul.bf16.gmra.mxu0 %v5181
        %v5403 = vpop.f32.mrf.mxu0
        %v5404 = vadd.f32 0.0, %v5403
        %v5405 = vpop.f32.mrf.mxu0
        %v5406 = vadd.f32 0.0, %v5405
        %5407 = vmatmul.bf16.gmra.mxu0 %v5182
        %v5408 = vpop.f32.mrf.mxu0
        %v5409 = vadd.f32 0.0, %v5408
        %v5410 = vpop.f32.mrf.mxu0
        %v5411 = vadd.f32 0.0, %v5410
        %5412 = vmatmul.bf16.gmra.mxu0 %v5183
        %v5413 = vpop.f32.mrf.mxu0
        %v5414 = vadd.f32 0.0, %v5413
        %v5415 = vpop.f32.mrf.mxu0
        %v5416 = vadd.f32 0.0, %v5415
        %5417 = vmatmul.bf16.gmra.mxu0 %v5184
        %v5418 = vpop.f32.mrf.mxu0
        %v5419 = vadd.f32 0.0, %v5418
        %v5420 = vpop.f32.mrf.mxu0
        %v5421 = vadd.f32 0.0, %v5420
        %5422 = vdwg.mxu0
        %v5423 = vmax.f32 %v5335, 0.0
        %v5424 = vmax.f32 %v5384, 0.0
        %v5425 = vmax.f32 %v5337, 0.0
        %v5426 = vmax.f32 %v5386, 0.0
        %v5427 = vmax.f32 %v5340, 0.0
        %v5428 = vmax.f32 %v5389, 0.0
        %v5429 = vmax.f32 %v5342, 0.0
        %v5430 = vmax.f32 %v5391, 0.0
        %v5431 = vmax.f32 %v5345, 0.0
        %v5432 = vmax.f32 %v5394, 0.0
        %v5433 = vmax.f32 %v5347, 0.0
        %v5434 = vmax.f32 %v5396, 0.0
        %v5435 = vmax.f32 %v5350, 0.0
        %v5436 = vmax.f32 %v5399, 0.0
        %v5437 = vmax.f32 %v5352, 0.0
        %v5438 = vmax.f32 %v5401, 0.0
        %v5439 = vmax.f32 %v5355, 0.0
        %v5440 = vmax.f32 %v5404, 0.0
        %v5441 = vmax.f32 %v5357, 0.0
        %v5442 = vmax.f32 %v5406, 0.0
        %v5443 = vmax.f32 %v5360, 0.0
        %v5444 = vmax.f32 %v5409, 0.0
        %v5445 = vmax.f32 %v5362, 0.0
        %v5446 = vmax.f32 %v5411, 0.0
        %v5447 = vmax.f32 %v5365, 0.0
        %v5448 = vmax.f32 %v5414, 0.0
        %v5449 = vmax.f32 %v5367, 0.0
        %v5450 = vmax.f32 %v5416, 0.0
        %v5451 = vmax.f32 %v5370, 0.0
        %v5452 = vmax.f32 %v5419, 0.0
        %v5453 = vmax.f32 %v5372, 0.0
        %v5454 = vmax.f32 %v5421, 0.0
        %v5455 = vmul.f32 %v5423, %v5423
        %v5456 = vmul.f32 %v5424, %v5424
        %v5457 = vmul.f32 %v5425, %v5425
        %v5458 = vmul.f32 %v5426, %v5426
        %v5459 = vmul.f32 %v5427, %v5427
        %v5460 = vmul.f32 %v5428, %v5428
        %v5461 = vmul.f32 %v5429, %v5429
        %v5462 = vmul.f32 %v5430, %v5430
        %v5463 = vmul.f32 %v5431, %v5431
        %v5464 = vmul.f32 %v5432, %v5432
        %v5465 = vmul.f32 %v5433, %v5433
        %v5466 = vmul.f32 %v5434, %v5434
        %v5467 = vmul.f32 %v5435, %v5435
        %v5468 = vmul.f32 %v5436, %v5436
        %v5469 = vmul.f32 %v5437, %v5437
        %v5470 = vmul.f32 %v5438, %v5438
        %v5471 = vmul.f32 %v5439, %v5439
        %v5472 = vmul.f32 %v5440, %v5440
        %v5473 = vmul.f32 %v5441, %v5441
        %v5474 = vmul.f32 %v5442, %v5442
        %v5475 = vmul.f32 %v5443, %v5443
        %v5476 = vmul.f32 %v5444, %v5444
        %v5477 = vmul.f32 %v5445, %v5445
        %v5478 = vmul.f32 %v5446, %v5446
        %v5479 = vmul.f32 %v5447, %v5447
        %v5480 = vmul.f32 %v5448, %v5448
        %v5481 = vmul.f32 %v5449, %v5449
        %v5482 = vmul.f32 %v5450, %v5450
        %v5483 = vmul.f32 %v5451, %v5451
        %v5484 = vmul.f32 %v5452, %v5452
        %v5485 = vmul.f32 %v5453, %v5453
        %v5486 = vmul.f32 %v5454, %v5454
        %v5487 = vpack.c.bf16 %v5457, %v5455
        %v5488 = vpack.c.bf16 %v5458, %v5456
        %v5489 = vpack.c.bf16 %v5461, %v5459
        %v5490 = vpack.c.bf16 %v5462, %v5460
        %v5491 = vpack.c.bf16 %v5465, %v5463
        %v5492 = vpack.c.bf16 %v5466, %v5464
        %v5493 = vpack.c.bf16 %v5469, %v5467
        %v5494 = vpack.c.bf16 %v5470, %v5468
        %v5495 = vpack.c.bf16 %v5473, %v5471
        %v5496 = vpack.c.bf16 %v5474, %v5472
        %v5497 = vpack.c.bf16 %v5477, %v5475
        %v5498 = vpack.c.bf16 %v5478, %v5476
        %v5499 = vpack.c.bf16 %v5481, %v5479
        %v5500 = vpack.c.bf16 %v5482, %v5480
        %v5501 = vpack.c.bf16 %v5485, %v5483
        %v5502 = vpack.c.bf16 %v5486, %v5484
        %v5503 = vld [vmem:[#allocation21] sm:$0xf]
        %v5504 = vld [vmem:[#allocation21 + $0x4] sm:$0xf]
        %v5505 = vld [vmem:[#allocation21 + $0x8] sm:$0xf]
        %v5506 = vld [vmem:[#allocation21 + $0xc] sm:$0xf]
        %v5507 = vld [vmem:[#allocation21 + $0x10] sm:$0xf]
        %v5508 = vld [vmem:[#allocation21 + $0x14] sm:$0xf]
        %v5509 = vld [vmem:[#allocation21 + $0x18] sm:$0xf]
        %v5510 = vld [vmem:[#allocation21 + $0x1c] sm:$0xf]
        %v5511 = vld [vmem:[#allocation21 + $0x20] sm:$0xf]
        %v5512 = vld [vmem:[#allocation21 + $0x24] sm:$0xf]
        %v5513 = vld [vmem:[#allocation21 + $0x28] sm:$0xf]
        %v5514 = vld [vmem:[#allocation21 + $0x2c] sm:$0xf]
        %v5515 = vld [vmem:[#allocation21 + $0x30] sm:$0xf]
        %v5516 = vld [vmem:[#allocation21 + $0x34] sm:$0xf]
        %v5517 = vld [vmem:[#allocation21 + $0x38] sm:$0xf]
        %v5518 = vld [vmem:[#allocation21 + $0x3c] sm:$0xf]
        %v5519 = vld [vmem:[#allocation21 + $0x40] sm:$0xf]
        %v5520 = vld [vmem:[#allocation21 + $0x44] sm:$0xf]
        %v5521 = vld [vmem:[#allocation21 + $0x48] sm:$0xf]
        %v5522 = vld [vmem:[#allocation21 + $0x4c] sm:$0xf]
        %v5523 = vld [vmem:[#allocation21 + $0x50] sm:$0xf]
        %v5524 = vld [vmem:[#allocation21 + $0x54] sm:$0xf]
        %v5525 = vld [vmem:[#allocation21 + $0x58] sm:$0xf]
        %v5526 = vld [vmem:[#allocation21 + $0x5c] sm:$0xf]
        %v5527 = vld [vmem:[#allocation21 + $0x60] sm:$0xf]
        %v5528 = vld [vmem:[#allocation21 + $0x64] sm:$0xf]
        %v5529 = vld [vmem:[#allocation21 + $0x68] sm:$0xf]
        %v5530 = vld [vmem:[#allocation21 + $0x6c] sm:$0xf]
        %v5531 = vld [vmem:[#allocation21 + $0x70] sm:$0xf]
        %v5532 = vld [vmem:[#allocation21 + $0x74] sm:$0xf]
        %v5533 = vld [vmem:[#allocation21 + $0x78] sm:$0xf]
        %v5534 = vld [vmem:[#allocation21 + $0x7c] sm:$0xf]
        %v5567 = vunpack.c.l.b16 %v5503
        %v5568 = vunpack.c.l.b16 %v5504
        %v5569 = vunpack.c.l.b16 %v5505
        %v5570 = vunpack.c.l.b16 %v5506
        %v5571 = vunpack.c.l.b16 %v5507
        %v5572 = vunpack.c.l.b16 %v5508
        %v5573 = vunpack.c.l.b16 %v5509
        %v5574 = vunpack.c.l.b16 %v5510
        %v5575 = vunpack.c.l.b16 %v5511
        %v5576 = vunpack.c.l.b16 %v5512
        %v5577 = vunpack.c.l.b16 %v5513
        %v5578 = vunpack.c.l.b16 %v5514
        %v5579 = vunpack.c.l.b16 %v5515
        %v5580 = vunpack.c.l.b16 %v5516
        %v5581 = vunpack.c.l.b16 %v5517
        %v5582 = vunpack.c.l.b16 %v5518
        %v5583 = vunpack.c.l.b16 %v5519
        %v5584 = vunpack.c.l.b16 %v5520
        %v5585 = vunpack.c.l.b16 %v5521
        %v5586 = vunpack.c.l.b16 %v5522
        %v5587 = vunpack.c.l.b16 %v5523
        %v5588 = vunpack.c.l.b16 %v5524
        %v5589 = vunpack.c.l.b16 %v5525
        %v5590 = vunpack.c.l.b16 %v5526
        %v5591 = vunpack.c.l.b16 %v5527
        %v5592 = vunpack.c.l.b16 %v5528
        %v5593 = vunpack.c.l.b16 %v5529
        %v5594 = vunpack.c.l.b16 %v5530
        %v5595 = vunpack.c.l.b16 %v5531
        %v5596 = vunpack.c.l.b16 %v5532
        %v5597 = vunpack.c.l.b16 %v5533
        %v5598 = vunpack.c.l.b16 %v5534
        %v5599 = vpack.c.b16 %v5568, %v5567
        %v5600 = vpack.c.b16 %v5570, %v5569
        %v5601 = vpack.c.b16 %v5572, %v5571
        %v5602 = vpack.c.b16 %v5574, %v5573
        %v5603 = vpack.c.b16 %v5576, %v5575
        %v5604 = vpack.c.b16 %v5578, %v5577
        %v5605 = vpack.c.b16 %v5580, %v5579
        %v5606 = vpack.c.b16 %v5582, %v5581
        %v5607 = vpack.c.b16 %v5584, %v5583
        %v5608 = vpack.c.b16 %v5586, %v5585
        %v5609 = vpack.c.b16 %v5588, %v5587
        %v5610 = vpack.c.b16 %v5590, %v5589
        %v5611 = vpack.c.b16 %v5592, %v5591
        %v5612 = vpack.c.b16 %v5594, %v5593
        %v5613 = vpack.c.b16 %v5596, %v5595
        %v5614 = vpack.c.b16 %v5598, %v5597
        %5631 = vmatpush.bf16.msra.mxu0 %v5606
        %5632 = vmatpush.bf16.msra.mxu0 %v5605
        %5633 = vmatpush.bf16.msra.mxu0 %v5604
        %5634 = vmatpush.bf16.msra.mxu0 %v5603
        %5635 = vmatpush.bf16.msra.mxu0 %v5602
        %5636 = vmatpush.bf16.msra.mxu0 %v5601
        %5637 = vmatpush.bf16.msra.mxu0 %v5600
        %5638 = vmatpush.bf16.msra.mxu0 %v5599
        %5639 = vmatmul.bf16.gmra.mxu0 %v5487
        %v5640 = vpop.f32.mrf.mxu0
        %v5641 = vadd.f32 0.0, %v5640
        %v5642 = vpop.f32.mrf.mxu0
        %v5643 = vadd.f32 0.0, %v5642
        %5644 = vmatmul.bf16.gmra.mxu0 %v5489
        %v5645 = vpop.f32.mrf.mxu0
        %v5646 = vadd.f32 0.0, %v5645
        %v5647 = vpop.f32.mrf.mxu0
        %v5648 = vadd.f32 0.0, %v5647
        %5649 = vmatmul.bf16.gmra.mxu0 %v5491
        %v5650 = vpop.f32.mrf.mxu0
        %v5651 = vadd.f32 0.0, %v5650
        %v5652 = vpop.f32.mrf.mxu0
        %v5653 = vadd.f32 0.0, %v5652
        %5654 = vmatmul.bf16.gmra.mxu0 %v5493
        %v5655 = vpop.f32.mrf.mxu0
        %v5656 = vadd.f32 0.0, %v5655
        %v5657 = vpop.f32.mrf.mxu0
        %v5658 = vadd.f32 0.0, %v5657
        %5659 = vmatmul.bf16.gmra.mxu0 %v5495
        %v5660 = vpop.f32.mrf.mxu0
        %v5661 = vadd.f32 0.0, %v5660
        %v5662 = vpop.f32.mrf.mxu0
        %v5663 = vadd.f32 0.0, %v5662
        %5664 = vmatmul.bf16.gmra.mxu0 %v5497
        %v5665 = vpop.f32.mrf.mxu0
        %v5666 = vadd.f32 0.0, %v5665
        %v5667 = vpop.f32.mrf.mxu0
        %v5668 = vadd.f32 0.0, %v5667
        %5669 = vmatmul.bf16.gmra.mxu0 %v5499
        %v5670 = vpop.f32.mrf.mxu0
        %v5671 = vadd.f32 0.0, %v5670
        %v5672 = vpop.f32.mrf.mxu0
        %v5673 = vadd.f32 0.0, %v5672
        %5674 = vmatmul.bf16.gmra.mxu0 %v5501
        %v5675 = vpop.f32.mrf.mxu0
        %v5676 = vadd.f32 0.0, %v5675
        %v5677 = vpop.f32.mrf.mxu0
        %v5678 = vadd.f32 0.0, %v5677
        %5679 = vdwg.mxu0
        %5680 = vmatpush.bf16.msra.mxu0 %v5614
        %5681 = vmatpush.bf16.msra.mxu0 %v5613
        %5682 = vmatpush.bf16.msra.mxu0 %v5612
        %5683 = vmatpush.bf16.msra.mxu0 %v5611
        %5684 = vmatpush.bf16.msra.mxu0 %v5610
        %5685 = vmatpush.bf16.msra.mxu0 %v5609
        %5686 = vmatpush.bf16.msra.mxu0 %v5608
        %5687 = vmatpush.bf16.msra.mxu0 %v5607
        %5688 = vmatmul.bf16.gmra.mxu0 %v5488
        %v5689 = vpop.f32.mrf.mxu0
        %v5690 = vadd.f32 %v5641, %v5689
        %v5691 = vpop.f32.mrf.mxu0
        %v5692 = vadd.f32 %v5643, %v5691
        %5693 = vmatmul.bf16.gmra.mxu0 %v5490
        %v5694 = vpop.f32.mrf.mxu0
        %v5695 = vadd.f32 %v5646, %v5694
        %v5696 = vpop.f32.mrf.mxu0
        %v5697 = vadd.f32 %v5648, %v5696
        %5698 = vmatmul.bf16.gmra.mxu0 %v5492
        %v5699 = vpop.f32.mrf.mxu0
        %v5700 = vadd.f32 %v5651, %v5699
        %v5701 = vpop.f32.mrf.mxu0
        %v5702 = vadd.f32 %v5653, %v5701
        %5703 = vmatmul.bf16.gmra.mxu0 %v5494
        %v5704 = vpop.f32.mrf.mxu0
        %v5705 = vadd.f32 %v5656, %v5704
        %v5706 = vpop.f32.mrf.mxu0
        %v5707 = vadd.f32 %v5658, %v5706
        %5708 = vmatmul.bf16.gmra.mxu0 %v5496
        %v5709 = vpop.f32.mrf.mxu0
        %v5710 = vadd.f32 %v5661, %v5709
        %v5711 = vpop.f32.mrf.mxu0
        %v5712 = vadd.f32 %v5663, %v5711
        %5713 = vmatmul.bf16.gmra.mxu0 %v5498
        %v5714 = vpop.f32.mrf.mxu0
        %v5715 = vadd.f32 %v5666, %v5714
        %v5716 = vpop.f32.mrf.mxu0
        %v5717 = vadd.f32 %v5668, %v5716
        %5718 = vmatmul.bf16.gmra.mxu0 %v5500
        %v5719 = vpop.f32.mrf.mxu0
        %v5720 = vadd.f32 %v5671, %v5719
        %v5721 = vpop.f32.mrf.mxu0
        %v5722 = vadd.f32 %v5673, %v5721
        %5723 = vmatmul.bf16.gmra.mxu0 %v5502
        %v5724 = vpop.f32.mrf.mxu0
        %v5725 = vadd.f32 %v5676, %v5724
        %v5726 = vpop.f32.mrf.mxu0
        %v5727 = vadd.f32 %v5678, %v5726
        %5728 = vdwg.mxu0
        %v5729 = vld [vmem:[#allocation19] sm:$0xf]
        %v5730 = vld [vmem:[#allocation19 + $0x4] sm:$0xf]
        %v5731 = vld [vmem:[#allocation19 + $0x8] sm:$0xf]
        %v5732 = vld [vmem:[#allocation19 + $0xc] sm:$0xf]
        %v5733 = vld [vmem:[#allocation19 + $0x10] sm:$0xf]
        %v5734 = vld [vmem:[#allocation19 + $0x14] sm:$0xf]
        %v5735 = vld [vmem:[#allocation19 + $0x18] sm:$0xf]
        %v5736 = vld [vmem:[#allocation19 + $0x1c] sm:$0xf]
        %v5737 = vld [vmem:[#allocation19 + $0x20] sm:$0xf]
        %v5738 = vld [vmem:[#allocation19 + $0x24] sm:$0xf]
        %v5739 = vld [vmem:[#allocation19 + $0x28] sm:$0xf]
        %v5740 = vld [vmem:[#allocation19 + $0x2c] sm:$0xf]
        %v5741 = vld [vmem:[#allocation19 + $0x30] sm:$0xf]
        %v5742 = vld [vmem:[#allocation19 + $0x34] sm:$0xf]
        %v5743 = vld [vmem:[#allocation19 + $0x38] sm:$0xf]
        %v5744 = vld [vmem:[#allocation19 + $0x3c] sm:$0xf]
        %v5761 = vunpack.c.l.b16 %v5729
        %v5762 = vunpack.c.l.b16 %v5730
        %v5763 = vunpack.c.l.b16 %v5731
        %v5764 = vunpack.c.l.b16 %v5732
        %v5765 = vunpack.c.l.b16 %v5733
        %v5766 = vunpack.c.l.b16 %v5734
        %v5767 = vunpack.c.l.b16 %v5735
        %v5768 = vunpack.c.l.b16 %v5736
        %v5769 = vunpack.c.l.b16 %v5737
        %v5770 = vunpack.c.l.b16 %v5738
        %v5771 = vunpack.c.l.b16 %v5739
        %v5772 = vunpack.c.l.b16 %v5740
        %v5773 = vunpack.c.l.b16 %v5741
        %v5774 = vunpack.c.l.b16 %v5742
        %v5775 = vunpack.c.l.b16 %v5743
        %v5776 = vunpack.c.l.b16 %v5744
        %v5777 = vpack.c.b16 %v5762, %v5761
        %v5778 = vpack.c.b16 %v5764, %v5763
        %v5779 = vpack.c.b16 %v5766, %v5765
        %v5780 = vpack.c.b16 %v5768, %v5767
        %v5781 = vpack.c.b16 %v5770, %v5769
        %v5782 = vpack.c.b16 %v5772, %v5771
        %v5783 = vpack.c.b16 %v5774, %v5773
        %v5784 = vpack.c.b16 %v5776, %v5775
        %5793 = vmatpush.bf16.msra.mxu0 %v5784
        %5794 = vmatpush.bf16.msra.mxu0 %v5783
        %5795 = vmatpush.bf16.msra.mxu0 %v5782
        %5796 = vmatpush.bf16.msra.mxu0 %v5781
        %5797 = vmatpush.bf16.msra.mxu0 %v5780
        %5798 = vmatpush.bf16.msra.mxu0 %v5779
        %5799 = vmatpush.bf16.msra.mxu0 %v5778
        %5800 = vmatpush.bf16.msra.mxu0 %v5777
        %5801 = vmatmul.bf16.gmra.mxu0 %v5221
        %v5802 = vpop.f32.mrf.mxu0
        %v5803 = vadd.f32 0.0, %v5802
        %v5804 = vpop.f32.mrf.mxu0
        %v5805 = vadd.f32 0.0, %v5804
        %5806 = vmatmul.bf16.gmra.mxu0 %v5222
        %v5807 = vpop.f32.mrf.mxu0
        %v5808 = vadd.f32 0.0, %v5807
        %v5809 = vpop.f32.mrf.mxu0
        %v5810 = vadd.f32 0.0, %v5809
        %5811 = vmatmul.bf16.gmra.mxu0 %v5223
        %v5812 = vpop.f32.mrf.mxu0
        %v5813 = vadd.f32 0.0, %v5812
        %v5814 = vpop.f32.mrf.mxu0
        %v5815 = vadd.f32 0.0, %v5814
        %5816 = vmatmul.bf16.gmra.mxu0 %v5224
        %v5817 = vpop.f32.mrf.mxu0
        %v5818 = vadd.f32 0.0, %v5817
        %v5819 = vpop.f32.mrf.mxu0
        %v5820 = vadd.f32 0.0, %v5819
        %5821 = vmatmul.bf16.gmra.mxu0 %v5225
        %v5822 = vpop.f32.mrf.mxu0
        %v5823 = vadd.f32 0.0, %v5822
        %v5824 = vpop.f32.mrf.mxu0
        %v5825 = vadd.f32 0.0, %v5824
        %5826 = vmatmul.bf16.gmra.mxu0 %v5226
        %v5827 = vpop.f32.mrf.mxu0
        %v5828 = vadd.f32 0.0, %v5827
        %v5829 = vpop.f32.mrf.mxu0
        %v5830 = vadd.f32 0.0, %v5829
        %5831 = vmatmul.bf16.gmra.mxu0 %v5227
        %v5832 = vpop.f32.mrf.mxu0
        %v5833 = vadd.f32 0.0, %v5832
        %v5834 = vpop.f32.mrf.mxu0
        %v5835 = vadd.f32 0.0, %v5834
        %5836 = vmatmul.bf16.gmra.mxu0 %v5228
        %v5837 = vpop.f32.mrf.mxu0
        %v5838 = vadd.f32 0.0, %v5837
        %v5839 = vpop.f32.mrf.mxu0
        %v5840 = vadd.f32 0.0, %v5839
        %5841 = vdwg.mxu0
        %v5842 = vxor.u32 %v5803, 2147483648
        %v5843 = vxor.u32 %v5805, 2147483648
        %v5844 = vxor.u32 %v5808, 2147483648
        %v5845 = vxor.u32 %v5810, 2147483648
        %v5846 = vxor.u32 %v5813, 2147483648
        %v5847 = vxor.u32 %v5815, 2147483648
        %v5848 = vxor.u32 %v5818, 2147483648
        %v5849 = vxor.u32 %v5820, 2147483648
        %v5850 = vxor.u32 %v5823, 2147483648
        %v5851 = vxor.u32 %v5825, 2147483648
        %v5852 = vxor.u32 %v5828, 2147483648
        %v5853 = vxor.u32 %v5830, 2147483648
        %v5854 = vxor.u32 %v5833, 2147483648
        %v5855 = vxor.u32 %v5835, 2147483648
        %v5856 = vxor.u32 %v5838, 2147483648
        %v5857 = vxor.u32 %v5840, 2147483648
        %v5858 = vmul.f32 %v5842, 1.442695
        %v5859 = vpow.pop %v5858
        %v5860 = vmul.f32 %v5843, 1.442695
        %v5861 = vpow.pop %v5860
        %v5862 = vmul.f32 %v5844, 1.442695
        %v5863 = vpow.pop %v5862
        %v5864 = vmul.f32 %v5845, 1.442695
        %v5865 = vpow.pop %v5864
        %v5866 = vmul.f32 %v5846, 1.442695
        %v5867 = vpow.pop %v5866
        %v5868 = vmul.f32 %v5847, 1.442695
        %v5869 = vpow.pop %v5868
        %v5870 = vmul.f32 %v5848, 1.442695
        %v5871 = vpow.pop %v5870
        %v5872 = vmul.f32 %v5849, 1.442695
        %v5873 = vpow.pop %v5872
        %v5874 = vmul.f32 %v5850, 1.442695
        %v5875 = vpow.pop %v5874
        %v5876 = vmul.f32 %v5851, 1.442695
        %v5877 = vpow.pop %v5876
        %v5878 = vmul.f32 %v5852, 1.442695
        %v5879 = vpow.pop %v5878
        %v5880 = vmul.f32 %v5853, 1.442695
        %v5881 = vpow.pop %v5880
        %v5882 = vmul.f32 %v5854, 1.442695
        %v5883 = vpow.pop %v5882
        %v5884 = vmul.f32 %v5855, 1.442695
        %v5885 = vpow.pop %v5884
        %v5886 = vmul.f32 %v5856, 1.442695
        %v5887 = vpow.pop %v5886
        %v5888 = vmul.f32 %v5857, 1.442695
        %v5889 = vpow.pop %v5888
        %v5890 = vadd.f32 %v5859, 1.0
        %v5891 = vadd.f32 %v5861, 1.0
        %v5892 = vadd.f32 %v5863, 1.0
        %v5893 = vadd.f32 %v5865, 1.0
        %v5894 = vadd.f32 %v5867, 1.0
        %v5895 = vadd.f32 %v5869, 1.0
        %v5896 = vadd.f32 %v5871, 1.0
        %v5897 = vadd.f32 %v5873, 1.0
        %v5898 = vadd.f32 %v5875, 1.0
        %v5899 = vadd.f32 %v5877, 1.0
        %v5900 = vadd.f32 %v5879, 1.0
        %v5901 = vadd.f32 %v5881, 1.0
        %v5902 = vadd.f32 %v5883, 1.0
        %v5903 = vadd.f32 %v5885, 1.0
        %v5904 = vadd.f32 %v5887, 1.0
        %v5905 = vadd.f32 %v5889, 1.0
        %v5906 = vrcp.pop %v5890
        %v5907 = vmul.f32 %v5890, %v5906
        %v5908 = vsub.f32 1.0, %v5907
        %v5909 = vmul.f32 %v5906, %v5908
        %v5910 = vadd.f32 %v5906, %v5909
        %vm5911 = vweird.f32 %v5890
        %vm5912 = vweird.f32 %v5906
        %vm5913 = vmor %vm5911, %vm5912
        %v5914 = vsel %vm5913, %v5906, %v5910
        %v5915 = vand.u32 2147483647, %v5890
        %vm5916 = vcmp.eq.f32.partialorder %v5915, 8.507059e+37
        %v5917 = vand.u32 %v5890, 2147483648
        %v5918 = vor.u32 1.1754944e-38, %v5917
        %v5919 = vsel %vm5916, %v5918, %v5914
        %v5920 = vmul.f32 1.0, %v5919
        %v5921 = vrcp.pop %v5891
        %v5922 = vmul.f32 %v5891, %v5921
        %v5923 = vsub.f32 1.0, %v5922
        %v5924 = vmul.f32 %v5921, %v5923
        %v5925 = vadd.f32 %v5921, %v5924
        %vm5926 = vweird.f32 %v5891
        %vm5927 = vweird.f32 %v5921
        %vm5928 = vmor %vm5926, %vm5927
        %v5929 = vsel %vm5928, %v5921, %v5925
        %v5930 = vand.u32 2147483647, %v5891
        %vm5931 = vcmp.eq.f32.partialorder %v5930, 8.507059e+37
        %v5932 = vand.u32 %v5891, 2147483648
        %v5933 = vor.u32 1.1754944e-38, %v5932
        %v5934 = vsel %vm5931, %v5933, %v5929
        %v5935 = vmul.f32 1.0, %v5934
        %v5936 = vrcp.pop %v5892
        %v5937 = vmul.f32 %v5892, %v5936
        %v5938 = vsub.f32 1.0, %v5937
        %v5939 = vmul.f32 %v5936, %v5938
        %v5940 = vadd.f32 %v5936, %v5939
        %vm5941 = vweird.f32 %v5892
        %vm5942 = vweird.f32 %v5936
        %vm5943 = vmor %vm5941, %vm5942
        %v5944 = vsel %vm5943, %v5936, %v5940
        %v5945 = vand.u32 2147483647, %v5892
        %vm5946 = vcmp.eq.f32.partialorder %v5945, 8.507059e+37
        %v5947 = vand.u32 %v5892, 2147483648
        %v5948 = vor.u32 1.1754944e-38, %v5947
        %v5949 = vsel %vm5946, %v5948, %v5944
        %v5950 = vmul.f32 1.0, %v5949
        %v5951 = vrcp.pop %v5893
        %v5952 = vmul.f32 %v5893, %v5951
        %v5953 = vsub.f32 1.0, %v5952
        %v5954 = vmul.f32 %v5951, %v5953
        %v5955 = vadd.f32 %v5951, %v5954
        %vm5956 = vweird.f32 %v5893
        %vm5957 = vweird.f32 %v5951
        %vm5958 = vmor %vm5956, %vm5957
        %v5959 = vsel %vm5958, %v5951, %v5955
        %v5960 = vand.u32 2147483647, %v5893
        %vm5961 = vcmp.eq.f32.partialorder %v5960, 8.507059e+37
        %v5962 = vand.u32 %v5893, 2147483648
        %v5963 = vor.u32 1.1754944e-38, %v5962
        %v5964 = vsel %vm5961, %v5963, %v5959
        %v5965 = vmul.f32 1.0, %v5964
        %v5966 = vrcp.pop %v5894
        %v5967 = vmul.f32 %v5894, %v5966
        %v5968 = vsub.f32 1.0, %v5967
        %v5969 = vmul.f32 %v5966, %v5968
        %v5970 = vadd.f32 %v5966, %v5969
        %vm5971 = vweird.f32 %v5894
        %vm5972 = vweird.f32 %v5966
        %vm5973 = vmor %vm5971, %vm5972
        %v5974 = vsel %vm5973, %v5966, %v5970
        %v5975 = vand.u32 2147483647, %v5894
        %vm5976 = vcmp.eq.f32.partialorder %v5975, 8.507059e+37
        %v5977 = vand.u32 %v5894, 2147483648
        %v5978 = vor.u32 1.1754944e-38, %v5977
        %v5979 = vsel %vm5976, %v5978, %v5974
        %v5980 = vmul.f32 1.0, %v5979
        %v5981 = vrcp.pop %v5895
        %v5982 = vmul.f32 %v5895, %v5981
        %v5983 = vsub.f32 1.0, %v5982
        %v5984 = vmul.f32 %v5981, %v5983
        %v5985 = vadd.f32 %v5981, %v5984
        %vm5986 = vweird.f32 %v5895
        %vm5987 = vweird.f32 %v5981
        %vm5988 = vmor %vm5986, %vm5987
        %v5989 = vsel %vm5988, %v5981, %v5985
        %v5990 = vand.u32 2147483647, %v5895
        %vm5991 = vcmp.eq.f32.partialorder %v5990, 8.507059e+37
        %v5992 = vand.u32 %v5895, 2147483648
        %v5993 = vor.u32 1.1754944e-38, %v5992
        %v5994 = vsel %vm5991, %v5993, %v5989
        %v5995 = vmul.f32 1.0, %v5994
        %v5996 = vrcp.pop %v5896
        %v5997 = vmul.f32 %v5896, %v5996
        %v5998 = vsub.f32 1.0, %v5997
        %v5999 = vmul.f32 %v5996, %v5998
        %v6000 = vadd.f32 %v5996, %v5999
        %vm6001 = vweird.f32 %v5896
        %vm6002 = vweird.f32 %v5996
        %vm6003 = vmor %vm6001, %vm6002
        %v6004 = vsel %vm6003, %v5996, %v6000
        %v6005 = vand.u32 2147483647, %v5896
        %vm6006 = vcmp.eq.f32.partialorder %v6005, 8.507059e+37
        %v6007 = vand.u32 %v5896, 2147483648
        %v6008 = vor.u32 1.1754944e-38, %v6007
        %v6009 = vsel %vm6006, %v6008, %v6004
        %v6010 = vmul.f32 1.0, %v6009
        %v6011 = vrcp.pop %v5897
        %v6012 = vmul.f32 %v5897, %v6011
        %v6013 = vsub.f32 1.0, %v6012
        %v6014 = vmul.f32 %v6011, %v6013
        %v6015 = vadd.f32 %v6011, %v6014
        %vm6016 = vweird.f32 %v5897
        %vm6017 = vweird.f32 %v6011
        %vm6018 = vmor %vm6016, %vm6017
        %v6019 = vsel %vm6018, %v6011, %v6015
        %v6020 = vand.u32 2147483647, %v5897
        %vm6021 = vcmp.eq.f32.partialorder %v6020, 8.507059e+37
        %v6022 = vand.u32 %v5897, 2147483648
        %v6023 = vor.u32 1.1754944e-38, %v6022
        %v6024 = vsel %vm6021, %v6023, %v6019
        %v6025 = vmul.f32 1.0, %v6024
        %v6026 = vrcp.pop %v5898
        %v6027 = vmul.f32 %v5898, %v6026
        %v6028 = vsub.f32 1.0, %v6027
        %v6029 = vmul.f32 %v6026, %v6028
        %v6030 = vadd.f32 %v6026, %v6029
        %vm6031 = vweird.f32 %v5898
        %vm6032 = vweird.f32 %v6026
        %vm6033 = vmor %vm6031, %vm6032
        %v6034 = vsel %vm6033, %v6026, %v6030
        %v6035 = vand.u32 2147483647, %v5898
        %vm6036 = vcmp.eq.f32.partialorder %v6035, 8.507059e+37
        %v6037 = vand.u32 %v5898, 2147483648
        %v6038 = vor.u32 1.1754944e-38, %v6037
        %v6039 = vsel %vm6036, %v6038, %v6034
        %v6040 = vmul.f32 1.0, %v6039
        %v6041 = vrcp.pop %v5899
        %v6042 = vmul.f32 %v5899, %v6041
        %v6043 = vsub.f32 1.0, %v6042
        %v6044 = vmul.f32 %v6041, %v6043
        %v6045 = vadd.f32 %v6041, %v6044
        %vm6046 = vweird.f32 %v5899
        %vm6047 = vweird.f32 %v6041
        %vm6048 = vmor %vm6046, %vm6047
        %v6049 = vsel %vm6048, %v6041, %v6045
        %v6050 = vand.u32 2147483647, %v5899
        %vm6051 = vcmp.eq.f32.partialorder %v6050, 8.507059e+37
        %v6052 = vand.u32 %v5899, 2147483648
        %v6053 = vor.u32 1.1754944e-38, %v6052
        %v6054 = vsel %vm6051, %v6053, %v6049
        %v6055 = vmul.f32 1.0, %v6054
        %v6056 = vrcp.pop %v5900
        %v6057 = vmul.f32 %v5900, %v6056
        %v6058 = vsub.f32 1.0, %v6057
        %v6059 = vmul.f32 %v6056, %v6058
        %v6060 = vadd.f32 %v6056, %v6059
        %vm6061 = vweird.f32 %v5900
        %vm6062 = vweird.f32 %v6056
        %vm6063 = vmor %vm6061, %vm6062
        %v6064 = vsel %vm6063, %v6056, %v6060
        %v6065 = vand.u32 2147483647, %v5900
        %vm6066 = vcmp.eq.f32.partialorder %v6065, 8.507059e+37
        %v6067 = vand.u32 %v5900, 2147483648
        %v6068 = vor.u32 1.1754944e-38, %v6067
        %v6069 = vsel %vm6066, %v6068, %v6064
        %v6070 = vmul.f32 1.0, %v6069
        %v6071 = vrcp.pop %v5901
        %v6072 = vmul.f32 %v5901, %v6071
        %v6073 = vsub.f32 1.0, %v6072
        %v6074 = vmul.f32 %v6071, %v6073
        %v6075 = vadd.f32 %v6071, %v6074
        %vm6076 = vweird.f32 %v5901
        %vm6077 = vweird.f32 %v6071
        %vm6078 = vmor %vm6076, %vm6077
        %v6079 = vsel %vm6078, %v6071, %v6075
        %v6080 = vand.u32 2147483647, %v5901
        %vm6081 = vcmp.eq.f32.partialorder %v6080, 8.507059e+37
        %v6082 = vand.u32 %v5901, 2147483648
        %v6083 = vor.u32 1.1754944e-38, %v6082
        %v6084 = vsel %vm6081, %v6083, %v6079
        %v6085 = vmul.f32 1.0, %v6084
        %v6086 = vrcp.pop %v5902
        %v6087 = vmul.f32 %v5902, %v6086
        %v6088 = vsub.f32 1.0, %v6087
        %v6089 = vmul.f32 %v6086, %v6088
        %v6090 = vadd.f32 %v6086, %v6089
        %vm6091 = vweird.f32 %v5902
        %vm6092 = vweird.f32 %v6086
        %vm6093 = vmor %vm6091, %vm6092
        %v6094 = vsel %vm6093, %v6086, %v6090
        %v6095 = vand.u32 2147483647, %v5902
        %vm6096 = vcmp.eq.f32.partialorder %v6095, 8.507059e+37
        %v6097 = vand.u32 %v5902, 2147483648
        %v6098 = vor.u32 1.1754944e-38, %v6097
        %v6099 = vsel %vm6096, %v6098, %v6094
        %v6100 = vmul.f32 1.0, %v6099
        %v6101 = vrcp.pop %v5903
        %v6102 = vmul.f32 %v5903, %v6101
        %v6103 = vsub.f32 1.0, %v6102
        %v6104 = vmul.f32 %v6101, %v6103
        %v6105 = vadd.f32 %v6101, %v6104
        %vm6106 = vweird.f32 %v5903
        %vm6107 = vweird.f32 %v6101
        %vm6108 = vmor %vm6106, %vm6107
        %v6109 = vsel %vm6108, %v6101, %v6105
        %v6110 = vand.u32 2147483647, %v5903
        %vm6111 = vcmp.eq.f32.partialorder %v6110, 8.507059e+37
        %v6112 = vand.u32 %v5903, 2147483648
        %v6113 = vor.u32 1.1754944e-38, %v6112
        %v6114 = vsel %vm6111, %v6113, %v6109
        %v6115 = vmul.f32 1.0, %v6114
        %v6116 = vrcp.pop %v5904
        %v6117 = vmul.f32 %v5904, %v6116
        %v6118 = vsub.f32 1.0, %v6117
        %v6119 = vmul.f32 %v6116, %v6118
        %v6120 = vadd.f32 %v6116, %v6119
        %vm6121 = vweird.f32 %v5904
        %vm6122 = vweird.f32 %v6116
        %vm6123 = vmor %vm6121, %vm6122
        %v6124 = vsel %vm6123, %v6116, %v6120
        %v6125 = vand.u32 2147483647, %v5904
        %vm6126 = vcmp.eq.f32.partialorder %v6125, 8.507059e+37
        %v6127 = vand.u32 %v5904, 2147483648
        %v6128 = vor.u32 1.1754944e-38, %v6127
        %v6129 = vsel %vm6126, %v6128, %v6124
        %v6130 = vmul.f32 1.0, %v6129
        %v6131 = vrcp.pop %v5905
        %v6132 = vmul.f32 %v5905, %v6131
        %v6133 = vsub.f32 1.0, %v6132
        %v6134 = vmul.f32 %v6131, %v6133
        %v6135 = vadd.f32 %v6131, %v6134
        %vm6136 = vweird.f32 %v5905
        %vm6137 = vweird.f32 %v6131
        %vm6138 = vmor %vm6136, %vm6137
        %v6139 = vsel %vm6138, %v6131, %v6135
        %v6140 = vand.u32 2147483647, %v5905
        %vm6141 = vcmp.eq.f32.partialorder %v6140, 8.507059e+37
        %v6142 = vand.u32 %v5905, 2147483648
        %v6143 = vor.u32 1.1754944e-38, %v6142
        %v6144 = vsel %vm6141, %v6143, %v6139
        %v6145 = vmul.f32 1.0, %v6144
        %v6146 = vmul.f32 %v5920, %v5690
        %v6147 = vmul.f32 %v5935, %v5692
        %v6148 = vmul.f32 %v5950, %v5695
        %v6149 = vmul.f32 %v5965, %v5697
        %v6150 = vmul.f32 %v5980, %v5700
        %v6151 = vmul.f32 %v5995, %v5702
        %v6152 = vmul.f32 %v6010, %v5705
        %v6153 = vmul.f32 %v6025, %v5707
        %v6154 = vmul.f32 %v6040, %v5710
        %v6155 = vmul.f32 %v6055, %v5712
        %v6156 = vmul.f32 %v6070, %v5715
        %v6157 = vmul.f32 %v6085, %v5717
        %v6158 = vmul.f32 %v6100, %v5720
        %v6159 = vmul.f32 %v6115, %v5722
        %v6160 = vmul.f32 %v6130, %v5725
        %v6161 = vmul.f32 %v6145, %v5727
        %v6162 = vadd.f32 %v4696, %v6146
        %v6163 = vadd.f32 %v4697, %v6147
        %v6164 = vadd.f32 %v4698, %v6148
        %v6165 = vadd.f32 %v4699, %v6149
        %v6166 = vadd.f32 %v4700, %v6150
        %v6167 = vadd.f32 %v4701, %v6151
        %v6168 = vadd.f32 %v4702, %v6152
        %v6169 = vadd.f32 %v4703, %v6153
        %v6170 = vadd.f32 %v4704, %v6154
        %v6171 = vadd.f32 %v4705, %v6155
        %v6172 = vadd.f32 %v4706, %v6156
        %v6173 = vadd.f32 %v4707, %v6157
        %v6174 = vadd.f32 %v4708, %v6158
        %v6175 = vadd.f32 %v4709, %v6159
        %v6176 = vadd.f32 %v4710, %v6160
        %v6177 = vadd.f32 %v4711, %v6161
        %6178 = vst [vmem:[%s833] sm:$0xff] %v6162
        %6179 = vst [vmem:[%s833 + $0x8] sm:$0xff] %v6163
        %6180 = vst [vmem:[%s833 + $0x10] sm:$0xff] %v6164
        %6181 = vst [vmem:[%s833 + $0x18] sm:$0xff] %v6165
        %6182 = vst [vmem:[%s833 + $0x20] sm:$0xff] %v6166
        %6183 = vst [vmem:[%s833 + $0x28] sm:$0xff] %v6167
        %6184 = vst [vmem:[%s833 + $0x30] sm:$0xff] %v6168
        %6185 = vst [vmem:[%s833 + $0x38] sm:$0xff] %v6169
        %6186 = vst [vmem:[%s833 + $0x40] sm:$0xff] %v6170
        %6187 = vst [vmem:[%s833 + $0x48] sm:$0xff] %v6171
        %6188 = vst [vmem:[%s833 + $0x50] sm:$0xff] %v6172
        %6189 = vst [vmem:[%s833 + $0x58] sm:$0xff] %v6173
        %6190 = vst [vmem:[%s833 + $0x60] sm:$0xff] %v6174
        %6191 = vst [vmem:[%s833 + $0x68] sm:$0xff] %v6175
        %6192 = vst [vmem:[%s833 + $0x70] sm:$0xff] %v6176
        %6193 = vst [vmem:[%s833 + $0x78] sm:$0xff] %v6177
        %s6194 = sand.u32 %s521, 1
        %s6195 = scalar_lea.sflag [#allocation9], %s6194
        %s6196 = sand.u32 %s521, 1
        %s6197 = smul.addr %s6196, 128
        %s6198 = scalar_lea.vmem [#allocation22], %s6197
        // Predicated region
        $region145: #{rwkv_block_forward.1} parent=103 // pred_check
          %p6199 = pneg %p531
        $region146: #{rwkv_block_forward.1} parent=103 // pred_check_branch
          %6201 = sbr.rel (%p6199) target = $region148
        $region147: #{rwkv_block_forward.1} parent=103 // pred_region
          %s6202 = smul.u32 16, %s56
          %6204 = vsyncadd %s6195, 0
          %s6205 = smul.addr %s55, 64
          %s6206 = sadd.s32 %s6202, %s6205
          %s6207 = smul.addr %s6206, 8
          %s6208 = scalar_lea.hbm %s22, %s6207
          %s6209 = sshll.u32 %s6198, 4
          %s6210 = int_to_ptr.vmem [resolvable:$true] %s6209
          %s6211 = sshll.u32 %s6208, 4
          %s6212 = int_to_ptr.hbm [resolvable:$true] %s6211
          %6217 = dma.vmem_to_hbm [thread:$0]  %s6210, 2048, %s6212, %s6195, 128, 128, 8
        $region148: #{rwkv_block_forward.1} parent=103 // pred_fallthru
          _
      $region104: #{rwkv_block_forward.1} parent=5 // pred_fallthru
        _
      %p6218 = scmp.le.s32.totalorder 2, %s46
      // Predicated region
      $region149: #{rwkv_block_forward.1} parent=5 // pred_check
        %p6219 = pneg %p6218
      $region150: #{rwkv_block_forward.1} parent=5 // pred_check_branch
        %6221 = sbr.rel (%p6219) target = $region152
      $region151: #{rwkv_block_forward.1} parent=5 // pred_region
        %s6222 = ssub.s32 %s46, 2
        // Predicated region
        $region153: #{rwkv_block_forward.1} parent=151 // pred_check
          %p6223 = pneg %p537
        $region154: #{rwkv_block_forward.1} parent=151 // pred_check_branch
          %6225 = sbr.rel (%p6223) target = $region156
        $region155: #{rwkv_block_forward.1} parent=151 // pred_region
          %s6226 = sand.u32 %s522, 1
          %s6227 = scalar_lea.sflag [#allocation9], %s6226
          %s6228 = sand.u32 %s522, 1
          %s6229 = smul.addr %s6228, 128
          %s6230 = scalar_lea.vmem [#allocation22], %s6229
          %6232 = dma.done %s6227, 2048
        $region156: #{rwkv_block_forward.1} parent=151 // pred_fallthru
          _
      $region152: #{rwkv_block_forward.1} parent=5 // pred_fallthru
        _
    $region6: #{rwkv_block_forward.1} parent=1 // loop_footer
      %s50 = sadd.s32 1, %s46
    $region7: #{rwkv_block_forward.1} parent=1 // loop_footer_branch
      %45 = sbr.rel target = $region3
    $region8: #{rwkv_block_forward.1} parent=1 // loop_exit
      _
    %6233 = vsyncpa [#allocation8], 1
    %s6234 = scalar_lea.sflag [#allocation8], 1
    %6235 = vsyncpa %s6234, 1
    %6236 = vsyncpa [#allocation11], 1
    %6237 = vsyncpa [#allocation14], 1
    %6238 = vsyncpa [#allocation17], 1
    %6239 = vsyncpa [#allocation20], 1
    %6240 = vsyncpa [#allocation9], 1
    %s6241 = scalar_lea.sflag [#allocation9], 1
    %6242 = vsyncpa %s6241, 1

</llo_original>
